<compile_context>
chip_gen: v7x
topology: tpu7x:2x2x1
jax: 0.10.0
libtpu: 0.0.40
codegen_flags: <defaults>
</compile_context>

<pallas_src>
import jax
import jax.numpy as jnp
from jax.experimental import pallas as pl
from jax.experimental.pallas import tpu as pltpu

FC1_UNITS = 400
FC2_UNITS = 300
FC1_PAD = 512          # 400 padded up to a multiple of 128 (lane-dense)
FC2_PAD = 384          # 300 padded up to a multiple of 128 (lane-dense)
BN_EPS = 1e-5
_HIGHEST = jax.lax.Precision.HIGHEST

# Row layout of the packed "vecs" operand (one (8, FC1_PAD) array == one DMA).
ROW_FC1_B = 0          # fc1 bias with bn1 affine folded in   (width FC1_PAD)
ROW_BN2_G = 1          # bn2 gamma                            (width FC1_PAD)
ROW_BN2_B = 2          # bn2 beta                             (width FC1_PAD)
ROW_FC2_B = 3          # fc2 bias                             (width FC2_PAD)
ROW_FC3_W = 4          # fc3 weight row                       (width FC2_PAD)
ROW_FC3_B = 5          # fc3 bias scalar at column 0
VEC_ROWS = 8           # padded to a full sublane tile


def critic_kernel(x_ref, act_ref, w1_ref, w2_ref, vec_ref, out_ref):
    x = x_ref[...]

    # --- bn1: training-mode batch statistics, biased variance.
    #     (The affine gamma/beta part was folded into fc1 host-side.)
    mean1 = jnp.mean(x, axis=0, keepdims=True)
    var1 = jnp.mean(jnp.square(x - mean1), axis=0, keepdims=True)
    xn = (x - mean1) * jax.lax.rsqrt(var1 + BN_EPS)

    # --- fc1 (bn1-affine-folded): (B, S) @ (S, FC1_PAD) + bias
    h1 = jnp.dot(xn, w1_ref[...], preferred_element_type=jnp.float32,
                 precision=_HIGHEST)
    h1 = h1 + vec_ref[ROW_FC1_B:ROW_FC1_B + 1, :]

    # --- bn2 + relu (padded columns are identically zero and stay zero)
    mean2 = jnp.mean(h1, axis=0, keepdims=True)
    var2 = jnp.mean(jnp.square(h1 - mean2), axis=0, keepdims=True)
    scale2 = vec_ref[ROW_BN2_G:ROW_BN2_G + 1, :] * jax.lax.rsqrt(var2 + BN_EPS)
    h1r = jnp.maximum(
        (h1 - mean2) * scale2 + vec_ref[ROW_BN2_B:ROW_BN2_B + 1, :], 0.0)

    # --- fc2 over cat([h1r, action], dim=1), expressed as split matmuls on a
    #     single packed weight: rows [0:FC1_PAD) = state half, rest = action half.
    h2 = (
        jnp.dot(h1r, w2_ref[0:FC1_PAD, :], preferred_element_type=jnp.float32,
                precision=_HIGHEST)
        + jnp.dot(act_ref[...], w2_ref[FC1_PAD:, :],
                  preferred_element_type=jnp.float32, precision=_HIGHEST)
        + vec_ref[ROW_FC2_B:ROW_FC2_B + 1, 0:FC2_PAD]
    )
    h2 = jnp.maximum(h2, 0.0)

    # --- fc3: output width 1 -> VPU multiply + lane reduce (keeps MXU free,
    #     avoids a 1-wide MXU result).  Padded lanes contribute exactly 0.
    w3 = vec_ref[ROW_FC3_W:ROW_FC3_W + 1, 0:FC2_PAD]
    q = jnp.sum(h2 * w3, axis=-1, keepdims=True)
    out_ref[...] = q + vec_ref[ROW_FC3_B:ROW_FC3_B + 1, 0:1]


def _full_spec(arr):
    # whole-array block, single grid point
    return pl.BlockSpec(arr.shape, lambda: (0,) * arr.ndim)


def critic_forward(x, action, kp):
    B = x.shape[0]
    args = (x, action, kp["fc1_w"], kp["fc2_w"], kp["vecs"])
    return pl.pallas_call(
        critic_kernel,
        out_shape=jax.ShapeDtypeStruct((B, 1), jnp.float32),
        in_specs=[_full_spec(a) for a in args],
        out_specs=pl.BlockSpec((B, 1), lambda: (0, 0)),
        # Right-sized VMEM request: total resident data is well under 1 MiB.
        compiler_params=pltpu.CompilerParams(vmem_limit_bytes=8 * 1024 * 1024),
    )(*args)


def init_params(key, state_size, action_size):
    """Module-faithful parameters.  Linear weights are stored transposed to
    (in_features, out_features) so the kernel does plain x @ W."""
    ks = jax.random.split(key, 6)
    f32 = jnp.float32

    # hidden_init uses weight.size()[0] == out_features (faithful to the module)
    lim1 = 1.0 / jnp.sqrt(f32(FC1_UNITS))
    lim2 = 1.0 / jnp.sqrt(f32(FC2_UNITS))
    fc1_w = jax.random.uniform(ks[0], (state_size, FC1_UNITS), f32, -lim1, lim1)
    fc2_w = jax.random.uniform(
        ks[1], (FC1_UNITS + action_size, FC2_UNITS), f32, -lim2, lim2)
    fc3_w = jax.random.uniform(ks[2], (FC2_UNITS, 1), f32, -0.003, 0.003)

    # biases: PyTorch Linear default init U(-1/sqrt(fan_in), 1/sqrt(fan_in))
    bl1 = 1.0 / jnp.sqrt(f32(state_size))
    bl2 = 1.0 / jnp.sqrt(f32(FC1_UNITS + action_size))
    bl3 = 1.0 / jnp.sqrt(f32(FC2_UNITS))
    fc1_b = jax.random.uniform(ks[3], (1, FC1_UNITS), f32, -bl1, bl1)
    fc2_b = jax.random.uniform(ks[4], (1, FC2_UNITS), f32, -bl2, bl2)
    fc3_b = jax.random.uniform(ks[5], (1, 1), f32, -bl3, bl3)

    return {
        "bn1_gamma": jnp.ones((1, state_size), f32),
        "bn1_beta": jnp.zeros((1, state_size), f32),
        "fc1_w": fc1_w, "fc1_b": fc1_b,
        "bn2_gamma": jnp.ones((1, FC1_UNITS), f32),
        "bn2_beta": jnp.zeros((1, FC1_UNITS), f32),
        "fc2_w_state": fc2_w[:FC1_UNITS, :],
        "fc2_w_action": fc2_w[FC1_UNITS:, :],
        "fc2_b": fc2_b,
        "fc3_w": fc3_w, "fc3_b": fc3_b,
    }


def prepare_params(p, state_size, action_size):
    """One-time host-side fold / pack / pad of module params into 3 kernel operands."""
    f32 = jnp.float32

    # Fold bn1 affine into fc1:
    #   (g*xhat + b) @ W + c  ==  xhat @ (g[:,None] * W) + (b @ W + c)
    fc1_w = p["fc1_w"] * jnp.reshape(p["bn1_gamma"], (state_size, 1))
    fc1_b = p["fc1_b"] + p["bn1_beta"] @ p["fc1_w"]

    # fc1: pad output width 400 -> 512 (zero columns -> zero activations).
    fc1_w_pad = jnp.zeros((state_size, FC1_PAD), f32).at[:, :FC1_UNITS].set(fc1_w)

    # fc2: pack state half (rows 0..511, padded) and action half (rows 512..) into
    # one (512 + A, 384) weight; pad cols 300 -> 384 with zeros.
    fc2_w_pad = jnp.zeros((FC1_PAD + action_size, FC2_PAD), f32)
    fc2_w_pad = fc2_w_pad.at[:FC1_UNITS, :FC2_UNITS].set(p["fc2_w_state"])
    fc2_w_pad = fc2_w_pad.at[FC1_PAD:, :FC2_UNITS].set(p["fc2_w_action"])

    # Every small (1, N) vector packed into one (8, 512) operand -> one DMA.
    vecs = jnp.zeros((VEC_ROWS, FC1_PAD), f32)
    vecs = vecs.at[ROW_FC1_B, :FC1_UNITS].set(jnp.reshape(fc1_b, (-1,)))
    vecs = vecs.at[ROW_BN2_G, :].set(1.0)   # harmless gamma for padded columns
    vecs = vecs.at[ROW_BN2_G, :FC1_UNITS].set(jnp.reshape(p["bn2_gamma"], (-1,)))
    vecs = vecs.at[ROW_BN2_B, :FC1_UNITS].set(jnp.reshape(p["bn2_beta"], (-1,)))
    vecs = vecs.at[ROW_FC2_B, :FC2_UNITS].set(jnp.reshape(p["fc2_b"], (-1,)))
    vecs = vecs.at[ROW_FC3_W, :FC2_UNITS].set(jnp.reshape(p["fc3_w"], (-1,)))
    vecs = vecs.at[ROW_FC3_B, 0].set(p["fc3_b"][0, 0])

    return {"fc1_w": fc1_w_pad, "fc2_w": fc2_w_pad, "vecs": vecs}


def critic_reference(x, action, p):
    """Pure-JAX reference of the PyTorch forward (training-mode BatchNorm)."""
    mean1 = jnp.mean(x, axis=0, keepdims=True)
    var1 = jnp.mean(jnp.square(x - mean1), axis=0, keepdims=True)
    xn = (x - mean1) * jax.lax.rsqrt(var1 + BN_EPS) * p["bn1_gamma"] + p["bn1_beta"]
    h1 = jnp.dot(xn, p["fc1_w"], precision=_HIGHEST) + p["fc1_b"]
    mean2 = jnp.mean(h1, axis=0, keepdims=True)
    var2 = jnp.mean(jnp.square(h1 - mean2), axis=0, keepdims=True)
    h1n = (h1 - mean2) * jax.lax.rsqrt(var2 + BN_EPS) * p["bn2_gamma"] + p["bn2_beta"]
    h1r = jnp.maximum(h1n, 0.0)
    h = jnp.concatenate([h1r, action], axis=1)
    w2 = jnp.concatenate([p["fc2_w_state"], p["fc2_w_action"]], axis=0)
    h2 = jnp.maximum(jnp.dot(h, w2, precision=_HIGHEST) + p["fc2_b"], 0.0)
    return jnp.dot(h2, p["fc3_w"], precision=_HIGHEST) + p["fc3_b"]


if __name__ == "__main__":
    state_size, action_size, batch = 32, 4, 8

    key = jax.random.PRNGKey(0)
    k_x, k_a, k_p = jax.random.split(key, 3)
    x = jax.random.normal(k_x, (batch, state_size), jnp.float32)
    action = jax.random.normal(k_a, (batch, action_size), jnp.float32)

    raw = init_params(k_p, state_size, action_size)
    kparams = prepare_params(raw, state_size, action_size)   # one-time fold/pack/pad

    q = critic_forward(x, action, kparams)
    q = jax.block_until_ready(q)
    assert q.shape == (batch, 1) and q.dtype == jnp.float32

    # Numerical check against the plain-JAX reference of the PyTorch forward.
    q_ref = jax.block_until_ready(critic_reference(x, action, raw))
    assert jnp.allclose(q, q_ref, rtol=1e-3, atol=1e-3), (q, q_ref)

    print("KERNEL_OK")
</pallas_src>

<mosaic_0001>
module attributes {stable_mosaic.version = 11 : i64} {
  func.func @critic_kernel(%arg0: memref<8x32xf32, #tpu.memory_space<vmem>>, %arg1: memref<8x4xf32, #tpu.memory_space<vmem>>, %arg2: memref<32x512xf32, #tpu.memory_space<vmem>>, %arg3: memref<516x384xf32, #tpu.memory_space<vmem>>, %arg4: memref<8x512xf32, #tpu.memory_space<vmem>>, %arg5: memref<8x1xf32, #tpu.memory_space<vmem>>) attributes {dimension_semantics = [], scalar_prefetch = 0 : i64, scratch_operands = 0 : i64, tpu.core_type = #tpu.core_type<tc>} {
    %c0 = arith.constant 0 : index
    %c0_0 = arith.constant 0 : index
    %0 = vector.load %arg0[%c0, %c0_0] : memref<8x32xf32, #tpu.memory_space<vmem>>, vector<8x32xf32>
    %cst = arith.constant dense<0.000000e+00> : vector<32xf32>
    %1 = vector.multi_reduction <add>, %0, %cst [0] : vector<8x32xf32> to vector<32xf32>
    %2 = vector.shape_cast %1 : vector<32xf32> to vector<1x32xf32>
    %cst_1 = arith.constant 8.000000e+00 : f32
    %3 = vector.broadcast %cst_1 : f32 to vector<1x32xf32>
    %4 = arith.divf %2, %3 : vector<1x32xf32>
    %5 = vector.broadcast %4 : vector<1x32xf32> to vector<8x32xf32>
    %6 = arith.subf %0, %5 : vector<8x32xf32>
    %7 = arith.mulf %6, %6 : vector<8x32xf32>
    %cst_2 = arith.constant dense<0.000000e+00> : vector<32xf32>
    %8 = vector.multi_reduction <add>, %7, %cst_2 [0] : vector<8x32xf32> to vector<32xf32>
    %9 = vector.shape_cast %8 : vector<32xf32> to vector<1x32xf32>
    %cst_3 = arith.constant 8.000000e+00 : f32
    %10 = vector.broadcast %cst_3 : f32 to vector<1x32xf32>
    %11 = arith.divf %9, %10 : vector<1x32xf32>
    %12 = vector.broadcast %4 : vector<1x32xf32> to vector<8x32xf32>
    %13 = arith.subf %0, %12 : vector<8x32xf32>
    %cst_4 = arith.constant 9.99999974E-6 : f32
    %14 = vector.broadcast %cst_4 : f32 to vector<1x32xf32>
    %15 = arith.addf %11, %14 : vector<1x32xf32>
    %16 = math.rsqrt %15 : vector<1x32xf32>
    %17 = vector.broadcast %16 : vector<1x32xf32> to vector<8x32xf32>
    %18 = arith.mulf %13, %17 : vector<8x32xf32>
    %c0_5 = arith.constant 0 : index
    %c0_6 = arith.constant 0 : index
    %19 = vector.load %arg2[%c0_5, %c0_6] : memref<32x512xf32, #tpu.memory_space<vmem>>, vector<32x512xf32>
    %cst_7 = arith.constant dense<0.000000e+00> : vector<8x512xf32>
    %20 = tpu.matmul %18, %19, %cst_7 {dimension_numbers = #tpu.dot_dimension_numbers<[1], [0], [0], [1], [0, 0, 1, 1], [], []>, precision = #tpu.contract_precision<fp32>} : vector<8x32xf32>, vector<32x512xf32>, vector<8x512xf32> -> vector<8x512xf32>
    %c0_8 = arith.constant 0 : index
    %c0_9 = arith.constant 0 : index
    %21 = vector.load %arg4[%c0_8, %c0_9] : memref<8x512xf32, #tpu.memory_space<vmem>>, vector<1x512xf32>
    %22 = vector.broadcast %21 : vector<1x512xf32> to vector<8x512xf32>
    %23 = arith.addf %20, %22 : vector<8x512xf32>
    %cst_10 = arith.constant dense<0.000000e+00> : vector<512xf32>
    %24 = vector.multi_reduction <add>, %23, %cst_10 [0] : vector<8x512xf32> to vector<512xf32>
    %25 = vector.shape_cast %24 : vector<512xf32> to vector<1x512xf32>
    %cst_11 = arith.constant 8.000000e+00 : f32
    %26 = vector.broadcast %cst_11 : f32 to vector<1x512xf32>
    %27 = arith.divf %25, %26 : vector<1x512xf32>
    %28 = vector.broadcast %27 : vector<1x512xf32> to vector<8x512xf32>
    %29 = arith.subf %23, %28 : vector<8x512xf32>
    %30 = arith.mulf %29, %29 : vector<8x512xf32>
    %cst_12 = arith.constant dense<0.000000e+00> : vector<512xf32>
    %31 = vector.multi_reduction <add>, %30, %cst_12 [0] : vector<8x512xf32> to vector<512xf32>
    %32 = vector.shape_cast %31 : vector<512xf32> to vector<1x512xf32>
    %cst_13 = arith.constant 8.000000e+00 : f32
    %33 = vector.broadcast %cst_13 : f32 to vector<1x512xf32>
    %34 = arith.divf %32, %33 : vector<1x512xf32>
    %c1 = arith.constant 1 : index
    %c0_14 = arith.constant 0 : index
    %35 = vector.load %arg4[%c1, %c0_14] : memref<8x512xf32, #tpu.memory_space<vmem>>, vector<1x512xf32>
    %cst_15 = arith.constant 9.99999974E-6 : f32
    %36 = vector.broadcast %cst_15 : f32 to vector<1x512xf32>
    %37 = arith.addf %34, %36 : vector<1x512xf32>
    %38 = math.rsqrt %37 : vector<1x512xf32>
    %39 = arith.mulf %35, %38 : vector<1x512xf32>
    %40 = vector.broadcast %27 : vector<1x512xf32> to vector<8x512xf32>
    %41 = arith.subf %23, %40 : vector<8x512xf32>
    %42 = vector.broadcast %39 : vector<1x512xf32> to vector<8x512xf32>
    %43 = arith.mulf %41, %42 : vector<8x512xf32>
    %c2 = arith.constant 2 : index
    %c0_16 = arith.constant 0 : index
    %44 = vector.load %arg4[%c2, %c0_16] : memref<8x512xf32, #tpu.memory_space<vmem>>, vector<1x512xf32>
    %45 = vector.broadcast %44 : vector<1x512xf32> to vector<8x512xf32>
    %46 = arith.addf %43, %45 : vector<8x512xf32>
    %cst_17 = arith.constant 0.000000e+00 : f32
    %47 = vector.broadcast %cst_17 : f32 to vector<8x512xf32>
    %48 = arith.maximumf %46, %47 : vector<8x512xf32>
    %c0_18 = arith.constant 0 : index
    %c0_19 = arith.constant 0 : index
    %49 = vector.load %arg3[%c0_18, %c0_19] : memref<516x384xf32, #tpu.memory_space<vmem>>, vector<512x384xf32>
    %cst_20 = arith.constant dense<0.000000e+00> : vector<8x384xf32>
    %50 = tpu.matmul %48, %49, %cst_20 {dimension_numbers = #tpu.dot_dimension_numbers<[1], [0], [0], [1], [0, 0, 1, 1], [], []>, precision = #tpu.contract_precision<fp32>} : vector<8x512xf32>, vector<512x384xf32>, vector<8x384xf32> -> vector<8x384xf32>
    %c0_21 = arith.constant 0 : index
    %c0_22 = arith.constant 0 : index
    %51 = vector.load %arg1[%c0_21, %c0_22] : memref<8x4xf32, #tpu.memory_space<vmem>>, vector<8x4xf32>
    %c512 = arith.constant 512 : index
    %c0_23 = arith.constant 0 : index
    %52 = vector.load %arg3[%c512, %c0_23] : memref<516x384xf32, #tpu.memory_space<vmem>>, vector<4x384xf32>
    %cst_24 = arith.constant dense<0.000000e+00> : vector<8x384xf32>
    %53 = tpu.matmul %51, %52, %cst_24 {dimension_numbers = #tpu.dot_dimension_numbers<[1], [0], [0], [1], [0, 0, 1, 1], [], []>, precision = #tpu.contract_precision<fp32>} : vector<8x4xf32>, vector<4x384xf32>, vector<8x384xf32> -> vector<8x384xf32>
    %54 = arith.addf %50, %53 : vector<8x384xf32>
    %c3 = arith.constant 3 : index
    %c0_25 = arith.constant 0 : index
    %55 = vector.load %arg4[%c3, %c0_25] : memref<8x512xf32, #tpu.memory_space<vmem>>, vector<1x384xf32>
    %56 = vector.broadcast %55 : vector<1x384xf32> to vector<8x384xf32>
    %57 = arith.addf %54, %56 : vector<8x384xf32>
    %cst_26 = arith.constant 0.000000e+00 : f32
    %58 = vector.broadcast %cst_26 : f32 to vector<8x384xf32>
    %59 = arith.maximumf %57, %58 : vector<8x384xf32>
    %c4 = arith.constant 4 : index
    %c0_27 = arith.constant 0 : index
    %60 = vector.load %arg4[%c4, %c0_27] : memref<8x512xf32, #tpu.memory_space<vmem>>, vector<1x384xf32>
    %61 = vector.broadcast %60 : vector<1x384xf32> to vector<8x384xf32>
    %62 = arith.mulf %59, %61 : vector<8x384xf32>
    %cst_28 = arith.constant dense<0.000000e+00> : vector<8xf32>
    %63 = vector.multi_reduction <add>, %62, %cst_28 [1] : vector<8x384xf32> to vector<8xf32>
    %64 = vector.shape_cast %63 : vector<8xf32> to vector<8x1xf32>
    %c5 = arith.constant 5 : index
    %c0_29 = arith.constant 0 : index
    %65 = vector.load %arg4[%c5, %c0_29] : memref<8x512xf32, #tpu.memory_space<vmem>>, vector<1x1xf32>
    %66 = vector.broadcast %65 : vector<1x1xf32> to vector<8x1xf32>
    %67 = arith.addf %64, %66 : vector<8x1xf32>
    %c0_30 = arith.constant 0 : index
    %c0_31 = arith.constant 0 : index
    %68 = vector.load %arg5[%c0_30, %c0_31] : memref<8x1xf32, #tpu.memory_space<vmem>>, vector<8x1xf32>
    tpu.vector_store %arg5[%c0_30, %c0_31], %67 {strides = array<i32>} : memref<8x1xf32, #tpu.memory_space<vmem>>, vector<8x1xf32>,
    return
  }
}

</mosaic_0001>

<llo_original>
// kernel: tpu_custom_call.1
$region0: #{tpu_custom_call.1}
  #allocation0 [shape = 'u32[]', space=smem, size = 0x4, offset = 0x4, fixed_abs, tag = 'smem constant byte address 0x4 - core index']
  #allocation1 [shape = 'u32[144,128]{1,0:T(1,128)}', space=vmem, size = 0x12000, scoped, tag = 'internal scratch']
  %s0 = inlined_call_operand.vmem [shape: f32[8,32], index: 0, kind: input, shape index: {}]
  %s1 = inlined_call_operand.vmem [shape: f32[8,4], index: 1, kind: input, shape index: {}]
  %s2 = inlined_call_operand.hbm [shape: f32[32,512], index: 2, kind: input, shape index: {}]
  %s3 = inlined_call_operand.hbm [shape: f32[516,384], index: 3, kind: input, shape index: {}]
  %s4 = inlined_call_operand.hbm [shape: f32[8,512], index: 4, kind: input, shape index: {}]
  %s5 = inlined_call_operand.vmem [shape: f32[8,1], index: 5, kind: output, shape index: {}]
  %s6 = sld [smem:[#allocation0]]
  $region42: #{tpu_custom_call.1} parent=0
    _
  %s8 = ssub.s32 1, %s6
  %s9 = scalar_select 0, %s8, %s6
  $region1: #{tpu_custom_call.1} parent=0
    #allocation2 [shape = 'u8[65536]{0}', space=vmem, size = 0x10000, scoped, tag = 'input window, operand 2, single buffered']
    #allocation3 [shape = 's32[1]{0}', space=sflag, size = 0x4, scoped, tag = 'scoped memory for tpu_custom_call.1']
    #allocation4 [shape = 'u8[798720]{0}', space=vmem, size = 0xc3000, scoped, tag = 'input window, operand 3, single buffered']
    #allocation5 [shape = 's32[1]{0}', space=sflag, size = 0x4, scoped, tag = 'scoped memory for tpu_custom_call.1']
    #allocation6 [shape = 'u8[16384]{0}', space=vmem, size = 0x4000, scoped, tag = 'input window, operand 4, single buffered']
    %10 = vsyncpa [#allocation3], 0
    %11 = vsyncpa [#allocation5], 0
    // Predicated region
    $region2: #{tpu_custom_call.1} parent=1 // pred_check
      _
    $region3: #{tpu_custom_call.1} parent=1 // pred_check_branch
      %13 = sbr.rel (0) target = $region5
    $region4: #{tpu_custom_call.1} parent=1 // pred_region
      _
    $region5: #{tpu_custom_call.1} parent=1 // pred_fallthru
      _
    // Predicated region
    $region6: #{tpu_custom_call.1} parent=1 // pred_check
      _
    $region7: #{tpu_custom_call.1} parent=1 // pred_check_branch
      %15 = sbr.rel (0) target = $region9
    $region8: #{tpu_custom_call.1} parent=1 // pred_region
      _
    $region9: #{tpu_custom_call.1} parent=1 // pred_fallthru
      _
    // Predicated region
    $region10: #{tpu_custom_call.1} parent=1 // pred_check
      _
    $region11: #{tpu_custom_call.1} parent=1 // pred_check_branch
      %17 = sbr.rel (0) target = $region13
    $region12: #{tpu_custom_call.1} parent=1 // pred_region
      %s19 = ssub.s32 2048, 2048
      %20 = vsyncadd [#allocation3], %s19
      %s21 = sshll.u32 [#allocation2], 4
      %s22 = int_to_ptr.vmem [resolvable:$true] %s21
      %27 = dma.hbm_to_vmem [thread:$0]  %s2, 2048, %s22, [#allocation3], 512, 512, 32
    $region13: #{tpu_custom_call.1} parent=1 // pred_fallthru
      _
    // Predicated region
    $region14: #{tpu_custom_call.1} parent=1 // pred_check
      _
    $region15: #{tpu_custom_call.1} parent=1 // pred_check_branch
      %29 = sbr.rel (0) target = $region17
    $region16: #{tpu_custom_call.1} parent=1 // pred_region
      %s31 = ssub.s32 24960, 24960
      %32 = vsyncadd [#allocation5], %s31
      %s33 = sshll.u32 [#allocation4], 4
      %s34 = int_to_ptr.vmem [resolvable:$true] %s33
      %39 = dma.hbm_to_vmem [thread:$0]  %s3, 24960, %s34, [#allocation5], 384, 384, 24
    $region17: #{tpu_custom_call.1} parent=1 // pred_fallthru
      _
    // Predicated region
    $region18: #{tpu_custom_call.1} parent=1 // pred_check
      _
    $region19: #{tpu_custom_call.1} parent=1 // pred_check_branch
      %41 = sbr.rel (0) target = $region21
    $region20: #{tpu_custom_call.1} parent=1 // pred_region
      %s43 = ssub.s32 512, 512
      %44 = vsyncadd [#allocation5], %s43
      %s46 = sshll.u32 [#allocation6], 4
      %s47 = int_to_ptr.vmem [resolvable:$true] %s46
      %49 = dma.hbm_to_vmem [thread:$0]  %s4, 512, %s47, [#allocation5]
    $region21: #{tpu_custom_call.1} parent=1 // pred_fallthru
      _
    // Predicated region
    $region22: #{tpu_custom_call.1} parent=1 // pred_check
      _
    $region23: #{tpu_custom_call.1} parent=1 // pred_check_branch
      %51 = sbr.rel (0) target = $region25
    $region24: #{tpu_custom_call.1} parent=1 // pred_region
      %52 = dma.done [#allocation3], 2048
    $region25: #{tpu_custom_call.1} parent=1 // pred_fallthru
      _
    // Predicated region
    $region26: #{tpu_custom_call.1} parent=1 // pred_check
      _
    $region27: #{tpu_custom_call.1} parent=1 // pred_check_branch
      %54 = sbr.rel (0) target = $region29
    $region28: #{tpu_custom_call.1} parent=1 // pred_region
      %55 = dma.done [#allocation5], 24960
    $region29: #{tpu_custom_call.1} parent=1 // pred_fallthru
      _
    // Predicated region
    $region30: #{tpu_custom_call.1} parent=1 // pred_check
      _
    $region31: #{tpu_custom_call.1} parent=1 // pred_check_branch
      %57 = sbr.rel (0) target = $region33
    $region32: #{tpu_custom_call.1} parent=1 // pred_region
      %58 = dma.done [#allocation5], 512
    $region33: #{tpu_custom_call.1} parent=1 // pred_fallthru
      _
    %v59 = vld [vmem:[%s0] sm:$0xff]
    %vm60 = vcmask 261120
    %v61 = vsel %vm60, %v59, 0.0
    %v62 = vrot.slane %v61, 4
    %v63 = vadd.f32 %v61, %v62
    %v64 = vrot.slane %v63, 2
    %v65 = vadd.f32 %v63, %v64
    %v66 = vrot.slane %v65, 1
    %v67 = vadd.f32 %v65, %v66
    %v68 = vrcp.pop 8.0
    %v69 = vmul.f32 %v67, %v68
    %v70 = vsub.f32 %v59, %v69
    %v71 = vmul.f32 %v70, %v70
    %v72 = vsel %vm60, %v71, 0.0
    %v73 = vrot.slane %v72, 4
    %v74 = vadd.f32 %v72, %v73
    %v75 = vrot.slane %v74, 2
    %v76 = vadd.f32 %v74, %v75
    %v77 = vrot.slane %v76, 1
    %v78 = vadd.f32 %v76, %v77
    %v79 = vmul.f32 %v78, %v68
    %v80 = vadd.f32 %v79, 1e-05
    %v81 = vrsqrt.pop %v80
    %v82 = vmul.f32 %v70, %v81
    %v83 = vld [vmem:[#allocation2] sm:$0xff]
    %v84 = vld [vmem:[#allocation2 + $0x8] sm:$0xff]
    %v85 = vld [vmem:[#allocation2 + $0x10] sm:$0xff]
    %v86 = vld [vmem:[#allocation2 + $0x18] sm:$0xff]
    %v87 = vld [vmem:[#allocation2 + $0x20] sm:$0xff]
    %v88 = vld [vmem:[#allocation2 + $0x28] sm:$0xff]
    %v89 = vld [vmem:[#allocation2 + $0x30] sm:$0xff]
    %v90 = vld [vmem:[#allocation2 + $0x38] sm:$0xff]
    %v91 = vld [vmem:[#allocation2 + $0x40] sm:$0xff]
    %v92 = vld [vmem:[#allocation2 + $0x48] sm:$0xff]
    %v93 = vld [vmem:[#allocation2 + $0x50] sm:$0xff]
    %v94 = vld [vmem:[#allocation2 + $0x58] sm:$0xff]
    %v95 = vld [vmem:[#allocation2 + $0x60] sm:$0xff]
    %v96 = vld [vmem:[#allocation2 + $0x68] sm:$0xff]
    %v97 = vld [vmem:[#allocation2 + $0x70] sm:$0xff]
    %v98 = vld [vmem:[#allocation2 + $0x78] sm:$0xff]
    %v99 = vld [vmem:[#allocation6] ss:$8 sm:$0xf]
    %v101 = vlaneseq
    %v102 = vshrl.u32 %v101, 7
    %v103 = vsub.s32 0, %v102
    %v104 = vrot.slane %v99, %v103
    %v105 = vlaneseq
    %v106 = vshrl.u32 %v105, 7
    %v107 = vsub.s32 1, %v106
    %v108 = vrot.slane %v99, %v107
    %v109 = vlaneseq
    %v110 = vshrl.u32 %v109, 7
    %v111 = vsub.s32 2, %v110
    %v112 = vrot.slane %v99, %v111
    %v113 = vlaneseq
    %v114 = vshrl.u32 %v113, 7
    %v115 = vsub.s32 3, %v114
    %v116 = vrot.slane %v99, %v115
    %v122 = vsel %vm60, %v82, 0
    %v124 = vand.u32 %v84, 4294901760
    %125 = vmatprep.subr.mxu0 %v124
    %v126 = vand.u32 %v83, 4294901760
    %127 = vmatpush1.msra.mxu0 %v126
    %v128 = vand.u32 %v88, 4294901760
    %129 = vmatprep.subr.mxu0 %v128
    %v130 = vand.u32 %v87, 4294901760
    %131 = vmatpush1.msra.mxu0 %v130
    %v132 = vand.u32 %v92, 4294901760
    %133 = vmatprep.subr.mxu0 %v132
    %v134 = vand.u32 %v91, 4294901760
    %135 = vmatpush1.msra.mxu0 %v134
    %v136 = vand.u32 %v96, 4294901760
    %137 = vmatprep.subr.mxu0 %v136
    %v138 = vand.u32 %v95, 4294901760
    %139 = vmatpush1.msra.mxu0 %v138
    %140 = vmatprep.subr.mxu0 0.0
    %141 = vmatpush1.msra.mxu0 0.0
    %142 = vmatprep.subr.mxu0 0.0
    %143 = vmatpush1.msra.mxu0 0.0
    %144 = vmatprep.subr.mxu0 0.0
    %145 = vmatpush1.msra.mxu0 0.0
    %146 = vmatprep.subr.mxu0 0.0
    %147 = vmatpush1.msra.mxu0 0.0
    %148 = vmatprep.subr.mxu0 0.0
    %149 = vmatpush1.msra.mxu0 0.0
    %150 = vmatprep.subr.mxu0 0.0
    %151 = vmatpush1.msra.mxu0 0.0
    %152 = vmatprep.subr.mxu0 0.0
    %153 = vmatpush1.msra.mxu0 0.0
    %154 = vmatprep.subr.mxu0 0.0
    %155 = vmatpush1.msra.mxu0 0.0
    %156 = vmatprep.subr.mxu0 0.0
    %157 = vmatpush1.msra.mxu0 0.0
    %158 = vmatprep.subr.mxu0 0.0
    %159 = vmatpush1.msra.mxu0 0.0
    %160 = vmatprep.subr.mxu0 0.0
    %161 = vmatpush1.msra.mxu0 0.0
    %162 = vmatprep.subr.mxu0 0.0
    %163 = vmatpush1.msra.mxu0 0.0
    %164 = vmatprep.subr.mxu0 0.0
    %165 = vmatpush1.msra.mxu0 0.0
    %166 = vmatprep.subr.mxu0 0.0
    %167 = vmatpush1.msra.mxu0 0.0
    %168 = vmatprep.subr.mxu0 0.0
    %169 = vmatpush1.msra.mxu0 0.0
    %170 = vmatprep.subr.mxu0 0.0
    %171 = vmatpush1.msra.mxu0 0.0
    %172 = vmatprep.subr.mxu0 0.0
    %173 = vmatpush1.msra.mxu0 0.0
    %174 = vmatprep.subr.mxu0 0.0
    %175 = vmatpush1.msra.mxu0 0.0
    %176 = vmatprep.subr.mxu0 0.0
    %177 = vmatpush1.msra.mxu0 0.0
    %178 = vmatprep.subr.mxu0 0.0
    %179 = vmatpush1.msra.mxu0 0.0
    %180 = vmatprep.subr.mxu0 0.0
    %181 = vmatpush1.msra.mxu0 0.0
    %182 = vmatprep.subr.mxu0 0.0
    %183 = vmatpush1.msra.mxu0 0.0
    %184 = vmatprep.subr.mxu0 0.0
    %185 = vmatpush1.msra.mxu0 0.0
    %186 = vmatprep.subr.mxu0 0.0
    %187 = vmatpush1.msra.mxu0 0.0
    %188 = vmatprep.subr.mxu0 0.0
    %189 = vmatpush1.msra.mxu0 0.0
    %190 = vmatprep.subr.mxu0 0.0
    %191 = vmatpush1.msra.mxu0 0.0
    %192 = vmatprep.subr.mxu0 0.0
    %193 = vmatpush1.msra.mxu0 0.0
    %194 = vmatprep.subr.mxu0 0.0
    %195 = vmatpush1.msra.mxu0 0.0
    %196 = vmatprep.mubr.f32.mxu0 0.0
    %v197 = vand.u32 %v122, 4294901760
    %v198 = vsub.f32 %v122, %v197
    %v199 = vand.u32 %v198, 4294901760
    %v200 = vsub.f32 %v198, %v199
    %v201 = vand.u32 %v200, 4294901760
    %202 = vmatmul.mubr.f32.gmra.mrb[0].mxu0 %v201
    %v203 = vpop.f32.mrb[0].mxu0
    %v204 = vadd.f32 %v104, %v203
    %v205 = vpop.f32.mrb[0].mxu0
    %v206 = vadd.f32 %v108, %v205
    %207 = vdwg.mxu0
    %v208 = vand.u32 %v84, 4294901760
    %v209 = vsub.f32 %v84, %v208
    %v210 = vand.u32 %v209, 4294901760
    %v211 = vsub.f32 %v209, %v210
    %v212 = vand.u32 %v211, 4294901760
    %213 = vmatprep.subr.mxu0 %v212
    %v214 = vand.u32 %v83, 4294901760
    %v215 = vsub.f32 %v83, %v214
    %v216 = vand.u32 %v215, 4294901760
    %v217 = vsub.f32 %v215, %v216
    %v218 = vand.u32 %v217, 4294901760
    %219 = vmatpush1.msra.mxu0 %v218
    %v220 = vand.u32 %v88, 4294901760
    %v221 = vsub.f32 %v88, %v220
    %v222 = vand.u32 %v221, 4294901760
    %v223 = vsub.f32 %v221, %v222
    %v224 = vand.u32 %v223, 4294901760
    %225 = vmatprep.subr.mxu0 %v224
    %v226 = vand.u32 %v87, 4294901760
    %v227 = vsub.f32 %v87, %v226
    %v228 = vand.u32 %v227, 4294901760
    %v229 = vsub.f32 %v227, %v228
    %v230 = vand.u32 %v229, 4294901760
    %231 = vmatpush1.msra.mxu0 %v230
    %v232 = vand.u32 %v92, 4294901760
    %v233 = vsub.f32 %v92, %v232
    %v234 = vand.u32 %v233, 4294901760
    %v235 = vsub.f32 %v233, %v234
    %v236 = vand.u32 %v235, 4294901760
    %237 = vmatprep.subr.mxu0 %v236
    %v238 = vand.u32 %v91, 4294901760
    %v239 = vsub.f32 %v91, %v238
    %v240 = vand.u32 %v239, 4294901760
    %v241 = vsub.f32 %v239, %v240
    %v242 = vand.u32 %v241, 4294901760
    %243 = vmatpush1.msra.mxu0 %v242
    %v244 = vand.u32 %v96, 4294901760
    %v245 = vsub.f32 %v96, %v244
    %v246 = vand.u32 %v245, 4294901760
    %v247 = vsub.f32 %v245, %v246
    %v248 = vand.u32 %v247, 4294901760
    %249 = vmatprep.subr.mxu0 %v248
    %v250 = vand.u32 %v95, 4294901760
    %v251 = vsub.f32 %v95, %v250
    %v252 = vand.u32 %v251, 4294901760
    %v253 = vsub.f32 %v251, %v252
    %v254 = vand.u32 %v253, 4294901760
    %255 = vmatpush1.msra.mxu0 %v254
    %256 = vmatprep.subr.mxu0 0.0
    %257 = vmatpush1.msra.mxu0 0.0
    %258 = vmatprep.subr.mxu0 0.0
    %259 = vmatpush1.msra.mxu0 0.0
    %260 = vmatprep.subr.mxu0 0.0
    %261 = vmatpush1.msra.mxu0 0.0
    %262 = vmatprep.subr.mxu0 0.0
    %263 = vmatpush1.msra.mxu0 0.0
    %264 = vmatprep.subr.mxu0 0.0
    %265 = vmatpush1.msra.mxu0 0.0
    %266 = vmatprep.subr.mxu0 0.0
    %267 = vmatpush1.msra.mxu0 0.0
    %268 = vmatprep.subr.mxu0 0.0
    %269 = vmatpush1.msra.mxu0 0.0
    %270 = vmatprep.subr.mxu0 0.0
    %271 = vmatpush1.msra.mxu0 0.0
    %272 = vmatprep.subr.mxu0 0.0
    %273 = vmatpush1.msra.mxu0 0.0
    %274 = vmatprep.subr.mxu0 0.0
    %275 = vmatpush1.msra.mxu0 0.0
    %276 = vmatprep.subr.mxu0 0.0
    %277 = vmatpush1.msra.mxu0 0.0
    %278 = vmatprep.subr.mxu0 0.0
    %279 = vmatpush1.msra.mxu0 0.0
    %280 = vmatprep.subr.mxu0 0.0
    %281 = vmatpush1.msra.mxu0 0.0
    %282 = vmatprep.subr.mxu0 0.0
    %283 = vmatpush1.msra.mxu0 0.0
    %284 = vmatprep.subr.mxu0 0.0
    %285 = vmatpush1.msra.mxu0 0.0
    %286 = vmatprep.subr.mxu0 0.0
    %287 = vmatpush1.msra.mxu0 0.0
    %288 = vmatprep.subr.mxu0 0.0
    %289 = vmatpush1.msra.mxu0 0.0
    %290 = vmatprep.subr.mxu0 0.0
    %291 = vmatpush1.msra.mxu0 0.0
    %292 = vmatprep.subr.mxu0 0.0
    %293 = vmatpush1.msra.mxu0 0.0
    %294 = vmatprep.subr.mxu0 0.0
    %295 = vmatpush1.msra.mxu0 0.0
    %296 = vmatprep.subr.mxu0 0.0
    %297 = vmatpush1.msra.mxu0 0.0
    %298 = vmatprep.subr.mxu0 0.0
    %299 = vmatpush1.msra.mxu0 0.0
    %300 = vmatprep.subr.mxu0 0.0
    %301 = vmatpush1.msra.mxu0 0.0
    %302 = vmatprep.subr.mxu0 0.0
    %303 = vmatpush1.msra.mxu0 0.0
    %304 = vmatprep.subr.mxu0 0.0
    %305 = vmatpush1.msra.mxu0 0.0
    %306 = vmatprep.subr.mxu0 0.0
    %307 = vmatpush1.msra.mxu0 0.0
    %308 = vmatprep.subr.mxu0 0.0
    %309 = vmatpush1.msra.mxu0 0.0
    %310 = vmatprep.subr.mxu0 0.0
    %311 = vmatpush1.msra.mxu0 0.0
    %312 = vmatprep.mubr.f32.mxu0 0.0
    %v313 = vand.u32 %v122, 4294901760
    %314 = vmatmul.mubr.f32.gmra.mrb[0].mxu0 %v313
    %v315 = vpop.f32.mrb[0].mxu0
    %v316 = vadd.f32 %v204, %v315
    %v317 = vpop.f32.mrb[0].mxu0
    %v318 = vadd.f32 %v206, %v317
    %319 = vdwg.mxu0
    %v320 = vand.u32 %v84, 4294901760
    %v321 = vsub.f32 %v84, %v320
    %322 = vmatprep.subr.mxu0 %v321
    %v323 = vand.u32 %v83, 4294901760
    %v324 = vsub.f32 %v83, %v323
    %325 = vmatpush1.msra.mxu0 %v324
    %v326 = vand.u32 %v88, 4294901760
    %v327 = vsub.f32 %v88, %v326
    %328 = vmatprep.subr.mxu0 %v327
    %v329 = vand.u32 %v87, 4294901760
    %v330 = vsub.f32 %v87, %v329
    %331 = vmatpush1.msra.mxu0 %v330
    %v332 = vand.u32 %v92, 4294901760
    %v333 = vsub.f32 %v92, %v332
    %334 = vmatprep.subr.mxu0 %v333
    %v335 = vand.u32 %v91, 4294901760
    %v336 = vsub.f32 %v91, %v335
    %337 = vmatpush1.msra.mxu0 %v336
    %v338 = vand.u32 %v96, 4294901760
    %v339 = vsub.f32 %v96, %v338
    %340 = vmatprep.subr.mxu0 %v339
    %v341 = vand.u32 %v95, 4294901760
    %v342 = vsub.f32 %v95, %v341
    %343 = vmatpush1.msra.mxu0 %v342
    %344 = vmatprep.subr.mxu0 0.0
    %345 = vmatpush1.msra.mxu0 0.0
    %346 = vmatprep.subr.mxu0 0.0
    %347 = vmatpush1.msra.mxu0 0.0
    %348 = vmatprep.subr.mxu0 0.0
    %349 = vmatpush1.msra.mxu0 0.0
    %350 = vmatprep.subr.mxu0 0.0
    %351 = vmatpush1.msra.mxu0 0.0
    %352 = vmatprep.subr.mxu0 0.0
    %353 = vmatpush1.msra.mxu0 0.0
    %354 = vmatprep.subr.mxu0 0.0
    %355 = vmatpush1.msra.mxu0 0.0
    %356 = vmatprep.subr.mxu0 0.0
    %357 = vmatpush1.msra.mxu0 0.0
    %358 = vmatprep.subr.mxu0 0.0
    %359 = vmatpush1.msra.mxu0 0.0
    %360 = vmatprep.subr.mxu0 0.0
    %361 = vmatpush1.msra.mxu0 0.0
    %362 = vmatprep.subr.mxu0 0.0
    %363 = vmatpush1.msra.mxu0 0.0
    %364 = vmatprep.subr.mxu0 0.0
    %365 = vmatpush1.msra.mxu0 0.0
    %366 = vmatprep.subr.mxu0 0.0
    %367 = vmatpush1.msra.mxu0 0.0
    %368 = vmatprep.subr.mxu0 0.0
    %369 = vmatpush1.msra.mxu0 0.0
    %370 = vmatprep.subr.mxu0 0.0
    %371 = vmatpush1.msra.mxu0 0.0
    %372 = vmatprep.subr.mxu0 0.0
    %373 = vmatpush1.msra.mxu0 0.0
    %374 = vmatprep.subr.mxu0 0.0
    %375 = vmatpush1.msra.mxu0 0.0
    %376 = vmatprep.subr.mxu0 0.0
    %377 = vmatpush1.msra.mxu0 0.0
    %378 = vmatprep.subr.mxu0 0.0
    %379 = vmatpush1.msra.mxu0 0.0
    %380 = vmatprep.subr.mxu0 0.0
    %381 = vmatpush1.msra.mxu0 0.0
    %382 = vmatprep.subr.mxu0 0.0
    %383 = vmatpush1.msra.mxu0 0.0
    %384 = vmatprep.subr.mxu0 0.0
    %385 = vmatpush1.msra.mxu0 0.0
    %386 = vmatprep.subr.mxu0 0.0
    %387 = vmatpush1.msra.mxu0 0.0
    %388 = vmatprep.subr.mxu0 0.0
    %389 = vmatpush1.msra.mxu0 0.0
    %390 = vmatprep.subr.mxu0 0.0
    %391 = vmatpush1.msra.mxu0 0.0
    %392 = vmatprep.subr.mxu0 0.0
    %393 = vmatpush1.msra.mxu0 0.0
    %394 = vmatprep.subr.mxu0 0.0
    %395 = vmatpush1.msra.mxu0 0.0
    %396 = vmatprep.subr.mxu0 0.0
    %397 = vmatpush1.msra.mxu0 0.0
    %398 = vmatprep.subr.mxu0 0.0
    %399 = vmatpush1.msra.mxu0 0.0
    %400 = vmatprep.mubr.f32.mxu0 0.0
    %v401 = vand.u32 %v122, 4294901760
    %v402 = vsub.f32 %v122, %v401
    %403 = vmatmul.mubr.f32.gmra.mrb[0].mxu0 %v402
    %v404 = vpop.f32.mrb[0].mxu0
    %v405 = vadd.f32 %v316, %v404
    %v406 = vpop.f32.mrb[0].mxu0
    %v407 = vadd.f32 %v318, %v406
    %408 = vdwg.mxu0
    %v409 = vand.u32 %v84, 4294901760
    %410 = vmatprep.subr.mxu0 %v409
    %v411 = vand.u32 %v83, 4294901760
    %412 = vmatpush1.msra.mxu0 %v411
    %v413 = vand.u32 %v88, 4294901760
    %414 = vmatprep.subr.mxu0 %v413
    %v415 = vand.u32 %v87, 4294901760
    %416 = vmatpush1.msra.mxu0 %v415
    %v417 = vand.u32 %v92, 4294901760
    %418 = vmatprep.subr.mxu0 %v417
    %v419 = vand.u32 %v91, 4294901760
    %420 = vmatpush1.msra.mxu0 %v419
    %v421 = vand.u32 %v96, 4294901760
    %422 = vmatprep.subr.mxu0 %v421
    %v423 = vand.u32 %v95, 4294901760
    %424 = vmatpush1.msra.mxu0 %v423
    %425 = vmatprep.subr.mxu0 0.0
    %426 = vmatpush1.msra.mxu0 0.0
    %427 = vmatprep.subr.mxu0 0.0
    %428 = vmatpush1.msra.mxu0 0.0
    %429 = vmatprep.subr.mxu0 0.0
    %430 = vmatpush1.msra.mxu0 0.0
    %431 = vmatprep.subr.mxu0 0.0
    %432 = vmatpush1.msra.mxu0 0.0
    %433 = vmatprep.subr.mxu0 0.0
    %434 = vmatpush1.msra.mxu0 0.0
    %435 = vmatprep.subr.mxu0 0.0
    %436 = vmatpush1.msra.mxu0 0.0
    %437 = vmatprep.subr.mxu0 0.0
    %438 = vmatpush1.msra.mxu0 0.0
    %439 = vmatprep.subr.mxu0 0.0
    %440 = vmatpush1.msra.mxu0 0.0
    %441 = vmatprep.subr.mxu0 0.0
    %442 = vmatpush1.msra.mxu0 0.0
    %443 = vmatprep.subr.mxu0 0.0
    %444 = vmatpush1.msra.mxu0 0.0
    %445 = vmatprep.subr.mxu0 0.0
    %446 = vmatpush1.msra.mxu0 0.0
    %447 = vmatprep.subr.mxu0 0.0
    %448 = vmatpush1.msra.mxu0 0.0
    %449 = vmatprep.subr.mxu0 0.0
    %450 = vmatpush1.msra.mxu0 0.0
    %451 = vmatprep.subr.mxu0 0.0
    %452 = vmatpush1.msra.mxu0 0.0
    %453 = vmatprep.subr.mxu0 0.0
    %454 = vmatpush1.msra.mxu0 0.0
    %455 = vmatprep.subr.mxu0 0.0
    %456 = vmatpush1.msra.mxu0 0.0
    %457 = vmatprep.subr.mxu0 0.0
    %458 = vmatpush1.msra.mxu0 0.0
    %459 = vmatprep.subr.mxu0 0.0
    %460 = vmatpush1.msra.mxu0 0.0
    %461 = vmatprep.subr.mxu0 0.0
    %462 = vmatpush1.msra.mxu0 0.0
    %463 = vmatprep.subr.mxu0 0.0
    %464 = vmatpush1.msra.mxu0 0.0
    %465 = vmatprep.subr.mxu0 0.0
    %466 = vmatpush1.msra.mxu0 0.0
    %467 = vmatprep.subr.mxu0 0.0
    %468 = vmatpush1.msra.mxu0 0.0
    %469 = vmatprep.subr.mxu0 0.0
    %470 = vmatpush1.msra.mxu0 0.0
    %471 = vmatprep.subr.mxu0 0.0
    %472 = vmatpush1.msra.mxu0 0.0
    %473 = vmatprep.subr.mxu0 0.0
    %474 = vmatpush1.msra.mxu0 0.0
    %475 = vmatprep.subr.mxu0 0.0
    %476 = vmatpush1.msra.mxu0 0.0
    %477 = vmatprep.subr.mxu0 0.0
    %478 = vmatpush1.msra.mxu0 0.0
    %479 = vmatprep.subr.mxu0 0.0
    %480 = vmatpush1.msra.mxu0 0.0
    %481 = vmatprep.mubr.f32.mxu0 0.0
    %v482 = vand.u32 %v122, 4294901760
    %v483 = vsub.f32 %v122, %v482
    %v484 = vand.u32 %v483, 4294901760
    %485 = vmatmul.mubr.f32.gmra.mrb[0].mxu0 %v484
    %v486 = vpop.f32.mrb[0].mxu0
    %v487 = vadd.f32 %v405, %v486
    %v488 = vpop.f32.mrb[0].mxu0
    %v489 = vadd.f32 %v407, %v488
    %490 = vdwg.mxu0
    %v491 = vand.u32 %v84, 4294901760
    %v492 = vsub.f32 %v84, %v491
    %v493 = vand.u32 %v492, 4294901760
    %494 = vmatprep.subr.mxu0 %v493
    %v495 = vand.u32 %v83, 4294901760
    %v496 = vsub.f32 %v83, %v495
    %v497 = vand.u32 %v496, 4294901760
    %498 = vmatpush1.msra.mxu0 %v497
    %v499 = vand.u32 %v88, 4294901760
    %v500 = vsub.f32 %v88, %v499
    %v501 = vand.u32 %v500, 4294901760
    %502 = vmatprep.subr.mxu0 %v501
    %v503 = vand.u32 %v87, 4294901760
    %v504 = vsub.f32 %v87, %v503
    %v505 = vand.u32 %v504, 4294901760
    %506 = vmatpush1.msra.mxu0 %v505
    %v507 = vand.u32 %v92, 4294901760
    %v508 = vsub.f32 %v92, %v507
    %v509 = vand.u32 %v508, 4294901760
    %510 = vmatprep.subr.mxu0 %v509
    %v511 = vand.u32 %v91, 4294901760
    %v512 = vsub.f32 %v91, %v511
    %v513 = vand.u32 %v512, 4294901760
    %514 = vmatpush1.msra.mxu0 %v513
    %v515 = vand.u32 %v96, 4294901760
    %v516 = vsub.f32 %v96, %v515
    %v517 = vand.u32 %v516, 4294901760
    %518 = vmatprep.subr.mxu0 %v517
    %v519 = vand.u32 %v95, 4294901760
    %v520 = vsub.f32 %v95, %v519
    %v521 = vand.u32 %v520, 4294901760
    %522 = vmatpush1.msra.mxu0 %v521
    %523 = vmatprep.subr.mxu0 0.0
    %524 = vmatpush1.msra.mxu0 0.0
    %525 = vmatprep.subr.mxu0 0.0
    %526 = vmatpush1.msra.mxu0 0.0
    %527 = vmatprep.subr.mxu0 0.0
    %528 = vmatpush1.msra.mxu0 0.0
    %529 = vmatprep.subr.mxu0 0.0
    %530 = vmatpush1.msra.mxu0 0.0
    %531 = vmatprep.subr.mxu0 0.0
    %532 = vmatpush1.msra.mxu0 0.0
    %533 = vmatprep.subr.mxu0 0.0
    %534 = vmatpush1.msra.mxu0 0.0
    %535 = vmatprep.subr.mxu0 0.0
    %536 = vmatpush1.msra.mxu0 0.0
    %537 = vmatprep.subr.mxu0 0.0
    %538 = vmatpush1.msra.mxu0 0.0
    %539 = vmatprep.subr.mxu0 0.0
    %540 = vmatpush1.msra.mxu0 0.0
    %541 = vmatprep.subr.mxu0 0.0
    %542 = vmatpush1.msra.mxu0 0.0
    %543 = vmatprep.subr.mxu0 0.0
    %544 = vmatpush1.msra.mxu0 0.0
    %545 = vmatprep.subr.mxu0 0.0
    %546 = vmatpush1.msra.mxu0 0.0
    %547 = vmatprep.subr.mxu0 0.0
    %548 = vmatpush1.msra.mxu0 0.0
    %549 = vmatprep.subr.mxu0 0.0
    %550 = vmatpush1.msra.mxu0 0.0
    %551 = vmatprep.subr.mxu0 0.0
    %552 = vmatpush1.msra.mxu0 0.0
    %553 = vmatprep.subr.mxu0 0.0
    %554 = vmatpush1.msra.mxu0 0.0
    %555 = vmatprep.subr.mxu0 0.0
    %556 = vmatpush1.msra.mxu0 0.0
    %557 = vmatprep.subr.mxu0 0.0
    %558 = vmatpush1.msra.mxu0 0.0
    %559 = vmatprep.subr.mxu0 0.0
    %560 = vmatpush1.msra.mxu0 0.0
    %561 = vmatprep.subr.mxu0 0.0
    %562 = vmatpush1.msra.mxu0 0.0
    %563 = vmatprep.subr.mxu0 0.0
    %564 = vmatpush1.msra.mxu0 0.0
    %565 = vmatprep.subr.mxu0 0.0
    %566 = vmatpush1.msra.mxu0 0.0
    %567 = vmatprep.subr.mxu0 0.0
    %568 = vmatpush1.msra.mxu0 0.0
    %569 = vmatprep.subr.mxu0 0.0
    %570 = vmatpush1.msra.mxu0 0.0
    %571 = vmatprep.subr.mxu0 0.0
    %572 = vmatpush1.msra.mxu0 0.0
    %573 = vmatprep.subr.mxu0 0.0
    %574 = vmatpush1.msra.mxu0 0.0
    %575 = vmatprep.subr.mxu0 0.0
    %576 = vmatpush1.msra.mxu0 0.0
    %577 = vmatprep.subr.mxu0 0.0
    %578 = vmatpush1.msra.mxu0 0.0
    %579 = vmatprep.mubr.f32.mxu0 0.0
    %v580 = vand.u32 %v122, 4294901760
    %581 = vmatmul.mubr.f32.gmra.mrb[0].mxu0 %v580
    %v582 = vpop.f32.mrb[0].mxu0
    %v583 = vadd.f32 %v487, %v582
    %v584 = vpop.f32.mrb[0].mxu0
    %v585 = vadd.f32 %v489, %v584
    %586 = vdwg.mxu0
    %v587 = vand.u32 %v84, 4294901760
    %588 = vmatprep.subr.mxu0 %v587
    %v589 = vand.u32 %v83, 4294901760
    %590 = vmatpush1.msra.mxu0 %v589
    %v591 = vand.u32 %v88, 4294901760
    %592 = vmatprep.subr.mxu0 %v591
    %v593 = vand.u32 %v87, 4294901760
    %594 = vmatpush1.msra.mxu0 %v593
    %v595 = vand.u32 %v92, 4294901760
    %596 = vmatprep.subr.mxu0 %v595
    %v597 = vand.u32 %v91, 4294901760
    %598 = vmatpush1.msra.mxu0 %v597
    %v599 = vand.u32 %v96, 4294901760
    %600 = vmatprep.subr.mxu0 %v599
    %v601 = vand.u32 %v95, 4294901760
    %602 = vmatpush1.msra.mxu0 %v601
    %603 = vmatprep.subr.mxu0 0.0
    %604 = vmatpush1.msra.mxu0 0.0
    %605 = vmatprep.subr.mxu0 0.0
    %606 = vmatpush1.msra.mxu0 0.0
    %607 = vmatprep.subr.mxu0 0.0
    %608 = vmatpush1.msra.mxu0 0.0
    %609 = vmatprep.subr.mxu0 0.0
    %610 = vmatpush1.msra.mxu0 0.0
    %611 = vmatprep.subr.mxu0 0.0
    %612 = vmatpush1.msra.mxu0 0.0
    %613 = vmatprep.subr.mxu0 0.0
    %614 = vmatpush1.msra.mxu0 0.0
    %615 = vmatprep.subr.mxu0 0.0
    %616 = vmatpush1.msra.mxu0 0.0
    %617 = vmatprep.subr.mxu0 0.0
    %618 = vmatpush1.msra.mxu0 0.0
    %619 = vmatprep.subr.mxu0 0.0
    %620 = vmatpush1.msra.mxu0 0.0
    %621 = vmatprep.subr.mxu0 0.0
    %622 = vmatpush1.msra.mxu0 0.0
    %623 = vmatprep.subr.mxu0 0.0
    %624 = vmatpush1.msra.mxu0 0.0
    %625 = vmatprep.subr.mxu0 0.0
    %626 = vmatpush1.msra.mxu0 0.0
    %627 = vmatprep.subr.mxu0 0.0
    %628 = vmatpush1.msra.mxu0 0.0
    %629 = vmatprep.subr.mxu0 0.0
    %630 = vmatpush1.msra.mxu0 0.0
    %631 = vmatprep.subr.mxu0 0.0
    %632 = vmatpush1.msra.mxu0 0.0
    %633 = vmatprep.subr.mxu0 0.0
    %634 = vmatpush1.msra.mxu0 0.0
    %635 = vmatprep.subr.mxu0 0.0
    %636 = vmatpush1.msra.mxu0 0.0
    %637 = vmatprep.subr.mxu0 0.0
    %638 = vmatpush1.msra.mxu0 0.0
    %639 = vmatprep.subr.mxu0 0.0
    %640 = vmatpush1.msra.mxu0 0.0
    %641 = vmatprep.subr.mxu0 0.0
    %642 = vmatpush1.msra.mxu0 0.0
    %643 = vmatprep.subr.mxu0 0.0
    %644 = vmatpush1.msra.mxu0 0.0
    %645 = vmatprep.subr.mxu0 0.0
    %646 = vmatpush1.msra.mxu0 0.0
    %647 = vmatprep.subr.mxu0 0.0
    %648 = vmatpush1.msra.mxu0 0.0
    %649 = vmatprep.subr.mxu0 0.0
    %650 = vmatpush1.msra.mxu0 0.0
    %651 = vmatprep.subr.mxu0 0.0
    %652 = vmatpush1.msra.mxu0 0.0
    %653 = vmatprep.subr.mxu0 0.0
    %654 = vmatpush1.msra.mxu0 0.0
    %655 = vmatprep.subr.mxu0 0.0
    %656 = vmatpush1.msra.mxu0 0.0
    %657 = vmatprep.subr.mxu0 0.0
    %658 = vmatpush1.msra.mxu0 0.0
    %659 = vmatprep.mubr.f32.mxu0 0.0
    %v660 = vand.u32 %v122, 4294901760
    %661 = vmatmul.mubr.f32.gmra.mrb[0].mxu0 %v660
    %v662 = vpop.f32.mrb[0].mxu0
    %v663 = vadd.f32 %v583, %v662
    %v664 = vpop.f32.mrb[0].mxu0
    %v665 = vadd.f32 %v585, %v664
    %666 = vdwg.mxu0
    %v667 = vand.u32 %v86, 4294901760
    %668 = vmatprep.subr.mxu0 %v667
    %v669 = vand.u32 %v85, 4294901760
    %670 = vmatpush1.msra.mxu0 %v669
    %v671 = vand.u32 %v90, 4294901760
    %672 = vmatprep.subr.mxu0 %v671
    %v673 = vand.u32 %v89, 4294901760
    %674 = vmatpush1.msra.mxu0 %v673
    %v675 = vand.u32 %v94, 4294901760
    %676 = vmatprep.subr.mxu0 %v675
    %v677 = vand.u32 %v93, 4294901760
    %678 = vmatpush1.msra.mxu0 %v677
    %v679 = vand.u32 %v98, 4294901760
    %680 = vmatprep.subr.mxu0 %v679
    %v681 = vand.u32 %v97, 4294901760
    %682 = vmatpush1.msra.mxu0 %v681
    %683 = vmatprep.subr.mxu0 0.0
    %684 = vmatpush1.msra.mxu0 0.0
    %685 = vmatprep.subr.mxu0 0.0
    %686 = vmatpush1.msra.mxu0 0.0
    %687 = vmatprep.subr.mxu0 0.0
    %688 = vmatpush1.msra.mxu0 0.0
    %689 = vmatprep.subr.mxu0 0.0
    %690 = vmatpush1.msra.mxu0 0.0
    %691 = vmatprep.subr.mxu0 0.0
    %692 = vmatpush1.msra.mxu0 0.0
    %693 = vmatprep.subr.mxu0 0.0
    %694 = vmatpush1.msra.mxu0 0.0
    %695 = vmatprep.subr.mxu0 0.0
    %696 = vmatpush1.msra.mxu0 0.0
    %697 = vmatprep.subr.mxu0 0.0
    %698 = vmatpush1.msra.mxu0 0.0
    %699 = vmatprep.subr.mxu0 0.0
    %700 = vmatpush1.msra.mxu0 0.0
    %701 = vmatprep.subr.mxu0 0.0
    %702 = vmatpush1.msra.mxu0 0.0
    %703 = vmatprep.subr.mxu0 0.0
    %704 = vmatpush1.msra.mxu0 0.0
    %705 = vmatprep.subr.mxu0 0.0
    %706 = vmatpush1.msra.mxu0 0.0
    %707 = vmatprep.subr.mxu0 0.0
    %708 = vmatpush1.msra.mxu0 0.0
    %709 = vmatprep.subr.mxu0 0.0
    %710 = vmatpush1.msra.mxu0 0.0
    %711 = vmatprep.subr.mxu0 0.0
    %712 = vmatpush1.msra.mxu0 0.0
    %713 = vmatprep.subr.mxu0 0.0
    %714 = vmatpush1.msra.mxu0 0.0
    %715 = vmatprep.subr.mxu0 0.0
    %716 = vmatpush1.msra.mxu0 0.0
    %717 = vmatprep.subr.mxu0 0.0
    %718 = vmatpush1.msra.mxu0 0.0
    %719 = vmatprep.subr.mxu0 0.0
    %720 = vmatpush1.msra.mxu0 0.0
    %721 = vmatprep.subr.mxu0 0.0
    %722 = vmatpush1.msra.mxu0 0.0
    %723 = vmatprep.subr.mxu0 0.0
    %724 = vmatpush1.msra.mxu0 0.0
    %725 = vmatprep.subr.mxu0 0.0
    %726 = vmatpush1.msra.mxu0 0.0
    %727 = vmatprep.subr.mxu0 0.0
    %728 = vmatpush1.msra.mxu0 0.0
    %729 = vmatprep.subr.mxu0 0.0
    %730 = vmatpush1.msra.mxu0 0.0
    %731 = vmatprep.subr.mxu0 0.0
    %732 = vmatpush1.msra.mxu0 0.0
    %733 = vmatprep.subr.mxu0 0.0
    %734 = vmatpush1.msra.mxu0 0.0
    %735 = vmatprep.subr.mxu0 0.0
    %736 = vmatpush1.msra.mxu0 0.0
    %737 = vmatprep.subr.mxu0 0.0
    %738 = vmatpush1.msra.mxu0 0.0
    %739 = vmatprep.mubr.f32.mxu0 0.0
    %v740 = vand.u32 %v122, 4294901760
    %v741 = vsub.f32 %v122, %v740
    %v742 = vand.u32 %v741, 4294901760
    %v743 = vsub.f32 %v741, %v742
    %v744 = vand.u32 %v743, 4294901760
    %745 = vmatmul.mubr.f32.gmra.mrb[0].mxu0 %v744
    %v746 = vpop.f32.mrb[0].mxu0
    %v747 = vadd.f32 %v112, %v746
    %v748 = vpop.f32.mrb[0].mxu0
    %v749 = vadd.f32 %v116, %v748
    %750 = vdwg.mxu0
    %v751 = vand.u32 %v86, 4294901760
    %v752 = vsub.f32 %v86, %v751
    %v753 = vand.u32 %v752, 4294901760
    %v754 = vsub.f32 %v752, %v753
    %v755 = vand.u32 %v754, 4294901760
    %756 = vmatprep.subr.mxu0 %v755
    %v757 = vand.u32 %v85, 4294901760
    %v758 = vsub.f32 %v85, %v757
    %v759 = vand.u32 %v758, 4294901760
    %v760 = vsub.f32 %v758, %v759
    %v761 = vand.u32 %v760, 4294901760
    %762 = vmatpush1.msra.mxu0 %v761
    %v763 = vand.u32 %v90, 4294901760
    %v764 = vsub.f32 %v90, %v763
    %v765 = vand.u32 %v764, 4294901760
    %v766 = vsub.f32 %v764, %v765
    %v767 = vand.u32 %v766, 4294901760
    %768 = vmatprep.subr.mxu0 %v767
    %v769 = vand.u32 %v89, 4294901760
    %v770 = vsub.f32 %v89, %v769
    %v771 = vand.u32 %v770, 4294901760
    %v772 = vsub.f32 %v770, %v771
    %v773 = vand.u32 %v772, 4294901760
    %774 = vmatpush1.msra.mxu0 %v773
    %v775 = vand.u32 %v94, 4294901760
    %v776 = vsub.f32 %v94, %v775
    %v777 = vand.u32 %v776, 4294901760
    %v778 = vsub.f32 %v776, %v777
    %v779 = vand.u32 %v778, 4294901760
    %780 = vmatprep.subr.mxu0 %v779
    %v781 = vand.u32 %v93, 4294901760
    %v782 = vsub.f32 %v93, %v781
    %v783 = vand.u32 %v782, 4294901760
    %v784 = vsub.f32 %v782, %v783
    %v785 = vand.u32 %v784, 4294901760
    %786 = vmatpush1.msra.mxu0 %v785
    %v787 = vand.u32 %v98, 4294901760
    %v788 = vsub.f32 %v98, %v787
    %v789 = vand.u32 %v788, 4294901760
    %v790 = vsub.f32 %v788, %v789
    %v791 = vand.u32 %v790, 4294901760
    %792 = vmatprep.subr.mxu0 %v791
    %v793 = vand.u32 %v97, 4294901760
    %v794 = vsub.f32 %v97, %v793
    %v795 = vand.u32 %v794, 4294901760
    %v796 = vsub.f32 %v794, %v795
    %v797 = vand.u32 %v796, 4294901760
    %798 = vmatpush1.msra.mxu0 %v797
    %799 = vmatprep.subr.mxu0 0.0
    %800 = vmatpush1.msra.mxu0 0.0
    %801 = vmatprep.subr.mxu0 0.0
    %802 = vmatpush1.msra.mxu0 0.0
    %803 = vmatprep.subr.mxu0 0.0
    %804 = vmatpush1.msra.mxu0 0.0
    %805 = vmatprep.subr.mxu0 0.0
    %806 = vmatpush1.msra.mxu0 0.0
    %807 = vmatprep.subr.mxu0 0.0
    %808 = vmatpush1.msra.mxu0 0.0
    %809 = vmatprep.subr.mxu0 0.0
    %810 = vmatpush1.msra.mxu0 0.0
    %811 = vmatprep.subr.mxu0 0.0
    %812 = vmatpush1.msra.mxu0 0.0
    %813 = vmatprep.subr.mxu0 0.0
    %814 = vmatpush1.msra.mxu0 0.0
    %815 = vmatprep.subr.mxu0 0.0
    %816 = vmatpush1.msra.mxu0 0.0
    %817 = vmatprep.subr.mxu0 0.0
    %818 = vmatpush1.msra.mxu0 0.0
    %819 = vmatprep.subr.mxu0 0.0
    %820 = vmatpush1.msra.mxu0 0.0
    %821 = vmatprep.subr.mxu0 0.0
    %822 = vmatpush1.msra.mxu0 0.0
    %823 = vmatprep.subr.mxu0 0.0
    %824 = vmatpush1.msra.mxu0 0.0
    %825 = vmatprep.subr.mxu0 0.0
    %826 = vmatpush1.msra.mxu0 0.0
    %827 = vmatprep.subr.mxu0 0.0
    %828 = vmatpush1.msra.mxu0 0.0
    %829 = vmatprep.subr.mxu0 0.0
    %830 = vmatpush1.msra.mxu0 0.0
    %831 = vmatprep.subr.mxu0 0.0
    %832 = vmatpush1.msra.mxu0 0.0
    %833 = vmatprep.subr.mxu0 0.0
    %834 = vmatpush1.msra.mxu0 0.0
    %835 = vmatprep.subr.mxu0 0.0
    %836 = vmatpush1.msra.mxu0 0.0
    %837 = vmatprep.subr.mxu0 0.0
    %838 = vmatpush1.msra.mxu0 0.0
    %839 = vmatprep.subr.mxu0 0.0
    %840 = vmatpush1.msra.mxu0 0.0
    %841 = vmatprep.subr.mxu0 0.0
    %842 = vmatpush1.msra.mxu0 0.0
    %843 = vmatprep.subr.mxu0 0.0
    %844 = vmatpush1.msra.mxu0 0.0
    %845 = vmatprep.subr.mxu0 0.0
    %846 = vmatpush1.msra.mxu0 0.0
    %847 = vmatprep.subr.mxu0 0.0
    %848 = vmatpush1.msra.mxu0 0.0
    %849 = vmatprep.subr.mxu0 0.0
    %850 = vmatpush1.msra.mxu0 0.0
    %851 = vmatprep.subr.mxu0 0.0
    %852 = vmatpush1.msra.mxu0 0.0
    %853 = vmatprep.subr.mxu0 0.0
    %854 = vmatpush1.msra.mxu0 0.0
    %855 = vmatprep.mubr.f32.mxu0 0.0
    %v856 = vand.u32 %v122, 4294901760
    %857 = vmatmul.mubr.f32.gmra.mrb[0].mxu0 %v856
    %v858 = vpop.f32.mrb[0].mxu0
    %v859 = vadd.f32 %v747, %v858
    %v860 = vpop.f32.mrb[0].mxu0
    %v861 = vadd.f32 %v749, %v860
    %862 = vdwg.mxu0
    %v863 = vand.u32 %v86, 4294901760
    %v864 = vsub.f32 %v86, %v863
    %865 = vmatprep.subr.mxu0 %v864
    %v866 = vand.u32 %v85, 4294901760
    %v867 = vsub.f32 %v85, %v866
    %868 = vmatpush1.msra.mxu0 %v867
    %v869 = vand.u32 %v90, 4294901760
    %v870 = vsub.f32 %v90, %v869
    %871 = vmatprep.subr.mxu0 %v870
    %v872 = vand.u32 %v89, 4294901760
    %v873 = vsub.f32 %v89, %v872
    %874 = vmatpush1.msra.mxu0 %v873
    %v875 = vand.u32 %v94, 4294901760
    %v876 = vsub.f32 %v94, %v875
    %877 = vmatprep.subr.mxu0 %v876
    %v878 = vand.u32 %v93, 4294901760
    %v879 = vsub.f32 %v93, %v878
    %880 = vmatpush1.msra.mxu0 %v879
    %v881 = vand.u32 %v98, 4294901760
    %v882 = vsub.f32 %v98, %v881
    %883 = vmatprep.subr.mxu0 %v882
    %v884 = vand.u32 %v97, 4294901760
    %v885 = vsub.f32 %v97, %v884
    %886 = vmatpush1.msra.mxu0 %v885
    %887 = vmatprep.subr.mxu0 0.0
    %888 = vmatpush1.msra.mxu0 0.0
    %889 = vmatprep.subr.mxu0 0.0
    %890 = vmatpush1.msra.mxu0 0.0
    %891 = vmatprep.subr.mxu0 0.0
    %892 = vmatpush1.msra.mxu0 0.0
    %893 = vmatprep.subr.mxu0 0.0
    %894 = vmatpush1.msra.mxu0 0.0
    %895 = vmatprep.subr.mxu0 0.0
    %896 = vmatpush1.msra.mxu0 0.0
    %897 = vmatprep.subr.mxu0 0.0
    %898 = vmatpush1.msra.mxu0 0.0
    %899 = vmatprep.subr.mxu0 0.0
    %900 = vmatpush1.msra.mxu0 0.0
    %901 = vmatprep.subr.mxu0 0.0
    %902 = vmatpush1.msra.mxu0 0.0
    %903 = vmatprep.subr.mxu0 0.0
    %904 = vmatpush1.msra.mxu0 0.0
    %905 = vmatprep.subr.mxu0 0.0
    %906 = vmatpush1.msra.mxu0 0.0
    %907 = vmatprep.subr.mxu0 0.0
    %908 = vmatpush1.msra.mxu0 0.0
    %909 = vmatprep.subr.mxu0 0.0
    %910 = vmatpush1.msra.mxu0 0.0
    %911 = vmatprep.subr.mxu0 0.0
    %912 = vmatpush1.msra.mxu0 0.0
    %913 = vmatprep.subr.mxu0 0.0
    %914 = vmatpush1.msra.mxu0 0.0
    %915 = vmatprep.subr.mxu0 0.0
    %916 = vmatpush1.msra.mxu0 0.0
    %917 = vmatprep.subr.mxu0 0.0
    %918 = vmatpush1.msra.mxu0 0.0
    %919 = vmatprep.subr.mxu0 0.0
    %920 = vmatpush1.msra.mxu0 0.0
    %921 = vmatprep.subr.mxu0 0.0
    %922 = vmatpush1.msra.mxu0 0.0
    %923 = vmatprep.subr.mxu0 0.0
    %924 = vmatpush1.msra.mxu0 0.0
    %925 = vmatprep.subr.mxu0 0.0
    %926 = vmatpush1.msra.mxu0 0.0
    %927 = vmatprep.subr.mxu0 0.0
    %928 = vmatpush1.msra.mxu0 0.0
    %929 = vmatprep.subr.mxu0 0.0
    %930 = vmatpush1.msra.mxu0 0.0
    %931 = vmatprep.subr.mxu0 0.0
    %932 = vmatpush1.msra.mxu0 0.0
    %933 = vmatprep.subr.mxu0 0.0
    %934 = vmatpush1.msra.mxu0 0.0
    %935 = vmatprep.subr.mxu0 0.0
    %936 = vmatpush1.msra.mxu0 0.0
    %937 = vmatprep.subr.mxu0 0.0
    %938 = vmatpush1.msra.mxu0 0.0
    %939 = vmatprep.subr.mxu0 0.0
    %940 = vmatpush1.msra.mxu0 0.0
    %941 = vmatprep.subr.mxu0 0.0
    %942 = vmatpush1.msra.mxu0 0.0
    %943 = vmatprep.mubr.f32.mxu0 0.0
    %v944 = vand.u32 %v122, 4294901760
    %v945 = vsub.f32 %v122, %v944
    %946 = vmatmul.mubr.f32.gmra.mrb[0].mxu0 %v945
    %v947 = vpop.f32.mrb[0].mxu0
    %v948 = vadd.f32 %v859, %v947
    %v949 = vpop.f32.mrb[0].mxu0
    %v950 = vadd.f32 %v861, %v949
    %951 = vdwg.mxu0
    %v952 = vand.u32 %v86, 4294901760
    %953 = vmatprep.subr.mxu0 %v952
    %v954 = vand.u32 %v85, 4294901760
    %955 = vmatpush1.msra.mxu0 %v954
    %v956 = vand.u32 %v90, 4294901760
    %957 = vmatprep.subr.mxu0 %v956
    %v958 = vand.u32 %v89, 4294901760
    %959 = vmatpush1.msra.mxu0 %v958
    %v960 = vand.u32 %v94, 4294901760
    %961 = vmatprep.subr.mxu0 %v960
    %v962 = vand.u32 %v93, 4294901760
    %963 = vmatpush1.msra.mxu0 %v962
    %v964 = vand.u32 %v98, 4294901760
    %965 = vmatprep.subr.mxu0 %v964
    %v966 = vand.u32 %v97, 4294901760
    %967 = vmatpush1.msra.mxu0 %v966
    %968 = vmatprep.subr.mxu0 0.0
    %969 = vmatpush1.msra.mxu0 0.0
    %970 = vmatprep.subr.mxu0 0.0
    %971 = vmatpush1.msra.mxu0 0.0
    %972 = vmatprep.subr.mxu0 0.0
    %973 = vmatpush1.msra.mxu0 0.0
    %974 = vmatprep.subr.mxu0 0.0
    %975 = vmatpush1.msra.mxu0 0.0
    %976 = vmatprep.subr.mxu0 0.0
    %977 = vmatpush1.msra.mxu0 0.0
    %978 = vmatprep.subr.mxu0 0.0
    %979 = vmatpush1.msra.mxu0 0.0
    %980 = vmatprep.subr.mxu0 0.0
    %981 = vmatpush1.msra.mxu0 0.0
    %982 = vmatprep.subr.mxu0 0.0
    %983 = vmatpush1.msra.mxu0 0.0
    %984 = vmatprep.subr.mxu0 0.0
    %985 = vmatpush1.msra.mxu0 0.0
    %986 = vmatprep.subr.mxu0 0.0
    %987 = vmatpush1.msra.mxu0 0.0
    %988 = vmatprep.subr.mxu0 0.0
    %989 = vmatpush1.msra.mxu0 0.0
    %990 = vmatprep.subr.mxu0 0.0
    %991 = vmatpush1.msra.mxu0 0.0
    %992 = vmatprep.subr.mxu0 0.0
    %993 = vmatpush1.msra.mxu0 0.0
    %994 = vmatprep.subr.mxu0 0.0
    %995 = vmatpush1.msra.mxu0 0.0
    %996 = vmatprep.subr.mxu0 0.0
    %997 = vmatpush1.msra.mxu0 0.0
    %998 = vmatprep.subr.mxu0 0.0
    %999 = vmatpush1.msra.mxu0 0.0
    %1000 = vmatprep.subr.mxu0 0.0
    %1001 = vmatpush1.msra.mxu0 0.0
    %1002 = vmatprep.subr.mxu0 0.0
    %1003 = vmatpush1.msra.mxu0 0.0
    %1004 = vmatprep.subr.mxu0 0.0
    %1005 = vmatpush1.msra.mxu0 0.0
    %1006 = vmatprep.subr.mxu0 0.0
    %1007 = vmatpush1.msra.mxu0 0.0
    %1008 = vmatprep.subr.mxu0 0.0
    %1009 = vmatpush1.msra.mxu0 0.0
    %1010 = vmatprep.subr.mxu0 0.0
    %1011 = vmatpush1.msra.mxu0 0.0
    %1012 = vmatprep.subr.mxu0 0.0
    %1013 = vmatpush1.msra.mxu0 0.0
    %1014 = vmatprep.subr.mxu0 0.0
    %1015 = vmatpush1.msra.mxu0 0.0
    %1016 = vmatprep.subr.mxu0 0.0
    %1017 = vmatpush1.msra.mxu0 0.0
    %1018 = vmatprep.subr.mxu0 0.0
    %1019 = vmatpush1.msra.mxu0 0.0
    %1020 = vmatprep.subr.mxu0 0.0
    %1021 = vmatpush1.msra.mxu0 0.0
    %1022 = vmatprep.subr.mxu0 0.0
    %1023 = vmatpush1.msra.mxu0 0.0
    %1024 = vmatprep.mubr.f32.mxu0 0.0
    %v1025 = vand.u32 %v122, 4294901760
    %v1026 = vsub.f32 %v122, %v1025
    %v1027 = vand.u32 %v1026, 4294901760
    %1028 = vmatmul.mubr.f32.gmra.mrb[0].mxu0 %v1027
    %v1029 = vpop.f32.mrb[0].mxu0
    %v1030 = vadd.f32 %v948, %v1029
    %v1031 = vpop.f32.mrb[0].mxu0
    %v1032 = vadd.f32 %v950, %v1031
    %1033 = vdwg.mxu0
    %v1034 = vand.u32 %v86, 4294901760
    %v1035 = vsub.f32 %v86, %v1034
    %v1036 = vand.u32 %v1035, 4294901760
    %1037 = vmatprep.subr.mxu0 %v1036
    %v1038 = vand.u32 %v85, 4294901760
    %v1039 = vsub.f32 %v85, %v1038
    %v1040 = vand.u32 %v1039, 4294901760
    %1041 = vmatpush1.msra.mxu0 %v1040
    %v1042 = vand.u32 %v90, 4294901760
    %v1043 = vsub.f32 %v90, %v1042
    %v1044 = vand.u32 %v1043, 4294901760
    %1045 = vmatprep.subr.mxu0 %v1044
    %v1046 = vand.u32 %v89, 4294901760
    %v1047 = vsub.f32 %v89, %v1046
    %v1048 = vand.u32 %v1047, 4294901760
    %1049 = vmatpush1.msra.mxu0 %v1048
    %v1050 = vand.u32 %v94, 4294901760
    %v1051 = vsub.f32 %v94, %v1050
    %v1052 = vand.u32 %v1051, 4294901760
    %1053 = vmatprep.subr.mxu0 %v1052
    %v1054 = vand.u32 %v93, 4294901760
    %v1055 = vsub.f32 %v93, %v1054
    %v1056 = vand.u32 %v1055, 4294901760
    %1057 = vmatpush1.msra.mxu0 %v1056
    %v1058 = vand.u32 %v98, 4294901760
    %v1059 = vsub.f32 %v98, %v1058
    %v1060 = vand.u32 %v1059, 4294901760
    %1061 = vmatprep.subr.mxu0 %v1060
    %v1062 = vand.u32 %v97, 4294901760
    %v1063 = vsub.f32 %v97, %v1062
    %v1064 = vand.u32 %v1063, 4294901760
    %1065 = vmatpush1.msra.mxu0 %v1064
    %1066 = vmatprep.subr.mxu0 0.0
    %1067 = vmatpush1.msra.mxu0 0.0
    %1068 = vmatprep.subr.mxu0 0.0
    %1069 = vmatpush1.msra.mxu0 0.0
    %1070 = vmatprep.subr.mxu0 0.0
    %1071 = vmatpush1.msra.mxu0 0.0
    %1072 = vmatprep.subr.mxu0 0.0
    %1073 = vmatpush1.msra.mxu0 0.0
    %1074 = vmatprep.subr.mxu0 0.0
    %1075 = vmatpush1.msra.mxu0 0.0
    %1076 = vmatprep.subr.mxu0 0.0
    %1077 = vmatpush1.msra.mxu0 0.0
    %1078 = vmatprep.subr.mxu0 0.0
    %1079 = vmatpush1.msra.mxu0 0.0
    %1080 = vmatprep.subr.mxu0 0.0
    %1081 = vmatpush1.msra.mxu0 0.0
    %1082 = vmatprep.subr.mxu0 0.0
    %1083 = vmatpush1.msra.mxu0 0.0
    %1084 = vmatprep.subr.mxu0 0.0
    %1085 = vmatpush1.msra.mxu0 0.0
    %1086 = vmatprep.subr.mxu0 0.0
    %1087 = vmatpush1.msra.mxu0 0.0
    %1088 = vmatprep.subr.mxu0 0.0
    %1089 = vmatpush1.msra.mxu0 0.0
    %1090 = vmatprep.subr.mxu0 0.0
    %1091 = vmatpush1.msra.mxu0 0.0
    %1092 = vmatprep.subr.mxu0 0.0
    %1093 = vmatpush1.msra.mxu0 0.0
    %1094 = vmatprep.subr.mxu0 0.0
    %1095 = vmatpush1.msra.mxu0 0.0
    %1096 = vmatprep.subr.mxu0 0.0
    %1097 = vmatpush1.msra.mxu0 0.0
    %1098 = vmatprep.subr.mxu0 0.0
    %1099 = vmatpush1.msra.mxu0 0.0
    %1100 = vmatprep.subr.mxu0 0.0
    %1101 = vmatpush1.msra.mxu0 0.0
    %1102 = vmatprep.subr.mxu0 0.0
    %1103 = vmatpush1.msra.mxu0 0.0
    %1104 = vmatprep.subr.mxu0 0.0
    %1105 = vmatpush1.msra.mxu0 0.0
    %1106 = vmatprep.subr.mxu0 0.0
    %1107 = vmatpush1.msra.mxu0 0.0
    %1108 = vmatprep.subr.mxu0 0.0
    %1109 = vmatpush1.msra.mxu0 0.0
    %1110 = vmatprep.subr.mxu0 0.0
    %1111 = vmatpush1.msra.mxu0 0.0
    %1112 = vmatprep.subr.mxu0 0.0
    %1113 = vmatpush1.msra.mxu0 0.0
    %1114 = vmatprep.subr.mxu0 0.0
    %1115 = vmatpush1.msra.mxu0 0.0
    %1116 = vmatprep.subr.mxu0 0.0
    %1117 = vmatpush1.msra.mxu0 0.0
    %1118 = vmatprep.subr.mxu0 0.0
    %1119 = vmatpush1.msra.mxu0 0.0
    %1120 = vmatprep.subr.mxu0 0.0
    %1121 = vmatpush1.msra.mxu0 0.0
    %1122 = vmatprep.mubr.f32.mxu0 0.0
    %v1123 = vand.u32 %v122, 4294901760
    %1124 = vmatmul.mubr.f32.gmra.mrb[0].mxu0 %v1123
    %v1125 = vpop.f32.mrb[0].mxu0
    %v1126 = vadd.f32 %v1030, %v1125
    %v1127 = vpop.f32.mrb[0].mxu0
    %v1128 = vadd.f32 %v1032, %v1127
    %1129 = vdwg.mxu0
    %v1130 = vand.u32 %v86, 4294901760
    %1131 = vmatprep.subr.mxu0 %v1130
    %v1132 = vand.u32 %v85, 4294901760
    %1133 = vmatpush1.msra.mxu0 %v1132
    %v1134 = vand.u32 %v90, 4294901760
    %1135 = vmatprep.subr.mxu0 %v1134
    %v1136 = vand.u32 %v89, 4294901760
    %1137 = vmatpush1.msra.mxu0 %v1136
    %v1138 = vand.u32 %v94, 4294901760
    %1139 = vmatprep.subr.mxu0 %v1138
    %v1140 = vand.u32 %v93, 4294901760
    %1141 = vmatpush1.msra.mxu0 %v1140
    %v1142 = vand.u32 %v98, 4294901760
    %1143 = vmatprep.subr.mxu0 %v1142
    %v1144 = vand.u32 %v97, 4294901760
    %1145 = vmatpush1.msra.mxu0 %v1144
    %1146 = vmatprep.subr.mxu0 0.0
    %1147 = vmatpush1.msra.mxu0 0.0
    %1148 = vmatprep.subr.mxu0 0.0
    %1149 = vmatpush1.msra.mxu0 0.0
    %1150 = vmatprep.subr.mxu0 0.0
    %1151 = vmatpush1.msra.mxu0 0.0
    %1152 = vmatprep.subr.mxu0 0.0
    %1153 = vmatpush1.msra.mxu0 0.0
    %1154 = vmatprep.subr.mxu0 0.0
    %1155 = vmatpush1.msra.mxu0 0.0
    %1156 = vmatprep.subr.mxu0 0.0
    %1157 = vmatpush1.msra.mxu0 0.0
    %1158 = vmatprep.subr.mxu0 0.0
    %1159 = vmatpush1.msra.mxu0 0.0
    %1160 = vmatprep.subr.mxu0 0.0
    %1161 = vmatpush1.msra.mxu0 0.0
    %1162 = vmatprep.subr.mxu0 0.0
    %1163 = vmatpush1.msra.mxu0 0.0
    %1164 = vmatprep.subr.mxu0 0.0
    %1165 = vmatpush1.msra.mxu0 0.0
    %1166 = vmatprep.subr.mxu0 0.0
    %1167 = vmatpush1.msra.mxu0 0.0
    %1168 = vmatprep.subr.mxu0 0.0
    %1169 = vmatpush1.msra.mxu0 0.0
    %1170 = vmatprep.subr.mxu0 0.0
    %1171 = vmatpush1.msra.mxu0 0.0
    %1172 = vmatprep.subr.mxu0 0.0
    %1173 = vmatpush1.msra.mxu0 0.0
    %1174 = vmatprep.subr.mxu0 0.0
    %1175 = vmatpush1.msra.mxu0 0.0
    %1176 = vmatprep.subr.mxu0 0.0
    %1177 = vmatpush1.msra.mxu0 0.0
    %1178 = vmatprep.subr.mxu0 0.0
    %1179 = vmatpush1.msra.mxu0 0.0
    %1180 = vmatprep.subr.mxu0 0.0
    %1181 = vmatpush1.msra.mxu0 0.0
    %1182 = vmatprep.subr.mxu0 0.0
    %1183 = vmatpush1.msra.mxu0 0.0
    %1184 = vmatprep.subr.mxu0 0.0
    %1185 = vmatpush1.msra.mxu0 0.0
    %1186 = vmatprep.subr.mxu0 0.0
    %1187 = vmatpush1.msra.mxu0 0.0
    %1188 = vmatprep.subr.mxu0 0.0
    %1189 = vmatpush1.msra.mxu0 0.0
    %1190 = vmatprep.subr.mxu0 0.0
    %1191 = vmatpush1.msra.mxu0 0.0
    %1192 = vmatprep.subr.mxu0 0.0
    %1193 = vmatpush1.msra.mxu0 0.0
    %1194 = vmatprep.subr.mxu0 0.0
    %1195 = vmatpush1.msra.mxu0 0.0
    %1196 = vmatprep.subr.mxu0 0.0
    %1197 = vmatpush1.msra.mxu0 0.0
    %1198 = vmatprep.subr.mxu0 0.0
    %1199 = vmatpush1.msra.mxu0 0.0
    %1200 = vmatprep.subr.mxu0 0.0
    %1201 = vmatpush1.msra.mxu0 0.0
    %1202 = vmatprep.mubr.f32.mxu0 0.0
    %v1203 = vand.u32 %v122, 4294901760
    %1204 = vmatmul.mubr.f32.gmra.mrb[0].mxu0 %v1203
    %v1205 = vpop.f32.mrb[0].mxu0
    %v1206 = vadd.f32 %v1126, %v1205
    %v1207 = vpop.f32.mrb[0].mxu0
    %v1208 = vadd.f32 %v1128, %v1207
    %1209 = vdwg.mxu0
    %v1210 = vrot.slane %v663, 4
    %v1211 = vadd.f32 %v663, %v1210
    %v1212 = vrot.slane %v1211, 2
    %v1213 = vadd.f32 %v1211, %v1212
    %v1214 = vrot.slane %v1213, 1
    %v1215 = vadd.f32 %v1213, %v1214
    %v1216 = vrot.slane %v665, 4
    %v1217 = vadd.f32 %v665, %v1216
    %v1218 = vrot.slane %v1217, 2
    %v1219 = vadd.f32 %v1217, %v1218
    %v1220 = vrot.slane %v1219, 1
    %v1221 = vadd.f32 %v1219, %v1220
    %v1222 = vrot.slane %v1206, 4
    %v1223 = vadd.f32 %v1206, %v1222
    %v1224 = vrot.slane %v1223, 2
    %v1225 = vadd.f32 %v1223, %v1224
    %v1226 = vrot.slane %v1225, 1
    %v1227 = vadd.f32 %v1225, %v1226
    %v1228 = vrot.slane %v1208, 4
    %v1229 = vadd.f32 %v1208, %v1228
    %v1230 = vrot.slane %v1229, 2
    %v1231 = vadd.f32 %v1229, %v1230
    %v1232 = vrot.slane %v1231, 1
    %v1233 = vadd.f32 %v1231, %v1232
    %v1234 = vmul.f32 %v1215, %v68
    %v1235 = vmul.f32 %v1221, %v68
    %v1236 = vmul.f32 %v1227, %v68
    %v1237 = vmul.f32 %v1233, %v68
    %v1238 = vsub.f32 %v663, %v1234
    %v1239 = vsub.f32 %v665, %v1235
    %v1240 = vsub.f32 %v1206, %v1236
    %v1241 = vsub.f32 %v1208, %v1237
    %v1242 = vmul.f32 %v1238, %v1238
    %v1243 = vmul.f32 %v1239, %v1239
    %v1244 = vmul.f32 %v1240, %v1240
    %v1245 = vmul.f32 %v1241, %v1241
    %v1246 = vrot.slane %v1242, 4
    %v1247 = vadd.f32 %v1242, %v1246
    %v1248 = vrot.slane %v1247, 2
    %v1249 = vadd.f32 %v1247, %v1248
    %v1250 = vrot.slane %v1249, 1
    %v1251 = vadd.f32 %v1249, %v1250
    %v1252 = vrot.slane %v1243, 4
    %v1253 = vadd.f32 %v1243, %v1252
    %v1254 = vrot.slane %v1253, 2
    %v1255 = vadd.f32 %v1253, %v1254
    %v1256 = vrot.slane %v1255, 1
    %v1257 = vadd.f32 %v1255, %v1256
    %v1258 = vrot.slane %v1244, 4
    %v1259 = vadd.f32 %v1244, %v1258
    %v1260 = vrot.slane %v1259, 2
    %v1261 = vadd.f32 %v1259, %v1260
    %v1262 = vrot.slane %v1261, 1
    %v1263 = vadd.f32 %v1261, %v1262
    %v1264 = vrot.slane %v1245, 4
    %v1265 = vadd.f32 %v1245, %v1264
    %v1266 = vrot.slane %v1265, 2
    %v1267 = vadd.f32 %v1265, %v1266
    %v1268 = vrot.slane %v1267, 1
    %v1269 = vadd.f32 %v1267, %v1268
    %v1270 = vmul.f32 %v1251, %v68
    %v1271 = vmul.f32 %v1257, %v68
    %v1272 = vmul.f32 %v1263, %v68
    %v1273 = vmul.f32 %v1269, %v68
    %s1274 = scalar_lea.vmem [#allocation6], 1
    %v1275 = vld [vmem:[%s1274] ss:$8 sm:$0xf]
    %v1276 = vadd.f32 %v1270, 1e-05
    %v1277 = vadd.f32 %v1271, 1e-05
    %v1278 = vadd.f32 %v1272, 1e-05
    %v1279 = vadd.f32 %v1273, 1e-05
    %v1280 = vrsqrt.pop %v1276
    %v1281 = vrsqrt.pop %v1277
    %v1282 = vrsqrt.pop %v1278
    %v1283 = vrsqrt.pop %v1279
    %v1288 = vcombine.low %v1280, %v1281
    %v1289 = vcombine.low %v1282, %v1283
    %v1291 = vunpack.c.l.s4 1966171168
    %v1292 = vunpack.c.0.s8 %v1291
    %v1293 = vlaneseq
    %v1294 = vshrl.u32 %v1293, 7
    %v1295 = vsub.s32 %v1292, %v1294
    %v1296 = vrot.slane %v1288, %v1295
    %v1298 = vunpack.c.l.s4 1966171168
    %v1299 = vunpack.c.0.s8 %v1298
    %v1300 = vlaneseq
    %v1301 = vshrl.u32 %v1300, 7
    %v1302 = vsub.s32 %v1299, %v1301
    %v1303 = vrot.slane %v1289, %v1302
    %v1304 = vcombine.low %v1296, %v1303
    %v1306 = vunpack.c.l.s4 1966171168
    %v1307 = vunpack.c.0.s8 %v1306
    %v1308 = vlaneseq
    %v1309 = vshrl.u32 %v1308, 7
    %v1310 = vsub.s32 %v1307, %v1309
    %v1311 = vrot.slane %v1304, %v1310
    %v1313 = vmul.f32 %v1275, %v1311
    %v1315 = vlaneseq
    %v1316 = vshrl.u32 %v1315, 7
    %v1317 = vsub.s32 0, %v1316
    %v1318 = vrot.slane %v1313, %v1317
    %v1319 = vlaneseq
    %v1320 = vshrl.u32 %v1319, 7
    %v1321 = vsub.s32 1, %v1320
    %v1322 = vrot.slane %v1313, %v1321
    %v1323 = vlaneseq
    %v1324 = vshrl.u32 %v1323, 7
    %v1325 = vsub.s32 2, %v1324
    %v1326 = vrot.slane %v1313, %v1325
    %v1327 = vlaneseq
    %v1328 = vshrl.u32 %v1327, 7
    %v1329 = vsub.s32 3, %v1328
    %v1330 = vrot.slane %v1313, %v1329
    %v1335 = vmul.f32 %v1238, %v1318
    %v1336 = vmul.f32 %v1239, %v1322
    %v1337 = vmul.f32 %v1240, %v1326
    %v1338 = vmul.f32 %v1241, %v1330
    %s1339 = scalar_lea.vmem [#allocation6], 2
    %v1340 = vld [vmem:[%s1339] ss:$8 sm:$0xf]
    %v1342 = vlaneseq
    %v1343 = vshrl.u32 %v1342, 7
    %v1344 = vsub.s32 0, %v1343
    %v1345 = vrot.slane %v1340, %v1344
    %v1346 = vlaneseq
    %v1347 = vshrl.u32 %v1346, 7
    %v1348 = vsub.s32 1, %v1347
    %v1349 = vrot.slane %v1340, %v1348
    %v1350 = vlaneseq
    %v1351 = vshrl.u32 %v1350, 7
    %v1352 = vsub.s32 2, %v1351
    %v1353 = vrot.slane %v1340, %v1352
    %v1354 = vlaneseq
    %v1355 = vshrl.u32 %v1354, 7
    %v1356 = vsub.s32 3, %v1355
    %v1357 = vrot.slane %v1340, %v1356
    %v1362 = vadd.f32 %v1335, %v1345
    %v1363 = vadd.f32 %v1336, %v1349
    %v1364 = vadd.f32 %v1337, %v1353
    %v1365 = vadd.f32 %v1338, %v1357
    %v1366 = vmax.f32 %v1362, 0.0
    %v1367 = vmax.f32 %v1363, 0.0
    %v1368 = vmax.f32 %v1364, 0.0
    %v1369 = vmax.f32 %v1365, 0.0
    %v1370 = vld [vmem:[#allocation4] sm:$0xff]
    %v1371 = vld [vmem:[#allocation4 + $0x8] sm:$0xff]
    %v1372 = vld [vmem:[#allocation4 + $0x10] sm:$0xff]
    %v1373 = vld [vmem:[#allocation4 + $0x18] sm:$0xff]
    %v1374 = vld [vmem:[#allocation4 + $0x20] sm:$0xff]
    %v1375 = vld [vmem:[#allocation4 + $0x28] sm:$0xff]
    %v1376 = vld [vmem:[#allocation4 + $0x30] sm:$0xff]
    %v1377 = vld [vmem:[#allocation4 + $0x38] sm:$0xff]
    %v1378 = vld [vmem:[#allocation4 + $0x40] sm:$0xff]
    %v1379 = vld [vmem:[#allocation4 + $0x48] sm:$0xff]
    %v1380 = vld [vmem:[#allocation4 + $0x50] sm:$0xff]
    %v1381 = vld [vmem:[#allocation4 + $0x58] sm:$0xff]
    %v1382 = vld [vmem:[#allocation4 + $0x60] sm:$0xff]
    %v1383 = vld [vmem:[#allocation4 + $0x68] sm:$0xff]
    %v1384 = vld [vmem:[#allocation4 + $0x70] sm:$0xff]
    %v1385 = vld [vmem:[#allocation4 + $0x78] sm:$0xff]
    %v1386 = vld [vmem:[#allocation4 + $0x80] sm:$0xff]
    %v1387 = vld [vmem:[#allocation4 + $0x88] sm:$0xff]
    %v1388 = vld [vmem:[#allocation4 + $0x90] sm:$0xff]
    %v1389 = vld [vmem:[#allocation4 + $0x98] sm:$0xff]
    %v1390 = vld [vmem:[#allocation4 + $0xa0] sm:$0xff]
    %v1391 = vld [vmem:[#allocation4 + $0xa8] sm:$0xff]
    %v1392 = vld [vmem:[#allocation4 + $0xb0] sm:$0xff]
    %v1393 = vld [vmem:[#allocation4 + $0xb8] sm:$0xff]
    %v1394 = vld [vmem:[#allocation4 + $0xc0] sm:$0xff]
    %v1395 = vld [vmem:[#allocation4 + $0xc8] sm:$0xff]
    %v1396 = vld [vmem:[#allocation4 + $0xd0] sm:$0xff]
    %v1397 = vld [vmem:[#allocation4 + $0xd8] sm:$0xff]
    %v1398 = vld [vmem:[#allocation4 + $0xe0] sm:$0xff]
    %v1399 = vld [vmem:[#allocation4 + $0xe8] sm:$0xff]
    %v1400 = vld [vmem:[#allocation4 + $0xf0] sm:$0xff]
    %v1401 = vld [vmem:[#allocation4 + $0xf8] sm:$0xff]
    %v1402 = vld [vmem:[#allocation4 + $0x100] sm:$0xff]
    %v1403 = vld [vmem:[#allocation4 + $0x108] sm:$0xff]
    %v1404 = vld [vmem:[#allocation4 + $0x110] sm:$0xff]
    %v1405 = vld [vmem:[#allocation4 + $0x118] sm:$0xff]
    %v1406 = vld [vmem:[#allocation4 + $0x120] sm:$0xff]
    %v1407 = vld [vmem:[#allocation4 + $0x128] sm:$0xff]
    %v1408 = vld [vmem:[#allocation4 + $0x130] sm:$0xff]
    %v1409 = vld [vmem:[#allocation4 + $0x138] sm:$0xff]
    %v1410 = vld [vmem:[#allocation4 + $0x140] sm:$0xff]
    %v1411 = vld [vmem:[#allocation4 + $0x148] sm:$0xff]
    %v1412 = vld [vmem:[#allocation4 + $0x150] sm:$0xff]
    %v1413 = vld [vmem:[#allocation4 + $0x158] sm:$0xff]
    %v1414 = vld [vmem:[#allocation4 + $0x160] sm:$0xff]
    %v1415 = vld [vmem:[#allocation4 + $0x168] sm:$0xff]
    %v1416 = vld [vmem:[#allocation4 + $0x170] sm:$0xff]
    %v1417 = vld [vmem:[#allocation4 + $0x178] sm:$0xff]
    %v1418 = vld [vmem:[#allocation4 + $0x180] sm:$0xff]
    %v1419 = vld [vmem:[#allocation4 + $0x188] sm:$0xff]
    %v1420 = vld [vmem:[#allocation4 + $0x190] sm:$0xff]
    %v1421 = vld [vmem:[#allocation4 + $0x198] sm:$0xff]
    %v1422 = vld [vmem:[#allocation4 + $0x1a0] sm:$0xff]
    %v1423 = vld [vmem:[#allocation4 + $0x1a8] sm:$0xff]
    %v1424 = vld [vmem:[#allocation4 + $0x1b0] sm:$0xff]
    %v1425 = vld [vmem:[#allocation4 + $0x1b8] sm:$0xff]
    %v1426 = vld [vmem:[#allocation4 + $0x1c0] sm:$0xff]
    %v1427 = vld [vmem:[#allocation4 + $0x1c8] sm:$0xff]
    %v1428 = vld [vmem:[#allocation4 + $0x1d0] sm:$0xff]
    %v1429 = vld [vmem:[#allocation4 + $0x1d8] sm:$0xff]
    %v1430 = vld [vmem:[#allocation4 + $0x1e0] sm:$0xff]
    %v1431 = vld [vmem:[#allocation4 + $0x1e8] sm:$0xff]
    %v1432 = vld [vmem:[#allocation4 + $0x1f0] sm:$0xff]
    %v1433 = vld [vmem:[#allocation4 + $0x1f8] sm:$0xff]
    %v1434 = vld [vmem:[#allocation4 + $0x200] sm:$0xff]
    %v1435 = vld [vmem:[#allocation4 + $0x208] sm:$0xff]
    %v1436 = vld [vmem:[#allocation4 + $0x210] sm:$0xff]
    %v1437 = vld [vmem:[#allocation4 + $0x218] sm:$0xff]
    %v1438 = vld [vmem:[#allocation4 + $0x220] sm:$0xff]
    %v1439 = vld [vmem:[#allocation4 + $0x228] sm:$0xff]
    %v1440 = vld [vmem:[#allocation4 + $0x230] sm:$0xff]
    %v1441 = vld [vmem:[#allocation4 + $0x238] sm:$0xff]
    %v1442 = vld [vmem:[#allocation4 + $0x240] sm:$0xff]
    %v1443 = vld [vmem:[#allocation4 + $0x248] sm:$0xff]
    %v1444 = vld [vmem:[#allocation4 + $0x250] sm:$0xff]
    %v1445 = vld [vmem:[#allocation4 + $0x258] sm:$0xff]
    %v1446 = vld [vmem:[#allocation4 + $0x260] sm:$0xff]
    %v1447 = vld [vmem:[#allocation4 + $0x268] sm:$0xff]
    %v1448 = vld [vmem:[#allocation4 + $0x270] sm:$0xff]
    %v1449 = vld [vmem:[#allocation4 + $0x278] sm:$0xff]
    %v1450 = vld [vmem:[#allocation4 + $0x280] sm:$0xff]
    %v1451 = vld [vmem:[#allocation4 + $0x288] sm:$0xff]
    %v1452 = vld [vmem:[#allocation4 + $0x290] sm:$0xff]
    %v1453 = vld [vmem:[#allocation4 + $0x298] sm:$0xff]
    %v1454 = vld [vmem:[#allocation4 + $0x2a0] sm:$0xff]
    %v1455 = vld [vmem:[#allocation4 + $0x2a8] sm:$0xff]
    %v1456 = vld [vmem:[#allocation4 + $0x2b0] sm:$0xff]
    %v1457 = vld [vmem:[#allocation4 + $0x2b8] sm:$0xff]
    %v1458 = vld [vmem:[#allocation4 + $0x2c0] sm:$0xff]
    %v1459 = vld [vmem:[#allocation4 + $0x2c8] sm:$0xff]
    %v1460 = vld [vmem:[#allocation4 + $0x2d0] sm:$0xff]
    %v1461 = vld [vmem:[#allocation4 + $0x2d8] sm:$0xff]
    %v1462 = vld [vmem:[#allocation4 + $0x2e0] sm:$0xff]
    %v1463 = vld [vmem:[#allocation4 + $0x2e8] sm:$0xff]
    %v1464 = vld [vmem:[#allocation4 + $0x2f0] sm:$0xff]
    %v1465 = vld [vmem:[#allocation4 + $0x2f8] sm:$0xff]
    %v1466 = vld [vmem:[#allocation4 + $0x300] sm:$0xff]
    %v1467 = vld [vmem:[#allocation4 + $0x308] sm:$0xff]
    %v1468 = vld [vmem:[#allocation4 + $0x310] sm:$0xff]
    %v1469 = vld [vmem:[#allocation4 + $0x318] sm:$0xff]
    %v1470 = vld [vmem:[#allocation4 + $0x320] sm:$0xff]
    %v1471 = vld [vmem:[#allocation4 + $0x328] sm:$0xff]
    %v1472 = vld [vmem:[#allocation4 + $0x330] sm:$0xff]
    %v1473 = vld [vmem:[#allocation4 + $0x338] sm:$0xff]
    %v1474 = vld [vmem:[#allocation4 + $0x340] sm:$0xff]
    %v1475 = vld [vmem:[#allocation4 + $0x348] sm:$0xff]
    %v1476 = vld [vmem:[#allocation4 + $0x350] sm:$0xff]
    %v1477 = vld [vmem:[#allocation4 + $0x358] sm:$0xff]
    %v1478 = vld [vmem:[#allocation4 + $0x360] sm:$0xff]
    %v1479 = vld [vmem:[#allocation4 + $0x368] sm:$0xff]
    %v1480 = vld [vmem:[#allocation4 + $0x370] sm:$0xff]
    %v1481 = vld [vmem:[#allocation4 + $0x378] sm:$0xff]
    %v1482 = vld [vmem:[#allocation4 + $0x380] sm:$0xff]
    %v1483 = vld [vmem:[#allocation4 + $0x388] sm:$0xff]
    %v1484 = vld [vmem:[#allocation4 + $0x390] sm:$0xff]
    %v1485 = vld [vmem:[#allocation4 + $0x398] sm:$0xff]
    %v1486 = vld [vmem:[#allocation4 + $0x3a0] sm:$0xff]
    %v1487 = vld [vmem:[#allocation4 + $0x3a8] sm:$0xff]
    %v1488 = vld [vmem:[#allocation4 + $0x3b0] sm:$0xff]
    %v1489 = vld [vmem:[#allocation4 + $0x3b8] sm:$0xff]
    %v1490 = vld [vmem:[#allocation4 + $0x3c0] sm:$0xff]
    %v1491 = vld [vmem:[#allocation4 + $0x3c8] sm:$0xff]
    %v1492 = vld [vmem:[#allocation4 + $0x3d0] sm:$0xff]
    %v1493 = vld [vmem:[#allocation4 + $0x3d8] sm:$0xff]
    %v1494 = vld [vmem:[#allocation4 + $0x3e0] sm:$0xff]
    %v1495 = vld [vmem:[#allocation4 + $0x3e8] sm:$0xff]
    %v1496 = vld [vmem:[#allocation4 + $0x3f0] sm:$0xff]
    %v1497 = vld [vmem:[#allocation4 + $0x3f8] sm:$0xff]
    %v1498 = vld [vmem:[#allocation4 + $0x400] sm:$0xff]
    %v1499 = vld [vmem:[#allocation4 + $0x408] sm:$0xff]
    %v1500 = vld [vmem:[#allocation4 + $0x410] sm:$0xff]
    %v1501 = vld [vmem:[#allocation4 + $0x418] sm:$0xff]
    %v1502 = vld [vmem:[#allocation4 + $0x420] sm:$0xff]
    %v1503 = vld [vmem:[#allocation4 + $0x428] sm:$0xff]
    %v1504 = vld [vmem:[#allocation4 + $0x430] sm:$0xff]
    %v1505 = vld [vmem:[#allocation4 + $0x438] sm:$0xff]
    %v1506 = vld [vmem:[#allocation4 + $0x440] sm:$0xff]
    %v1507 = vld [vmem:[#allocation4 + $0x448] sm:$0xff]
    %v1508 = vld [vmem:[#allocation4 + $0x450] sm:$0xff]
    %v1509 = vld [vmem:[#allocation4 + $0x458] sm:$0xff]
    %v1510 = vld [vmem:[#allocation4 + $0x460] sm:$0xff]
    %v1511 = vld [vmem:[#allocation4 + $0x468] sm:$0xff]
    %v1512 = vld [vmem:[#allocation4 + $0x470] sm:$0xff]
    %v1513 = vld [vmem:[#allocation4 + $0x478] sm:$0xff]
    %v1514 = vld [vmem:[#allocation4 + $0x480] sm:$0xff]
    %v1515 = vld [vmem:[#allocation4 + $0x488] sm:$0xff]
    %v1516 = vld [vmem:[#allocation4 + $0x490] sm:$0xff]
    %v1517 = vld [vmem:[#allocation4 + $0x498] sm:$0xff]
    %v1518 = vld [vmem:[#allocation4 + $0x4a0] sm:$0xff]
    %v1519 = vld [vmem:[#allocation4 + $0x4a8] sm:$0xff]
    %v1520 = vld [vmem:[#allocation4 + $0x4b0] sm:$0xff]
    %v1521 = vld [vmem:[#allocation4 + $0x4b8] sm:$0xff]
    %v1522 = vld [vmem:[#allocation4 + $0x4c0] sm:$0xff]
    %v1523 = vld [vmem:[#allocation4 + $0x4c8] sm:$0xff]
    %v1524 = vld [vmem:[#allocation4 + $0x4d0] sm:$0xff]
    %v1525 = vld [vmem:[#allocation4 + $0x4d8] sm:$0xff]
    %v1526 = vld [vmem:[#allocation4 + $0x4e0] sm:$0xff]
    %v1527 = vld [vmem:[#allocation4 + $0x4e8] sm:$0xff]
    %v1528 = vld [vmem:[#allocation4 + $0x4f0] sm:$0xff]
    %v1529 = vld [vmem:[#allocation4 + $0x4f8] sm:$0xff]
    %v1530 = vld [vmem:[#allocation4 + $0x500] sm:$0xff]
    %v1531 = vld [vmem:[#allocation4 + $0x508] sm:$0xff]
    %v1532 = vld [vmem:[#allocation4 + $0x510] sm:$0xff]
    %v1533 = vld [vmem:[#allocation4 + $0x518] sm:$0xff]
    %v1534 = vld [vmem:[#allocation4 + $0x520] sm:$0xff]
    %v1535 = vld [vmem:[#allocation4 + $0x528] sm:$0xff]
    %v1536 = vld [vmem:[#allocation4 + $0x530] sm:$0xff]
    %v1537 = vld [vmem:[#allocation4 + $0x538] sm:$0xff]
    %v1538 = vld [vmem:[#allocation4 + $0x540] sm:$0xff]
    %v1539 = vld [vmem:[#allocation4 + $0x548] sm:$0xff]
    %v1540 = vld [vmem:[#allocation4 + $0x550] sm:$0xff]
    %v1541 = vld [vmem:[#allocation4 + $0x558] sm:$0xff]
    %v1542 = vld [vmem:[#allocation4 + $0x560] sm:$0xff]
    %v1543 = vld [vmem:[#allocation4 + $0x568] sm:$0xff]
    %v1544 = vld [vmem:[#allocation4 + $0x570] sm:$0xff]
    %v1545 = vld [vmem:[#allocation4 + $0x578] sm:$0xff]
    %v1546 = vld [vmem:[#allocation4 + $0x580] sm:$0xff]
    %v1547 = vld [vmem:[#allocation4 + $0x588] sm:$0xff]
    %v1548 = vld [vmem:[#allocation4 + $0x590] sm:$0xff]
    %v1549 = vld [vmem:[#allocation4 + $0x598] sm:$0xff]
    %v1550 = vld [vmem:[#allocation4 + $0x5a0] sm:$0xff]
    %v1551 = vld [vmem:[#allocation4 + $0x5a8] sm:$0xff]
    %v1552 = vld [vmem:[#allocation4 + $0x5b0] sm:$0xff]
    %v1553 = vld [vmem:[#allocation4 + $0x5b8] sm:$0xff]
    %v1554 = vld [vmem:[#allocation4 + $0x5c0] sm:$0xff]
    %v1555 = vld [vmem:[#allocation4 + $0x5c8] sm:$0xff]
    %v1556 = vld [vmem:[#allocation4 + $0x5d0] sm:$0xff]
    %v1557 = vld [vmem:[#allocation4 + $0x5d8] sm:$0xff]
    %v1558 = vld [vmem:[#allocation4 + $0x5e0] sm:$0xff]
    %v1559 = vld [vmem:[#allocation4 + $0x5e8] sm:$0xff]
    %v1560 = vld [vmem:[#allocation4 + $0x5f0] sm:$0xff]
    %v1561 = vld [vmem:[#allocation4 + $0x5f8] sm:$0xff]
    %v1562 = vld [vmem:[%s1] sm:$0xff]
    %v1563 = vld [vmem:[#allocation4 + $0x600] sm:$0xf]
    %v1564 = vld [vmem:[#allocation4 + $0x608] sm:$0xf]
    %v1565 = vld [vmem:[#allocation4 + $0x610] sm:$0xf]
    %vm1566 = vcmask 31744
    %v1568 = vsel %vm1566, %v1562, 0
    %vm1570 = vcmask 1043456
    %v1572 = vsel %vm1570, %v1563, 0
    %v1575 = vsel %vm1570, %v1564, 0
    %v1578 = vsel %vm1570, %v1565, 0
    %v1580 = vand.u32 %v1575, 4294901760
    %1581 = vmatprep.subr.mxu0 %v1580
    %v1582 = vand.u32 %v1572, 4294901760
    %1583 = vmatpush1.msra.mxu0 %v1582
    %1584 = vmatprep.subr.mxu0 0.0
    %1585 = vmatpush1.msra.mxu0 0.0
    %1586 = vmatprep.subr.mxu0 0.0
    %1587 = vmatpush1.msra.mxu0 0.0
    %1588 = vmatprep.subr.mxu0 0.0
    %1589 = vmatpush1.msra.mxu0 0.0
    %1590 = vmatprep.subr.mxu0 0.0
    %1591 = vmatpush1.msra.mxu0 0.0
    %1592 = vmatprep.subr.mxu0 0.0
    %1593 = vmatpush1.msra.mxu0 0.0
    %1594 = vmatprep.subr.mxu0 0.0
    %1595 = vmatpush1.msra.mxu0 0.0
    %1596 = vmatprep.subr.mxu0 0.0
    %1597 = vmatpush1.msra.mxu0 0.0
    %1598 = vmatprep.subr.mxu0 0.0
    %1599 = vmatpush1.msra.mxu0 0.0
    %1600 = vmatprep.subr.mxu0 0.0
    %1601 = vmatpush1.msra.mxu0 0.0
    %1602 = vmatprep.subr.mxu0 0.0
    %1603 = vmatpush1.msra.mxu0 0.0
    %1604 = vmatprep.subr.mxu0 0.0
    %1605 = vmatpush1.msra.mxu0 0.0
    %1606 = vmatprep.subr.mxu0 0.0
    %1607 = vmatpush1.msra.mxu0 0.0
    %1608 = vmatprep.subr.mxu0 0.0
    %1609 = vmatpush1.msra.mxu0 0.0
    %1610 = vmatprep.subr.mxu0 0.0
    %1611 = vmatpush1.msra.mxu0 0.0
    %1612 = vmatprep.subr.mxu0 0.0
    %1613 = vmatpush1.msra.mxu0 0.0
    %1614 = vmatprep.subr.mxu0 0.0
    %1615 = vmatpush1.msra.mxu0 0.0
    %1616 = vmatprep.subr.mxu0 0.0
    %1617 = vmatpush1.msra.mxu0 0.0
    %1618 = vmatprep.subr.mxu0 0.0
    %1619 = vmatpush1.msra.mxu0 0.0
    %1620 = vmatprep.subr.mxu0 0.0
    %1621 = vmatpush1.msra.mxu0 0.0
    %1622 = vmatprep.subr.mxu0 0.0
    %1623 = vmatpush1.msra.mxu0 0.0
    %1624 = vmatprep.subr.mxu0 0.0
    %1625 = vmatpush1.msra.mxu0 0.0
    %1626 = vmatprep.subr.mxu0 0.0
    %1627 = vmatpush1.msra.mxu0 0.0
    %1628 = vmatprep.subr.mxu0 0.0
    %1629 = vmatpush1.msra.mxu0 0.0
    %1630 = vmatprep.subr.mxu0 0.0
    %1631 = vmatpush1.msra.mxu0 0.0
    %1632 = vmatprep.subr.mxu0 0.0
    %1633 = vmatpush1.msra.mxu0 0.0
    %1634 = vmatprep.subr.mxu0 0.0
    %1635 = vmatpush1.msra.mxu0 0.0
    %1636 = vmatprep.subr.mxu0 0.0
    %1637 = vmatpush1.msra.mxu0 0.0
    %1638 = vmatprep.subr.mxu0 0.0
    %1639 = vmatpush1.msra.mxu0 0.0
    %1640 = vmatprep.subr.mxu0 0.0
    %1641 = vmatpush1.msra.mxu0 0.0
    %1642 = vmatprep.subr.mxu0 0.0
    %1643 = vmatpush1.msra.mxu0 0.0
    %1644 = vmatprep.subr.mxu0 0.0
    %1645 = vmatpush1.msra.mxu0 0.0
    %1646 = vmatprep.mubr.f32.mxu0 0.0
    %v1647 = vand.u32 %v1568, 4294901760
    %v1648 = vsub.f32 %v1568, %v1647
    %v1649 = vand.u32 %v1648, 4294901760
    %v1650 = vsub.f32 %v1648, %v1649
    %v1651 = vand.u32 %v1650, 4294901760
    %1652 = vmatmul.mubr.f32.gmra.mrb[0].mxu0 %v1651
    %v1653 = vpop.f32.mrb[0].mxu0
    %v1654 = vadd.f32 0.0, %v1653
    %v1655 = vpop.f32.mrb[0].mxu0
    %v1656 = vadd.f32 0.0, %v1655
    %1657 = vdwg.mxu0
    %v1658 = vand.u32 %v1575, 4294901760
    %v1659 = vsub.f32 %v1575, %v1658
    %v1660 = vand.u32 %v1659, 4294901760
    %v1661 = vsub.f32 %v1659, %v1660
    %v1662 = vand.u32 %v1661, 4294901760
    %1663 = vmatprep.subr.mxu0 %v1662
    %v1664 = vand.u32 %v1572, 4294901760
    %v1665 = vsub.f32 %v1572, %v1664
    %v1666 = vand.u32 %v1665, 4294901760
    %v1667 = vsub.f32 %v1665, %v1666
    %v1668 = vand.u32 %v1667, 4294901760
    %1669 = vmatpush1.msra.mxu0 %v1668
    %1670 = vmatprep.subr.mxu0 0.0
    %1671 = vmatpush1.msra.mxu0 0.0
    %1672 = vmatprep.subr.mxu0 0.0
    %1673 = vmatpush1.msra.mxu0 0.0
    %1674 = vmatprep.subr.mxu0 0.0
    %1675 = vmatpush1.msra.mxu0 0.0
    %1676 = vmatprep.subr.mxu0 0.0
    %1677 = vmatpush1.msra.mxu0 0.0
    %1678 = vmatprep.subr.mxu0 0.0
    %1679 = vmatpush1.msra.mxu0 0.0
    %1680 = vmatprep.subr.mxu0 0.0
    %1681 = vmatpush1.msra.mxu0 0.0
    %1682 = vmatprep.subr.mxu0 0.0
    %1683 = vmatpush1.msra.mxu0 0.0
    %1684 = vmatprep.subr.mxu0 0.0
    %1685 = vmatpush1.msra.mxu0 0.0
    %1686 = vmatprep.subr.mxu0 0.0
    %1687 = vmatpush1.msra.mxu0 0.0
    %1688 = vmatprep.subr.mxu0 0.0
    %1689 = vmatpush1.msra.mxu0 0.0
    %1690 = vmatprep.subr.mxu0 0.0
    %1691 = vmatpush1.msra.mxu0 0.0
    %1692 = vmatprep.subr.mxu0 0.0
    %1693 = vmatpush1.msra.mxu0 0.0
    %1694 = vmatprep.subr.mxu0 0.0
    %1695 = vmatpush1.msra.mxu0 0.0
    %1696 = vmatprep.subr.mxu0 0.0
    %1697 = vmatpush1.msra.mxu0 0.0
    %1698 = vmatprep.subr.mxu0 0.0
    %1699 = vmatpush1.msra.mxu0 0.0
    %1700 = vmatprep.subr.mxu0 0.0
    %1701 = vmatpush1.msra.mxu0 0.0
    %1702 = vmatprep.subr.mxu0 0.0
    %1703 = vmatpush1.msra.mxu0 0.0
    %1704 = vmatprep.subr.mxu0 0.0
    %1705 = vmatpush1.msra.mxu0 0.0
    %1706 = vmatprep.subr.mxu0 0.0
    %1707 = vmatpush1.msra.mxu0 0.0
    %1708 = vmatprep.subr.mxu0 0.0
    %1709 = vmatpush1.msra.mxu0 0.0
    %1710 = vmatprep.subr.mxu0 0.0
    %1711 = vmatpush1.msra.mxu0 0.0
    %1712 = vmatprep.subr.mxu0 0.0
    %1713 = vmatpush1.msra.mxu0 0.0
    %1714 = vmatprep.subr.mxu0 0.0
    %1715 = vmatpush1.msra.mxu0 0.0
    %1716 = vmatprep.subr.mxu0 0.0
    %1717 = vmatpush1.msra.mxu0 0.0
    %1718 = vmatprep.subr.mxu0 0.0
    %1719 = vmatpush1.msra.mxu0 0.0
    %1720 = vmatprep.subr.mxu0 0.0
    %1721 = vmatpush1.msra.mxu0 0.0
    %1722 = vmatprep.subr.mxu0 0.0
    %1723 = vmatpush1.msra.mxu0 0.0
    %1724 = vmatprep.subr.mxu0 0.0
    %1725 = vmatpush1.msra.mxu0 0.0
    %1726 = vmatprep.subr.mxu0 0.0
    %1727 = vmatpush1.msra.mxu0 0.0
    %1728 = vmatprep.subr.mxu0 0.0
    %1729 = vmatpush1.msra.mxu0 0.0
    %1730 = vmatprep.subr.mxu0 0.0
    %1731 = vmatpush1.msra.mxu0 0.0
    %1732 = vmatprep.mubr.f32.mxu0 0.0
    %v1733 = vand.u32 %v1568, 4294901760
    %1734 = vmatmul.mubr.f32.gmra.mrb[0].mxu0 %v1733
    %v1735 = vpop.f32.mrb[0].mxu0
    %v1736 = vadd.f32 %v1654, %v1735
    %v1737 = vpop.f32.mrb[0].mxu0
    %v1738 = vadd.f32 %v1656, %v1737
    %1739 = vdwg.mxu0
    %v1740 = vand.u32 %v1575, 4294901760
    %v1741 = vsub.f32 %v1575, %v1740
    %1742 = vmatprep.subr.mxu0 %v1741
    %v1743 = vand.u32 %v1572, 4294901760
    %v1744 = vsub.f32 %v1572, %v1743
    %1745 = vmatpush1.msra.mxu0 %v1744
    %1746 = vmatprep.subr.mxu0 0.0
    %1747 = vmatpush1.msra.mxu0 0.0
    %1748 = vmatprep.subr.mxu0 0.0
    %1749 = vmatpush1.msra.mxu0 0.0
    %1750 = vmatprep.subr.mxu0 0.0
    %1751 = vmatpush1.msra.mxu0 0.0
    %1752 = vmatprep.subr.mxu0 0.0
    %1753 = vmatpush1.msra.mxu0 0.0
    %1754 = vmatprep.subr.mxu0 0.0
    %1755 = vmatpush1.msra.mxu0 0.0
    %1756 = vmatprep.subr.mxu0 0.0
    %1757 = vmatpush1.msra.mxu0 0.0
    %1758 = vmatprep.subr.mxu0 0.0
    %1759 = vmatpush1.msra.mxu0 0.0
    %1760 = vmatprep.subr.mxu0 0.0
    %1761 = vmatpush1.msra.mxu0 0.0
    %1762 = vmatprep.subr.mxu0 0.0
    %1763 = vmatpush1.msra.mxu0 0.0
    %1764 = vmatprep.subr.mxu0 0.0
    %1765 = vmatpush1.msra.mxu0 0.0
    %1766 = vmatprep.subr.mxu0 0.0
    %1767 = vmatpush1.msra.mxu0 0.0
    %1768 = vmatprep.subr.mxu0 0.0
    %1769 = vmatpush1.msra.mxu0 0.0
    %1770 = vmatprep.subr.mxu0 0.0
    %1771 = vmatpush1.msra.mxu0 0.0
    %1772 = vmatprep.subr.mxu0 0.0
    %1773 = vmatpush1.msra.mxu0 0.0
    %1774 = vmatprep.subr.mxu0 0.0
    %1775 = vmatpush1.msra.mxu0 0.0
    %1776 = vmatprep.subr.mxu0 0.0
    %1777 = vmatpush1.msra.mxu0 0.0
    %1778 = vmatprep.subr.mxu0 0.0
    %1779 = vmatpush1.msra.mxu0 0.0
    %1780 = vmatprep.subr.mxu0 0.0
    %1781 = vmatpush1.msra.mxu0 0.0
    %1782 = vmatprep.subr.mxu0 0.0
    %1783 = vmatpush1.msra.mxu0 0.0
    %1784 = vmatprep.subr.mxu0 0.0
    %1785 = vmatpush1.msra.mxu0 0.0
    %1786 = vmatprep.subr.mxu0 0.0
    %1787 = vmatpush1.msra.mxu0 0.0
    %1788 = vmatprep.subr.mxu0 0.0
    %1789 = vmatpush1.msra.mxu0 0.0
    %1790 = vmatprep.subr.mxu0 0.0
    %1791 = vmatpush1.msra.mxu0 0.0
    %1792 = vmatprep.subr.mxu0 0.0
    %1793 = vmatpush1.msra.mxu0 0.0
    %1794 = vmatprep.subr.mxu0 0.0
    %1795 = vmatpush1.msra.mxu0 0.0
    %1796 = vmatprep.subr.mxu0 0.0
    %1797 = vmatpush1.msra.mxu0 0.0
    %1798 = vmatprep.subr.mxu0 0.0
    %1799 = vmatpush1.msra.mxu0 0.0
    %1800 = vmatprep.subr.mxu0 0.0
    %1801 = vmatpush1.msra.mxu0 0.0
    %1802 = vmatprep.subr.mxu0 0.0
    %1803 = vmatpush1.msra.mxu0 0.0
    %1804 = vmatprep.subr.mxu0 0.0
    %1805 = vmatpush1.msra.mxu0 0.0
    %1806 = vmatprep.subr.mxu0 0.0
    %1807 = vmatpush1.msra.mxu0 0.0
    %1808 = vmatprep.mubr.f32.mxu0 0.0
    %v1809 = vand.u32 %v1568, 4294901760
    %v1810 = vsub.f32 %v1568, %v1809
    %1811 = vmatmul.mubr.f32.gmra.mrb[0].mxu0 %v1810
    %v1812 = vpop.f32.mrb[0].mxu0
    %v1813 = vadd.f32 %v1736, %v1812
    %v1814 = vpop.f32.mrb[0].mxu0
    %v1815 = vadd.f32 %v1738, %v1814
    %1816 = vdwg.mxu0
    %v1817 = vand.u32 %v1575, 4294901760
    %1818 = vmatprep.subr.mxu0 %v1817
    %v1819 = vand.u32 %v1572, 4294901760
    %1820 = vmatpush1.msra.mxu0 %v1819
    %1821 = vmatprep.subr.mxu0 0.0
    %1822 = vmatpush1.msra.mxu0 0.0
    %1823 = vmatprep.subr.mxu0 0.0
    %1824 = vmatpush1.msra.mxu0 0.0
    %1825 = vmatprep.subr.mxu0 0.0
    %1826 = vmatpush1.msra.mxu0 0.0
    %1827 = vmatprep.subr.mxu0 0.0
    %1828 = vmatpush1.msra.mxu0 0.0
    %1829 = vmatprep.subr.mxu0 0.0
    %1830 = vmatpush1.msra.mxu0 0.0
    %1831 = vmatprep.subr.mxu0 0.0
    %1832 = vmatpush1.msra.mxu0 0.0
    %1833 = vmatprep.subr.mxu0 0.0
    %1834 = vmatpush1.msra.mxu0 0.0
    %1835 = vmatprep.subr.mxu0 0.0
    %1836 = vmatpush1.msra.mxu0 0.0
    %1837 = vmatprep.subr.mxu0 0.0
    %1838 = vmatpush1.msra.mxu0 0.0
    %1839 = vmatprep.subr.mxu0 0.0
    %1840 = vmatpush1.msra.mxu0 0.0
    %1841 = vmatprep.subr.mxu0 0.0
    %1842 = vmatpush1.msra.mxu0 0.0
    %1843 = vmatprep.subr.mxu0 0.0
    %1844 = vmatpush1.msra.mxu0 0.0
    %1845 = vmatprep.subr.mxu0 0.0
    %1846 = vmatpush1.msra.mxu0 0.0
    %1847 = vmatprep.subr.mxu0 0.0
    %1848 = vmatpush1.msra.mxu0 0.0
    %1849 = vmatprep.subr.mxu0 0.0
    %1850 = vmatpush1.msra.mxu0 0.0
    %1851 = vmatprep.subr.mxu0 0.0
    %1852 = vmatpush1.msra.mxu0 0.0
    %1853 = vmatprep.subr.mxu0 0.0
    %1854 = vmatpush1.msra.mxu0 0.0
    %1855 = vmatprep.subr.mxu0 0.0
    %1856 = vmatpush1.msra.mxu0 0.0
    %1857 = vmatprep.subr.mxu0 0.0
    %1858 = vmatpush1.msra.mxu0 0.0
    %1859 = vmatprep.subr.mxu0 0.0
    %1860 = vmatpush1.msra.mxu0 0.0
    %1861 = vmatprep.subr.mxu0 0.0
    %1862 = vmatpush1.msra.mxu0 0.0
    %1863 = vmatprep.subr.mxu0 0.0
    %1864 = vmatpush1.msra.mxu0 0.0
    %1865 = vmatprep.subr.mxu0 0.0
    %1866 = vmatpush1.msra.mxu0 0.0
    %1867 = vmatprep.subr.mxu0 0.0
    %1868 = vmatpush1.msra.mxu0 0.0
    %1869 = vmatprep.subr.mxu0 0.0
    %1870 = vmatpush1.msra.mxu0 0.0
    %1871 = vmatprep.subr.mxu0 0.0
    %1872 = vmatpush1.msra.mxu0 0.0
    %1873 = vmatprep.subr.mxu0 0.0
    %1874 = vmatpush1.msra.mxu0 0.0
    %1875 = vmatprep.subr.mxu0 0.0
    %1876 = vmatpush1.msra.mxu0 0.0
    %1877 = vmatprep.subr.mxu0 0.0
    %1878 = vmatpush1.msra.mxu0 0.0
    %1879 = vmatprep.subr.mxu0 0.0
    %1880 = vmatpush1.msra.mxu0 0.0
    %1881 = vmatprep.subr.mxu0 0.0
    %1882 = vmatpush1.msra.mxu0 0.0
    %1883 = vmatprep.mubr.f32.mxu0 0.0
    %v1884 = vand.u32 %v1568, 4294901760
    %v1885 = vsub.f32 %v1568, %v1884
    %v1886 = vand.u32 %v1885, 4294901760
    %1887 = vmatmul.mubr.f32.gmra.mrb[0].mxu0 %v1886
    %v1888 = vpop.f32.mrb[0].mxu0
    %v1889 = vadd.f32 %v1813, %v1888
    %v1890 = vpop.f32.mrb[0].mxu0
    %v1891 = vadd.f32 %v1815, %v1890
    %1892 = vdwg.mxu0
    %v1893 = vand.u32 %v1575, 4294901760
    %v1894 = vsub.f32 %v1575, %v1893
    %v1895 = vand.u32 %v1894, 4294901760
    %1896 = vmatprep.subr.mxu0 %v1895
    %v1897 = vand.u32 %v1572, 4294901760
    %v1898 = vsub.f32 %v1572, %v1897
    %v1899 = vand.u32 %v1898, 4294901760
    %1900 = vmatpush1.msra.mxu0 %v1899
    %1901 = vmatprep.subr.mxu0 0.0
    %1902 = vmatpush1.msra.mxu0 0.0
    %1903 = vmatprep.subr.mxu0 0.0
    %1904 = vmatpush1.msra.mxu0 0.0
    %1905 = vmatprep.subr.mxu0 0.0
    %1906 = vmatpush1.msra.mxu0 0.0
    %1907 = vmatprep.subr.mxu0 0.0
    %1908 = vmatpush1.msra.mxu0 0.0
    %1909 = vmatprep.subr.mxu0 0.0
    %1910 = vmatpush1.msra.mxu0 0.0
    %1911 = vmatprep.subr.mxu0 0.0
    %1912 = vmatpush1.msra.mxu0 0.0
    %1913 = vmatprep.subr.mxu0 0.0
    %1914 = vmatpush1.msra.mxu0 0.0
    %1915 = vmatprep.subr.mxu0 0.0
    %1916 = vmatpush1.msra.mxu0 0.0
    %1917 = vmatprep.subr.mxu0 0.0
    %1918 = vmatpush1.msra.mxu0 0.0
    %1919 = vmatprep.subr.mxu0 0.0
    %1920 = vmatpush1.msra.mxu0 0.0
    %1921 = vmatprep.subr.mxu0 0.0
    %1922 = vmatpush1.msra.mxu0 0.0
    %1923 = vmatprep.subr.mxu0 0.0
    %1924 = vmatpush1.msra.mxu0 0.0
    %1925 = vmatprep.subr.mxu0 0.0
    %1926 = vmatpush1.msra.mxu0 0.0
    %1927 = vmatprep.subr.mxu0 0.0
    %1928 = vmatpush1.msra.mxu0 0.0
    %1929 = vmatprep.subr.mxu0 0.0
    %1930 = vmatpush1.msra.mxu0 0.0
    %1931 = vmatprep.subr.mxu0 0.0
    %1932 = vmatpush1.msra.mxu0 0.0
    %1933 = vmatprep.subr.mxu0 0.0
    %1934 = vmatpush1.msra.mxu0 0.0
    %1935 = vmatprep.subr.mxu0 0.0
    %1936 = vmatpush1.msra.mxu0 0.0
    %1937 = vmatprep.subr.mxu0 0.0
    %1938 = vmatpush1.msra.mxu0 0.0
    %1939 = vmatprep.subr.mxu0 0.0
    %1940 = vmatpush1.msra.mxu0 0.0
    %1941 = vmatprep.subr.mxu0 0.0
    %1942 = vmatpush1.msra.mxu0 0.0
    %1943 = vmatprep.subr.mxu0 0.0
    %1944 = vmatpush1.msra.mxu0 0.0
    %1945 = vmatprep.subr.mxu0 0.0
    %1946 = vmatpush1.msra.mxu0 0.0
    %1947 = vmatprep.subr.mxu0 0.0
    %1948 = vmatpush1.msra.mxu0 0.0
    %1949 = vmatprep.subr.mxu0 0.0
    %1950 = vmatpush1.msra.mxu0 0.0
    %1951 = vmatprep.subr.mxu0 0.0
    %1952 = vmatpush1.msra.mxu0 0.0
    %1953 = vmatprep.subr.mxu0 0.0
    %1954 = vmatpush1.msra.mxu0 0.0
    %1955 = vmatprep.subr.mxu0 0.0
    %1956 = vmatpush1.msra.mxu0 0.0
    %1957 = vmatprep.subr.mxu0 0.0
    %1958 = vmatpush1.msra.mxu0 0.0
    %1959 = vmatprep.subr.mxu0 0.0
    %1960 = vmatpush1.msra.mxu0 0.0
    %1961 = vmatprep.subr.mxu0 0.0
    %1962 = vmatpush1.msra.mxu0 0.0
    %1963 = vmatprep.mubr.f32.mxu0 0.0
    %v1964 = vand.u32 %v1568, 4294901760
    %1965 = vmatmul.mubr.f32.gmra.mrb[0].mxu0 %v1964
    %v1966 = vpop.f32.mrb[0].mxu0
    %v1967 = vadd.f32 %v1889, %v1966
    %v1968 = vpop.f32.mrb[0].mxu0
    %v1969 = vadd.f32 %v1891, %v1968
    %1970 = vdwg.mxu0
    %v1971 = vand.u32 %v1575, 4294901760
    %1972 = vmatprep.subr.mxu0 %v1971
    %v1973 = vand.u32 %v1572, 4294901760
    %1974 = vmatpush1.msra.mxu0 %v1973
    %1975 = vmatprep.subr.mxu0 0.0
    %1976 = vmatpush1.msra.mxu0 0.0
    %1977 = vmatprep.subr.mxu0 0.0
    %1978 = vmatpush1.msra.mxu0 0.0
    %1979 = vmatprep.subr.mxu0 0.0
    %1980 = vmatpush1.msra.mxu0 0.0
    %1981 = vmatprep.subr.mxu0 0.0
    %1982 = vmatpush1.msra.mxu0 0.0
    %1983 = vmatprep.subr.mxu0 0.0
    %1984 = vmatpush1.msra.mxu0 0.0
    %1985 = vmatprep.subr.mxu0 0.0
    %1986 = vmatpush1.msra.mxu0 0.0
    %1987 = vmatprep.subr.mxu0 0.0
    %1988 = vmatpush1.msra.mxu0 0.0
    %1989 = vmatprep.subr.mxu0 0.0
    %1990 = vmatpush1.msra.mxu0 0.0
    %1991 = vmatprep.subr.mxu0 0.0
    %1992 = vmatpush1.msra.mxu0 0.0
    %1993 = vmatprep.subr.mxu0 0.0
    %1994 = vmatpush1.msra.mxu0 0.0
    %1995 = vmatprep.subr.mxu0 0.0
    %1996 = vmatpush1.msra.mxu0 0.0
    %1997 = vmatprep.subr.mxu0 0.0
    %1998 = vmatpush1.msra.mxu0 0.0
    %1999 = vmatprep.subr.mxu0 0.0
    %2000 = vmatpush1.msra.mxu0 0.0
    %2001 = vmatprep.subr.mxu0 0.0
    %2002 = vmatpush1.msra.mxu0 0.0
    %2003 = vmatprep.subr.mxu0 0.0
    %2004 = vmatpush1.msra.mxu0 0.0
    %2005 = vmatprep.subr.mxu0 0.0
    %2006 = vmatpush1.msra.mxu0 0.0
    %2007 = vmatprep.subr.mxu0 0.0
    %2008 = vmatpush1.msra.mxu0 0.0
    %2009 = vmatprep.subr.mxu0 0.0
    %2010 = vmatpush1.msra.mxu0 0.0
    %2011 = vmatprep.subr.mxu0 0.0
    %2012 = vmatpush1.msra.mxu0 0.0
    %2013 = vmatprep.subr.mxu0 0.0
    %2014 = vmatpush1.msra.mxu0 0.0
    %2015 = vmatprep.subr.mxu0 0.0
    %2016 = vmatpush1.msra.mxu0 0.0
    %2017 = vmatprep.subr.mxu0 0.0
    %2018 = vmatpush1.msra.mxu0 0.0
    %2019 = vmatprep.subr.mxu0 0.0
    %2020 = vmatpush1.msra.mxu0 0.0
    %2021 = vmatprep.subr.mxu0 0.0
    %2022 = vmatpush1.msra.mxu0 0.0
    %2023 = vmatprep.subr.mxu0 0.0
    %2024 = vmatpush1.msra.mxu0 0.0
    %2025 = vmatprep.subr.mxu0 0.0
    %2026 = vmatpush1.msra.mxu0 0.0
    %2027 = vmatprep.subr.mxu0 0.0
    %2028 = vmatpush1.msra.mxu0 0.0
    %2029 = vmatprep.subr.mxu0 0.0
    %2030 = vmatpush1.msra.mxu0 0.0
    %2031 = vmatprep.subr.mxu0 0.0
    %2032 = vmatpush1.msra.mxu0 0.0
    %2033 = vmatprep.subr.mxu0 0.0
    %2034 = vmatpush1.msra.mxu0 0.0
    %2035 = vmatprep.subr.mxu0 0.0
    %2036 = vmatpush1.msra.mxu0 0.0
    %2037 = vmatprep.mubr.f32.mxu0 0.0
    %v2038 = vand.u32 %v1568, 4294901760
    %2039 = vmatmul.mubr.f32.gmra.mrb[0].mxu0 %v2038
    %v2040 = vpop.f32.mrb[0].mxu0
    %v2041 = vadd.f32 %v1967, %v2040
    %v2042 = vpop.f32.mrb[0].mxu0
    %v2043 = vadd.f32 %v1969, %v2042
    %2044 = vdwg.mxu0
    %2045 = vmatprep.subr.mxu0 0.0
    %v2046 = vand.u32 %v1578, 4294901760
    %2047 = vmatpush1.msra.mxu0 %v2046
    %2048 = vmatprep.subr.mxu0 0.0
    %2049 = vmatpush1.msra.mxu0 0.0
    %2050 = vmatprep.subr.mxu0 0.0
    %2051 = vmatpush1.msra.mxu0 0.0
    %2052 = vmatprep.subr.mxu0 0.0
    %2053 = vmatpush1.msra.mxu0 0.0
    %2054 = vmatprep.subr.mxu0 0.0
    %2055 = vmatpush1.msra.mxu0 0.0
    %2056 = vmatprep.subr.mxu0 0.0
    %2057 = vmatpush1.msra.mxu0 0.0
    %2058 = vmatprep.subr.mxu0 0.0
    %2059 = vmatpush1.msra.mxu0 0.0
    %2060 = vmatprep.subr.mxu0 0.0
    %2061 = vmatpush1.msra.mxu0 0.0
    %2062 = vmatprep.subr.mxu0 0.0
    %2063 = vmatpush1.msra.mxu0 0.0
    %2064 = vmatprep.subr.mxu0 0.0
    %2065 = vmatpush1.msra.mxu0 0.0
    %2066 = vmatprep.subr.mxu0 0.0
    %2067 = vmatpush1.msra.mxu0 0.0
    %2068 = vmatprep.subr.mxu0 0.0
    %2069 = vmatpush1.msra.mxu0 0.0
    %2070 = vmatprep.subr.mxu0 0.0
    %2071 = vmatpush1.msra.mxu0 0.0
    %2072 = vmatprep.subr.mxu0 0.0
    %2073 = vmatpush1.msra.mxu0 0.0
    %2074 = vmatprep.subr.mxu0 0.0
    %2075 = vmatpush1.msra.mxu0 0.0
    %2076 = vmatprep.subr.mxu0 0.0
    %2077 = vmatpush1.msra.mxu0 0.0
    %2078 = vmatprep.subr.mxu0 0.0
    %2079 = vmatpush1.msra.mxu0 0.0
    %2080 = vmatprep.subr.mxu0 0.0
    %2081 = vmatpush1.msra.mxu0 0.0
    %2082 = vmatprep.subr.mxu0 0.0
    %2083 = vmatpush1.msra.mxu0 0.0
    %2084 = vmatprep.subr.mxu0 0.0
    %2085 = vmatpush1.msra.mxu0 0.0
    %2086 = vmatprep.subr.mxu0 0.0
    %2087 = vmatpush1.msra.mxu0 0.0
    %2088 = vmatprep.subr.mxu0 0.0
    %2089 = vmatpush1.msra.mxu0 0.0
    %2090 = vmatprep.subr.mxu0 0.0
    %2091 = vmatpush1.msra.mxu0 0.0
    %2092 = vmatprep.subr.mxu0 0.0
    %2093 = vmatpush1.msra.mxu0 0.0
    %2094 = vmatprep.subr.mxu0 0.0
    %2095 = vmatpush1.msra.mxu0 0.0
    %2096 = vmatprep.subr.mxu0 0.0
    %2097 = vmatpush1.msra.mxu0 0.0
    %2098 = vmatprep.subr.mxu0 0.0
    %2099 = vmatpush1.msra.mxu0 0.0
    %2100 = vmatprep.subr.mxu0 0.0
    %2101 = vmatpush1.msra.mxu0 0.0
    %2102 = vmatprep.subr.mxu0 0.0
    %2103 = vmatpush1.msra.mxu0 0.0
    %2104 = vmatprep.subr.mxu0 0.0
    %2105 = vmatpush1.msra.mxu0 0.0
    %2106 = vmatprep.subr.mxu0 0.0
    %2107 = vmatpush1.msra.mxu0 0.0
    %2108 = vmatprep.subr.mxu0 0.0
    %2109 = vmatpush1.msra.mxu0 0.0
    %2110 = vmatprep.mubr.f32.mxu0 0.0
    %v2111 = vand.u32 %v1568, 4294901760
    %v2112 = vsub.f32 %v1568, %v2111
    %v2113 = vand.u32 %v2112, 4294901760
    %v2114 = vsub.f32 %v2112, %v2113
    %v2115 = vand.u32 %v2114, 4294901760
    %2116 = vmatmul.mubr.f32.gmra.mrb[0].mxu0 %v2115
    %v2117 = vpop.f32.mrb[0].mxu0
    %v2118 = vadd.f32 0.0, %v2117
    %v2119 = vpop.f32.mrb[0].mxu0
    %2120 = vdwg.mxu0
    %2121 = vmatprep.subr.mxu0 0.0
    %v2122 = vand.u32 %v1578, 4294901760
    %v2123 = vsub.f32 %v1578, %v2122
    %v2124 = vand.u32 %v2123, 4294901760
    %v2125 = vsub.f32 %v2123, %v2124
    %v2126 = vand.u32 %v2125, 4294901760
    %2127 = vmatpush1.msra.mxu0 %v2126
    %2128 = vmatprep.subr.mxu0 0.0
    %2129 = vmatpush1.msra.mxu0 0.0
    %2130 = vmatprep.subr.mxu0 0.0
    %2131 = vmatpush1.msra.mxu0 0.0
    %2132 = vmatprep.subr.mxu0 0.0
    %2133 = vmatpush1.msra.mxu0 0.0
    %2134 = vmatprep.subr.mxu0 0.0
    %2135 = vmatpush1.msra.mxu0 0.0
    %2136 = vmatprep.subr.mxu0 0.0
    %2137 = vmatpush1.msra.mxu0 0.0
    %2138 = vmatprep.subr.mxu0 0.0
    %2139 = vmatpush1.msra.mxu0 0.0
    %2140 = vmatprep.subr.mxu0 0.0
    %2141 = vmatpush1.msra.mxu0 0.0
    %2142 = vmatprep.subr.mxu0 0.0
    %2143 = vmatpush1.msra.mxu0 0.0
    %2144 = vmatprep.subr.mxu0 0.0
    %2145 = vmatpush1.msra.mxu0 0.0
    %2146 = vmatprep.subr.mxu0 0.0
    %2147 = vmatpush1.msra.mxu0 0.0
    %2148 = vmatprep.subr.mxu0 0.0
    %2149 = vmatpush1.msra.mxu0 0.0
    %2150 = vmatprep.subr.mxu0 0.0
    %2151 = vmatpush1.msra.mxu0 0.0
    %2152 = vmatprep.subr.mxu0 0.0
    %2153 = vmatpush1.msra.mxu0 0.0
    %2154 = vmatprep.subr.mxu0 0.0
    %2155 = vmatpush1.msra.mxu0 0.0
    %2156 = vmatprep.subr.mxu0 0.0
    %2157 = vmatpush1.msra.mxu0 0.0
    %2158 = vmatprep.subr.mxu0 0.0
    %2159 = vmatpush1.msra.mxu0 0.0
    %2160 = vmatprep.subr.mxu0 0.0
    %2161 = vmatpush1.msra.mxu0 0.0
    %2162 = vmatprep.subr.mxu0 0.0
    %2163 = vmatpush1.msra.mxu0 0.0
    %2164 = vmatprep.subr.mxu0 0.0
    %2165 = vmatpush1.msra.mxu0 0.0
    %2166 = vmatprep.subr.mxu0 0.0
    %2167 = vmatpush1.msra.mxu0 0.0
    %2168 = vmatprep.subr.mxu0 0.0
    %2169 = vmatpush1.msra.mxu0 0.0
    %2170 = vmatprep.subr.mxu0 0.0
    %2171 = vmatpush1.msra.mxu0 0.0
    %2172 = vmatprep.subr.mxu0 0.0
    %2173 = vmatpush1.msra.mxu0 0.0
    %2174 = vmatprep.subr.mxu0 0.0
    %2175 = vmatpush1.msra.mxu0 0.0
    %2176 = vmatprep.subr.mxu0 0.0
    %2177 = vmatpush1.msra.mxu0 0.0
    %2178 = vmatprep.subr.mxu0 0.0
    %2179 = vmatpush1.msra.mxu0 0.0
    %2180 = vmatprep.subr.mxu0 0.0
    %2181 = vmatpush1.msra.mxu0 0.0
    %2182 = vmatprep.subr.mxu0 0.0
    %2183 = vmatpush1.msra.mxu0 0.0
    %2184 = vmatprep.subr.mxu0 0.0
    %2185 = vmatpush1.msra.mxu0 0.0
    %2186 = vmatprep.subr.mxu0 0.0
    %2187 = vmatpush1.msra.mxu0 0.0
    %2188 = vmatprep.subr.mxu0 0.0
    %2189 = vmatpush1.msra.mxu0 0.0
    %2190 = vmatprep.mubr.f32.mxu0 0.0
    %v2191 = vand.u32 %v1568, 4294901760
    %2192 = vmatmul.mubr.f32.gmra.mrb[0].mxu0 %v2191
    %v2193 = vpop.f32.mrb[0].mxu0
    %v2194 = vadd.f32 %v2118, %v2193
    %v2195 = vpop.f32.mrb[0].mxu0
    %2196 = vdwg.mxu0
    %2197 = vmatprep.subr.mxu0 0.0
    %v2198 = vand.u32 %v1578, 4294901760
    %v2199 = vsub.f32 %v1578, %v2198
    %2200 = vmatpush1.msra.mxu0 %v2199
    %2201 = vmatprep.subr.mxu0 0.0
    %2202 = vmatpush1.msra.mxu0 0.0
    %2203 = vmatprep.subr.mxu0 0.0
    %2204 = vmatpush1.msra.mxu0 0.0
    %2205 = vmatprep.subr.mxu0 0.0
    %2206 = vmatpush1.msra.mxu0 0.0
    %2207 = vmatprep.subr.mxu0 0.0
    %2208 = vmatpush1.msra.mxu0 0.0
    %2209 = vmatprep.subr.mxu0 0.0
    %2210 = vmatpush1.msra.mxu0 0.0
    %2211 = vmatprep.subr.mxu0 0.0
    %2212 = vmatpush1.msra.mxu0 0.0
    %2213 = vmatprep.subr.mxu0 0.0
    %2214 = vmatpush1.msra.mxu0 0.0
    %2215 = vmatprep.subr.mxu0 0.0
    %2216 = vmatpush1.msra.mxu0 0.0
    %2217 = vmatprep.subr.mxu0 0.0
    %2218 = vmatpush1.msra.mxu0 0.0
    %2219 = vmatprep.subr.mxu0 0.0
    %2220 = vmatpush1.msra.mxu0 0.0
    %2221 = vmatprep.subr.mxu0 0.0
    %2222 = vmatpush1.msra.mxu0 0.0
    %2223 = vmatprep.subr.mxu0 0.0
    %2224 = vmatpush1.msra.mxu0 0.0
    %2225 = vmatprep.subr.mxu0 0.0
    %2226 = vmatpush1.msra.mxu0 0.0
    %2227 = vmatprep.subr.mxu0 0.0
    %2228 = vmatpush1.msra.mxu0 0.0
    %2229 = vmatprep.subr.mxu0 0.0
    %2230 = vmatpush1.msra.mxu0 0.0
    %2231 = vmatprep.subr.mxu0 0.0
    %2232 = vmatpush1.msra.mxu0 0.0
    %2233 = vmatprep.subr.mxu0 0.0
    %2234 = vmatpush1.msra.mxu0 0.0
    %2235 = vmatprep.subr.mxu0 0.0
    %2236 = vmatpush1.msra.mxu0 0.0
    %2237 = vmatprep.subr.mxu0 0.0
    %2238 = vmatpush1.msra.mxu0 0.0
    %2239 = vmatprep.subr.mxu0 0.0
    %2240 = vmatpush1.msra.mxu0 0.0
    %2241 = vmatprep.subr.mxu0 0.0
    %2242 = vmatpush1.msra.mxu0 0.0
    %2243 = vmatprep.subr.mxu0 0.0
    %2244 = vmatpush1.msra.mxu0 0.0
    %2245 = vmatprep.subr.mxu0 0.0
    %2246 = vmatpush1.msra.mxu0 0.0
    %2247 = vmatprep.subr.mxu0 0.0
    %2248 = vmatpush1.msra.mxu0 0.0
    %2249 = vmatprep.subr.mxu0 0.0
    %2250 = vmatpush1.msra.mxu0 0.0
    %2251 = vmatprep.subr.mxu0 0.0
    %2252 = vmatpush1.msra.mxu0 0.0
    %2253 = vmatprep.subr.mxu0 0.0
    %2254 = vmatpush1.msra.mxu0 0.0
    %2255 = vmatprep.subr.mxu0 0.0
    %2256 = vmatpush1.msra.mxu0 0.0
    %2257 = vmatprep.subr.mxu0 0.0
    %2258 = vmatpush1.msra.mxu0 0.0
    %2259 = vmatprep.subr.mxu0 0.0
    %2260 = vmatpush1.msra.mxu0 0.0
    %2261 = vmatprep.subr.mxu0 0.0
    %2262 = vmatpush1.msra.mxu0 0.0
    %2263 = vmatprep.mubr.f32.mxu0 0.0
    %v2264 = vand.u32 %v1568, 4294901760
    %v2265 = vsub.f32 %v1568, %v2264
    %2266 = vmatmul.mubr.f32.gmra.mrb[0].mxu0 %v2265
    %v2267 = vpop.f32.mrb[0].mxu0
    %v2268 = vadd.f32 %v2194, %v2267
    %v2269 = vpop.f32.mrb[0].mxu0
    %2270 = vdwg.mxu0
    %2271 = vmatprep.subr.mxu0 0.0
    %v2272 = vand.u32 %v1578, 4294901760
    %2273 = vmatpush1.msra.mxu0 %v2272
    %2274 = vmatprep.subr.mxu0 0.0
    %2275 = vmatpush1.msra.mxu0 0.0
    %2276 = vmatprep.subr.mxu0 0.0
    %2277 = vmatpush1.msra.mxu0 0.0
    %2278 = vmatprep.subr.mxu0 0.0
    %2279 = vmatpush1.msra.mxu0 0.0
    %2280 = vmatprep.subr.mxu0 0.0
    %2281 = vmatpush1.msra.mxu0 0.0
    %2282 = vmatprep.subr.mxu0 0.0
    %2283 = vmatpush1.msra.mxu0 0.0
    %2284 = vmatprep.subr.mxu0 0.0
    %2285 = vmatpush1.msra.mxu0 0.0
    %2286 = vmatprep.subr.mxu0 0.0
    %2287 = vmatpush1.msra.mxu0 0.0
    %2288 = vmatprep.subr.mxu0 0.0
    %2289 = vmatpush1.msra.mxu0 0.0
    %2290 = vmatprep.subr.mxu0 0.0
    %2291 = vmatpush1.msra.mxu0 0.0
    %2292 = vmatprep.subr.mxu0 0.0
    %2293 = vmatpush1.msra.mxu0 0.0
    %2294 = vmatprep.subr.mxu0 0.0
    %2295 = vmatpush1.msra.mxu0 0.0
    %2296 = vmatprep.subr.mxu0 0.0
    %2297 = vmatpush1.msra.mxu0 0.0
    %2298 = vmatprep.subr.mxu0 0.0
    %2299 = vmatpush1.msra.mxu0 0.0
    %2300 = vmatprep.subr.mxu0 0.0
    %2301 = vmatpush1.msra.mxu0 0.0
    %2302 = vmatprep.subr.mxu0 0.0
    %2303 = vmatpush1.msra.mxu0 0.0
    %2304 = vmatprep.subr.mxu0 0.0
    %2305 = vmatpush1.msra.mxu0 0.0
    %2306 = vmatprep.subr.mxu0 0.0
    %2307 = vmatpush1.msra.mxu0 0.0
    %2308 = vmatprep.subr.mxu0 0.0
    %2309 = vmatpush1.msra.mxu0 0.0
    %2310 = vmatprep.subr.mxu0 0.0
    %2311 = vmatpush1.msra.mxu0 0.0
    %2312 = vmatprep.subr.mxu0 0.0
    %2313 = vmatpush1.msra.mxu0 0.0
    %2314 = vmatprep.subr.mxu0 0.0
    %2315 = vmatpush1.msra.mxu0 0.0
    %2316 = vmatprep.subr.mxu0 0.0
    %2317 = vmatpush1.msra.mxu0 0.0
    %2318 = vmatprep.subr.mxu0 0.0
    %2319 = vmatpush1.msra.mxu0 0.0
    %2320 = vmatprep.subr.mxu0 0.0
    %2321 = vmatpush1.msra.mxu0 0.0
    %2322 = vmatprep.subr.mxu0 0.0
    %2323 = vmatpush1.msra.mxu0 0.0
    %2324 = vmatprep.subr.mxu0 0.0
    %2325 = vmatpush1.msra.mxu0 0.0
    %2326 = vmatprep.subr.mxu0 0.0
    %2327 = vmatpush1.msra.mxu0 0.0
    %2328 = vmatprep.subr.mxu0 0.0
    %2329 = vmatpush1.msra.mxu0 0.0
    %2330 = vmatprep.subr.mxu0 0.0
    %2331 = vmatpush1.msra.mxu0 0.0
    %2332 = vmatprep.subr.mxu0 0.0
    %2333 = vmatpush1.msra.mxu0 0.0
    %2334 = vmatprep.subr.mxu0 0.0
    %2335 = vmatpush1.msra.mxu0 0.0
    %2336 = vmatprep.mubr.f32.mxu0 0.0
    %v2337 = vand.u32 %v1568, 4294901760
    %v2338 = vsub.f32 %v1568, %v2337
    %v2339 = vand.u32 %v2338, 4294901760
    %2340 = vmatmul.mubr.f32.gmra.mrb[0].mxu0 %v2339
    %v2341 = vpop.f32.mrb[0].mxu0
    %v2342 = vadd.f32 %v2268, %v2341
    %v2343 = vpop.f32.mrb[0].mxu0
    %2344 = vdwg.mxu0
    %2345 = vmatprep.subr.mxu0 0.0
    %v2346 = vand.u32 %v1578, 4294901760
    %v2347 = vsub.f32 %v1578, %v2346
    %v2348 = vand.u32 %v2347, 4294901760
    %2349 = vmatpush1.msra.mxu0 %v2348
    %2350 = vmatprep.subr.mxu0 0.0
    %2351 = vmatpush1.msra.mxu0 0.0
    %2352 = vmatprep.subr.mxu0 0.0
    %2353 = vmatpush1.msra.mxu0 0.0
    %2354 = vmatprep.subr.mxu0 0.0
    %2355 = vmatpush1.msra.mxu0 0.0
    %2356 = vmatprep.subr.mxu0 0.0
    %2357 = vmatpush1.msra.mxu0 0.0
    %2358 = vmatprep.subr.mxu0 0.0
    %2359 = vmatpush1.msra.mxu0 0.0
    %2360 = vmatprep.subr.mxu0 0.0
    %2361 = vmatpush1.msra.mxu0 0.0
    %2362 = vmatprep.subr.mxu0 0.0
    %2363 = vmatpush1.msra.mxu0 0.0
    %2364 = vmatprep.subr.mxu0 0.0
    %2365 = vmatpush1.msra.mxu0 0.0
    %2366 = vmatprep.subr.mxu0 0.0
    %2367 = vmatpush1.msra.mxu0 0.0
    %2368 = vmatprep.subr.mxu0 0.0
    %2369 = vmatpush1.msra.mxu0 0.0
    %2370 = vmatprep.subr.mxu0 0.0
    %2371 = vmatpush1.msra.mxu0 0.0
    %2372 = vmatprep.subr.mxu0 0.0
    %2373 = vmatpush1.msra.mxu0 0.0
    %2374 = vmatprep.subr.mxu0 0.0
    %2375 = vmatpush1.msra.mxu0 0.0
    %2376 = vmatprep.subr.mxu0 0.0
    %2377 = vmatpush1.msra.mxu0 0.0
    %2378 = vmatprep.subr.mxu0 0.0
    %2379 = vmatpush1.msra.mxu0 0.0
    %2380 = vmatprep.subr.mxu0 0.0
    %2381 = vmatpush1.msra.mxu0 0.0
    %2382 = vmatprep.subr.mxu0 0.0
    %2383 = vmatpush1.msra.mxu0 0.0
    %2384 = vmatprep.subr.mxu0 0.0
    %2385 = vmatpush1.msra.mxu0 0.0
    %2386 = vmatprep.subr.mxu0 0.0
    %2387 = vmatpush1.msra.mxu0 0.0
    %2388 = vmatprep.subr.mxu0 0.0
    %2389 = vmatpush1.msra.mxu0 0.0
    %2390 = vmatprep.subr.mxu0 0.0
    %2391 = vmatpush1.msra.mxu0 0.0
    %2392 = vmatprep.subr.mxu0 0.0
    %2393 = vmatpush1.msra.mxu0 0.0
    %2394 = vmatprep.subr.mxu0 0.0
    %2395 = vmatpush1.msra.mxu0 0.0
    %2396 = vmatprep.subr.mxu0 0.0
    %2397 = vmatpush1.msra.mxu0 0.0
    %2398 = vmatprep.subr.mxu0 0.0
    %2399 = vmatpush1.msra.mxu0 0.0
    %2400 = vmatprep.subr.mxu0 0.0
    %2401 = vmatpush1.msra.mxu0 0.0
    %2402 = vmatprep.subr.mxu0 0.0
    %2403 = vmatpush1.msra.mxu0 0.0
    %2404 = vmatprep.subr.mxu0 0.0
    %2405 = vmatpush1.msra.mxu0 0.0
    %2406 = vmatprep.subr.mxu0 0.0
    %2407 = vmatpush1.msra.mxu0 0.0
    %2408 = vmatprep.subr.mxu0 0.0
    %2409 = vmatpush1.msra.mxu0 0.0
    %2410 = vmatprep.subr.mxu0 0.0
    %2411 = vmatpush1.msra.mxu0 0.0
    %2412 = vmatprep.mubr.f32.mxu0 0.0
    %v2413 = vand.u32 %v1568, 4294901760
    %2414 = vmatmul.mubr.f32.gmra.mrb[0].mxu0 %v2413
    %v2415 = vpop.f32.mrb[0].mxu0
    %v2416 = vadd.f32 %v2342, %v2415
    %v2417 = vpop.f32.mrb[0].mxu0
    %2418 = vdwg.mxu0
    %2419 = vmatprep.subr.mxu0 0.0
    %v2420 = vand.u32 %v1578, 4294901760
    %2421 = vmatpush1.msra.mxu0 %v2420
    %2422 = vmatprep.subr.mxu0 0.0
    %2423 = vmatpush1.msra.mxu0 0.0
    %2424 = vmatprep.subr.mxu0 0.0
    %2425 = vmatpush1.msra.mxu0 0.0
    %2426 = vmatprep.subr.mxu0 0.0
    %2427 = vmatpush1.msra.mxu0 0.0
    %2428 = vmatprep.subr.mxu0 0.0
    %2429 = vmatpush1.msra.mxu0 0.0
    %2430 = vmatprep.subr.mxu0 0.0
    %2431 = vmatpush1.msra.mxu0 0.0
    %2432 = vmatprep.subr.mxu0 0.0
    %2433 = vmatpush1.msra.mxu0 0.0
    %2434 = vmatprep.subr.mxu0 0.0
    %2435 = vmatpush1.msra.mxu0 0.0
    %2436 = vmatprep.subr.mxu0 0.0
    %2437 = vmatpush1.msra.mxu0 0.0
    %2438 = vmatprep.subr.mxu0 0.0
    %2439 = vmatpush1.msra.mxu0 0.0
    %2440 = vmatprep.subr.mxu0 0.0
    %2441 = vmatpush1.msra.mxu0 0.0
    %2442 = vmatprep.subr.mxu0 0.0
    %2443 = vmatpush1.msra.mxu0 0.0
    %2444 = vmatprep.subr.mxu0 0.0
    %2445 = vmatpush1.msra.mxu0 0.0
    %2446 = vmatprep.subr.mxu0 0.0
    %2447 = vmatpush1.msra.mxu0 0.0
    %2448 = vmatprep.subr.mxu0 0.0
    %2449 = vmatpush1.msra.mxu0 0.0
    %2450 = vmatprep.subr.mxu0 0.0
    %2451 = vmatpush1.msra.mxu0 0.0
    %2452 = vmatprep.subr.mxu0 0.0
    %2453 = vmatpush1.msra.mxu0 0.0
    %2454 = vmatprep.subr.mxu0 0.0
    %2455 = vmatpush1.msra.mxu0 0.0
    %2456 = vmatprep.subr.mxu0 0.0
    %2457 = vmatpush1.msra.mxu0 0.0
    %2458 = vmatprep.subr.mxu0 0.0
    %2459 = vmatpush1.msra.mxu0 0.0
    %2460 = vmatprep.subr.mxu0 0.0
    %2461 = vmatpush1.msra.mxu0 0.0
    %2462 = vmatprep.subr.mxu0 0.0
    %2463 = vmatpush1.msra.mxu0 0.0
    %2464 = vmatprep.subr.mxu0 0.0
    %2465 = vmatpush1.msra.mxu0 0.0
    %2466 = vmatprep.subr.mxu0 0.0
    %2467 = vmatpush1.msra.mxu0 0.0
    %2468 = vmatprep.subr.mxu0 0.0
    %2469 = vmatpush1.msra.mxu0 0.0
    %2470 = vmatprep.subr.mxu0 0.0
    %2471 = vmatpush1.msra.mxu0 0.0
    %2472 = vmatprep.subr.mxu0 0.0
    %2473 = vmatpush1.msra.mxu0 0.0
    %2474 = vmatprep.subr.mxu0 0.0
    %2475 = vmatpush1.msra.mxu0 0.0
    %2476 = vmatprep.subr.mxu0 0.0
    %2477 = vmatpush1.msra.mxu0 0.0
    %2478 = vmatprep.subr.mxu0 0.0
    %2479 = vmatpush1.msra.mxu0 0.0
    %2480 = vmatprep.subr.mxu0 0.0
    %2481 = vmatpush1.msra.mxu0 0.0
    %2482 = vmatprep.subr.mxu0 0.0
    %2483 = vmatpush1.msra.mxu0 0.0
    %2484 = vmatprep.mubr.f32.mxu0 0.0
    %v2485 = vand.u32 %v1568, 4294901760
    %2486 = vmatmul.mubr.f32.gmra.mrb[0].mxu0 %v2485
    %v2487 = vpop.f32.mrb[0].mxu0
    %v2488 = vadd.f32 %v2416, %v2487
    %v2489 = vpop.f32.mrb[0].mxu0
    %2490 = vdwg.mxu0
    %v2491 = vand.u32 %v1371, 4294901760
    %2492 = vmatprep.subr.mxu0 %v2491
    %v2493 = vand.u32 %v1370, 4294901760
    %2494 = vmatpush1.msra.mxu0 %v2493
    %v2495 = vand.u32 %v1374, 4294901760
    %2496 = vmatprep.subr.mxu0 %v2495
    %v2497 = vand.u32 %v1373, 4294901760
    %2498 = vmatpush1.msra.mxu0 %v2497
    %v2499 = vand.u32 %v1377, 4294901760
    %2500 = vmatprep.subr.mxu0 %v2499
    %v2501 = vand.u32 %v1376, 4294901760
    %2502 = vmatpush1.msra.mxu0 %v2501
    %v2503 = vand.u32 %v1380, 4294901760
    %2504 = vmatprep.subr.mxu0 %v2503
    %v2505 = vand.u32 %v1379, 4294901760
    %2506 = vmatpush1.msra.mxu0 %v2505
    %v2507 = vand.u32 %v1383, 4294901760
    %2508 = vmatprep.subr.mxu0 %v2507
    %v2509 = vand.u32 %v1382, 4294901760
    %2510 = vmatpush1.msra.mxu0 %v2509
    %v2511 = vand.u32 %v1386, 4294901760
    %2512 = vmatprep.subr.mxu0 %v2511
    %v2513 = vand.u32 %v1385, 4294901760
    %2514 = vmatpush1.msra.mxu0 %v2513
    %v2515 = vand.u32 %v1389, 4294901760
    %2516 = vmatprep.subr.mxu0 %v2515
    %v2517 = vand.u32 %v1388, 4294901760
    %2518 = vmatpush1.msra.mxu0 %v2517
    %v2519 = vand.u32 %v1392, 4294901760
    %2520 = vmatprep.subr.mxu0 %v2519
    %v2521 = vand.u32 %v1391, 4294901760
    %2522 = vmatpush1.msra.mxu0 %v2521
    %v2523 = vand.u32 %v1395, 4294901760
    %2524 = vmatprep.subr.mxu0 %v2523
    %v2525 = vand.u32 %v1394, 4294901760
    %2526 = vmatpush1.msra.mxu0 %v2525
    %v2527 = vand.u32 %v1398, 4294901760
    %2528 = vmatprep.subr.mxu0 %v2527
    %v2529 = vand.u32 %v1397, 4294901760
    %2530 = vmatpush1.msra.mxu0 %v2529
    %v2531 = vand.u32 %v1401, 4294901760
    %2532 = vmatprep.subr.mxu0 %v2531
    %v2533 = vand.u32 %v1400, 4294901760
    %2534 = vmatpush1.msra.mxu0 %v2533
    %v2535 = vand.u32 %v1404, 4294901760
    %2536 = vmatprep.subr.mxu0 %v2535
    %v2537 = vand.u32 %v1403, 4294901760
    %2538 = vmatpush1.msra.mxu0 %v2537
    %v2539 = vand.u32 %v1407, 4294901760
    %2540 = vmatprep.subr.mxu0 %v2539
    %v2541 = vand.u32 %v1406, 4294901760
    %2542 = vmatpush1.msra.mxu0 %v2541
    %v2543 = vand.u32 %v1410, 4294901760
    %2544 = vmatprep.subr.mxu0 %v2543
    %v2545 = vand.u32 %v1409, 4294901760
    %2546 = vmatpush1.msra.mxu0 %v2545
    %v2547 = vand.u32 %v1413, 4294901760
    %2548 = vmatprep.subr.mxu0 %v2547
    %v2549 = vand.u32 %v1412, 4294901760
    %2550 = vmatpush1.msra.mxu0 %v2549
    %v2551 = vand.u32 %v1416, 4294901760
    %2552 = vmatprep.subr.mxu0 %v2551
    %v2553 = vand.u32 %v1415, 4294901760
    %2554 = vmatpush1.msra.mxu0 %v2553
    %v2555 = vand.u32 %v1419, 4294901760
    %2556 = vmatprep.subr.mxu0 %v2555
    %v2557 = vand.u32 %v1418, 4294901760
    %2558 = vmatpush1.msra.mxu0 %v2557
    %v2559 = vand.u32 %v1422, 4294901760
    %2560 = vmatprep.subr.mxu0 %v2559
    %v2561 = vand.u32 %v1421, 4294901760
    %2562 = vmatpush1.msra.mxu0 %v2561
    %v2563 = vand.u32 %v1425, 4294901760
    %2564 = vmatprep.subr.mxu0 %v2563
    %v2565 = vand.u32 %v1424, 4294901760
    %2566 = vmatpush1.msra.mxu0 %v2565
    %v2567 = vand.u32 %v1428, 4294901760
    %2568 = vmatprep.subr.mxu0 %v2567
    %v2569 = vand.u32 %v1427, 4294901760
    %2570 = vmatpush1.msra.mxu0 %v2569
    %v2571 = vand.u32 %v1431, 4294901760
    %2572 = vmatprep.subr.mxu0 %v2571
    %v2573 = vand.u32 %v1430, 4294901760
    %2574 = vmatpush1.msra.mxu0 %v2573
    %v2575 = vand.u32 %v1434, 4294901760
    %2576 = vmatprep.subr.mxu0 %v2575
    %v2577 = vand.u32 %v1433, 4294901760
    %2578 = vmatpush1.msra.mxu0 %v2577
    %v2579 = vand.u32 %v1437, 4294901760
    %2580 = vmatprep.subr.mxu0 %v2579
    %v2581 = vand.u32 %v1436, 4294901760
    %2582 = vmatpush1.msra.mxu0 %v2581
    %v2583 = vand.u32 %v1440, 4294901760
    %2584 = vmatprep.subr.mxu0 %v2583
    %v2585 = vand.u32 %v1439, 4294901760
    %2586 = vmatpush1.msra.mxu0 %v2585
    %v2587 = vand.u32 %v1443, 4294901760
    %2588 = vmatprep.subr.mxu0 %v2587
    %v2589 = vand.u32 %v1442, 4294901760
    %2590 = vmatpush1.msra.mxu0 %v2589
    %v2591 = vand.u32 %v1446, 4294901760
    %2592 = vmatprep.subr.mxu0 %v2591
    %v2593 = vand.u32 %v1445, 4294901760
    %2594 = vmatpush1.msra.mxu0 %v2593
    %v2595 = vand.u32 %v1449, 4294901760
    %2596 = vmatprep.subr.mxu0 %v2595
    %v2597 = vand.u32 %v1448, 4294901760
    %2598 = vmatpush1.msra.mxu0 %v2597
    %v2599 = vand.u32 %v1452, 4294901760
    %2600 = vmatprep.subr.mxu0 %v2599
    %v2601 = vand.u32 %v1451, 4294901760
    %2602 = vmatpush1.msra.mxu0 %v2601
    %v2603 = vand.u32 %v1455, 4294901760
    %2604 = vmatprep.subr.mxu0 %v2603
    %v2605 = vand.u32 %v1454, 4294901760
    %2606 = vmatpush1.msra.mxu0 %v2605
    %v2607 = vand.u32 %v1458, 4294901760
    %2608 = vmatprep.subr.mxu0 %v2607
    %v2609 = vand.u32 %v1457, 4294901760
    %2610 = vmatpush1.msra.mxu0 %v2609
    %v2611 = vand.u32 %v1461, 4294901760
    %2612 = vmatprep.subr.mxu0 %v2611
    %v2613 = vand.u32 %v1460, 4294901760
    %2614 = vmatpush1.msra.mxu0 %v2613
    %v2615 = vand.u32 %v1464, 4294901760
    %2616 = vmatprep.subr.mxu0 %v2615
    %v2617 = vand.u32 %v1463, 4294901760
    %2618 = vmatpush1.msra.mxu0 %v2617
    %v2619 = vand.u32 %v1367, 4294901760
    %v2620 = vsub.f32 %v1367, %v2619
    %v2621 = vand.u32 %v2620, 4294901760
    %v2622 = vsub.f32 %v2620, %v2621
    %v2623 = vand.u32 %v2622, 4294901760
    %2624 = vmatprep.mubr.f32.mxu0 %v2623
    %v2625 = vand.u32 %v1366, 4294901760
    %v2626 = vsub.f32 %v1366, %v2625
    %v2627 = vand.u32 %v2626, 4294901760
    %v2628 = vsub.f32 %v2626, %v2627
    %v2629 = vand.u32 %v2628, 4294901760
    %2630 = vmatmul.mubr.f32.gmra.mrb[0].mxu0 %v2629
    %v2631 = vpop.f32.mrb[0].mxu0
    %v2632 = vadd.f32 %v2041, %v2631
    %v2633 = vpop.f32.mrb[0].mxu0
    %v2634 = vadd.f32 %v2043, %v2633
    %2635 = vdwg.mxu0
    %v2636 = vand.u32 %v1371, 4294901760
    %v2637 = vsub.f32 %v1371, %v2636
    %v2638 = vand.u32 %v2637, 4294901760
    %v2639 = vsub.f32 %v2637, %v2638
    %v2640 = vand.u32 %v2639, 4294901760
    %2641 = vmatprep.subr.mxu0 %v2640
    %v2642 = vand.u32 %v1370, 4294901760
    %v2643 = vsub.f32 %v1370, %v2642
    %v2644 = vand.u32 %v2643, 4294901760
    %v2645 = vsub.f32 %v2643, %v2644
    %v2646 = vand.u32 %v2645, 4294901760
    %2647 = vmatpush1.msra.mxu0 %v2646
    %v2648 = vand.u32 %v1374, 4294901760
    %v2649 = vsub.f32 %v1374, %v2648
    %v2650 = vand.u32 %v2649, 4294901760
    %v2651 = vsub.f32 %v2649, %v2650
    %v2652 = vand.u32 %v2651, 4294901760
    %2653 = vmatprep.subr.mxu0 %v2652
    %v2654 = vand.u32 %v1373, 4294901760
    %v2655 = vsub.f32 %v1373, %v2654
    %v2656 = vand.u32 %v2655, 4294901760
    %v2657 = vsub.f32 %v2655, %v2656
    %v2658 = vand.u32 %v2657, 4294901760
    %2659 = vmatpush1.msra.mxu0 %v2658
    %v2660 = vand.u32 %v1377, 4294901760
    %v2661 = vsub.f32 %v1377, %v2660
    %v2662 = vand.u32 %v2661, 4294901760
    %v2663 = vsub.f32 %v2661, %v2662
    %v2664 = vand.u32 %v2663, 4294901760
    %2665 = vmatprep.subr.mxu0 %v2664
    %v2666 = vand.u32 %v1376, 4294901760
    %v2667 = vsub.f32 %v1376, %v2666
    %v2668 = vand.u32 %v2667, 4294901760
    %v2669 = vsub.f32 %v2667, %v2668
    %v2670 = vand.u32 %v2669, 4294901760
    %2671 = vmatpush1.msra.mxu0 %v2670
    %v2672 = vand.u32 %v1380, 4294901760
    %v2673 = vsub.f32 %v1380, %v2672
    %v2674 = vand.u32 %v2673, 4294901760
    %v2675 = vsub.f32 %v2673, %v2674
    %v2676 = vand.u32 %v2675, 4294901760
    %2677 = vmatprep.subr.mxu0 %v2676
    %v2678 = vand.u32 %v1379, 4294901760
    %v2679 = vsub.f32 %v1379, %v2678
    %v2680 = vand.u32 %v2679, 4294901760
    %v2681 = vsub.f32 %v2679, %v2680
    %v2682 = vand.u32 %v2681, 4294901760
    %2683 = vmatpush1.msra.mxu0 %v2682
    %v2684 = vand.u32 %v1383, 4294901760
    %v2685 = vsub.f32 %v1383, %v2684
    %v2686 = vand.u32 %v2685, 4294901760
    %v2687 = vsub.f32 %v2685, %v2686
    %v2688 = vand.u32 %v2687, 4294901760
    %2689 = vmatprep.subr.mxu0 %v2688
    %v2690 = vand.u32 %v1382, 4294901760
    %v2691 = vsub.f32 %v1382, %v2690
    %v2692 = vand.u32 %v2691, 4294901760
    %v2693 = vsub.f32 %v2691, %v2692
    %v2694 = vand.u32 %v2693, 4294901760
    %2695 = vmatpush1.msra.mxu0 %v2694
    %v2696 = vand.u32 %v1386, 4294901760
    %v2697 = vsub.f32 %v1386, %v2696
    %v2698 = vand.u32 %v2697, 4294901760
    %v2699 = vsub.f32 %v2697, %v2698
    %v2700 = vand.u32 %v2699, 4294901760
    %2701 = vmatprep.subr.mxu0 %v2700
    %v2702 = vand.u32 %v1385, 4294901760
    %v2703 = vsub.f32 %v1385, %v2702
    %v2704 = vand.u32 %v2703, 4294901760
    %v2705 = vsub.f32 %v2703, %v2704
    %v2706 = vand.u32 %v2705, 4294901760
    %2707 = vmatpush1.msra.mxu0 %v2706
    %v2708 = vand.u32 %v1389, 4294901760
    %v2709 = vsub.f32 %v1389, %v2708
    %v2710 = vand.u32 %v2709, 4294901760
    %v2711 = vsub.f32 %v2709, %v2710
    %v2712 = vand.u32 %v2711, 4294901760
    %2713 = vmatprep.subr.mxu0 %v2712
    %v2714 = vand.u32 %v1388, 4294901760
    %v2715 = vsub.f32 %v1388, %v2714
    %v2716 = vand.u32 %v2715, 4294901760
    %v2717 = vsub.f32 %v2715, %v2716
    %v2718 = vand.u32 %v2717, 4294901760
    %2719 = vmatpush1.msra.mxu0 %v2718
    %v2720 = vand.u32 %v1392, 4294901760
    %v2721 = vsub.f32 %v1392, %v2720
    %v2722 = vand.u32 %v2721, 4294901760
    %v2723 = vsub.f32 %v2721, %v2722
    %v2724 = vand.u32 %v2723, 4294901760
    %2725 = vmatprep.subr.mxu0 %v2724
    %v2726 = vand.u32 %v1391, 4294901760
    %v2727 = vsub.f32 %v1391, %v2726
    %v2728 = vand.u32 %v2727, 4294901760
    %v2729 = vsub.f32 %v2727, %v2728
    %v2730 = vand.u32 %v2729, 4294901760
    %2731 = vmatpush1.msra.mxu0 %v2730
    %v2732 = vand.u32 %v1395, 4294901760
    %v2733 = vsub.f32 %v1395, %v2732
    %v2734 = vand.u32 %v2733, 4294901760
    %v2735 = vsub.f32 %v2733, %v2734
    %v2736 = vand.u32 %v2735, 4294901760
    %2737 = vmatprep.subr.mxu0 %v2736
    %v2738 = vand.u32 %v1394, 4294901760
    %v2739 = vsub.f32 %v1394, %v2738
    %v2740 = vand.u32 %v2739, 4294901760
    %v2741 = vsub.f32 %v2739, %v2740
    %v2742 = vand.u32 %v2741, 4294901760
    %2743 = vmatpush1.msra.mxu0 %v2742
    %v2744 = vand.u32 %v1398, 4294901760
    %v2745 = vsub.f32 %v1398, %v2744
    %v2746 = vand.u32 %v2745, 4294901760
    %v2747 = vsub.f32 %v2745, %v2746
    %v2748 = vand.u32 %v2747, 4294901760
    %2749 = vmatprep.subr.mxu0 %v2748
    %v2750 = vand.u32 %v1397, 4294901760
    %v2751 = vsub.f32 %v1397, %v2750
    %v2752 = vand.u32 %v2751, 4294901760
    %v2753 = vsub.f32 %v2751, %v2752
    %v2754 = vand.u32 %v2753, 4294901760
    %2755 = vmatpush1.msra.mxu0 %v2754
    %v2756 = vand.u32 %v1401, 4294901760
    %v2757 = vsub.f32 %v1401, %v2756
    %v2758 = vand.u32 %v2757, 4294901760
    %v2759 = vsub.f32 %v2757, %v2758
    %v2760 = vand.u32 %v2759, 4294901760
    %2761 = vmatprep.subr.mxu0 %v2760
    %v2762 = vand.u32 %v1400, 4294901760
    %v2763 = vsub.f32 %v1400, %v2762
    %v2764 = vand.u32 %v2763, 4294901760
    %v2765 = vsub.f32 %v2763, %v2764
    %v2766 = vand.u32 %v2765, 4294901760
    %2767 = vmatpush1.msra.mxu0 %v2766
    %v2768 = vand.u32 %v1404, 4294901760
    %v2769 = vsub.f32 %v1404, %v2768
    %v2770 = vand.u32 %v2769, 4294901760
    %v2771 = vsub.f32 %v2769, %v2770
    %v2772 = vand.u32 %v2771, 4294901760
    %2773 = vmatprep.subr.mxu0 %v2772
    %v2774 = vand.u32 %v1403, 4294901760
    %v2775 = vsub.f32 %v1403, %v2774
    %v2776 = vand.u32 %v2775, 4294901760
    %v2777 = vsub.f32 %v2775, %v2776
    %v2778 = vand.u32 %v2777, 4294901760
    %2779 = vmatpush1.msra.mxu0 %v2778
    %v2780 = vand.u32 %v1407, 4294901760
    %v2781 = vsub.f32 %v1407, %v2780
    %v2782 = vand.u32 %v2781, 4294901760
    %v2783 = vsub.f32 %v2781, %v2782
    %v2784 = vand.u32 %v2783, 4294901760
    %2785 = vmatprep.subr.mxu0 %v2784
    %v2786 = vand.u32 %v1406, 4294901760
    %v2787 = vsub.f32 %v1406, %v2786
    %v2788 = vand.u32 %v2787, 4294901760
    %v2789 = vsub.f32 %v2787, %v2788
    %v2790 = vand.u32 %v2789, 4294901760
    %2791 = vmatpush1.msra.mxu0 %v2790
    %v2792 = vand.u32 %v1410, 4294901760
    %v2793 = vsub.f32 %v1410, %v2792
    %v2794 = vand.u32 %v2793, 4294901760
    %v2795 = vsub.f32 %v2793, %v2794
    %v2796 = vand.u32 %v2795, 4294901760
    %2797 = vmatprep.subr.mxu0 %v2796
    %v2798 = vand.u32 %v1409, 4294901760
    %v2799 = vsub.f32 %v1409, %v2798
    %v2800 = vand.u32 %v2799, 4294901760
    %v2801 = vsub.f32 %v2799, %v2800
    %v2802 = vand.u32 %v2801, 4294901760
    %2803 = vmatpush1.msra.mxu0 %v2802
    %v2804 = vand.u32 %v1413, 4294901760
    %v2805 = vsub.f32 %v1413, %v2804
    %v2806 = vand.u32 %v2805, 4294901760
    %v2807 = vsub.f32 %v2805, %v2806
    %v2808 = vand.u32 %v2807, 4294901760
    %2809 = vmatprep.subr.mxu0 %v2808
    %v2810 = vand.u32 %v1412, 4294901760
    %v2811 = vsub.f32 %v1412, %v2810
    %v2812 = vand.u32 %v2811, 4294901760
    %v2813 = vsub.f32 %v2811, %v2812
    %v2814 = vand.u32 %v2813, 4294901760
    %2815 = vmatpush1.msra.mxu0 %v2814
    %v2816 = vand.u32 %v1416, 4294901760
    %v2817 = vsub.f32 %v1416, %v2816
    %v2818 = vand.u32 %v2817, 4294901760
    %v2819 = vsub.f32 %v2817, %v2818
    %v2820 = vand.u32 %v2819, 4294901760
    %2821 = vmatprep.subr.mxu0 %v2820
    %v2822 = vand.u32 %v1415, 4294901760
    %v2823 = vsub.f32 %v1415, %v2822
    %v2824 = vand.u32 %v2823, 4294901760
    %v2825 = vsub.f32 %v2823, %v2824
    %v2826 = vand.u32 %v2825, 4294901760
    %2827 = vmatpush1.msra.mxu0 %v2826
    %v2828 = vand.u32 %v1419, 4294901760
    %v2829 = vsub.f32 %v1419, %v2828
    %v2830 = vand.u32 %v2829, 4294901760
    %v2831 = vsub.f32 %v2829, %v2830
    %v2832 = vand.u32 %v2831, 4294901760
    %2833 = vmatprep.subr.mxu0 %v2832
    %v2834 = vand.u32 %v1418, 4294901760
    %v2835 = vsub.f32 %v1418, %v2834
    %v2836 = vand.u32 %v2835, 4294901760
    %v2837 = vsub.f32 %v2835, %v2836
    %v2838 = vand.u32 %v2837, 4294901760
    %2839 = vmatpush1.msra.mxu0 %v2838
    %v2840 = vand.u32 %v1422, 4294901760
    %v2841 = vsub.f32 %v1422, %v2840
    %v2842 = vand.u32 %v2841, 4294901760
    %v2843 = vsub.f32 %v2841, %v2842
    %v2844 = vand.u32 %v2843, 4294901760
    %2845 = vmatprep.subr.mxu0 %v2844
    %v2846 = vand.u32 %v1421, 4294901760
    %v2847 = vsub.f32 %v1421, %v2846
    %v2848 = vand.u32 %v2847, 4294901760
    %v2849 = vsub.f32 %v2847, %v2848
    %v2850 = vand.u32 %v2849, 4294901760
    %2851 = vmatpush1.msra.mxu0 %v2850
    %v2852 = vand.u32 %v1425, 4294901760
    %v2853 = vsub.f32 %v1425, %v2852
    %v2854 = vand.u32 %v2853, 4294901760
    %v2855 = vsub.f32 %v2853, %v2854
    %v2856 = vand.u32 %v2855, 4294901760
    %2857 = vmatprep.subr.mxu0 %v2856
    %v2858 = vand.u32 %v1424, 4294901760
    %v2859 = vsub.f32 %v1424, %v2858
    %v2860 = vand.u32 %v2859, 4294901760
    %v2861 = vsub.f32 %v2859, %v2860
    %v2862 = vand.u32 %v2861, 4294901760
    %2863 = vmatpush1.msra.mxu0 %v2862
    %v2864 = vand.u32 %v1428, 4294901760
    %v2865 = vsub.f32 %v1428, %v2864
    %v2866 = vand.u32 %v2865, 4294901760
    %v2867 = vsub.f32 %v2865, %v2866
    %v2868 = vand.u32 %v2867, 4294901760
    %2869 = vmatprep.subr.mxu0 %v2868
    %v2870 = vand.u32 %v1427, 4294901760
    %v2871 = vsub.f32 %v1427, %v2870
    %v2872 = vand.u32 %v2871, 4294901760
    %v2873 = vsub.f32 %v2871, %v2872
    %v2874 = vand.u32 %v2873, 4294901760
    %2875 = vmatpush1.msra.mxu0 %v2874
    %v2876 = vand.u32 %v1431, 4294901760
    %v2877 = vsub.f32 %v1431, %v2876
    %v2878 = vand.u32 %v2877, 4294901760
    %v2879 = vsub.f32 %v2877, %v2878
    %v2880 = vand.u32 %v2879, 4294901760
    %2881 = vmatprep.subr.mxu0 %v2880
    %v2882 = vand.u32 %v1430, 4294901760
    %v2883 = vsub.f32 %v1430, %v2882
    %v2884 = vand.u32 %v2883, 4294901760
    %v2885 = vsub.f32 %v2883, %v2884
    %v2886 = vand.u32 %v2885, 4294901760
    %2887 = vmatpush1.msra.mxu0 %v2886
    %v2888 = vand.u32 %v1434, 4294901760
    %v2889 = vsub.f32 %v1434, %v2888
    %v2890 = vand.u32 %v2889, 4294901760
    %v2891 = vsub.f32 %v2889, %v2890
    %v2892 = vand.u32 %v2891, 4294901760
    %2893 = vmatprep.subr.mxu0 %v2892
    %v2894 = vand.u32 %v1433, 4294901760
    %v2895 = vsub.f32 %v1433, %v2894
    %v2896 = vand.u32 %v2895, 4294901760
    %v2897 = vsub.f32 %v2895, %v2896
    %v2898 = vand.u32 %v2897, 4294901760
    %2899 = vmatpush1.msra.mxu0 %v2898
    %v2900 = vand.u32 %v1437, 4294901760
    %v2901 = vsub.f32 %v1437, %v2900
    %v2902 = vand.u32 %v2901, 4294901760
    %v2903 = vsub.f32 %v2901, %v2902
    %v2904 = vand.u32 %v2903, 4294901760
    %2905 = vmatprep.subr.mxu0 %v2904
    %v2906 = vand.u32 %v1436, 4294901760
    %v2907 = vsub.f32 %v1436, %v2906
    %v2908 = vand.u32 %v2907, 4294901760
    %v2909 = vsub.f32 %v2907, %v2908
    %v2910 = vand.u32 %v2909, 4294901760
    %2911 = vmatpush1.msra.mxu0 %v2910
    %v2912 = vand.u32 %v1440, 4294901760
    %v2913 = vsub.f32 %v1440, %v2912
    %v2914 = vand.u32 %v2913, 4294901760
    %v2915 = vsub.f32 %v2913, %v2914
    %v2916 = vand.u32 %v2915, 4294901760
    %2917 = vmatprep.subr.mxu0 %v2916
    %v2918 = vand.u32 %v1439, 4294901760
    %v2919 = vsub.f32 %v1439, %v2918
    %v2920 = vand.u32 %v2919, 4294901760
    %v2921 = vsub.f32 %v2919, %v2920
    %v2922 = vand.u32 %v2921, 4294901760
    %2923 = vmatpush1.msra.mxu0 %v2922
    %v2924 = vand.u32 %v1443, 4294901760
    %v2925 = vsub.f32 %v1443, %v2924
    %v2926 = vand.u32 %v2925, 4294901760
    %v2927 = vsub.f32 %v2925, %v2926
    %v2928 = vand.u32 %v2927, 4294901760
    %2929 = vmatprep.subr.mxu0 %v2928
    %v2930 = vand.u32 %v1442, 4294901760
    %v2931 = vsub.f32 %v1442, %v2930
    %v2932 = vand.u32 %v2931, 4294901760
    %v2933 = vsub.f32 %v2931, %v2932
    %v2934 = vand.u32 %v2933, 4294901760
    %2935 = vmatpush1.msra.mxu0 %v2934
    %v2936 = vand.u32 %v1446, 4294901760
    %v2937 = vsub.f32 %v1446, %v2936
    %v2938 = vand.u32 %v2937, 4294901760
    %v2939 = vsub.f32 %v2937, %v2938
    %v2940 = vand.u32 %v2939, 4294901760
    %2941 = vmatprep.subr.mxu0 %v2940
    %v2942 = vand.u32 %v1445, 4294901760
    %v2943 = vsub.f32 %v1445, %v2942
    %v2944 = vand.u32 %v2943, 4294901760
    %v2945 = vsub.f32 %v2943, %v2944
    %v2946 = vand.u32 %v2945, 4294901760
    %2947 = vmatpush1.msra.mxu0 %v2946
    %v2948 = vand.u32 %v1449, 4294901760
    %v2949 = vsub.f32 %v1449, %v2948
    %v2950 = vand.u32 %v2949, 4294901760
    %v2951 = vsub.f32 %v2949, %v2950
    %v2952 = vand.u32 %v2951, 4294901760
    %2953 = vmatprep.subr.mxu0 %v2952
    %v2954 = vand.u32 %v1448, 4294901760
    %v2955 = vsub.f32 %v1448, %v2954
    %v2956 = vand.u32 %v2955, 4294901760
    %v2957 = vsub.f32 %v2955, %v2956
    %v2958 = vand.u32 %v2957, 4294901760
    %2959 = vmatpush1.msra.mxu0 %v2958
    %v2960 = vand.u32 %v1452, 4294901760
    %v2961 = vsub.f32 %v1452, %v2960
    %v2962 = vand.u32 %v2961, 4294901760
    %v2963 = vsub.f32 %v2961, %v2962
    %v2964 = vand.u32 %v2963, 4294901760
    %2965 = vmatprep.subr.mxu0 %v2964
    %v2966 = vand.u32 %v1451, 4294901760
    %v2967 = vsub.f32 %v1451, %v2966
    %v2968 = vand.u32 %v2967, 4294901760
    %v2969 = vsub.f32 %v2967, %v2968
    %v2970 = vand.u32 %v2969, 4294901760
    %2971 = vmatpush1.msra.mxu0 %v2970
    %v2972 = vand.u32 %v1455, 4294901760
    %v2973 = vsub.f32 %v1455, %v2972
    %v2974 = vand.u32 %v2973, 4294901760
    %v2975 = vsub.f32 %v2973, %v2974
    %v2976 = vand.u32 %v2975, 4294901760
    %2977 = vmatprep.subr.mxu0 %v2976
    %v2978 = vand.u32 %v1454, 4294901760
    %v2979 = vsub.f32 %v1454, %v2978
    %v2980 = vand.u32 %v2979, 4294901760
    %v2981 = vsub.f32 %v2979, %v2980
    %v2982 = vand.u32 %v2981, 4294901760
    %2983 = vmatpush1.msra.mxu0 %v2982
    %v2984 = vand.u32 %v1458, 4294901760
    %v2985 = vsub.f32 %v1458, %v2984
    %v2986 = vand.u32 %v2985, 4294901760
    %v2987 = vsub.f32 %v2985, %v2986
    %v2988 = vand.u32 %v2987, 4294901760
    %2989 = vmatprep.subr.mxu0 %v2988
    %v2990 = vand.u32 %v1457, 4294901760
    %v2991 = vsub.f32 %v1457, %v2990
    %v2992 = vand.u32 %v2991, 4294901760
    %v2993 = vsub.f32 %v2991, %v2992
    %v2994 = vand.u32 %v2993, 4294901760
    %2995 = vmatpush1.msra.mxu0 %v2994
    %v2996 = vand.u32 %v1461, 4294901760
    %v2997 = vsub.f32 %v1461, %v2996
    %v2998 = vand.u32 %v2997, 4294901760
    %v2999 = vsub.f32 %v2997, %v2998
    %v3000 = vand.u32 %v2999, 4294901760
    %3001 = vmatprep.subr.mxu0 %v3000
    %v3002 = vand.u32 %v1460, 4294901760
    %v3003 = vsub.f32 %v1460, %v3002
    %v3004 = vand.u32 %v3003, 4294901760
    %v3005 = vsub.f32 %v3003, %v3004
    %v3006 = vand.u32 %v3005, 4294901760
    %3007 = vmatpush1.msra.mxu0 %v3006
    %v3008 = vand.u32 %v1464, 4294901760
    %v3009 = vsub.f32 %v1464, %v3008
    %v3010 = vand.u32 %v3009, 4294901760
    %v3011 = vsub.f32 %v3009, %v3010
    %v3012 = vand.u32 %v3011, 4294901760
    %3013 = vmatprep.subr.mxu0 %v3012
    %v3014 = vand.u32 %v1463, 4294901760
    %v3015 = vsub.f32 %v1463, %v3014
    %v3016 = vand.u32 %v3015, 4294901760
    %v3017 = vsub.f32 %v3015, %v3016
    %v3018 = vand.u32 %v3017, 4294901760
    %3019 = vmatpush1.msra.mxu0 %v3018
    %v3020 = vand.u32 %v1367, 4294901760
    %3021 = vmatprep.mubr.f32.mxu0 %v3020
    %v3022 = vand.u32 %v1366, 4294901760
    %3023 = vmatmul.mubr.f32.gmra.mrb[0].mxu0 %v3022
    %v3024 = vpop.f32.mrb[0].mxu0
    %v3025 = vadd.f32 %v2632, %v3024
    %v3026 = vpop.f32.mrb[0].mxu0
    %v3027 = vadd.f32 %v2634, %v3026
    %3028 = vdwg.mxu0
    %v3029 = vand.u32 %v1371, 4294901760
    %v3030 = vsub.f32 %v1371, %v3029
    %3031 = vmatprep.subr.mxu0 %v3030
    %v3032 = vand.u32 %v1370, 4294901760
    %v3033 = vsub.f32 %v1370, %v3032
    %3034 = vmatpush1.msra.mxu0 %v3033
    %v3035 = vand.u32 %v1374, 4294901760
    %v3036 = vsub.f32 %v1374, %v3035
    %3037 = vmatprep.subr.mxu0 %v3036
    %v3038 = vand.u32 %v1373, 4294901760
    %v3039 = vsub.f32 %v1373, %v3038
    %3040 = vmatpush1.msra.mxu0 %v3039
    %v3041 = vand.u32 %v1377, 4294901760
    %v3042 = vsub.f32 %v1377, %v3041
    %3043 = vmatprep.subr.mxu0 %v3042
    %v3044 = vand.u32 %v1376, 4294901760
    %v3045 = vsub.f32 %v1376, %v3044
    %3046 = vmatpush1.msra.mxu0 %v3045
    %v3047 = vand.u32 %v1380, 4294901760
    %v3048 = vsub.f32 %v1380, %v3047
    %3049 = vmatprep.subr.mxu0 %v3048
    %v3050 = vand.u32 %v1379, 4294901760
    %v3051 = vsub.f32 %v1379, %v3050
    %3052 = vmatpush1.msra.mxu0 %v3051
    %v3053 = vand.u32 %v1383, 4294901760
    %v3054 = vsub.f32 %v1383, %v3053
    %3055 = vmatprep.subr.mxu0 %v3054
    %v3056 = vand.u32 %v1382, 4294901760
    %v3057 = vsub.f32 %v1382, %v3056
    %3058 = vmatpush1.msra.mxu0 %v3057
    %v3059 = vand.u32 %v1386, 4294901760
    %v3060 = vsub.f32 %v1386, %v3059
    %3061 = vmatprep.subr.mxu0 %v3060
    %v3062 = vand.u32 %v1385, 4294901760
    %v3063 = vsub.f32 %v1385, %v3062
    %3064 = vmatpush1.msra.mxu0 %v3063
    %v3065 = vand.u32 %v1389, 4294901760
    %v3066 = vsub.f32 %v1389, %v3065
    %3067 = vmatprep.subr.mxu0 %v3066
    %v3068 = vand.u32 %v1388, 4294901760
    %v3069 = vsub.f32 %v1388, %v3068
    %3070 = vmatpush1.msra.mxu0 %v3069
    %v3071 = vand.u32 %v1392, 4294901760
    %v3072 = vsub.f32 %v1392, %v3071
    %3073 = vmatprep.subr.mxu0 %v3072
    %v3074 = vand.u32 %v1391, 4294901760
    %v3075 = vsub.f32 %v1391, %v3074
    %3076 = vmatpush1.msra.mxu0 %v3075
    %v3077 = vand.u32 %v1395, 4294901760
    %v3078 = vsub.f32 %v1395, %v3077
    %3079 = vmatprep.subr.mxu0 %v3078
    %v3080 = vand.u32 %v1394, 4294901760
    %v3081 = vsub.f32 %v1394, %v3080
    %3082 = vmatpush1.msra.mxu0 %v3081
    %v3083 = vand.u32 %v1398, 4294901760
    %v3084 = vsub.f32 %v1398, %v3083
    %3085 = vmatprep.subr.mxu0 %v3084
    %v3086 = vand.u32 %v1397, 4294901760
    %v3087 = vsub.f32 %v1397, %v3086
    %3088 = vmatpush1.msra.mxu0 %v3087
    %v3089 = vand.u32 %v1401, 4294901760
    %v3090 = vsub.f32 %v1401, %v3089
    %3091 = vmatprep.subr.mxu0 %v3090
    %v3092 = vand.u32 %v1400, 4294901760
    %v3093 = vsub.f32 %v1400, %v3092
    %3094 = vmatpush1.msra.mxu0 %v3093
    %v3095 = vand.u32 %v1404, 4294901760
    %v3096 = vsub.f32 %v1404, %v3095
    %3097 = vmatprep.subr.mxu0 %v3096
    %v3098 = vand.u32 %v1403, 4294901760
    %v3099 = vsub.f32 %v1403, %v3098
    %3100 = vmatpush1.msra.mxu0 %v3099
    %v3101 = vand.u32 %v1407, 4294901760
    %v3102 = vsub.f32 %v1407, %v3101
    %3103 = vmatprep.subr.mxu0 %v3102
    %v3104 = vand.u32 %v1406, 4294901760
    %v3105 = vsub.f32 %v1406, %v3104
    %3106 = vmatpush1.msra.mxu0 %v3105
    %v3107 = vand.u32 %v1410, 4294901760
    %v3108 = vsub.f32 %v1410, %v3107
    %3109 = vmatprep.subr.mxu0 %v3108
    %v3110 = vand.u32 %v1409, 4294901760
    %v3111 = vsub.f32 %v1409, %v3110
    %3112 = vmatpush1.msra.mxu0 %v3111
    %v3113 = vand.u32 %v1413, 4294901760
    %v3114 = vsub.f32 %v1413, %v3113
    %3115 = vmatprep.subr.mxu0 %v3114
    %v3116 = vand.u32 %v1412, 4294901760
    %v3117 = vsub.f32 %v1412, %v3116
    %3118 = vmatpush1.msra.mxu0 %v3117
    %v3119 = vand.u32 %v1416, 4294901760
    %v3120 = vsub.f32 %v1416, %v3119
    %3121 = vmatprep.subr.mxu0 %v3120
    %v3122 = vand.u32 %v1415, 4294901760
    %v3123 = vsub.f32 %v1415, %v3122
    %3124 = vmatpush1.msra.mxu0 %v3123
    %v3125 = vand.u32 %v1419, 4294901760
    %v3126 = vsub.f32 %v1419, %v3125
    %3127 = vmatprep.subr.mxu0 %v3126
    %v3128 = vand.u32 %v1418, 4294901760
    %v3129 = vsub.f32 %v1418, %v3128
    %3130 = vmatpush1.msra.mxu0 %v3129
    %v3131 = vand.u32 %v1422, 4294901760
    %v3132 = vsub.f32 %v1422, %v3131
    %3133 = vmatprep.subr.mxu0 %v3132
    %v3134 = vand.u32 %v1421, 4294901760
    %v3135 = vsub.f32 %v1421, %v3134
    %3136 = vmatpush1.msra.mxu0 %v3135
    %v3137 = vand.u32 %v1425, 4294901760
    %v3138 = vsub.f32 %v1425, %v3137
    %3139 = vmatprep.subr.mxu0 %v3138
    %v3140 = vand.u32 %v1424, 4294901760
    %v3141 = vsub.f32 %v1424, %v3140
    %3142 = vmatpush1.msra.mxu0 %v3141
    %v3143 = vand.u32 %v1428, 4294901760
    %v3144 = vsub.f32 %v1428, %v3143
    %3145 = vmatprep.subr.mxu0 %v3144
    %v3146 = vand.u32 %v1427, 4294901760
    %v3147 = vsub.f32 %v1427, %v3146
    %3148 = vmatpush1.msra.mxu0 %v3147
    %v3149 = vand.u32 %v1431, 4294901760
    %v3150 = vsub.f32 %v1431, %v3149
    %3151 = vmatprep.subr.mxu0 %v3150
    %v3152 = vand.u32 %v1430, 4294901760
    %v3153 = vsub.f32 %v1430, %v3152
    %3154 = vmatpush1.msra.mxu0 %v3153
    %v3155 = vand.u32 %v1434, 4294901760
    %v3156 = vsub.f32 %v1434, %v3155
    %3157 = vmatprep.subr.mxu0 %v3156
    %v3158 = vand.u32 %v1433, 4294901760
    %v3159 = vsub.f32 %v1433, %v3158
    %3160 = vmatpush1.msra.mxu0 %v3159
    %v3161 = vand.u32 %v1437, 4294901760
    %v3162 = vsub.f32 %v1437, %v3161
    %3163 = vmatprep.subr.mxu0 %v3162
    %v3164 = vand.u32 %v1436, 4294901760
    %v3165 = vsub.f32 %v1436, %v3164
    %3166 = vmatpush1.msra.mxu0 %v3165
    %v3167 = vand.u32 %v1440, 4294901760
    %v3168 = vsub.f32 %v1440, %v3167
    %3169 = vmatprep.subr.mxu0 %v3168
    %v3170 = vand.u32 %v1439, 4294901760
    %v3171 = vsub.f32 %v1439, %v3170
    %3172 = vmatpush1.msra.mxu0 %v3171
    %v3173 = vand.u32 %v1443, 4294901760
    %v3174 = vsub.f32 %v1443, %v3173
    %3175 = vmatprep.subr.mxu0 %v3174
    %v3176 = vand.u32 %v1442, 4294901760
    %v3177 = vsub.f32 %v1442, %v3176
    %3178 = vmatpush1.msra.mxu0 %v3177
    %v3179 = vand.u32 %v1446, 4294901760
    %v3180 = vsub.f32 %v1446, %v3179
    %3181 = vmatprep.subr.mxu0 %v3180
    %v3182 = vand.u32 %v1445, 4294901760
    %v3183 = vsub.f32 %v1445, %v3182
    %3184 = vmatpush1.msra.mxu0 %v3183
    %v3185 = vand.u32 %v1449, 4294901760
    %v3186 = vsub.f32 %v1449, %v3185
    %3187 = vmatprep.subr.mxu0 %v3186
    %v3188 = vand.u32 %v1448, 4294901760
    %v3189 = vsub.f32 %v1448, %v3188
    %3190 = vmatpush1.msra.mxu0 %v3189
    %v3191 = vand.u32 %v1452, 4294901760
    %v3192 = vsub.f32 %v1452, %v3191
    %3193 = vmatprep.subr.mxu0 %v3192
    %v3194 = vand.u32 %v1451, 4294901760
    %v3195 = vsub.f32 %v1451, %v3194
    %3196 = vmatpush1.msra.mxu0 %v3195
    %v3197 = vand.u32 %v1455, 4294901760
    %v3198 = vsub.f32 %v1455, %v3197
    %3199 = vmatprep.subr.mxu0 %v3198
    %v3200 = vand.u32 %v1454, 4294901760
    %v3201 = vsub.f32 %v1454, %v3200
    %3202 = vmatpush1.msra.mxu0 %v3201
    %v3203 = vand.u32 %v1458, 4294901760
    %v3204 = vsub.f32 %v1458, %v3203
    %3205 = vmatprep.subr.mxu0 %v3204
    %v3206 = vand.u32 %v1457, 4294901760
    %v3207 = vsub.f32 %v1457, %v3206
    %3208 = vmatpush1.msra.mxu0 %v3207
    %v3209 = vand.u32 %v1461, 4294901760
    %v3210 = vsub.f32 %v1461, %v3209
    %3211 = vmatprep.subr.mxu0 %v3210
    %v3212 = vand.u32 %v1460, 4294901760
    %v3213 = vsub.f32 %v1460, %v3212
    %3214 = vmatpush1.msra.mxu0 %v3213
    %v3215 = vand.u32 %v1464, 4294901760
    %v3216 = vsub.f32 %v1464, %v3215
    %3217 = vmatprep.subr.mxu0 %v3216
    %v3218 = vand.u32 %v1463, 4294901760
    %v3219 = vsub.f32 %v1463, %v3218
    %3220 = vmatpush1.msra.mxu0 %v3219
    %v3221 = vand.u32 %v1367, 4294901760
    %v3222 = vsub.f32 %v1367, %v3221
    %3223 = vmatprep.mubr.f32.mxu0 %v3222
    %v3224 = vand.u32 %v1366, 4294901760
    %v3225 = vsub.f32 %v1366, %v3224
    %3226 = vmatmul.mubr.f32.gmra.mrb[0].mxu0 %v3225
    %v3227 = vpop.f32.mrb[0].mxu0
    %v3228 = vadd.f32 %v3025, %v3227
    %v3229 = vpop.f32.mrb[0].mxu0
    %v3230 = vadd.f32 %v3027, %v3229
    %3231 = vdwg.mxu0
    %v3232 = vand.u32 %v1371, 4294901760
    %3233 = vmatprep.subr.mxu0 %v3232
    %v3234 = vand.u32 %v1370, 4294901760
    %3235 = vmatpush1.msra.mxu0 %v3234
    %v3236 = vand.u32 %v1374, 4294901760
    %3237 = vmatprep.subr.mxu0 %v3236
    %v3238 = vand.u32 %v1373, 4294901760
    %3239 = vmatpush1.msra.mxu0 %v3238
    %v3240 = vand.u32 %v1377, 4294901760
    %3241 = vmatprep.subr.mxu0 %v3240
    %v3242 = vand.u32 %v1376, 4294901760
    %3243 = vmatpush1.msra.mxu0 %v3242
    %v3244 = vand.u32 %v1380, 4294901760
    %3245 = vmatprep.subr.mxu0 %v3244
    %v3246 = vand.u32 %v1379, 4294901760
    %3247 = vmatpush1.msra.mxu0 %v3246
    %v3248 = vand.u32 %v1383, 4294901760
    %3249 = vmatprep.subr.mxu0 %v3248
    %v3250 = vand.u32 %v1382, 4294901760
    %3251 = vmatpush1.msra.mxu0 %v3250
    %v3252 = vand.u32 %v1386, 4294901760
    %3253 = vmatprep.subr.mxu0 %v3252
    %v3254 = vand.u32 %v1385, 4294901760
    %3255 = vmatpush1.msra.mxu0 %v3254
    %v3256 = vand.u32 %v1389, 4294901760
    %3257 = vmatprep.subr.mxu0 %v3256
    %v3258 = vand.u32 %v1388, 4294901760
    %3259 = vmatpush1.msra.mxu0 %v3258
    %v3260 = vand.u32 %v1392, 4294901760
    %3261 = vmatprep.subr.mxu0 %v3260
    %v3262 = vand.u32 %v1391, 4294901760
    %3263 = vmatpush1.msra.mxu0 %v3262
    %v3264 = vand.u32 %v1395, 4294901760
    %3265 = vmatprep.subr.mxu0 %v3264
    %v3266 = vand.u32 %v1394, 4294901760
    %3267 = vmatpush1.msra.mxu0 %v3266
    %v3268 = vand.u32 %v1398, 4294901760
    %3269 = vmatprep.subr.mxu0 %v3268
    %v3270 = vand.u32 %v1397, 4294901760
    %3271 = vmatpush1.msra.mxu0 %v3270
    %v3272 = vand.u32 %v1401, 4294901760
    %3273 = vmatprep.subr.mxu0 %v3272
    %v3274 = vand.u32 %v1400, 4294901760
    %3275 = vmatpush1.msra.mxu0 %v3274
    %v3276 = vand.u32 %v1404, 4294901760
    %3277 = vmatprep.subr.mxu0 %v3276
    %v3278 = vand.u32 %v1403, 4294901760
    %3279 = vmatpush1.msra.mxu0 %v3278
    %v3280 = vand.u32 %v1407, 4294901760
    %3281 = vmatprep.subr.mxu0 %v3280
    %v3282 = vand.u32 %v1406, 4294901760
    %3283 = vmatpush1.msra.mxu0 %v3282
    %v3284 = vand.u32 %v1410, 4294901760
    %3285 = vmatprep.subr.mxu0 %v3284
    %v3286 = vand.u32 %v1409, 4294901760
    %3287 = vmatpush1.msra.mxu0 %v3286
    %v3288 = vand.u32 %v1413, 4294901760
    %3289 = vmatprep.subr.mxu0 %v3288
    %v3290 = vand.u32 %v1412, 4294901760
    %3291 = vmatpush1.msra.mxu0 %v3290
    %v3292 = vand.u32 %v1416, 4294901760
    %3293 = vmatprep.subr.mxu0 %v3292
    %v3294 = vand.u32 %v1415, 4294901760
    %3295 = vmatpush1.msra.mxu0 %v3294
    %v3296 = vand.u32 %v1419, 4294901760
    %3297 = vmatprep.subr.mxu0 %v3296
    %v3298 = vand.u32 %v1418, 4294901760
    %3299 = vmatpush1.msra.mxu0 %v3298
    %v3300 = vand.u32 %v1422, 4294901760
    %3301 = vmatprep.subr.mxu0 %v3300
    %v3302 = vand.u32 %v1421, 4294901760
    %3303 = vmatpush1.msra.mxu0 %v3302
    %v3304 = vand.u32 %v1425, 4294901760
    %3305 = vmatprep.subr.mxu0 %v3304
    %v3306 = vand.u32 %v1424, 4294901760
    %3307 = vmatpush1.msra.mxu0 %v3306
    %v3308 = vand.u32 %v1428, 4294901760
    %3309 = vmatprep.subr.mxu0 %v3308
    %v3310 = vand.u32 %v1427, 4294901760
    %3311 = vmatpush1.msra.mxu0 %v3310
    %v3312 = vand.u32 %v1431, 4294901760
    %3313 = vmatprep.subr.mxu0 %v3312
    %v3314 = vand.u32 %v1430, 4294901760
    %3315 = vmatpush1.msra.mxu0 %v3314
    %v3316 = vand.u32 %v1434, 4294901760
    %3317 = vmatprep.subr.mxu0 %v3316
    %v3318 = vand.u32 %v1433, 4294901760
    %3319 = vmatpush1.msra.mxu0 %v3318
    %v3320 = vand.u32 %v1437, 4294901760
    %3321 = vmatprep.subr.mxu0 %v3320
    %v3322 = vand.u32 %v1436, 4294901760
    %3323 = vmatpush1.msra.mxu0 %v3322
    %v3324 = vand.u32 %v1440, 4294901760
    %3325 = vmatprep.subr.mxu0 %v3324
    %v3326 = vand.u32 %v1439, 4294901760
    %3327 = vmatpush1.msra.mxu0 %v3326
    %v3328 = vand.u32 %v1443, 4294901760
    %3329 = vmatprep.subr.mxu0 %v3328
    %v3330 = vand.u32 %v1442, 4294901760
    %3331 = vmatpush1.msra.mxu0 %v3330
    %v3332 = vand.u32 %v1446, 4294901760
    %3333 = vmatprep.subr.mxu0 %v3332
    %v3334 = vand.u32 %v1445, 4294901760
    %3335 = vmatpush1.msra.mxu0 %v3334
    %v3336 = vand.u32 %v1449, 4294901760
    %3337 = vmatprep.subr.mxu0 %v3336
    %v3338 = vand.u32 %v1448, 4294901760
    %3339 = vmatpush1.msra.mxu0 %v3338
    %v3340 = vand.u32 %v1452, 4294901760
    %3341 = vmatprep.subr.mxu0 %v3340
    %v3342 = vand.u32 %v1451, 4294901760
    %3343 = vmatpush1.msra.mxu0 %v3342
    %v3344 = vand.u32 %v1455, 4294901760
    %3345 = vmatprep.subr.mxu0 %v3344
    %v3346 = vand.u32 %v1454, 4294901760
    %3347 = vmatpush1.msra.mxu0 %v3346
    %v3348 = vand.u32 %v1458, 4294901760
    %3349 = vmatprep.subr.mxu0 %v3348
    %v3350 = vand.u32 %v1457, 4294901760
    %3351 = vmatpush1.msra.mxu0 %v3350
    %v3352 = vand.u32 %v1461, 4294901760
    %3353 = vmatprep.subr.mxu0 %v3352
    %v3354 = vand.u32 %v1460, 4294901760
    %3355 = vmatpush1.msra.mxu0 %v3354
    %v3356 = vand.u32 %v1464, 4294901760
    %3357 = vmatprep.subr.mxu0 %v3356
    %v3358 = vand.u32 %v1463, 4294901760
    %3359 = vmatpush1.msra.mxu0 %v3358
    %v3360 = vand.u32 %v1367, 4294901760
    %v3361 = vsub.f32 %v1367, %v3360
    %v3362 = vand.u32 %v3361, 4294901760
    %3363 = vmatprep.mubr.f32.mxu0 %v3362
    %v3364 = vand.u32 %v1366, 4294901760
    %v3365 = vsub.f32 %v1366, %v3364
    %v3366 = vand.u32 %v3365, 4294901760
    %3367 = vmatmul.mubr.f32.gmra.mrb[0].mxu0 %v3366
    %v3368 = vpop.f32.mrb[0].mxu0
    %v3369 = vadd.f32 %v3228, %v3368
    %v3370 = vpop.f32.mrb[0].mxu0
    %v3371 = vadd.f32 %v3230, %v3370
    %3372 = vdwg.mxu0
    %v3373 = vand.u32 %v1371, 4294901760
    %v3374 = vsub.f32 %v1371, %v3373
    %v3375 = vand.u32 %v3374, 4294901760
    %3376 = vmatprep.subr.mxu0 %v3375
    %v3377 = vand.u32 %v1370, 4294901760
    %v3378 = vsub.f32 %v1370, %v3377
    %v3379 = vand.u32 %v3378, 4294901760
    %3380 = vmatpush1.msra.mxu0 %v3379
    %v3381 = vand.u32 %v1374, 4294901760
    %v3382 = vsub.f32 %v1374, %v3381
    %v3383 = vand.u32 %v3382, 4294901760
    %3384 = vmatprep.subr.mxu0 %v3383
    %v3385 = vand.u32 %v1373, 4294901760
    %v3386 = vsub.f32 %v1373, %v3385
    %v3387 = vand.u32 %v3386, 4294901760
    %3388 = vmatpush1.msra.mxu0 %v3387
    %v3389 = vand.u32 %v1377, 4294901760
    %v3390 = vsub.f32 %v1377, %v3389
    %v3391 = vand.u32 %v3390, 4294901760
    %3392 = vmatprep.subr.mxu0 %v3391
    %v3393 = vand.u32 %v1376, 4294901760
    %v3394 = vsub.f32 %v1376, %v3393
    %v3395 = vand.u32 %v3394, 4294901760
    %3396 = vmatpush1.msra.mxu0 %v3395
    %v3397 = vand.u32 %v1380, 4294901760
    %v3398 = vsub.f32 %v1380, %v3397
    %v3399 = vand.u32 %v3398, 4294901760
    %3400 = vmatprep.subr.mxu0 %v3399
    %v3401 = vand.u32 %v1379, 4294901760
    %v3402 = vsub.f32 %v1379, %v3401
    %v3403 = vand.u32 %v3402, 4294901760
    %3404 = vmatpush1.msra.mxu0 %v3403
    %v3405 = vand.u32 %v1383, 4294901760
    %v3406 = vsub.f32 %v1383, %v3405
    %v3407 = vand.u32 %v3406, 4294901760
    %3408 = vmatprep.subr.mxu0 %v3407
    %v3409 = vand.u32 %v1382, 4294901760
    %v3410 = vsub.f32 %v1382, %v3409
    %v3411 = vand.u32 %v3410, 4294901760
    %3412 = vmatpush1.msra.mxu0 %v3411
    %v3413 = vand.u32 %v1386, 4294901760
    %v3414 = vsub.f32 %v1386, %v3413
    %v3415 = vand.u32 %v3414, 4294901760
    %3416 = vmatprep.subr.mxu0 %v3415
    %v3417 = vand.u32 %v1385, 4294901760
    %v3418 = vsub.f32 %v1385, %v3417
    %v3419 = vand.u32 %v3418, 4294901760
    %3420 = vmatpush1.msra.mxu0 %v3419
    %v3421 = vand.u32 %v1389, 4294901760
    %v3422 = vsub.f32 %v1389, %v3421
    %v3423 = vand.u32 %v3422, 4294901760
    %3424 = vmatprep.subr.mxu0 %v3423
    %v3425 = vand.u32 %v1388, 4294901760
    %v3426 = vsub.f32 %v1388, %v3425
    %v3427 = vand.u32 %v3426, 4294901760
    %3428 = vmatpush1.msra.mxu0 %v3427
    %v3429 = vand.u32 %v1392, 4294901760
    %v3430 = vsub.f32 %v1392, %v3429
    %v3431 = vand.u32 %v3430, 4294901760
    %3432 = vmatprep.subr.mxu0 %v3431
    %v3433 = vand.u32 %v1391, 4294901760
    %v3434 = vsub.f32 %v1391, %v3433
    %v3435 = vand.u32 %v3434, 4294901760
    %3436 = vmatpush1.msra.mxu0 %v3435
    %v3437 = vand.u32 %v1395, 4294901760
    %v3438 = vsub.f32 %v1395, %v3437
    %v3439 = vand.u32 %v3438, 4294901760
    %3440 = vmatprep.subr.mxu0 %v3439
    %v3441 = vand.u32 %v1394, 4294901760
    %v3442 = vsub.f32 %v1394, %v3441
    %v3443 = vand.u32 %v3442, 4294901760
    %3444 = vmatpush1.msra.mxu0 %v3443
    %v3445 = vand.u32 %v1398, 4294901760
    %v3446 = vsub.f32 %v1398, %v3445
    %v3447 = vand.u32 %v3446, 4294901760
    %3448 = vmatprep.subr.mxu0 %v3447
    %v3449 = vand.u32 %v1397, 4294901760
    %v3450 = vsub.f32 %v1397, %v3449
    %v3451 = vand.u32 %v3450, 4294901760
    %3452 = vmatpush1.msra.mxu0 %v3451
    %v3453 = vand.u32 %v1401, 4294901760
    %v3454 = vsub.f32 %v1401, %v3453
    %v3455 = vand.u32 %v3454, 4294901760
    %3456 = vmatprep.subr.mxu0 %v3455
    %v3457 = vand.u32 %v1400, 4294901760
    %v3458 = vsub.f32 %v1400, %v3457
    %v3459 = vand.u32 %v3458, 4294901760
    %3460 = vmatpush1.msra.mxu0 %v3459
    %v3461 = vand.u32 %v1404, 4294901760
    %v3462 = vsub.f32 %v1404, %v3461
    %v3463 = vand.u32 %v3462, 4294901760
    %3464 = vmatprep.subr.mxu0 %v3463
    %v3465 = vand.u32 %v1403, 4294901760
    %v3466 = vsub.f32 %v1403, %v3465
    %v3467 = vand.u32 %v3466, 4294901760
    %3468 = vmatpush1.msra.mxu0 %v3467
    %v3469 = vand.u32 %v1407, 4294901760
    %v3470 = vsub.f32 %v1407, %v3469
    %v3471 = vand.u32 %v3470, 4294901760
    %3472 = vmatprep.subr.mxu0 %v3471
    %v3473 = vand.u32 %v1406, 4294901760
    %v3474 = vsub.f32 %v1406, %v3473
    %v3475 = vand.u32 %v3474, 4294901760
    %3476 = vmatpush1.msra.mxu0 %v3475
    %v3477 = vand.u32 %v1410, 4294901760
    %v3478 = vsub.f32 %v1410, %v3477
    %v3479 = vand.u32 %v3478, 4294901760
    %3480 = vmatprep.subr.mxu0 %v3479
    %v3481 = vand.u32 %v1409, 4294901760
    %v3482 = vsub.f32 %v1409, %v3481
    %v3483 = vand.u32 %v3482, 4294901760
    %3484 = vmatpush1.msra.mxu0 %v3483
    %v3485 = vand.u32 %v1413, 4294901760
    %v3486 = vsub.f32 %v1413, %v3485
    %v3487 = vand.u32 %v3486, 4294901760
    %3488 = vmatprep.subr.mxu0 %v3487
    %v3489 = vand.u32 %v1412, 4294901760
    %v3490 = vsub.f32 %v1412, %v3489
    %v3491 = vand.u32 %v3490, 4294901760
    %3492 = vmatpush1.msra.mxu0 %v3491
    %v3493 = vand.u32 %v1416, 4294901760
    %v3494 = vsub.f32 %v1416, %v3493
    %v3495 = vand.u32 %v3494, 4294901760
    %3496 = vmatprep.subr.mxu0 %v3495
    %v3497 = vand.u32 %v1415, 4294901760
    %v3498 = vsub.f32 %v1415, %v3497
    %v3499 = vand.u32 %v3498, 4294901760
    %3500 = vmatpush1.msra.mxu0 %v3499
    %v3501 = vand.u32 %v1419, 4294901760
    %v3502 = vsub.f32 %v1419, %v3501
    %v3503 = vand.u32 %v3502, 4294901760
    %3504 = vmatprep.subr.mxu0 %v3503
    %v3505 = vand.u32 %v1418, 4294901760
    %v3506 = vsub.f32 %v1418, %v3505
    %v3507 = vand.u32 %v3506, 4294901760
    %3508 = vmatpush1.msra.mxu0 %v3507
    %v3509 = vand.u32 %v1422, 4294901760
    %v3510 = vsub.f32 %v1422, %v3509
    %v3511 = vand.u32 %v3510, 4294901760
    %3512 = vmatprep.subr.mxu0 %v3511
    %v3513 = vand.u32 %v1421, 4294901760
    %v3514 = vsub.f32 %v1421, %v3513
    %v3515 = vand.u32 %v3514, 4294901760
    %3516 = vmatpush1.msra.mxu0 %v3515
    %v3517 = vand.u32 %v1425, 4294901760
    %v3518 = vsub.f32 %v1425, %v3517
    %v3519 = vand.u32 %v3518, 4294901760
    %3520 = vmatprep.subr.mxu0 %v3519
    %v3521 = vand.u32 %v1424, 4294901760
    %v3522 = vsub.f32 %v1424, %v3521
    %v3523 = vand.u32 %v3522, 4294901760
    %3524 = vmatpush1.msra.mxu0 %v3523
    %v3525 = vand.u32 %v1428, 4294901760
    %v3526 = vsub.f32 %v1428, %v3525
    %v3527 = vand.u32 %v3526, 4294901760
    %3528 = vmatprep.subr.mxu0 %v3527
    %v3529 = vand.u32 %v1427, 4294901760
    %v3530 = vsub.f32 %v1427, %v3529
    %v3531 = vand.u32 %v3530, 4294901760
    %3532 = vmatpush1.msra.mxu0 %v3531
    %v3533 = vand.u32 %v1431, 4294901760
    %v3534 = vsub.f32 %v1431, %v3533
    %v3535 = vand.u32 %v3534, 4294901760
    %3536 = vmatprep.subr.mxu0 %v3535
    %v3537 = vand.u32 %v1430, 4294901760
    %v3538 = vsub.f32 %v1430, %v3537
    %v3539 = vand.u32 %v3538, 4294901760
    %3540 = vmatpush1.msra.mxu0 %v3539
    %v3541 = vand.u32 %v1434, 4294901760
    %v3542 = vsub.f32 %v1434, %v3541
    %v3543 = vand.u32 %v3542, 4294901760
    %3544 = vmatprep.subr.mxu0 %v3543
    %v3545 = vand.u32 %v1433, 4294901760
    %v3546 = vsub.f32 %v1433, %v3545
    %v3547 = vand.u32 %v3546, 4294901760
    %3548 = vmatpush1.msra.mxu0 %v3547
    %v3549 = vand.u32 %v1437, 4294901760
    %v3550 = vsub.f32 %v1437, %v3549
    %v3551 = vand.u32 %v3550, 4294901760
    %3552 = vmatprep.subr.mxu0 %v3551
    %v3553 = vand.u32 %v1436, 4294901760
    %v3554 = vsub.f32 %v1436, %v3553
    %v3555 = vand.u32 %v3554, 4294901760
    %3556 = vmatpush1.msra.mxu0 %v3555
    %v3557 = vand.u32 %v1440, 4294901760
    %v3558 = vsub.f32 %v1440, %v3557
    %v3559 = vand.u32 %v3558, 4294901760
    %3560 = vmatprep.subr.mxu0 %v3559
    %v3561 = vand.u32 %v1439, 4294901760
    %v3562 = vsub.f32 %v1439, %v3561
    %v3563 = vand.u32 %v3562, 4294901760
    %3564 = vmatpush1.msra.mxu0 %v3563
    %v3565 = vand.u32 %v1443, 4294901760
    %v3566 = vsub.f32 %v1443, %v3565
    %v3567 = vand.u32 %v3566, 4294901760
    %3568 = vmatprep.subr.mxu0 %v3567
    %v3569 = vand.u32 %v1442, 4294901760
    %v3570 = vsub.f32 %v1442, %v3569
    %v3571 = vand.u32 %v3570, 4294901760
    %3572 = vmatpush1.msra.mxu0 %v3571
    %v3573 = vand.u32 %v1446, 4294901760
    %v3574 = vsub.f32 %v1446, %v3573
    %v3575 = vand.u32 %v3574, 4294901760
    %3576 = vmatprep.subr.mxu0 %v3575
    %v3577 = vand.u32 %v1445, 4294901760
    %v3578 = vsub.f32 %v1445, %v3577
    %v3579 = vand.u32 %v3578, 4294901760
    %3580 = vmatpush1.msra.mxu0 %v3579
    %v3581 = vand.u32 %v1449, 4294901760
    %v3582 = vsub.f32 %v1449, %v3581
    %v3583 = vand.u32 %v3582, 4294901760
    %3584 = vmatprep.subr.mxu0 %v3583
    %v3585 = vand.u32 %v1448, 4294901760
    %v3586 = vsub.f32 %v1448, %v3585
    %v3587 = vand.u32 %v3586, 4294901760
    %3588 = vmatpush1.msra.mxu0 %v3587
    %v3589 = vand.u32 %v1452, 4294901760
    %v3590 = vsub.f32 %v1452, %v3589
    %v3591 = vand.u32 %v3590, 4294901760
    %3592 = vmatprep.subr.mxu0 %v3591
    %v3593 = vand.u32 %v1451, 4294901760
    %v3594 = vsub.f32 %v1451, %v3593
    %v3595 = vand.u32 %v3594, 4294901760
    %3596 = vmatpush1.msra.mxu0 %v3595
    %v3597 = vand.u32 %v1455, 4294901760
    %v3598 = vsub.f32 %v1455, %v3597
    %v3599 = vand.u32 %v3598, 4294901760
    %3600 = vmatprep.subr.mxu0 %v3599
    %v3601 = vand.u32 %v1454, 4294901760
    %v3602 = vsub.f32 %v1454, %v3601
    %v3603 = vand.u32 %v3602, 4294901760
    %3604 = vmatpush1.msra.mxu0 %v3603
    %v3605 = vand.u32 %v1458, 4294901760
    %v3606 = vsub.f32 %v1458, %v3605
    %v3607 = vand.u32 %v3606, 4294901760
    %3608 = vmatprep.subr.mxu0 %v3607
    %v3609 = vand.u32 %v1457, 4294901760
    %v3610 = vsub.f32 %v1457, %v3609
    %v3611 = vand.u32 %v3610, 4294901760
    %3612 = vmatpush1.msra.mxu0 %v3611
    %v3613 = vand.u32 %v1461, 4294901760
    %v3614 = vsub.f32 %v1461, %v3613
    %v3615 = vand.u32 %v3614, 4294901760
    %3616 = vmatprep.subr.mxu0 %v3615
    %v3617 = vand.u32 %v1460, 4294901760
    %v3618 = vsub.f32 %v1460, %v3617
    %v3619 = vand.u32 %v3618, 4294901760
    %3620 = vmatpush1.msra.mxu0 %v3619
    %v3621 = vand.u32 %v1464, 4294901760
    %v3622 = vsub.f32 %v1464, %v3621
    %v3623 = vand.u32 %v3622, 4294901760
    %3624 = vmatprep.subr.mxu0 %v3623
    %v3625 = vand.u32 %v1463, 4294901760
    %v3626 = vsub.f32 %v1463, %v3625
    %v3627 = vand.u32 %v3626, 4294901760
    %3628 = vmatpush1.msra.mxu0 %v3627
    %v3629 = vand.u32 %v1367, 4294901760
    %3630 = vmatprep.mubr.f32.mxu0 %v3629
    %v3631 = vand.u32 %v1366, 4294901760
    %3632 = vmatmul.mubr.f32.gmra.mrb[0].mxu0 %v3631
    %v3633 = vpop.f32.mrb[0].mxu0
    %v3634 = vadd.f32 %v3369, %v3633
    %v3635 = vpop.f32.mrb[0].mxu0
    %v3636 = vadd.f32 %v3371, %v3635
    %3637 = vdwg.mxu0
    %v3638 = vand.u32 %v1371, 4294901760
    %3639 = vmatprep.subr.mxu0 %v3638
    %v3640 = vand.u32 %v1370, 4294901760
    %3641 = vmatpush1.msra.mxu0 %v3640
    %v3642 = vand.u32 %v1374, 4294901760
    %3643 = vmatprep.subr.mxu0 %v3642
    %v3644 = vand.u32 %v1373, 4294901760
    %3645 = vmatpush1.msra.mxu0 %v3644
    %v3646 = vand.u32 %v1377, 4294901760
    %3647 = vmatprep.subr.mxu0 %v3646
    %v3648 = vand.u32 %v1376, 4294901760
    %3649 = vmatpush1.msra.mxu0 %v3648
    %v3650 = vand.u32 %v1380, 4294901760
    %3651 = vmatprep.subr.mxu0 %v3650
    %v3652 = vand.u32 %v1379, 4294901760
    %3653 = vmatpush1.msra.mxu0 %v3652
    %v3654 = vand.u32 %v1383, 4294901760
    %3655 = vmatprep.subr.mxu0 %v3654
    %v3656 = vand.u32 %v1382, 4294901760
    %3657 = vmatpush1.msra.mxu0 %v3656
    %v3658 = vand.u32 %v1386, 4294901760
    %3659 = vmatprep.subr.mxu0 %v3658
    %v3660 = vand.u32 %v1385, 4294901760
    %3661 = vmatpush1.msra.mxu0 %v3660
    %v3662 = vand.u32 %v1389, 4294901760
    %3663 = vmatprep.subr.mxu0 %v3662
    %v3664 = vand.u32 %v1388, 4294901760
    %3665 = vmatpush1.msra.mxu0 %v3664
    %v3666 = vand.u32 %v1392, 4294901760
    %3667 = vmatprep.subr.mxu0 %v3666
    %v3668 = vand.u32 %v1391, 4294901760
    %3669 = vmatpush1.msra.mxu0 %v3668
    %v3670 = vand.u32 %v1395, 4294901760
    %3671 = vmatprep.subr.mxu0 %v3670
    %v3672 = vand.u32 %v1394, 4294901760
    %3673 = vmatpush1.msra.mxu0 %v3672
    %v3674 = vand.u32 %v1398, 4294901760
    %3675 = vmatprep.subr.mxu0 %v3674
    %v3676 = vand.u32 %v1397, 4294901760
    %3677 = vmatpush1.msra.mxu0 %v3676
    %v3678 = vand.u32 %v1401, 4294901760
    %3679 = vmatprep.subr.mxu0 %v3678
    %v3680 = vand.u32 %v1400, 4294901760
    %3681 = vmatpush1.msra.mxu0 %v3680
    %v3682 = vand.u32 %v1404, 4294901760
    %3683 = vmatprep.subr.mxu0 %v3682
    %v3684 = vand.u32 %v1403, 4294901760
    %3685 = vmatpush1.msra.mxu0 %v3684
    %v3686 = vand.u32 %v1407, 4294901760
    %3687 = vmatprep.subr.mxu0 %v3686
    %v3688 = vand.u32 %v1406, 4294901760
    %3689 = vmatpush1.msra.mxu0 %v3688
    %v3690 = vand.u32 %v1410, 4294901760
    %3691 = vmatprep.subr.mxu0 %v3690
    %v3692 = vand.u32 %v1409, 4294901760
    %3693 = vmatpush1.msra.mxu0 %v3692
    %v3694 = vand.u32 %v1413, 4294901760
    %3695 = vmatprep.subr.mxu0 %v3694
    %v3696 = vand.u32 %v1412, 4294901760
    %3697 = vmatpush1.msra.mxu0 %v3696
    %v3698 = vand.u32 %v1416, 4294901760
    %3699 = vmatprep.subr.mxu0 %v3698
    %v3700 = vand.u32 %v1415, 4294901760
    %3701 = vmatpush1.msra.mxu0 %v3700
    %v3702 = vand.u32 %v1419, 4294901760
    %3703 = vmatprep.subr.mxu0 %v3702
    %v3704 = vand.u32 %v1418, 4294901760
    %3705 = vmatpush1.msra.mxu0 %v3704
    %v3706 = vand.u32 %v1422, 4294901760
    %3707 = vmatprep.subr.mxu0 %v3706
    %v3708 = vand.u32 %v1421, 4294901760
    %3709 = vmatpush1.msra.mxu0 %v3708
    %v3710 = vand.u32 %v1425, 4294901760
    %3711 = vmatprep.subr.mxu0 %v3710
    %v3712 = vand.u32 %v1424, 4294901760
    %3713 = vmatpush1.msra.mxu0 %v3712
    %v3714 = vand.u32 %v1428, 4294901760
    %3715 = vmatprep.subr.mxu0 %v3714
    %v3716 = vand.u32 %v1427, 4294901760
    %3717 = vmatpush1.msra.mxu0 %v3716
    %v3718 = vand.u32 %v1431, 4294901760
    %3719 = vmatprep.subr.mxu0 %v3718
    %v3720 = vand.u32 %v1430, 4294901760
    %3721 = vmatpush1.msra.mxu0 %v3720
    %v3722 = vand.u32 %v1434, 4294901760
    %3723 = vmatprep.subr.mxu0 %v3722
    %v3724 = vand.u32 %v1433, 4294901760
    %3725 = vmatpush1.msra.mxu0 %v3724
    %v3726 = vand.u32 %v1437, 4294901760
    %3727 = vmatprep.subr.mxu0 %v3726
    %v3728 = vand.u32 %v1436, 4294901760
    %3729 = vmatpush1.msra.mxu0 %v3728
    %v3730 = vand.u32 %v1440, 4294901760
    %3731 = vmatprep.subr.mxu0 %v3730
    %v3732 = vand.u32 %v1439, 4294901760
    %3733 = vmatpush1.msra.mxu0 %v3732
    %v3734 = vand.u32 %v1443, 4294901760
    %3735 = vmatprep.subr.mxu0 %v3734
    %v3736 = vand.u32 %v1442, 4294901760
    %3737 = vmatpush1.msra.mxu0 %v3736
    %v3738 = vand.u32 %v1446, 4294901760
    %3739 = vmatprep.subr.mxu0 %v3738
    %v3740 = vand.u32 %v1445, 4294901760
    %3741 = vmatpush1.msra.mxu0 %v3740
    %v3742 = vand.u32 %v1449, 4294901760
    %3743 = vmatprep.subr.mxu0 %v3742
    %v3744 = vand.u32 %v1448, 4294901760
    %3745 = vmatpush1.msra.mxu0 %v3744
    %v3746 = vand.u32 %v1452, 4294901760
    %3747 = vmatprep.subr.mxu0 %v3746
    %v3748 = vand.u32 %v1451, 4294901760
    %3749 = vmatpush1.msra.mxu0 %v3748
    %v3750 = vand.u32 %v1455, 4294901760
    %3751 = vmatprep.subr.mxu0 %v3750
    %v3752 = vand.u32 %v1454, 4294901760
    %3753 = vmatpush1.msra.mxu0 %v3752
    %v3754 = vand.u32 %v1458, 4294901760
    %3755 = vmatprep.subr.mxu0 %v3754
    %v3756 = vand.u32 %v1457, 4294901760
    %3757 = vmatpush1.msra.mxu0 %v3756
    %v3758 = vand.u32 %v1461, 4294901760
    %3759 = vmatprep.subr.mxu0 %v3758
    %v3760 = vand.u32 %v1460, 4294901760
    %3761 = vmatpush1.msra.mxu0 %v3760
    %v3762 = vand.u32 %v1464, 4294901760
    %3763 = vmatprep.subr.mxu0 %v3762
    %v3764 = vand.u32 %v1463, 4294901760
    %3765 = vmatpush1.msra.mxu0 %v3764
    %v3766 = vand.u32 %v1367, 4294901760
    %3767 = vmatprep.mubr.f32.mxu0 %v3766
    %v3768 = vand.u32 %v1366, 4294901760
    %3769 = vmatmul.mubr.f32.gmra.mrb[0].mxu0 %v3768
    %v3770 = vpop.f32.mrb[0].mxu0
    %v3771 = vadd.f32 %v3634, %v3770
    %v3772 = vpop.f32.mrb[0].mxu0
    %v3773 = vadd.f32 %v3636, %v3772
    %3774 = vdwg.mxu0
    %v3775 = vand.u32 %v1467, 4294901760
    %3776 = vmatprep.subr.mxu0 %v3775
    %v3777 = vand.u32 %v1466, 4294901760
    %3778 = vmatpush1.msra.mxu0 %v3777
    %v3779 = vand.u32 %v1470, 4294901760
    %3780 = vmatprep.subr.mxu0 %v3779
    %v3781 = vand.u32 %v1469, 4294901760
    %3782 = vmatpush1.msra.mxu0 %v3781
    %v3783 = vand.u32 %v1473, 4294901760
    %3784 = vmatprep.subr.mxu0 %v3783
    %v3785 = vand.u32 %v1472, 4294901760
    %3786 = vmatpush1.msra.mxu0 %v3785
    %v3787 = vand.u32 %v1476, 4294901760
    %3788 = vmatprep.subr.mxu0 %v3787
    %v3789 = vand.u32 %v1475, 4294901760
    %3790 = vmatpush1.msra.mxu0 %v3789
    %v3791 = vand.u32 %v1479, 4294901760
    %3792 = vmatprep.subr.mxu0 %v3791
    %v3793 = vand.u32 %v1478, 4294901760
    %3794 = vmatpush1.msra.mxu0 %v3793
    %v3795 = vand.u32 %v1482, 4294901760
    %3796 = vmatprep.subr.mxu0 %v3795
    %v3797 = vand.u32 %v1481, 4294901760
    %3798 = vmatpush1.msra.mxu0 %v3797
    %v3799 = vand.u32 %v1485, 4294901760
    %3800 = vmatprep.subr.mxu0 %v3799
    %v3801 = vand.u32 %v1484, 4294901760
    %3802 = vmatpush1.msra.mxu0 %v3801
    %v3803 = vand.u32 %v1488, 4294901760
    %3804 = vmatprep.subr.mxu0 %v3803
    %v3805 = vand.u32 %v1487, 4294901760
    %3806 = vmatpush1.msra.mxu0 %v3805
    %v3807 = vand.u32 %v1491, 4294901760
    %3808 = vmatprep.subr.mxu0 %v3807
    %v3809 = vand.u32 %v1490, 4294901760
    %3810 = vmatpush1.msra.mxu0 %v3809
    %v3811 = vand.u32 %v1494, 4294901760
    %3812 = vmatprep.subr.mxu0 %v3811
    %v3813 = vand.u32 %v1493, 4294901760
    %3814 = vmatpush1.msra.mxu0 %v3813
    %v3815 = vand.u32 %v1497, 4294901760
    %3816 = vmatprep.subr.mxu0 %v3815
    %v3817 = vand.u32 %v1496, 4294901760
    %3818 = vmatpush1.msra.mxu0 %v3817
    %v3819 = vand.u32 %v1500, 4294901760
    %3820 = vmatprep.subr.mxu0 %v3819
    %v3821 = vand.u32 %v1499, 4294901760
    %3822 = vmatpush1.msra.mxu0 %v3821
    %v3823 = vand.u32 %v1503, 4294901760
    %3824 = vmatprep.subr.mxu0 %v3823
    %v3825 = vand.u32 %v1502, 4294901760
    %3826 = vmatpush1.msra.mxu0 %v3825
    %v3827 = vand.u32 %v1506, 4294901760
    %3828 = vmatprep.subr.mxu0 %v3827
    %v3829 = vand.u32 %v1505, 4294901760
    %3830 = vmatpush1.msra.mxu0 %v3829
    %v3831 = vand.u32 %v1509, 4294901760
    %3832 = vmatprep.subr.mxu0 %v3831
    %v3833 = vand.u32 %v1508, 4294901760
    %3834 = vmatpush1.msra.mxu0 %v3833
    %v3835 = vand.u32 %v1512, 4294901760
    %3836 = vmatprep.subr.mxu0 %v3835
    %v3837 = vand.u32 %v1511, 4294901760
    %3838 = vmatpush1.msra.mxu0 %v3837
    %v3839 = vand.u32 %v1515, 4294901760
    %3840 = vmatprep.subr.mxu0 %v3839
    %v3841 = vand.u32 %v1514, 4294901760
    %3842 = vmatpush1.msra.mxu0 %v3841
    %v3843 = vand.u32 %v1518, 4294901760
    %3844 = vmatprep.subr.mxu0 %v3843
    %v3845 = vand.u32 %v1517, 4294901760
    %3846 = vmatpush1.msra.mxu0 %v3845
    %v3847 = vand.u32 %v1521, 4294901760
    %3848 = vmatprep.subr.mxu0 %v3847
    %v3849 = vand.u32 %v1520, 4294901760
    %3850 = vmatpush1.msra.mxu0 %v3849
    %v3851 = vand.u32 %v1524, 4294901760
    %3852 = vmatprep.subr.mxu0 %v3851
    %v3853 = vand.u32 %v1523, 4294901760
    %3854 = vmatpush1.msra.mxu0 %v3853
    %v3855 = vand.u32 %v1527, 4294901760
    %3856 = vmatprep.subr.mxu0 %v3855
    %v3857 = vand.u32 %v1526, 4294901760
    %3858 = vmatpush1.msra.mxu0 %v3857
    %v3859 = vand.u32 %v1530, 4294901760
    %3860 = vmatprep.subr.mxu0 %v3859
    %v3861 = vand.u32 %v1529, 4294901760
    %3862 = vmatpush1.msra.mxu0 %v3861
    %v3863 = vand.u32 %v1533, 4294901760
    %3864 = vmatprep.subr.mxu0 %v3863
    %v3865 = vand.u32 %v1532, 4294901760
    %3866 = vmatpush1.msra.mxu0 %v3865
    %v3867 = vand.u32 %v1536, 4294901760
    %3868 = vmatprep.subr.mxu0 %v3867
    %v3869 = vand.u32 %v1535, 4294901760
    %3870 = vmatpush1.msra.mxu0 %v3869
    %v3871 = vand.u32 %v1539, 4294901760
    %3872 = vmatprep.subr.mxu0 %v3871
    %v3873 = vand.u32 %v1538, 4294901760
    %3874 = vmatpush1.msra.mxu0 %v3873
    %v3875 = vand.u32 %v1542, 4294901760
    %3876 = vmatprep.subr.mxu0 %v3875
    %v3877 = vand.u32 %v1541, 4294901760
    %3878 = vmatpush1.msra.mxu0 %v3877
    %v3879 = vand.u32 %v1545, 4294901760
    %3880 = vmatprep.subr.mxu0 %v3879
    %v3881 = vand.u32 %v1544, 4294901760
    %3882 = vmatpush1.msra.mxu0 %v3881
    %v3883 = vand.u32 %v1548, 4294901760
    %3884 = vmatprep.subr.mxu0 %v3883
    %v3885 = vand.u32 %v1547, 4294901760
    %3886 = vmatpush1.msra.mxu0 %v3885
    %v3887 = vand.u32 %v1551, 4294901760
    %3888 = vmatprep.subr.mxu0 %v3887
    %v3889 = vand.u32 %v1550, 4294901760
    %3890 = vmatpush1.msra.mxu0 %v3889
    %v3891 = vand.u32 %v1554, 4294901760
    %3892 = vmatprep.subr.mxu0 %v3891
    %v3893 = vand.u32 %v1553, 4294901760
    %3894 = vmatpush1.msra.mxu0 %v3893
    %v3895 = vand.u32 %v1557, 4294901760
    %3896 = vmatprep.subr.mxu0 %v3895
    %v3897 = vand.u32 %v1556, 4294901760
    %3898 = vmatpush1.msra.mxu0 %v3897
    %v3899 = vand.u32 %v1560, 4294901760
    %3900 = vmatprep.subr.mxu0 %v3899
    %v3901 = vand.u32 %v1559, 4294901760
    %3902 = vmatpush1.msra.mxu0 %v3901
    %v3903 = vand.u32 %v1369, 4294901760
    %v3904 = vsub.f32 %v1369, %v3903
    %v3905 = vand.u32 %v3904, 4294901760
    %v3906 = vsub.f32 %v3904, %v3905
    %v3907 = vand.u32 %v3906, 4294901760
    %3908 = vmatprep.mubr.f32.mxu0 %v3907
    %v3909 = vand.u32 %v1368, 4294901760
    %v3910 = vsub.f32 %v1368, %v3909
    %v3911 = vand.u32 %v3910, 4294901760
    %v3912 = vsub.f32 %v3910, %v3911
    %v3913 = vand.u32 %v3912, 4294901760
    %3914 = vmatmul.mubr.f32.gmra.mrb[0].mxu0 %v3913
    %v3915 = vpop.f32.mrb[0].mxu0
    %v3916 = vadd.f32 %v3771, %v3915
    %v3917 = vpop.f32.mrb[0].mxu0
    %v3918 = vadd.f32 %v3773, %v3917
    %3919 = vdwg.mxu0
    %v3920 = vand.u32 %v1467, 4294901760
    %v3921 = vsub.f32 %v1467, %v3920
    %v3922 = vand.u32 %v3921, 4294901760
    %v3923 = vsub.f32 %v3921, %v3922
    %v3924 = vand.u32 %v3923, 4294901760
    %3925 = vmatprep.subr.mxu0 %v3924
    %v3926 = vand.u32 %v1466, 4294901760
    %v3927 = vsub.f32 %v1466, %v3926
    %v3928 = vand.u32 %v3927, 4294901760
    %v3929 = vsub.f32 %v3927, %v3928
    %v3930 = vand.u32 %v3929, 4294901760
    %3931 = vmatpush1.msra.mxu0 %v3930
    %v3932 = vand.u32 %v1470, 4294901760
    %v3933 = vsub.f32 %v1470, %v3932
    %v3934 = vand.u32 %v3933, 4294901760
    %v3935 = vsub.f32 %v3933, %v3934
    %v3936 = vand.u32 %v3935, 4294901760
    %3937 = vmatprep.subr.mxu0 %v3936
    %v3938 = vand.u32 %v1469, 4294901760
    %v3939 = vsub.f32 %v1469, %v3938
    %v3940 = vand.u32 %v3939, 4294901760
    %v3941 = vsub.f32 %v3939, %v3940
    %v3942 = vand.u32 %v3941, 4294901760
    %3943 = vmatpush1.msra.mxu0 %v3942
    %v3944 = vand.u32 %v1473, 4294901760
    %v3945 = vsub.f32 %v1473, %v3944
    %v3946 = vand.u32 %v3945, 4294901760
    %v3947 = vsub.f32 %v3945, %v3946
    %v3948 = vand.u32 %v3947, 4294901760
    %3949 = vmatprep.subr.mxu0 %v3948
    %v3950 = vand.u32 %v1472, 4294901760
    %v3951 = vsub.f32 %v1472, %v3950
    %v3952 = vand.u32 %v3951, 4294901760
    %v3953 = vsub.f32 %v3951, %v3952
    %v3954 = vand.u32 %v3953, 4294901760
    %3955 = vmatpush1.msra.mxu0 %v3954
    %v3956 = vand.u32 %v1476, 4294901760
    %v3957 = vsub.f32 %v1476, %v3956
    %v3958 = vand.u32 %v3957, 4294901760
    %v3959 = vsub.f32 %v3957, %v3958
    %v3960 = vand.u32 %v3959, 4294901760
    %3961 = vmatprep.subr.mxu0 %v3960
    %v3962 = vand.u32 %v1475, 4294901760
    %v3963 = vsub.f32 %v1475, %v3962
    %v3964 = vand.u32 %v3963, 4294901760
    %v3965 = vsub.f32 %v3963, %v3964
    %v3966 = vand.u32 %v3965, 4294901760
    %3967 = vmatpush1.msra.mxu0 %v3966
    %v3968 = vand.u32 %v1479, 4294901760
    %v3969 = vsub.f32 %v1479, %v3968
    %v3970 = vand.u32 %v3969, 4294901760
    %v3971 = vsub.f32 %v3969, %v3970
    %v3972 = vand.u32 %v3971, 4294901760
    %3973 = vmatprep.subr.mxu0 %v3972
    %v3974 = vand.u32 %v1478, 4294901760
    %v3975 = vsub.f32 %v1478, %v3974
    %v3976 = vand.u32 %v3975, 4294901760
    %v3977 = vsub.f32 %v3975, %v3976
    %v3978 = vand.u32 %v3977, 4294901760
    %3979 = vmatpush1.msra.mxu0 %v3978
    %v3980 = vand.u32 %v1482, 4294901760
    %v3981 = vsub.f32 %v1482, %v3980
    %v3982 = vand.u32 %v3981, 4294901760
    %v3983 = vsub.f32 %v3981, %v3982
    %v3984 = vand.u32 %v3983, 4294901760
    %3985 = vmatprep.subr.mxu0 %v3984
    %v3986 = vand.u32 %v1481, 4294901760
    %v3987 = vsub.f32 %v1481, %v3986
    %v3988 = vand.u32 %v3987, 4294901760
    %v3989 = vsub.f32 %v3987, %v3988
    %v3990 = vand.u32 %v3989, 4294901760
    %3991 = vmatpush1.msra.mxu0 %v3990
    %v3992 = vand.u32 %v1485, 4294901760
    %v3993 = vsub.f32 %v1485, %v3992
    %v3994 = vand.u32 %v3993, 4294901760
    %v3995 = vsub.f32 %v3993, %v3994
    %v3996 = vand.u32 %v3995, 4294901760
    %3997 = vmatprep.subr.mxu0 %v3996
    %v3998 = vand.u32 %v1484, 4294901760
    %v3999 = vsub.f32 %v1484, %v3998
    %v4000 = vand.u32 %v3999, 4294901760
    %v4001 = vsub.f32 %v3999, %v4000
    %v4002 = vand.u32 %v4001, 4294901760
    %4003 = vmatpush1.msra.mxu0 %v4002
    %v4004 = vand.u32 %v1488, 4294901760
    %v4005 = vsub.f32 %v1488, %v4004
    %v4006 = vand.u32 %v4005, 4294901760
    %v4007 = vsub.f32 %v4005, %v4006
    %v4008 = vand.u32 %v4007, 4294901760
    %4009 = vmatprep.subr.mxu0 %v4008
    %v4010 = vand.u32 %v1487, 4294901760
    %v4011 = vsub.f32 %v1487, %v4010
    %v4012 = vand.u32 %v4011, 4294901760
    %v4013 = vsub.f32 %v4011, %v4012
    %v4014 = vand.u32 %v4013, 4294901760
    %4015 = vmatpush1.msra.mxu0 %v4014
    %v4016 = vand.u32 %v1491, 4294901760
    %v4017 = vsub.f32 %v1491, %v4016
    %v4018 = vand.u32 %v4017, 4294901760
    %v4019 = vsub.f32 %v4017, %v4018
    %v4020 = vand.u32 %v4019, 4294901760
    %4021 = vmatprep.subr.mxu0 %v4020
    %v4022 = vand.u32 %v1490, 4294901760
    %v4023 = vsub.f32 %v1490, %v4022
    %v4024 = vand.u32 %v4023, 4294901760
    %v4025 = vsub.f32 %v4023, %v4024
    %v4026 = vand.u32 %v4025, 4294901760
    %4027 = vmatpush1.msra.mxu0 %v4026
    %v4028 = vand.u32 %v1494, 4294901760
    %v4029 = vsub.f32 %v1494, %v4028
    %v4030 = vand.u32 %v4029, 4294901760
    %v4031 = vsub.f32 %v4029, %v4030
    %v4032 = vand.u32 %v4031, 4294901760
    %4033 = vmatprep.subr.mxu0 %v4032
    %v4034 = vand.u32 %v1493, 4294901760
    %v4035 = vsub.f32 %v1493, %v4034
    %v4036 = vand.u32 %v4035, 4294901760
    %v4037 = vsub.f32 %v4035, %v4036
    %v4038 = vand.u32 %v4037, 4294901760
    %4039 = vmatpush1.msra.mxu0 %v4038
    %v4040 = vand.u32 %v1497, 4294901760
    %v4041 = vsub.f32 %v1497, %v4040
    %v4042 = vand.u32 %v4041, 4294901760
    %v4043 = vsub.f32 %v4041, %v4042
    %v4044 = vand.u32 %v4043, 4294901760
    %4045 = vmatprep.subr.mxu0 %v4044
    %v4046 = vand.u32 %v1496, 4294901760
    %v4047 = vsub.f32 %v1496, %v4046
    %v4048 = vand.u32 %v4047, 4294901760
    %v4049 = vsub.f32 %v4047, %v4048
    %v4050 = vand.u32 %v4049, 4294901760
    %4051 = vmatpush1.msra.mxu0 %v4050
    %v4052 = vand.u32 %v1500, 4294901760
    %v4053 = vsub.f32 %v1500, %v4052
    %v4054 = vand.u32 %v4053, 4294901760
    %v4055 = vsub.f32 %v4053, %v4054
    %v4056 = vand.u32 %v4055, 4294901760
    %4057 = vmatprep.subr.mxu0 %v4056
    %v4058 = vand.u32 %v1499, 4294901760
    %v4059 = vsub.f32 %v1499, %v4058
    %v4060 = vand.u32 %v4059, 4294901760
    %v4061 = vsub.f32 %v4059, %v4060
    %v4062 = vand.u32 %v4061, 4294901760
    %4063 = vmatpush1.msra.mxu0 %v4062
    %v4064 = vand.u32 %v1503, 4294901760
    %v4065 = vsub.f32 %v1503, %v4064
    %v4066 = vand.u32 %v4065, 4294901760
    %v4067 = vsub.f32 %v4065, %v4066
    %v4068 = vand.u32 %v4067, 4294901760
    %4069 = vmatprep.subr.mxu0 %v4068
    %v4070 = vand.u32 %v1502, 4294901760
    %v4071 = vsub.f32 %v1502, %v4070
    %v4072 = vand.u32 %v4071, 4294901760
    %v4073 = vsub.f32 %v4071, %v4072
    %v4074 = vand.u32 %v4073, 4294901760
    %4075 = vmatpush1.msra.mxu0 %v4074
    %v4076 = vand.u32 %v1506, 4294901760
    %v4077 = vsub.f32 %v1506, %v4076
    %v4078 = vand.u32 %v4077, 4294901760
    %v4079 = vsub.f32 %v4077, %v4078
    %v4080 = vand.u32 %v4079, 4294901760
    %4081 = vmatprep.subr.mxu0 %v4080
    %v4082 = vand.u32 %v1505, 4294901760
    %v4083 = vsub.f32 %v1505, %v4082
    %v4084 = vand.u32 %v4083, 4294901760
    %v4085 = vsub.f32 %v4083, %v4084
    %v4086 = vand.u32 %v4085, 4294901760
    %4087 = vmatpush1.msra.mxu0 %v4086
    %v4088 = vand.u32 %v1509, 4294901760
    %v4089 = vsub.f32 %v1509, %v4088
    %v4090 = vand.u32 %v4089, 4294901760
    %v4091 = vsub.f32 %v4089, %v4090
    %v4092 = vand.u32 %v4091, 4294901760
    %4093 = vmatprep.subr.mxu0 %v4092
    %v4094 = vand.u32 %v1508, 4294901760
    %v4095 = vsub.f32 %v1508, %v4094
    %v4096 = vand.u32 %v4095, 4294901760
    %v4097 = vsub.f32 %v4095, %v4096
    %v4098 = vand.u32 %v4097, 4294901760
    %4099 = vmatpush1.msra.mxu0 %v4098
    %v4100 = vand.u32 %v1512, 4294901760
    %v4101 = vsub.f32 %v1512, %v4100
    %v4102 = vand.u32 %v4101, 4294901760
    %v4103 = vsub.f32 %v4101, %v4102
    %v4104 = vand.u32 %v4103, 4294901760
    %4105 = vmatprep.subr.mxu0 %v4104
    %v4106 = vand.u32 %v1511, 4294901760
    %v4107 = vsub.f32 %v1511, %v4106
    %v4108 = vand.u32 %v4107, 4294901760
    %v4109 = vsub.f32 %v4107, %v4108
    %v4110 = vand.u32 %v4109, 4294901760
    %4111 = vmatpush1.msra.mxu0 %v4110
    %v4112 = vand.u32 %v1515, 4294901760
    %v4113 = vsub.f32 %v1515, %v4112
    %v4114 = vand.u32 %v4113, 4294901760
    %v4115 = vsub.f32 %v4113, %v4114
    %v4116 = vand.u32 %v4115, 4294901760
    %4117 = vmatprep.subr.mxu0 %v4116
    %v4118 = vand.u32 %v1514, 4294901760
    %v4119 = vsub.f32 %v1514, %v4118
    %v4120 = vand.u32 %v4119, 4294901760
    %v4121 = vsub.f32 %v4119, %v4120
    %v4122 = vand.u32 %v4121, 4294901760
    %4123 = vmatpush1.msra.mxu0 %v4122
    %v4124 = vand.u32 %v1518, 4294901760
    %v4125 = vsub.f32 %v1518, %v4124
    %v4126 = vand.u32 %v4125, 4294901760
    %v4127 = vsub.f32 %v4125, %v4126
    %v4128 = vand.u32 %v4127, 4294901760
    %4129 = vmatprep.subr.mxu0 %v4128
    %v4130 = vand.u32 %v1517, 4294901760
    %v4131 = vsub.f32 %v1517, %v4130
    %v4132 = vand.u32 %v4131, 4294901760
    %v4133 = vsub.f32 %v4131, %v4132
    %v4134 = vand.u32 %v4133, 4294901760
    %4135 = vmatpush1.msra.mxu0 %v4134
    %v4136 = vand.u32 %v1521, 4294901760
    %v4137 = vsub.f32 %v1521, %v4136
    %v4138 = vand.u32 %v4137, 4294901760
    %v4139 = vsub.f32 %v4137, %v4138
    %v4140 = vand.u32 %v4139, 4294901760
    %4141 = vmatprep.subr.mxu0 %v4140
    %v4142 = vand.u32 %v1520, 4294901760
    %v4143 = vsub.f32 %v1520, %v4142
    %v4144 = vand.u32 %v4143, 4294901760
    %v4145 = vsub.f32 %v4143, %v4144
    %v4146 = vand.u32 %v4145, 4294901760
    %4147 = vmatpush1.msra.mxu0 %v4146
    %v4148 = vand.u32 %v1524, 4294901760
    %v4149 = vsub.f32 %v1524, %v4148
    %v4150 = vand.u32 %v4149, 4294901760
    %v4151 = vsub.f32 %v4149, %v4150
    %v4152 = vand.u32 %v4151, 4294901760
    %4153 = vmatprep.subr.mxu0 %v4152
    %v4154 = vand.u32 %v1523, 4294901760
    %v4155 = vsub.f32 %v1523, %v4154
    %v4156 = vand.u32 %v4155, 4294901760
    %v4157 = vsub.f32 %v4155, %v4156
    %v4158 = vand.u32 %v4157, 4294901760
    %4159 = vmatpush1.msra.mxu0 %v4158
    %v4160 = vand.u32 %v1527, 4294901760
    %v4161 = vsub.f32 %v1527, %v4160
    %v4162 = vand.u32 %v4161, 4294901760
    %v4163 = vsub.f32 %v4161, %v4162
    %v4164 = vand.u32 %v4163, 4294901760
    %4165 = vmatprep.subr.mxu0 %v4164
    %v4166 = vand.u32 %v1526, 4294901760
    %v4167 = vsub.f32 %v1526, %v4166
    %v4168 = vand.u32 %v4167, 4294901760
    %v4169 = vsub.f32 %v4167, %v4168
    %v4170 = vand.u32 %v4169, 4294901760
    %4171 = vmatpush1.msra.mxu0 %v4170
    %v4172 = vand.u32 %v1530, 4294901760
    %v4173 = vsub.f32 %v1530, %v4172
    %v4174 = vand.u32 %v4173, 4294901760
    %v4175 = vsub.f32 %v4173, %v4174
    %v4176 = vand.u32 %v4175, 4294901760
    %4177 = vmatprep.subr.mxu0 %v4176
    %v4178 = vand.u32 %v1529, 4294901760
    %v4179 = vsub.f32 %v1529, %v4178
    %v4180 = vand.u32 %v4179, 4294901760
    %v4181 = vsub.f32 %v4179, %v4180
    %v4182 = vand.u32 %v4181, 4294901760
    %4183 = vmatpush1.msra.mxu0 %v4182
    %v4184 = vand.u32 %v1533, 4294901760
    %v4185 = vsub.f32 %v1533, %v4184
    %v4186 = vand.u32 %v4185, 4294901760
    %v4187 = vsub.f32 %v4185, %v4186
    %v4188 = vand.u32 %v4187, 4294901760
    %4189 = vmatprep.subr.mxu0 %v4188
    %v4190 = vand.u32 %v1532, 4294901760
    %v4191 = vsub.f32 %v1532, %v4190
    %v4192 = vand.u32 %v4191, 4294901760
    %v4193 = vsub.f32 %v4191, %v4192
    %v4194 = vand.u32 %v4193, 4294901760
    %4195 = vmatpush1.msra.mxu0 %v4194
    %v4196 = vand.u32 %v1536, 4294901760
    %v4197 = vsub.f32 %v1536, %v4196
    %v4198 = vand.u32 %v4197, 4294901760
    %v4199 = vsub.f32 %v4197, %v4198
    %v4200 = vand.u32 %v4199, 4294901760
    %4201 = vmatprep.subr.mxu0 %v4200
    %v4202 = vand.u32 %v1535, 4294901760
    %v4203 = vsub.f32 %v1535, %v4202
    %v4204 = vand.u32 %v4203, 4294901760
    %v4205 = vsub.f32 %v4203, %v4204
    %v4206 = vand.u32 %v4205, 4294901760
    %4207 = vmatpush1.msra.mxu0 %v4206
    %v4208 = vand.u32 %v1539, 4294901760
    %v4209 = vsub.f32 %v1539, %v4208
    %v4210 = vand.u32 %v4209, 4294901760
    %v4211 = vsub.f32 %v4209, %v4210
    %v4212 = vand.u32 %v4211, 4294901760
    %4213 = vmatprep.subr.mxu0 %v4212
    %v4214 = vand.u32 %v1538, 4294901760
    %v4215 = vsub.f32 %v1538, %v4214
    %v4216 = vand.u32 %v4215, 4294901760
    %v4217 = vsub.f32 %v4215, %v4216
    %v4218 = vand.u32 %v4217, 4294901760
    %4219 = vmatpush1.msra.mxu0 %v4218
    %v4220 = vand.u32 %v1542, 4294901760
    %v4221 = vsub.f32 %v1542, %v4220
    %v4222 = vand.u32 %v4221, 4294901760
    %v4223 = vsub.f32 %v4221, %v4222
    %v4224 = vand.u32 %v4223, 4294901760
    %4225 = vmatprep.subr.mxu0 %v4224
    %v4226 = vand.u32 %v1541, 4294901760
    %v4227 = vsub.f32 %v1541, %v4226
    %v4228 = vand.u32 %v4227, 4294901760
    %v4229 = vsub.f32 %v4227, %v4228
    %v4230 = vand.u32 %v4229, 4294901760
    %4231 = vmatpush1.msra.mxu0 %v4230
    %v4232 = vand.u32 %v1545, 4294901760
    %v4233 = vsub.f32 %v1545, %v4232
    %v4234 = vand.u32 %v4233, 4294901760
    %v4235 = vsub.f32 %v4233, %v4234
    %v4236 = vand.u32 %v4235, 4294901760
    %4237 = vmatprep.subr.mxu0 %v4236
    %v4238 = vand.u32 %v1544, 4294901760
    %v4239 = vsub.f32 %v1544, %v4238
    %v4240 = vand.u32 %v4239, 4294901760
    %v4241 = vsub.f32 %v4239, %v4240
    %v4242 = vand.u32 %v4241, 4294901760
    %4243 = vmatpush1.msra.mxu0 %v4242
    %v4244 = vand.u32 %v1548, 4294901760
    %v4245 = vsub.f32 %v1548, %v4244
    %v4246 = vand.u32 %v4245, 4294901760
    %v4247 = vsub.f32 %v4245, %v4246
    %v4248 = vand.u32 %v4247, 4294901760
    %4249 = vmatprep.subr.mxu0 %v4248
    %v4250 = vand.u32 %v1547, 4294901760
    %v4251 = vsub.f32 %v1547, %v4250
    %v4252 = vand.u32 %v4251, 4294901760
    %v4253 = vsub.f32 %v4251, %v4252
    %v4254 = vand.u32 %v4253, 4294901760
    %4255 = vmatpush1.msra.mxu0 %v4254
    %v4256 = vand.u32 %v1551, 4294901760
    %v4257 = vsub.f32 %v1551, %v4256
    %v4258 = vand.u32 %v4257, 4294901760
    %v4259 = vsub.f32 %v4257, %v4258
    %v4260 = vand.u32 %v4259, 4294901760
    %4261 = vmatprep.subr.mxu0 %v4260
    %v4262 = vand.u32 %v1550, 4294901760
    %v4263 = vsub.f32 %v1550, %v4262
    %v4264 = vand.u32 %v4263, 4294901760
    %v4265 = vsub.f32 %v4263, %v4264
    %v4266 = vand.u32 %v4265, 4294901760
    %4267 = vmatpush1.msra.mxu0 %v4266
    %v4268 = vand.u32 %v1554, 4294901760
    %v4269 = vsub.f32 %v1554, %v4268
    %v4270 = vand.u32 %v4269, 4294901760
    %v4271 = vsub.f32 %v4269, %v4270
    %v4272 = vand.u32 %v4271, 4294901760
    %4273 = vmatprep.subr.mxu0 %v4272
    %v4274 = vand.u32 %v1553, 4294901760
    %v4275 = vsub.f32 %v1553, %v4274
    %v4276 = vand.u32 %v4275, 4294901760
    %v4277 = vsub.f32 %v4275, %v4276
    %v4278 = vand.u32 %v4277, 4294901760
    %4279 = vmatpush1.msra.mxu0 %v4278
    %v4280 = vand.u32 %v1557, 4294901760
    %v4281 = vsub.f32 %v1557, %v4280
    %v4282 = vand.u32 %v4281, 4294901760
    %v4283 = vsub.f32 %v4281, %v4282
    %v4284 = vand.u32 %v4283, 4294901760
    %4285 = vmatprep.subr.mxu0 %v4284
    %v4286 = vand.u32 %v1556, 4294901760
    %v4287 = vsub.f32 %v1556, %v4286
    %v4288 = vand.u32 %v4287, 4294901760
    %v4289 = vsub.f32 %v4287, %v4288
    %v4290 = vand.u32 %v4289, 4294901760
    %4291 = vmatpush1.msra.mxu0 %v4290
    %v4292 = vand.u32 %v1560, 4294901760
    %v4293 = vsub.f32 %v1560, %v4292
    %v4294 = vand.u32 %v4293, 4294901760
    %v4295 = vsub.f32 %v4293, %v4294
    %v4296 = vand.u32 %v4295, 4294901760
    %4297 = vmatprep.subr.mxu0 %v4296
    %v4298 = vand.u32 %v1559, 4294901760
    %v4299 = vsub.f32 %v1559, %v4298
    %v4300 = vand.u32 %v4299, 4294901760
    %v4301 = vsub.f32 %v4299, %v4300
    %v4302 = vand.u32 %v4301, 4294901760
    %4303 = vmatpush1.msra.mxu0 %v4302
    %v4304 = vand.u32 %v1369, 4294901760
    %4305 = vmatprep.mubr.f32.mxu0 %v4304
    %v4306 = vand.u32 %v1368, 4294901760
    %4307 = vmatmul.mubr.f32.gmra.mrb[0].mxu0 %v4306
    %v4308 = vpop.f32.mrb[0].mxu0
    %v4309 = vadd.f32 %v3916, %v4308
    %v4310 = vpop.f32.mrb[0].mxu0
    %v4311 = vadd.f32 %v3918, %v4310
    %4312 = vdwg.mxu0
    %v4313 = vand.u32 %v1467, 4294901760
    %v4314 = vsub.f32 %v1467, %v4313
    %4315 = vmatprep.subr.mxu0 %v4314
    %v4316 = vand.u32 %v1466, 4294901760
    %v4317 = vsub.f32 %v1466, %v4316
    %4318 = vmatpush1.msra.mxu0 %v4317
    %v4319 = vand.u32 %v1470, 4294901760
    %v4320 = vsub.f32 %v1470, %v4319
    %4321 = vmatprep.subr.mxu0 %v4320
    %v4322 = vand.u32 %v1469, 4294901760
    %v4323 = vsub.f32 %v1469, %v4322
    %4324 = vmatpush1.msra.mxu0 %v4323
    %v4325 = vand.u32 %v1473, 4294901760
    %v4326 = vsub.f32 %v1473, %v4325
    %4327 = vmatprep.subr.mxu0 %v4326
    %v4328 = vand.u32 %v1472, 4294901760
    %v4329 = vsub.f32 %v1472, %v4328
    %4330 = vmatpush1.msra.mxu0 %v4329
    %v4331 = vand.u32 %v1476, 4294901760
    %v4332 = vsub.f32 %v1476, %v4331
    %4333 = vmatprep.subr.mxu0 %v4332
    %v4334 = vand.u32 %v1475, 4294901760
    %v4335 = vsub.f32 %v1475, %v4334
    %4336 = vmatpush1.msra.mxu0 %v4335
    %v4337 = vand.u32 %v1479, 4294901760
    %v4338 = vsub.f32 %v1479, %v4337
    %4339 = vmatprep.subr.mxu0 %v4338
    %v4340 = vand.u32 %v1478, 4294901760
    %v4341 = vsub.f32 %v1478, %v4340
    %4342 = vmatpush1.msra.mxu0 %v4341
    %v4343 = vand.u32 %v1482, 4294901760
    %v4344 = vsub.f32 %v1482, %v4343
    %4345 = vmatprep.subr.mxu0 %v4344
    %v4346 = vand.u32 %v1481, 4294901760
    %v4347 = vsub.f32 %v1481, %v4346
    %4348 = vmatpush1.msra.mxu0 %v4347
    %v4349 = vand.u32 %v1485, 4294901760
    %v4350 = vsub.f32 %v1485, %v4349
    %4351 = vmatprep.subr.mxu0 %v4350
    %v4352 = vand.u32 %v1484, 4294901760
    %v4353 = vsub.f32 %v1484, %v4352
    %4354 = vmatpush1.msra.mxu0 %v4353
    %v4355 = vand.u32 %v1488, 4294901760
    %v4356 = vsub.f32 %v1488, %v4355
    %4357 = vmatprep.subr.mxu0 %v4356
    %v4358 = vand.u32 %v1487, 4294901760
    %v4359 = vsub.f32 %v1487, %v4358
    %4360 = vmatpush1.msra.mxu0 %v4359
    %v4361 = vand.u32 %v1491, 4294901760
    %v4362 = vsub.f32 %v1491, %v4361
    %4363 = vmatprep.subr.mxu0 %v4362
    %v4364 = vand.u32 %v1490, 4294901760
    %v4365 = vsub.f32 %v1490, %v4364
    %4366 = vmatpush1.msra.mxu0 %v4365
    %v4367 = vand.u32 %v1494, 4294901760
    %v4368 = vsub.f32 %v1494, %v4367
    %4369 = vmatprep.subr.mxu0 %v4368
    %v4370 = vand.u32 %v1493, 4294901760
    %v4371 = vsub.f32 %v1493, %v4370
    %4372 = vmatpush1.msra.mxu0 %v4371
    %v4373 = vand.u32 %v1497, 4294901760
    %v4374 = vsub.f32 %v1497, %v4373
    %4375 = vmatprep.subr.mxu0 %v4374
    %v4376 = vand.u32 %v1496, 4294901760
    %v4377 = vsub.f32 %v1496, %v4376
    %4378 = vmatpush1.msra.mxu0 %v4377
    %v4379 = vand.u32 %v1500, 4294901760
    %v4380 = vsub.f32 %v1500, %v4379
    %4381 = vmatprep.subr.mxu0 %v4380
    %v4382 = vand.u32 %v1499, 4294901760
    %v4383 = vsub.f32 %v1499, %v4382
    %4384 = vmatpush1.msra.mxu0 %v4383
    %v4385 = vand.u32 %v1503, 4294901760
    %v4386 = vsub.f32 %v1503, %v4385
    %4387 = vmatprep.subr.mxu0 %v4386
    %v4388 = vand.u32 %v1502, 4294901760
    %v4389 = vsub.f32 %v1502, %v4388
    %4390 = vmatpush1.msra.mxu0 %v4389
    %v4391 = vand.u32 %v1506, 4294901760
    %v4392 = vsub.f32 %v1506, %v4391
    %4393 = vmatprep.subr.mxu0 %v4392
    %v4394 = vand.u32 %v1505, 4294901760
    %v4395 = vsub.f32 %v1505, %v4394
    %4396 = vmatpush1.msra.mxu0 %v4395
    %v4397 = vand.u32 %v1509, 4294901760
    %v4398 = vsub.f32 %v1509, %v4397
    %4399 = vmatprep.subr.mxu0 %v4398
    %v4400 = vand.u32 %v1508, 4294901760
    %v4401 = vsub.f32 %v1508, %v4400
    %4402 = vmatpush1.msra.mxu0 %v4401
    %v4403 = vand.u32 %v1512, 4294901760
    %v4404 = vsub.f32 %v1512, %v4403
    %4405 = vmatprep.subr.mxu0 %v4404
    %v4406 = vand.u32 %v1511, 4294901760
    %v4407 = vsub.f32 %v1511, %v4406
    %4408 = vmatpush1.msra.mxu0 %v4407
    %v4409 = vand.u32 %v1515, 4294901760
    %v4410 = vsub.f32 %v1515, %v4409
    %4411 = vmatprep.subr.mxu0 %v4410
    %v4412 = vand.u32 %v1514, 4294901760
    %v4413 = vsub.f32 %v1514, %v4412
    %4414 = vmatpush1.msra.mxu0 %v4413
    %v4415 = vand.u32 %v1518, 4294901760
    %v4416 = vsub.f32 %v1518, %v4415
    %4417 = vmatprep.subr.mxu0 %v4416
    %v4418 = vand.u32 %v1517, 4294901760
    %v4419 = vsub.f32 %v1517, %v4418
    %4420 = vmatpush1.msra.mxu0 %v4419
    %v4421 = vand.u32 %v1521, 4294901760
    %v4422 = vsub.f32 %v1521, %v4421
    %4423 = vmatprep.subr.mxu0 %v4422
    %v4424 = vand.u32 %v1520, 4294901760
    %v4425 = vsub.f32 %v1520, %v4424
    %4426 = vmatpush1.msra.mxu0 %v4425
    %v4427 = vand.u32 %v1524, 4294901760
    %v4428 = vsub.f32 %v1524, %v4427
    %4429 = vmatprep.subr.mxu0 %v4428
    %v4430 = vand.u32 %v1523, 4294901760
    %v4431 = vsub.f32 %v1523, %v4430
    %4432 = vmatpush1.msra.mxu0 %v4431
    %v4433 = vand.u32 %v1527, 4294901760
    %v4434 = vsub.f32 %v1527, %v4433
    %4435 = vmatprep.subr.mxu0 %v4434
    %v4436 = vand.u32 %v1526, 4294901760
    %v4437 = vsub.f32 %v1526, %v4436
    %4438 = vmatpush1.msra.mxu0 %v4437
    %v4439 = vand.u32 %v1530, 4294901760
    %v4440 = vsub.f32 %v1530, %v4439
    %4441 = vmatprep.subr.mxu0 %v4440
    %v4442 = vand.u32 %v1529, 4294901760
    %v4443 = vsub.f32 %v1529, %v4442
    %4444 = vmatpush1.msra.mxu0 %v4443
    %v4445 = vand.u32 %v1533, 4294901760
    %v4446 = vsub.f32 %v1533, %v4445
    %4447 = vmatprep.subr.mxu0 %v4446
    %v4448 = vand.u32 %v1532, 4294901760
    %v4449 = vsub.f32 %v1532, %v4448
    %4450 = vmatpush1.msra.mxu0 %v4449
    %v4451 = vand.u32 %v1536, 4294901760
    %v4452 = vsub.f32 %v1536, %v4451
    %4453 = vmatprep.subr.mxu0 %v4452
    %v4454 = vand.u32 %v1535, 4294901760
    %v4455 = vsub.f32 %v1535, %v4454
    %4456 = vmatpush1.msra.mxu0 %v4455
    %v4457 = vand.u32 %v1539, 4294901760
    %v4458 = vsub.f32 %v1539, %v4457
    %4459 = vmatprep.subr.mxu0 %v4458
    %v4460 = vand.u32 %v1538, 4294901760
    %v4461 = vsub.f32 %v1538, %v4460
    %4462 = vmatpush1.msra.mxu0 %v4461
    %v4463 = vand.u32 %v1542, 4294901760
    %v4464 = vsub.f32 %v1542, %v4463
    %4465 = vmatprep.subr.mxu0 %v4464
    %v4466 = vand.u32 %v1541, 4294901760
    %v4467 = vsub.f32 %v1541, %v4466
    %4468 = vmatpush1.msra.mxu0 %v4467
    %v4469 = vand.u32 %v1545, 4294901760
    %v4470 = vsub.f32 %v1545, %v4469
    %4471 = vmatprep.subr.mxu0 %v4470
    %v4472 = vand.u32 %v1544, 4294901760
    %v4473 = vsub.f32 %v1544, %v4472
    %4474 = vmatpush1.msra.mxu0 %v4473
    %v4475 = vand.u32 %v1548, 4294901760
    %v4476 = vsub.f32 %v1548, %v4475
    %4477 = vmatprep.subr.mxu0 %v4476
    %v4478 = vand.u32 %v1547, 4294901760
    %v4479 = vsub.f32 %v1547, %v4478
    %4480 = vmatpush1.msra.mxu0 %v4479
    %v4481 = vand.u32 %v1551, 4294901760
    %v4482 = vsub.f32 %v1551, %v4481
    %4483 = vmatprep.subr.mxu0 %v4482
    %v4484 = vand.u32 %v1550, 4294901760
    %v4485 = vsub.f32 %v1550, %v4484
    %4486 = vmatpush1.msra.mxu0 %v4485
    %v4487 = vand.u32 %v1554, 4294901760
    %v4488 = vsub.f32 %v1554, %v4487
    %4489 = vmatprep.subr.mxu0 %v4488
    %v4490 = vand.u32 %v1553, 4294901760
    %v4491 = vsub.f32 %v1553, %v4490
    %4492 = vmatpush1.msra.mxu0 %v4491
    %v4493 = vand.u32 %v1557, 4294901760
    %v4494 = vsub.f32 %v1557, %v4493
    %4495 = vmatprep.subr.mxu0 %v4494
    %v4496 = vand.u32 %v1556, 4294901760
    %v4497 = vsub.f32 %v1556, %v4496
    %4498 = vmatpush1.msra.mxu0 %v4497
    %v4499 = vand.u32 %v1560, 4294901760
    %v4500 = vsub.f32 %v1560, %v4499
    %4501 = vmatprep.subr.mxu0 %v4500
    %v4502 = vand.u32 %v1559, 4294901760
    %v4503 = vsub.f32 %v1559, %v4502
    %4504 = vmatpush1.msra.mxu0 %v4503
    %v4505 = vand.u32 %v1369, 4294901760
    %v4506 = vsub.f32 %v1369, %v4505
    %4507 = vmatprep.mubr.f32.mxu0 %v4506
    %v4508 = vand.u32 %v1368, 4294901760
    %v4509 = vsub.f32 %v1368, %v4508
    %4510 = vmatmul.mubr.f32.gmra.mrb[0].mxu0 %v4509
    %v4511 = vpop.f32.mrb[0].mxu0
    %v4512 = vadd.f32 %v4309, %v4511
    %v4513 = vpop.f32.mrb[0].mxu0
    %v4514 = vadd.f32 %v4311, %v4513
    %4515 = vdwg.mxu0
    %v4516 = vand.u32 %v1467, 4294901760
    %4517 = vmatprep.subr.mxu0 %v4516
    %v4518 = vand.u32 %v1466, 4294901760
    %4519 = vmatpush1.msra.mxu0 %v4518
    %v4520 = vand.u32 %v1470, 4294901760
    %4521 = vmatprep.subr.mxu0 %v4520
    %v4522 = vand.u32 %v1469, 4294901760
    %4523 = vmatpush1.msra.mxu0 %v4522
    %v4524 = vand.u32 %v1473, 4294901760
    %4525 = vmatprep.subr.mxu0 %v4524
    %v4526 = vand.u32 %v1472, 4294901760
    %4527 = vmatpush1.msra.mxu0 %v4526
    %v4528 = vand.u32 %v1476, 4294901760
    %4529 = vmatprep.subr.mxu0 %v4528
    %v4530 = vand.u32 %v1475, 4294901760
    %4531 = vmatpush1.msra.mxu0 %v4530
    %v4532 = vand.u32 %v1479, 4294901760
    %4533 = vmatprep.subr.mxu0 %v4532
    %v4534 = vand.u32 %v1478, 4294901760
    %4535 = vmatpush1.msra.mxu0 %v4534
    %v4536 = vand.u32 %v1482, 4294901760
    %4537 = vmatprep.subr.mxu0 %v4536
    %v4538 = vand.u32 %v1481, 4294901760
    %4539 = vmatpush1.msra.mxu0 %v4538
    %v4540 = vand.u32 %v1485, 4294901760
    %4541 = vmatprep.subr.mxu0 %v4540
    %v4542 = vand.u32 %v1484, 4294901760
    %4543 = vmatpush1.msra.mxu0 %v4542
    %v4544 = vand.u32 %v1488, 4294901760
    %4545 = vmatprep.subr.mxu0 %v4544
    %v4546 = vand.u32 %v1487, 4294901760
    %4547 = vmatpush1.msra.mxu0 %v4546
    %v4548 = vand.u32 %v1491, 4294901760
    %4549 = vmatprep.subr.mxu0 %v4548
    %v4550 = vand.u32 %v1490, 4294901760
    %4551 = vmatpush1.msra.mxu0 %v4550
    %v4552 = vand.u32 %v1494, 4294901760
    %4553 = vmatprep.subr.mxu0 %v4552
    %v4554 = vand.u32 %v1493, 4294901760
    %4555 = vmatpush1.msra.mxu0 %v4554
    %v4556 = vand.u32 %v1497, 4294901760
    %4557 = vmatprep.subr.mxu0 %v4556
    %v4558 = vand.u32 %v1496, 4294901760
    %4559 = vmatpush1.msra.mxu0 %v4558
    %v4560 = vand.u32 %v1500, 4294901760
    %4561 = vmatprep.subr.mxu0 %v4560
    %v4562 = vand.u32 %v1499, 4294901760
    %4563 = vmatpush1.msra.mxu0 %v4562
    %v4564 = vand.u32 %v1503, 4294901760
    %4565 = vmatprep.subr.mxu0 %v4564
    %v4566 = vand.u32 %v1502, 4294901760
    %4567 = vmatpush1.msra.mxu0 %v4566
    %v4568 = vand.u32 %v1506, 4294901760
    %4569 = vmatprep.subr.mxu0 %v4568
    %v4570 = vand.u32 %v1505, 4294901760
    %4571 = vmatpush1.msra.mxu0 %v4570
    %v4572 = vand.u32 %v1509, 4294901760
    %4573 = vmatprep.subr.mxu0 %v4572
    %v4574 = vand.u32 %v1508, 4294901760
    %4575 = vmatpush1.msra.mxu0 %v4574
    %v4576 = vand.u32 %v1512, 4294901760
    %4577 = vmatprep.subr.mxu0 %v4576
    %v4578 = vand.u32 %v1511, 4294901760
    %4579 = vmatpush1.msra.mxu0 %v4578
    %v4580 = vand.u32 %v1515, 4294901760
    %4581 = vmatprep.subr.mxu0 %v4580
    %v4582 = vand.u32 %v1514, 4294901760
    %4583 = vmatpush1.msra.mxu0 %v4582
    %v4584 = vand.u32 %v1518, 4294901760
    %4585 = vmatprep.subr.mxu0 %v4584
    %v4586 = vand.u32 %v1517, 4294901760
    %4587 = vmatpush1.msra.mxu0 %v4586
    %v4588 = vand.u32 %v1521, 4294901760
    %4589 = vmatprep.subr.mxu0 %v4588
    %v4590 = vand.u32 %v1520, 4294901760
    %4591 = vmatpush1.msra.mxu0 %v4590
    %v4592 = vand.u32 %v1524, 4294901760
    %4593 = vmatprep.subr.mxu0 %v4592
    %v4594 = vand.u32 %v1523, 4294901760
    %4595 = vmatpush1.msra.mxu0 %v4594
    %v4596 = vand.u32 %v1527, 4294901760
    %4597 = vmatprep.subr.mxu0 %v4596
    %v4598 = vand.u32 %v1526, 4294901760
    %4599 = vmatpush1.msra.mxu0 %v4598
    %v4600 = vand.u32 %v1530, 4294901760
    %4601 = vmatprep.subr.mxu0 %v4600
    %v4602 = vand.u32 %v1529, 4294901760
    %4603 = vmatpush1.msra.mxu0 %v4602
    %v4604 = vand.u32 %v1533, 4294901760
    %4605 = vmatprep.subr.mxu0 %v4604
    %v4606 = vand.u32 %v1532, 4294901760
    %4607 = vmatpush1.msra.mxu0 %v4606
    %v4608 = vand.u32 %v1536, 4294901760
    %4609 = vmatprep.subr.mxu0 %v4608
    %v4610 = vand.u32 %v1535, 4294901760
    %4611 = vmatpush1.msra.mxu0 %v4610
    %v4612 = vand.u32 %v1539, 4294901760
    %4613 = vmatprep.subr.mxu0 %v4612
    %v4614 = vand.u32 %v1538, 4294901760
    %4615 = vmatpush1.msra.mxu0 %v4614
    %v4616 = vand.u32 %v1542, 4294901760
    %4617 = vmatprep.subr.mxu0 %v4616
    %v4618 = vand.u32 %v1541, 4294901760
    %4619 = vmatpush1.msra.mxu0 %v4618
    %v4620 = vand.u32 %v1545, 4294901760
    %4621 = vmatprep.subr.mxu0 %v4620
    %v4622 = vand.u32 %v1544, 4294901760
    %4623 = vmatpush1.msra.mxu0 %v4622
    %v4624 = vand.u32 %v1548, 4294901760
    %4625 = vmatprep.subr.mxu0 %v4624
    %v4626 = vand.u32 %v1547, 4294901760
    %4627 = vmatpush1.msra.mxu0 %v4626
    %v4628 = vand.u32 %v1551, 4294901760
    %4629 = vmatprep.subr.mxu0 %v4628
    %v4630 = vand.u32 %v1550, 4294901760
    %4631 = vmatpush1.msra.mxu0 %v4630
    %v4632 = vand.u32 %v1554, 4294901760
    %4633 = vmatprep.subr.mxu0 %v4632
    %v4634 = vand.u32 %v1553, 4294901760
    %4635 = vmatpush1.msra.mxu0 %v4634
    %v4636 = vand.u32 %v1557, 4294901760
    %4637 = vmatprep.subr.mxu0 %v4636
    %v4638 = vand.u32 %v1556, 4294901760
    %4639 = vmatpush1.msra.mxu0 %v4638
    %v4640 = vand.u32 %v1560, 4294901760
    %4641 = vmatprep.subr.mxu0 %v4640
    %v4642 = vand.u32 %v1559, 4294901760
    %4643 = vmatpush1.msra.mxu0 %v4642
    %v4644 = vand.u32 %v1369, 4294901760
    %v4645 = vsub.f32 %v1369, %v4644
    %v4646 = vand.u32 %v4645, 4294901760
    %4647 = vmatprep.mubr.f32.mxu0 %v4646
    %v4648 = vand.u32 %v1368, 4294901760
    %v4649 = vsub.f32 %v1368, %v4648
    %v4650 = vand.u32 %v4649, 4294901760
    %4651 = vmatmul.mubr.f32.gmra.mrb[0].mxu0 %v4650
    %v4652 = vpop.f32.mrb[0].mxu0
    %v4653 = vadd.f32 %v4512, %v4652
    %v4654 = vpop.f32.mrb[0].mxu0
    %v4655 = vadd.f32 %v4514, %v4654
    %4656 = vdwg.mxu0
    %v4657 = vand.u32 %v1467, 4294901760
    %v4658 = vsub.f32 %v1467, %v4657
    %v4659 = vand.u32 %v4658, 4294901760
    %4660 = vmatprep.subr.mxu0 %v4659
    %v4661 = vand.u32 %v1466, 4294901760
    %v4662 = vsub.f32 %v1466, %v4661
    %v4663 = vand.u32 %v4662, 4294901760
    %4664 = vmatpush1.msra.mxu0 %v4663
    %v4665 = vand.u32 %v1470, 4294901760
    %v4666 = vsub.f32 %v1470, %v4665
    %v4667 = vand.u32 %v4666, 4294901760
    %4668 = vmatprep.subr.mxu0 %v4667
    %v4669 = vand.u32 %v1469, 4294901760
    %v4670 = vsub.f32 %v1469, %v4669
    %v4671 = vand.u32 %v4670, 4294901760
    %4672 = vmatpush1.msra.mxu0 %v4671
    %v4673 = vand.u32 %v1473, 4294901760
    %v4674 = vsub.f32 %v1473, %v4673
    %v4675 = vand.u32 %v4674, 4294901760
    %4676 = vmatprep.subr.mxu0 %v4675
    %v4677 = vand.u32 %v1472, 4294901760
    %v4678 = vsub.f32 %v1472, %v4677
    %v4679 = vand.u32 %v4678, 4294901760
    %4680 = vmatpush1.msra.mxu0 %v4679
    %v4681 = vand.u32 %v1476, 4294901760
    %v4682 = vsub.f32 %v1476, %v4681
    %v4683 = vand.u32 %v4682, 4294901760
    %4684 = vmatprep.subr.mxu0 %v4683
    %v4685 = vand.u32 %v1475, 4294901760
    %v4686 = vsub.f32 %v1475, %v4685
    %v4687 = vand.u32 %v4686, 4294901760
    %4688 = vmatpush1.msra.mxu0 %v4687
    %v4689 = vand.u32 %v1479, 4294901760
    %v4690 = vsub.f32 %v1479, %v4689
    %v4691 = vand.u32 %v4690, 4294901760
    %4692 = vmatprep.subr.mxu0 %v4691
    %v4693 = vand.u32 %v1478, 4294901760
    %v4694 = vsub.f32 %v1478, %v4693
    %v4695 = vand.u32 %v4694, 4294901760
    %4696 = vmatpush1.msra.mxu0 %v4695
    %v4697 = vand.u32 %v1482, 4294901760
    %v4698 = vsub.f32 %v1482, %v4697
    %v4699 = vand.u32 %v4698, 4294901760
    %4700 = vmatprep.subr.mxu0 %v4699
    %v4701 = vand.u32 %v1481, 4294901760
    %v4702 = vsub.f32 %v1481, %v4701
    %v4703 = vand.u32 %v4702, 4294901760
    %4704 = vmatpush1.msra.mxu0 %v4703
    %v4705 = vand.u32 %v1485, 4294901760
    %v4706 = vsub.f32 %v1485, %v4705
    %v4707 = vand.u32 %v4706, 4294901760
    %4708 = vmatprep.subr.mxu0 %v4707
    %v4709 = vand.u32 %v1484, 4294901760
    %v4710 = vsub.f32 %v1484, %v4709
    %v4711 = vand.u32 %v4710, 4294901760
    %4712 = vmatpush1.msra.mxu0 %v4711
    %v4713 = vand.u32 %v1488, 4294901760
    %v4714 = vsub.f32 %v1488, %v4713
    %v4715 = vand.u32 %v4714, 4294901760
    %4716 = vmatprep.subr.mxu0 %v4715
    %v4717 = vand.u32 %v1487, 4294901760
    %v4718 = vsub.f32 %v1487, %v4717
    %v4719 = vand.u32 %v4718, 4294901760
    %4720 = vmatpush1.msra.mxu0 %v4719
    %v4721 = vand.u32 %v1491, 4294901760
    %v4722 = vsub.f32 %v1491, %v4721
    %v4723 = vand.u32 %v4722, 4294901760
    %4724 = vmatprep.subr.mxu0 %v4723
    %v4725 = vand.u32 %v1490, 4294901760
    %v4726 = vsub.f32 %v1490, %v4725
    %v4727 = vand.u32 %v4726, 4294901760
    %4728 = vmatpush1.msra.mxu0 %v4727
    %v4729 = vand.u32 %v1494, 4294901760
    %v4730 = vsub.f32 %v1494, %v4729
    %v4731 = vand.u32 %v4730, 4294901760
    %4732 = vmatprep.subr.mxu0 %v4731
    %v4733 = vand.u32 %v1493, 4294901760
    %v4734 = vsub.f32 %v1493, %v4733
    %v4735 = vand.u32 %v4734, 4294901760
    %4736 = vmatpush1.msra.mxu0 %v4735
    %v4737 = vand.u32 %v1497, 4294901760
    %v4738 = vsub.f32 %v1497, %v4737
    %v4739 = vand.u32 %v4738, 4294901760
    %4740 = vmatprep.subr.mxu0 %v4739
    %v4741 = vand.u32 %v1496, 4294901760
    %v4742 = vsub.f32 %v1496, %v4741
    %v4743 = vand.u32 %v4742, 4294901760
    %4744 = vmatpush1.msra.mxu0 %v4743
    %v4745 = vand.u32 %v1500, 4294901760
    %v4746 = vsub.f32 %v1500, %v4745
    %v4747 = vand.u32 %v4746, 4294901760
    %4748 = vmatprep.subr.mxu0 %v4747
    %v4749 = vand.u32 %v1499, 4294901760
    %v4750 = vsub.f32 %v1499, %v4749
    %v4751 = vand.u32 %v4750, 4294901760
    %4752 = vmatpush1.msra.mxu0 %v4751
    %v4753 = vand.u32 %v1503, 4294901760
    %v4754 = vsub.f32 %v1503, %v4753
    %v4755 = vand.u32 %v4754, 4294901760
    %4756 = vmatprep.subr.mxu0 %v4755
    %v4757 = vand.u32 %v1502, 4294901760
    %v4758 = vsub.f32 %v1502, %v4757
    %v4759 = vand.u32 %v4758, 4294901760
    %4760 = vmatpush1.msra.mxu0 %v4759
    %v4761 = vand.u32 %v1506, 4294901760
    %v4762 = vsub.f32 %v1506, %v4761
    %v4763 = vand.u32 %v4762, 4294901760
    %4764 = vmatprep.subr.mxu0 %v4763
    %v4765 = vand.u32 %v1505, 4294901760
    %v4766 = vsub.f32 %v1505, %v4765
    %v4767 = vand.u32 %v4766, 4294901760
    %4768 = vmatpush1.msra.mxu0 %v4767
    %v4769 = vand.u32 %v1509, 4294901760
    %v4770 = vsub.f32 %v1509, %v4769
    %v4771 = vand.u32 %v4770, 4294901760
    %4772 = vmatprep.subr.mxu0 %v4771
    %v4773 = vand.u32 %v1508, 4294901760
    %v4774 = vsub.f32 %v1508, %v4773
    %v4775 = vand.u32 %v4774, 4294901760
    %4776 = vmatpush1.msra.mxu0 %v4775
    %v4777 = vand.u32 %v1512, 4294901760
    %v4778 = vsub.f32 %v1512, %v4777
    %v4779 = vand.u32 %v4778, 4294901760
    %4780 = vmatprep.subr.mxu0 %v4779
    %v4781 = vand.u32 %v1511, 4294901760
    %v4782 = vsub.f32 %v1511, %v4781
    %v4783 = vand.u32 %v4782, 4294901760
    %4784 = vmatpush1.msra.mxu0 %v4783
    %v4785 = vand.u32 %v1515, 4294901760
    %v4786 = vsub.f32 %v1515, %v4785
    %v4787 = vand.u32 %v4786, 4294901760
    %4788 = vmatprep.subr.mxu0 %v4787
    %v4789 = vand.u32 %v1514, 4294901760
    %v4790 = vsub.f32 %v1514, %v4789
    %v4791 = vand.u32 %v4790, 4294901760
    %4792 = vmatpush1.msra.mxu0 %v4791
    %v4793 = vand.u32 %v1518, 4294901760
    %v4794 = vsub.f32 %v1518, %v4793
    %v4795 = vand.u32 %v4794, 4294901760
    %4796 = vmatprep.subr.mxu0 %v4795
    %v4797 = vand.u32 %v1517, 4294901760
    %v4798 = vsub.f32 %v1517, %v4797
    %v4799 = vand.u32 %v4798, 4294901760
    %4800 = vmatpush1.msra.mxu0 %v4799
    %v4801 = vand.u32 %v1521, 4294901760
    %v4802 = vsub.f32 %v1521, %v4801
    %v4803 = vand.u32 %v4802, 4294901760
    %4804 = vmatprep.subr.mxu0 %v4803
    %v4805 = vand.u32 %v1520, 4294901760
    %v4806 = vsub.f32 %v1520, %v4805
    %v4807 = vand.u32 %v4806, 4294901760
    %4808 = vmatpush1.msra.mxu0 %v4807
    %v4809 = vand.u32 %v1524, 4294901760
    %v4810 = vsub.f32 %v1524, %v4809
    %v4811 = vand.u32 %v4810, 4294901760
    %4812 = vmatprep.subr.mxu0 %v4811
    %v4813 = vand.u32 %v1523, 4294901760
    %v4814 = vsub.f32 %v1523, %v4813
    %v4815 = vand.u32 %v4814, 4294901760
    %4816 = vmatpush1.msra.mxu0 %v4815
    %v4817 = vand.u32 %v1527, 4294901760
    %v4818 = vsub.f32 %v1527, %v4817
    %v4819 = vand.u32 %v4818, 4294901760
    %4820 = vmatprep.subr.mxu0 %v4819
    %v4821 = vand.u32 %v1526, 4294901760
    %v4822 = vsub.f32 %v1526, %v4821
    %v4823 = vand.u32 %v4822, 4294901760
    %4824 = vmatpush1.msra.mxu0 %v4823
    %v4825 = vand.u32 %v1530, 4294901760
    %v4826 = vsub.f32 %v1530, %v4825
    %v4827 = vand.u32 %v4826, 4294901760
    %4828 = vmatprep.subr.mxu0 %v4827
    %v4829 = vand.u32 %v1529, 4294901760
    %v4830 = vsub.f32 %v1529, %v4829
    %v4831 = vand.u32 %v4830, 4294901760
    %4832 = vmatpush1.msra.mxu0 %v4831
    %v4833 = vand.u32 %v1533, 4294901760
    %v4834 = vsub.f32 %v1533, %v4833
    %v4835 = vand.u32 %v4834, 4294901760
    %4836 = vmatprep.subr.mxu0 %v4835
    %v4837 = vand.u32 %v1532, 4294901760
    %v4838 = vsub.f32 %v1532, %v4837
    %v4839 = vand.u32 %v4838, 4294901760
    %4840 = vmatpush1.msra.mxu0 %v4839
    %v4841 = vand.u32 %v1536, 4294901760
    %v4842 = vsub.f32 %v1536, %v4841
    %v4843 = vand.u32 %v4842, 4294901760
    %4844 = vmatprep.subr.mxu0 %v4843
    %v4845 = vand.u32 %v1535, 4294901760
    %v4846 = vsub.f32 %v1535, %v4845
    %v4847 = vand.u32 %v4846, 4294901760
    %4848 = vmatpush1.msra.mxu0 %v4847
    %v4849 = vand.u32 %v1539, 4294901760
    %v4850 = vsub.f32 %v1539, %v4849
    %v4851 = vand.u32 %v4850, 4294901760
    %4852 = vmatprep.subr.mxu0 %v4851
    %v4853 = vand.u32 %v1538, 4294901760
    %v4854 = vsub.f32 %v1538, %v4853
    %v4855 = vand.u32 %v4854, 4294901760
    %4856 = vmatpush1.msra.mxu0 %v4855
    %v4857 = vand.u32 %v1542, 4294901760
    %v4858 = vsub.f32 %v1542, %v4857
    %v4859 = vand.u32 %v4858, 4294901760
    %4860 = vmatprep.subr.mxu0 %v4859
    %v4861 = vand.u32 %v1541, 4294901760
    %v4862 = vsub.f32 %v1541, %v4861
    %v4863 = vand.u32 %v4862, 4294901760
    %4864 = vmatpush1.msra.mxu0 %v4863
    %v4865 = vand.u32 %v1545, 4294901760
    %v4866 = vsub.f32 %v1545, %v4865
    %v4867 = vand.u32 %v4866, 4294901760
    %4868 = vmatprep.subr.mxu0 %v4867
    %v4869 = vand.u32 %v1544, 4294901760
    %v4870 = vsub.f32 %v1544, %v4869
    %v4871 = vand.u32 %v4870, 4294901760
    %4872 = vmatpush1.msra.mxu0 %v4871
    %v4873 = vand.u32 %v1548, 4294901760
    %v4874 = vsub.f32 %v1548, %v4873
    %v4875 = vand.u32 %v4874, 4294901760
    %4876 = vmatprep.subr.mxu0 %v4875
    %v4877 = vand.u32 %v1547, 4294901760
    %v4878 = vsub.f32 %v1547, %v4877
    %v4879 = vand.u32 %v4878, 4294901760
    %4880 = vmatpush1.msra.mxu0 %v4879
    %v4881 = vand.u32 %v1551, 4294901760
    %v4882 = vsub.f32 %v1551, %v4881
    %v4883 = vand.u32 %v4882, 4294901760
    %4884 = vmatprep.subr.mxu0 %v4883
    %v4885 = vand.u32 %v1550, 4294901760
    %v4886 = vsub.f32 %v1550, %v4885
    %v4887 = vand.u32 %v4886, 4294901760
    %4888 = vmatpush1.msra.mxu0 %v4887
    %v4889 = vand.u32 %v1554, 4294901760
    %v4890 = vsub.f32 %v1554, %v4889
    %v4891 = vand.u32 %v4890, 4294901760
    %4892 = vmatprep.subr.mxu0 %v4891
    %v4893 = vand.u32 %v1553, 4294901760
    %v4894 = vsub.f32 %v1553, %v4893
    %v4895 = vand.u32 %v4894, 4294901760
    %4896 = vmatpush1.msra.mxu0 %v4895
    %v4897 = vand.u32 %v1557, 4294901760
    %v4898 = vsub.f32 %v1557, %v4897
    %v4899 = vand.u32 %v4898, 4294901760
    %4900 = vmatprep.subr.mxu0 %v4899
    %v4901 = vand.u32 %v1556, 4294901760
    %v4902 = vsub.f32 %v1556, %v4901
    %v4903 = vand.u32 %v4902, 4294901760
    %4904 = vmatpush1.msra.mxu0 %v4903
    %v4905 = vand.u32 %v1560, 4294901760
    %v4906 = vsub.f32 %v1560, %v4905
    %v4907 = vand.u32 %v4906, 4294901760
    %4908 = vmatprep.subr.mxu0 %v4907
    %v4909 = vand.u32 %v1559, 4294901760
    %v4910 = vsub.f32 %v1559, %v4909
    %v4911 = vand.u32 %v4910, 4294901760
    %4912 = vmatpush1.msra.mxu0 %v4911
    %v4913 = vand.u32 %v1369, 4294901760
    %4914 = vmatprep.mubr.f32.mxu0 %v4913
    %v4915 = vand.u32 %v1368, 4294901760
    %4916 = vmatmul.mubr.f32.gmra.mrb[0].mxu0 %v4915
    %v4917 = vpop.f32.mrb[0].mxu0
    %v4918 = vadd.f32 %v4653, %v4917
    %v4919 = vpop.f32.mrb[0].mxu0
    %v4920 = vadd.f32 %v4655, %v4919
    %4921 = vdwg.mxu0
    %v4922 = vand.u32 %v1467, 4294901760
    %4923 = vmatprep.subr.mxu0 %v4922
    %v4924 = vand.u32 %v1466, 4294901760
    %4925 = vmatpush1.msra.mxu0 %v4924
    %v4926 = vand.u32 %v1470, 4294901760
    %4927 = vmatprep.subr.mxu0 %v4926
    %v4928 = vand.u32 %v1469, 4294901760
    %4929 = vmatpush1.msra.mxu0 %v4928
    %v4930 = vand.u32 %v1473, 4294901760
    %4931 = vmatprep.subr.mxu0 %v4930
    %v4932 = vand.u32 %v1472, 4294901760
    %4933 = vmatpush1.msra.mxu0 %v4932
    %v4934 = vand.u32 %v1476, 4294901760
    %4935 = vmatprep.subr.mxu0 %v4934
    %v4936 = vand.u32 %v1475, 4294901760
    %4937 = vmatpush1.msra.mxu0 %v4936
    %v4938 = vand.u32 %v1479, 4294901760
    %4939 = vmatprep.subr.mxu0 %v4938
    %v4940 = vand.u32 %v1478, 4294901760
    %4941 = vmatpush1.msra.mxu0 %v4940
    %v4942 = vand.u32 %v1482, 4294901760
    %4943 = vmatprep.subr.mxu0 %v4942
    %v4944 = vand.u32 %v1481, 4294901760
    %4945 = vmatpush1.msra.mxu0 %v4944
    %v4946 = vand.u32 %v1485, 4294901760
    %4947 = vmatprep.subr.mxu0 %v4946
    %v4948 = vand.u32 %v1484, 4294901760
    %4949 = vmatpush1.msra.mxu0 %v4948
    %v4950 = vand.u32 %v1488, 4294901760
    %4951 = vmatprep.subr.mxu0 %v4950
    %v4952 = vand.u32 %v1487, 4294901760
    %4953 = vmatpush1.msra.mxu0 %v4952
    %v4954 = vand.u32 %v1491, 4294901760
    %4955 = vmatprep.subr.mxu0 %v4954
    %v4956 = vand.u32 %v1490, 4294901760
    %4957 = vmatpush1.msra.mxu0 %v4956
    %v4958 = vand.u32 %v1494, 4294901760
    %4959 = vmatprep.subr.mxu0 %v4958
    %v4960 = vand.u32 %v1493, 4294901760
    %4961 = vmatpush1.msra.mxu0 %v4960
    %v4962 = vand.u32 %v1497, 4294901760
    %4963 = vmatprep.subr.mxu0 %v4962
    %v4964 = vand.u32 %v1496, 4294901760
    %4965 = vmatpush1.msra.mxu0 %v4964
    %v4966 = vand.u32 %v1500, 4294901760
    %4967 = vmatprep.subr.mxu0 %v4966
    %v4968 = vand.u32 %v1499, 4294901760
    %4969 = vmatpush1.msra.mxu0 %v4968
    %v4970 = vand.u32 %v1503, 4294901760
    %4971 = vmatprep.subr.mxu0 %v4970
    %v4972 = vand.u32 %v1502, 4294901760
    %4973 = vmatpush1.msra.mxu0 %v4972
    %v4974 = vand.u32 %v1506, 4294901760
    %4975 = vmatprep.subr.mxu0 %v4974
    %v4976 = vand.u32 %v1505, 4294901760
    %4977 = vmatpush1.msra.mxu0 %v4976
    %v4978 = vand.u32 %v1509, 4294901760
    %4979 = vmatprep.subr.mxu0 %v4978
    %v4980 = vand.u32 %v1508, 4294901760
    %4981 = vmatpush1.msra.mxu0 %v4980
    %v4982 = vand.u32 %v1512, 4294901760
    %4983 = vmatprep.subr.mxu0 %v4982
    %v4984 = vand.u32 %v1511, 4294901760
    %4985 = vmatpush1.msra.mxu0 %v4984
    %v4986 = vand.u32 %v1515, 4294901760
    %4987 = vmatprep.subr.mxu0 %v4986
    %v4988 = vand.u32 %v1514, 4294901760
    %4989 = vmatpush1.msra.mxu0 %v4988
    %v4990 = vand.u32 %v1518, 4294901760
    %4991 = vmatprep.subr.mxu0 %v4990
    %v4992 = vand.u32 %v1517, 4294901760
    %4993 = vmatpush1.msra.mxu0 %v4992
    %v4994 = vand.u32 %v1521, 4294901760
    %4995 = vmatprep.subr.mxu0 %v4994
    %v4996 = vand.u32 %v1520, 4294901760
    %4997 = vmatpush1.msra.mxu0 %v4996
    %v4998 = vand.u32 %v1524, 4294901760
    %4999 = vmatprep.subr.mxu0 %v4998
    %v5000 = vand.u32 %v1523, 4294901760
    %5001 = vmatpush1.msra.mxu0 %v5000
    %v5002 = vand.u32 %v1527, 4294901760
    %5003 = vmatprep.subr.mxu0 %v5002
    %v5004 = vand.u32 %v1526, 4294901760
    %5005 = vmatpush1.msra.mxu0 %v5004
    %v5006 = vand.u32 %v1530, 4294901760
    %5007 = vmatprep.subr.mxu0 %v5006
    %v5008 = vand.u32 %v1529, 4294901760
    %5009 = vmatpush1.msra.mxu0 %v5008
    %v5010 = vand.u32 %v1533, 4294901760
    %5011 = vmatprep.subr.mxu0 %v5010
    %v5012 = vand.u32 %v1532, 4294901760
    %5013 = vmatpush1.msra.mxu0 %v5012
    %v5014 = vand.u32 %v1536, 4294901760
    %5015 = vmatprep.subr.mxu0 %v5014
    %v5016 = vand.u32 %v1535, 4294901760
    %5017 = vmatpush1.msra.mxu0 %v5016
    %v5018 = vand.u32 %v1539, 4294901760
    %5019 = vmatprep.subr.mxu0 %v5018
    %v5020 = vand.u32 %v1538, 4294901760
    %5021 = vmatpush1.msra.mxu0 %v5020
    %v5022 = vand.u32 %v1542, 4294901760
    %5023 = vmatprep.subr.mxu0 %v5022
    %v5024 = vand.u32 %v1541, 4294901760
    %5025 = vmatpush1.msra.mxu0 %v5024
    %v5026 = vand.u32 %v1545, 4294901760
    %5027 = vmatprep.subr.mxu0 %v5026
    %v5028 = vand.u32 %v1544, 4294901760
    %5029 = vmatpush1.msra.mxu0 %v5028
    %v5030 = vand.u32 %v1548, 4294901760
    %5031 = vmatprep.subr.mxu0 %v5030
    %v5032 = vand.u32 %v1547, 4294901760
    %5033 = vmatpush1.msra.mxu0 %v5032
    %v5034 = vand.u32 %v1551, 4294901760
    %5035 = vmatprep.subr.mxu0 %v5034
    %v5036 = vand.u32 %v1550, 4294901760
    %5037 = vmatpush1.msra.mxu0 %v5036
    %v5038 = vand.u32 %v1554, 4294901760
    %5039 = vmatprep.subr.mxu0 %v5038
    %v5040 = vand.u32 %v1553, 4294901760
    %5041 = vmatpush1.msra.mxu0 %v5040
    %v5042 = vand.u32 %v1557, 4294901760
    %5043 = vmatprep.subr.mxu0 %v5042
    %v5044 = vand.u32 %v1556, 4294901760
    %5045 = vmatpush1.msra.mxu0 %v5044
    %v5046 = vand.u32 %v1560, 4294901760
    %5047 = vmatprep.subr.mxu0 %v5046
    %v5048 = vand.u32 %v1559, 4294901760
    %5049 = vmatpush1.msra.mxu0 %v5048
    %v5050 = vand.u32 %v1369, 4294901760
    %5051 = vmatprep.mubr.f32.mxu0 %v5050
    %v5052 = vand.u32 %v1368, 4294901760
    %5053 = vmatmul.mubr.f32.gmra.mrb[0].mxu0 %v5052
    %v5054 = vpop.f32.mrb[0].mxu0
    %v5055 = vadd.f32 %v4918, %v5054
    %v5056 = vpop.f32.mrb[0].mxu0
    %v5057 = vadd.f32 %v4920, %v5056
    %5058 = vdwg.mxu0
    %5059 = vmatprep.subr.mxu0 0.0
    %v5060 = vand.u32 %v1372, 4294901760
    %5061 = vmatpush1.msra.mxu0 %v5060
    %5062 = vmatprep.subr.mxu0 0.0
    %v5063 = vand.u32 %v1375, 4294901760
    %5064 = vmatpush1.msra.mxu0 %v5063
    %5065 = vmatprep.subr.mxu0 0.0
    %v5066 = vand.u32 %v1378, 4294901760
    %5067 = vmatpush1.msra.mxu0 %v5066
    %5068 = vmatprep.subr.mxu0 0.0
    %v5069 = vand.u32 %v1381, 4294901760
    %5070 = vmatpush1.msra.mxu0 %v5069
    %5071 = vmatprep.subr.mxu0 0.0
    %v5072 = vand.u32 %v1384, 4294901760
    %5073 = vmatpush1.msra.mxu0 %v5072
    %5074 = vmatprep.subr.mxu0 0.0
    %v5075 = vand.u32 %v1387, 4294901760
    %5076 = vmatpush1.msra.mxu0 %v5075
    %5077 = vmatprep.subr.mxu0 0.0
    %v5078 = vand.u32 %v1390, 4294901760
    %5079 = vmatpush1.msra.mxu0 %v5078
    %5080 = vmatprep.subr.mxu0 0.0
    %v5081 = vand.u32 %v1393, 4294901760
    %5082 = vmatpush1.msra.mxu0 %v5081
    %5083 = vmatprep.subr.mxu0 0.0
    %v5084 = vand.u32 %v1396, 4294901760
    %5085 = vmatpush1.msra.mxu0 %v5084
    %5086 = vmatprep.subr.mxu0 0.0
    %v5087 = vand.u32 %v1399, 4294901760
    %5088 = vmatpush1.msra.mxu0 %v5087
    %5089 = vmatprep.subr.mxu0 0.0
    %v5090 = vand.u32 %v1402, 4294901760
    %5091 = vmatpush1.msra.mxu0 %v5090
    %5092 = vmatprep.subr.mxu0 0.0
    %v5093 = vand.u32 %v1405, 4294901760
    %5094 = vmatpush1.msra.mxu0 %v5093
    %5095 = vmatprep.subr.mxu0 0.0
    %v5096 = vand.u32 %v1408, 4294901760
    %5097 = vmatpush1.msra.mxu0 %v5096
    %5098 = vmatprep.subr.mxu0 0.0
    %v5099 = vand.u32 %v1411, 4294901760
    %5100 = vmatpush1.msra.mxu0 %v5099
    %5101 = vmatprep.subr.mxu0 0.0
    %v5102 = vand.u32 %v1414, 4294901760
    %5103 = vmatpush1.msra.mxu0 %v5102
    %5104 = vmatprep.subr.mxu0 0.0
    %v5105 = vand.u32 %v1417, 4294901760
    %5106 = vmatpush1.msra.mxu0 %v5105
    %5107 = vmatprep.subr.mxu0 0.0
    %v5108 = vand.u32 %v1420, 4294901760
    %5109 = vmatpush1.msra.mxu0 %v5108
    %5110 = vmatprep.subr.mxu0 0.0
    %v5111 = vand.u32 %v1423, 4294901760
    %5112 = vmatpush1.msra.mxu0 %v5111
    %5113 = vmatprep.subr.mxu0 0.0
    %v5114 = vand.u32 %v1426, 4294901760
    %5115 = vmatpush1.msra.mxu0 %v5114
    %5116 = vmatprep.subr.mxu0 0.0
    %v5117 = vand.u32 %v1429, 4294901760
    %5118 = vmatpush1.msra.mxu0 %v5117
    %5119 = vmatprep.subr.mxu0 0.0
    %v5120 = vand.u32 %v1432, 4294901760
    %5121 = vmatpush1.msra.mxu0 %v5120
    %5122 = vmatprep.subr.mxu0 0.0
    %v5123 = vand.u32 %v1435, 4294901760
    %5124 = vmatpush1.msra.mxu0 %v5123
    %5125 = vmatprep.subr.mxu0 0.0
    %v5126 = vand.u32 %v1438, 4294901760
    %5127 = vmatpush1.msra.mxu0 %v5126
    %5128 = vmatprep.subr.mxu0 0.0
    %v5129 = vand.u32 %v1441, 4294901760
    %5130 = vmatpush1.msra.mxu0 %v5129
    %5131 = vmatprep.subr.mxu0 0.0
    %v5132 = vand.u32 %v1444, 4294901760
    %5133 = vmatpush1.msra.mxu0 %v5132
    %5134 = vmatprep.subr.mxu0 0.0
    %v5135 = vand.u32 %v1447, 4294901760
    %5136 = vmatpush1.msra.mxu0 %v5135
    %5137 = vmatprep.subr.mxu0 0.0
    %v5138 = vand.u32 %v1450, 4294901760
    %5139 = vmatpush1.msra.mxu0 %v5138
    %5140 = vmatprep.subr.mxu0 0.0
    %v5141 = vand.u32 %v1453, 4294901760
    %5142 = vmatpush1.msra.mxu0 %v5141
    %5143 = vmatprep.subr.mxu0 0.0
    %v5144 = vand.u32 %v1456, 4294901760
    %5145 = vmatpush1.msra.mxu0 %v5144
    %5146 = vmatprep.subr.mxu0 0.0
    %v5147 = vand.u32 %v1459, 4294901760
    %5148 = vmatpush1.msra.mxu0 %v5147
    %5149 = vmatprep.subr.mxu0 0.0
    %v5150 = vand.u32 %v1462, 4294901760
    %5151 = vmatpush1.msra.mxu0 %v5150
    %5152 = vmatprep.subr.mxu0 0.0
    %v5153 = vand.u32 %v1465, 4294901760
    %5154 = vmatpush1.msra.mxu0 %v5153
    %v5155 = vand.u32 %v1367, 4294901760
    %v5156 = vsub.f32 %v1367, %v5155
    %v5157 = vand.u32 %v5156, 4294901760
    %v5158 = vsub.f32 %v5156, %v5157
    %v5159 = vand.u32 %v5158, 4294901760
    %5160 = vmatprep.mubr.f32.mxu0 %v5159
    %v5161 = vand.u32 %v1366, 4294901760
    %v5162 = vsub.f32 %v1366, %v5161
    %v5163 = vand.u32 %v5162, 4294901760
    %v5164 = vsub.f32 %v5162, %v5163
    %v5165 = vand.u32 %v5164, 4294901760
    %5166 = vmatmul.mubr.f32.gmra.mrb[0].mxu0 %v5165
    %v5167 = vpop.f32.mrb[0].mxu0
    %v5168 = vadd.f32 %v2488, %v5167
    %v5169 = vpop.f32.mrb[0].mxu0
    %5170 = vdwg.mxu0
    %5171 = vmatprep.subr.mxu0 0.0
    %v5172 = vand.u32 %v1372, 4294901760
    %v5173 = vsub.f32 %v1372, %v5172
    %v5174 = vand.u32 %v5173, 4294901760
    %v5175 = vsub.f32 %v5173, %v5174
    %v5176 = vand.u32 %v5175, 4294901760
    %5177 = vmatpush1.msra.mxu0 %v5176
    %5178 = vmatprep.subr.mxu0 0.0
    %v5179 = vand.u32 %v1375, 4294901760
    %v5180 = vsub.f32 %v1375, %v5179
    %v5181 = vand.u32 %v5180, 4294901760
    %v5182 = vsub.f32 %v5180, %v5181
    %v5183 = vand.u32 %v5182, 4294901760
    %5184 = vmatpush1.msra.mxu0 %v5183
    %5185 = vmatprep.subr.mxu0 0.0
    %v5186 = vand.u32 %v1378, 4294901760
    %v5187 = vsub.f32 %v1378, %v5186
    %v5188 = vand.u32 %v5187, 4294901760
    %v5189 = vsub.f32 %v5187, %v5188
    %v5190 = vand.u32 %v5189, 4294901760
    %5191 = vmatpush1.msra.mxu0 %v5190
    %5192 = vmatprep.subr.mxu0 0.0
    %v5193 = vand.u32 %v1381, 4294901760
    %v5194 = vsub.f32 %v1381, %v5193
    %v5195 = vand.u32 %v5194, 4294901760
    %v5196 = vsub.f32 %v5194, %v5195
    %v5197 = vand.u32 %v5196, 4294901760
    %5198 = vmatpush1.msra.mxu0 %v5197
    %5199 = vmatprep.subr.mxu0 0.0
    %v5200 = vand.u32 %v1384, 4294901760
    %v5201 = vsub.f32 %v1384, %v5200
    %v5202 = vand.u32 %v5201, 4294901760
    %v5203 = vsub.f32 %v5201, %v5202
    %v5204 = vand.u32 %v5203, 4294901760
    %5205 = vmatpush1.msra.mxu0 %v5204
    %5206 = vmatprep.subr.mxu0 0.0
    %v5207 = vand.u32 %v1387, 4294901760
    %v5208 = vsub.f32 %v1387, %v5207
    %v5209 = vand.u32 %v5208, 4294901760
    %v5210 = vsub.f32 %v5208, %v5209
    %v5211 = vand.u32 %v5210, 4294901760
    %5212 = vmatpush1.msra.mxu0 %v5211
    %5213 = vmatprep.subr.mxu0 0.0
    %v5214 = vand.u32 %v1390, 4294901760
    %v5215 = vsub.f32 %v1390, %v5214
    %v5216 = vand.u32 %v5215, 4294901760
    %v5217 = vsub.f32 %v5215, %v5216
    %v5218 = vand.u32 %v5217, 4294901760
    %5219 = vmatpush1.msra.mxu0 %v5218
    %5220 = vmatprep.subr.mxu0 0.0
    %v5221 = vand.u32 %v1393, 4294901760
    %v5222 = vsub.f32 %v1393, %v5221
    %v5223 = vand.u32 %v5222, 4294901760
    %v5224 = vsub.f32 %v5222, %v5223
    %v5225 = vand.u32 %v5224, 4294901760
    %5226 = vmatpush1.msra.mxu0 %v5225
    %5227 = vmatprep.subr.mxu0 0.0
    %v5228 = vand.u32 %v1396, 4294901760
    %v5229 = vsub.f32 %v1396, %v5228
    %v5230 = vand.u32 %v5229, 4294901760
    %v5231 = vsub.f32 %v5229, %v5230
    %v5232 = vand.u32 %v5231, 4294901760
    %5233 = vmatpush1.msra.mxu0 %v5232
    %5234 = vmatprep.subr.mxu0 0.0
    %v5235 = vand.u32 %v1399, 4294901760
    %v5236 = vsub.f32 %v1399, %v5235
    %v5237 = vand.u32 %v5236, 4294901760
    %v5238 = vsub.f32 %v5236, %v5237
    %v5239 = vand.u32 %v5238, 4294901760
    %5240 = vmatpush1.msra.mxu0 %v5239
    %5241 = vmatprep.subr.mxu0 0.0
    %v5242 = vand.u32 %v1402, 4294901760
    %v5243 = vsub.f32 %v1402, %v5242
    %v5244 = vand.u32 %v5243, 4294901760
    %v5245 = vsub.f32 %v5243, %v5244
    %v5246 = vand.u32 %v5245, 4294901760
    %5247 = vmatpush1.msra.mxu0 %v5246
    %5248 = vmatprep.subr.mxu0 0.0
    %v5249 = vand.u32 %v1405, 4294901760
    %v5250 = vsub.f32 %v1405, %v5249
    %v5251 = vand.u32 %v5250, 4294901760
    %v5252 = vsub.f32 %v5250, %v5251
    %v5253 = vand.u32 %v5252, 4294901760
    %5254 = vmatpush1.msra.mxu0 %v5253
    %5255 = vmatprep.subr.mxu0 0.0
    %v5256 = vand.u32 %v1408, 4294901760
    %v5257 = vsub.f32 %v1408, %v5256
    %v5258 = vand.u32 %v5257, 4294901760
    %v5259 = vsub.f32 %v5257, %v5258
    %v5260 = vand.u32 %v5259, 4294901760
    %5261 = vmatpush1.msra.mxu0 %v5260
    %5262 = vmatprep.subr.mxu0 0.0
    %v5263 = vand.u32 %v1411, 4294901760
    %v5264 = vsub.f32 %v1411, %v5263
    %v5265 = vand.u32 %v5264, 4294901760
    %v5266 = vsub.f32 %v5264, %v5265
    %v5267 = vand.u32 %v5266, 4294901760
    %5268 = vmatpush1.msra.mxu0 %v5267
    %5269 = vmatprep.subr.mxu0 0.0
    %v5270 = vand.u32 %v1414, 4294901760
    %v5271 = vsub.f32 %v1414, %v5270
    %v5272 = vand.u32 %v5271, 4294901760
    %v5273 = vsub.f32 %v5271, %v5272
    %v5274 = vand.u32 %v5273, 4294901760
    %5275 = vmatpush1.msra.mxu0 %v5274
    %5276 = vmatprep.subr.mxu0 0.0
    %v5277 = vand.u32 %v1417, 4294901760
    %v5278 = vsub.f32 %v1417, %v5277
    %v5279 = vand.u32 %v5278, 4294901760
    %v5280 = vsub.f32 %v5278, %v5279
    %v5281 = vand.u32 %v5280, 4294901760
    %5282 = vmatpush1.msra.mxu0 %v5281
    %5283 = vmatprep.subr.mxu0 0.0
    %v5284 = vand.u32 %v1420, 4294901760
    %v5285 = vsub.f32 %v1420, %v5284
    %v5286 = vand.u32 %v5285, 4294901760
    %v5287 = vsub.f32 %v5285, %v5286
    %v5288 = vand.u32 %v5287, 4294901760
    %5289 = vmatpush1.msra.mxu0 %v5288
    %5290 = vmatprep.subr.mxu0 0.0
    %v5291 = vand.u32 %v1423, 4294901760
    %v5292 = vsub.f32 %v1423, %v5291
    %v5293 = vand.u32 %v5292, 4294901760
    %v5294 = vsub.f32 %v5292, %v5293
    %v5295 = vand.u32 %v5294, 4294901760
    %5296 = vmatpush1.msra.mxu0 %v5295
    %5297 = vmatprep.subr.mxu0 0.0
    %v5298 = vand.u32 %v1426, 4294901760
    %v5299 = vsub.f32 %v1426, %v5298
    %v5300 = vand.u32 %v5299, 4294901760
    %v5301 = vsub.f32 %v5299, %v5300
    %v5302 = vand.u32 %v5301, 4294901760
    %5303 = vmatpush1.msra.mxu0 %v5302
    %5304 = vmatprep.subr.mxu0 0.0
    %v5305 = vand.u32 %v1429, 4294901760
    %v5306 = vsub.f32 %v1429, %v5305
    %v5307 = vand.u32 %v5306, 4294901760
    %v5308 = vsub.f32 %v5306, %v5307
    %v5309 = vand.u32 %v5308, 4294901760
    %5310 = vmatpush1.msra.mxu0 %v5309
    %5311 = vmatprep.subr.mxu0 0.0
    %v5312 = vand.u32 %v1432, 4294901760
    %v5313 = vsub.f32 %v1432, %v5312
    %v5314 = vand.u32 %v5313, 4294901760
    %v5315 = vsub.f32 %v5313, %v5314
    %v5316 = vand.u32 %v5315, 4294901760
    %5317 = vmatpush1.msra.mxu0 %v5316
    %5318 = vmatprep.subr.mxu0 0.0
    %v5319 = vand.u32 %v1435, 4294901760
    %v5320 = vsub.f32 %v1435, %v5319
    %v5321 = vand.u32 %v5320, 4294901760
    %v5322 = vsub.f32 %v5320, %v5321
    %v5323 = vand.u32 %v5322, 4294901760
    %5324 = vmatpush1.msra.mxu0 %v5323
    %5325 = vmatprep.subr.mxu0 0.0
    %v5326 = vand.u32 %v1438, 4294901760
    %v5327 = vsub.f32 %v1438, %v5326
    %v5328 = vand.u32 %v5327, 4294901760
    %v5329 = vsub.f32 %v5327, %v5328
    %v5330 = vand.u32 %v5329, 4294901760
    %5331 = vmatpush1.msra.mxu0 %v5330
    %5332 = vmatprep.subr.mxu0 0.0
    %v5333 = vand.u32 %v1441, 4294901760
    %v5334 = vsub.f32 %v1441, %v5333
    %v5335 = vand.u32 %v5334, 4294901760
    %v5336 = vsub.f32 %v5334, %v5335
    %v5337 = vand.u32 %v5336, 4294901760
    %5338 = vmatpush1.msra.mxu0 %v5337
    %5339 = vmatprep.subr.mxu0 0.0
    %v5340 = vand.u32 %v1444, 4294901760
    %v5341 = vsub.f32 %v1444, %v5340
    %v5342 = vand.u32 %v5341, 4294901760
    %v5343 = vsub.f32 %v5341, %v5342
    %v5344 = vand.u32 %v5343, 4294901760
    %5345 = vmatpush1.msra.mxu0 %v5344
    %5346 = vmatprep.subr.mxu0 0.0
    %v5347 = vand.u32 %v1447, 4294901760
    %v5348 = vsub.f32 %v1447, %v5347
    %v5349 = vand.u32 %v5348, 4294901760
    %v5350 = vsub.f32 %v5348, %v5349
    %v5351 = vand.u32 %v5350, 4294901760
    %5352 = vmatpush1.msra.mxu0 %v5351
    %5353 = vmatprep.subr.mxu0 0.0
    %v5354 = vand.u32 %v1450, 4294901760
    %v5355 = vsub.f32 %v1450, %v5354
    %v5356 = vand.u32 %v5355, 4294901760
    %v5357 = vsub.f32 %v5355, %v5356
    %v5358 = vand.u32 %v5357, 4294901760
    %5359 = vmatpush1.msra.mxu0 %v5358
    %5360 = vmatprep.subr.mxu0 0.0
    %v5361 = vand.u32 %v1453, 4294901760
    %v5362 = vsub.f32 %v1453, %v5361
    %v5363 = vand.u32 %v5362, 4294901760
    %v5364 = vsub.f32 %v5362, %v5363
    %v5365 = vand.u32 %v5364, 4294901760
    %5366 = vmatpush1.msra.mxu0 %v5365
    %5367 = vmatprep.subr.mxu0 0.0
    %v5368 = vand.u32 %v1456, 4294901760
    %v5369 = vsub.f32 %v1456, %v5368
    %v5370 = vand.u32 %v5369, 4294901760
    %v5371 = vsub.f32 %v5369, %v5370
    %v5372 = vand.u32 %v5371, 4294901760
    %5373 = vmatpush1.msra.mxu0 %v5372
    %5374 = vmatprep.subr.mxu0 0.0
    %v5375 = vand.u32 %v1459, 4294901760
    %v5376 = vsub.f32 %v1459, %v5375
    %v5377 = vand.u32 %v5376, 4294901760
    %v5378 = vsub.f32 %v5376, %v5377
    %v5379 = vand.u32 %v5378, 4294901760
    %5380 = vmatpush1.msra.mxu0 %v5379
    %5381 = vmatprep.subr.mxu0 0.0
    %v5382 = vand.u32 %v1462, 4294901760
    %v5383 = vsub.f32 %v1462, %v5382
    %v5384 = vand.u32 %v5383, 4294901760
    %v5385 = vsub.f32 %v5383, %v5384
    %v5386 = vand.u32 %v5385, 4294901760
    %5387 = vmatpush1.msra.mxu0 %v5386
    %5388 = vmatprep.subr.mxu0 0.0
    %v5389 = vand.u32 %v1465, 4294901760
    %v5390 = vsub.f32 %v1465, %v5389
    %v5391 = vand.u32 %v5390, 4294901760
    %v5392 = vsub.f32 %v5390, %v5391
    %v5393 = vand.u32 %v5392, 4294901760
    %5394 = vmatpush1.msra.mxu0 %v5393
    %v5395 = vand.u32 %v1367, 4294901760
    %5396 = vmatprep.mubr.f32.mxu0 %v5395
    %v5397 = vand.u32 %v1366, 4294901760
    %5398 = vmatmul.mubr.f32.gmra.mrb[0].mxu0 %v5397
    %v5399 = vpop.f32.mrb[0].mxu0
    %v5400 = vadd.f32 %v5168, %v5399
    %v5401 = vpop.f32.mrb[0].mxu0
    %5402 = vdwg.mxu0
    %5403 = vmatprep.subr.mxu0 0.0
    %v5404 = vand.u32 %v1372, 4294901760
    %v5405 = vsub.f32 %v1372, %v5404
    %5406 = vmatpush1.msra.mxu0 %v5405
    %5407 = vmatprep.subr.mxu0 0.0
    %v5408 = vand.u32 %v1375, 4294901760
    %v5409 = vsub.f32 %v1375, %v5408
    %5410 = vmatpush1.msra.mxu0 %v5409
    %5411 = vmatprep.subr.mxu0 0.0
    %v5412 = vand.u32 %v1378, 4294901760
    %v5413 = vsub.f32 %v1378, %v5412
    %5414 = vmatpush1.msra.mxu0 %v5413
    %5415 = vmatprep.subr.mxu0 0.0
    %v5416 = vand.u32 %v1381, 4294901760
    %v5417 = vsub.f32 %v1381, %v5416
    %5418 = vmatpush1.msra.mxu0 %v5417
    %5419 = vmatprep.subr.mxu0 0.0
    %v5420 = vand.u32 %v1384, 4294901760
    %v5421 = vsub.f32 %v1384, %v5420
    %5422 = vmatpush1.msra.mxu0 %v5421
    %5423 = vmatprep.subr.mxu0 0.0
    %v5424 = vand.u32 %v1387, 4294901760
    %v5425 = vsub.f32 %v1387, %v5424
    %5426 = vmatpush1.msra.mxu0 %v5425
    %5427 = vmatprep.subr.mxu0 0.0
    %v5428 = vand.u32 %v1390, 4294901760
    %v5429 = vsub.f32 %v1390, %v5428
    %5430 = vmatpush1.msra.mxu0 %v5429
    %5431 = vmatprep.subr.mxu0 0.0
    %v5432 = vand.u32 %v1393, 4294901760
    %v5433 = vsub.f32 %v1393, %v5432
    %5434 = vmatpush1.msra.mxu0 %v5433
    %5435 = vmatprep.subr.mxu0 0.0
    %v5436 = vand.u32 %v1396, 4294901760
    %v5437 = vsub.f32 %v1396, %v5436
    %5438 = vmatpush1.msra.mxu0 %v5437
    %5439 = vmatprep.subr.mxu0 0.0
    %v5440 = vand.u32 %v1399, 4294901760
    %v5441 = vsub.f32 %v1399, %v5440
    %5442 = vmatpush1.msra.mxu0 %v5441
    %5443 = vmatprep.subr.mxu0 0.0
    %v5444 = vand.u32 %v1402, 4294901760
    %v5445 = vsub.f32 %v1402, %v5444
    %5446 = vmatpush1.msra.mxu0 %v5445
    %5447 = vmatprep.subr.mxu0 0.0
    %v5448 = vand.u32 %v1405, 4294901760
    %v5449 = vsub.f32 %v1405, %v5448
    %5450 = vmatpush1.msra.mxu0 %v5449
    %5451 = vmatprep.subr.mxu0 0.0
    %v5452 = vand.u32 %v1408, 4294901760
    %v5453 = vsub.f32 %v1408, %v5452
    %5454 = vmatpush1.msra.mxu0 %v5453
    %5455 = vmatprep.subr.mxu0 0.0
    %v5456 = vand.u32 %v1411, 4294901760
    %v5457 = vsub.f32 %v1411, %v5456
    %5458 = vmatpush1.msra.mxu0 %v5457
    %5459 = vmatprep.subr.mxu0 0.0
    %v5460 = vand.u32 %v1414, 4294901760
    %v5461 = vsub.f32 %v1414, %v5460
    %5462 = vmatpush1.msra.mxu0 %v5461
    %5463 = vmatprep.subr.mxu0 0.0
    %v5464 = vand.u32 %v1417, 4294901760
    %v5465 = vsub.f32 %v1417, %v5464
    %5466 = vmatpush1.msra.mxu0 %v5465
    %5467 = vmatprep.subr.mxu0 0.0
    %v5468 = vand.u32 %v1420, 4294901760
    %v5469 = vsub.f32 %v1420, %v5468
    %5470 = vmatpush1.msra.mxu0 %v5469
    %5471 = vmatprep.subr.mxu0 0.0
    %v5472 = vand.u32 %v1423, 4294901760
    %v5473 = vsub.f32 %v1423, %v5472
    %5474 = vmatpush1.msra.mxu0 %v5473
    %5475 = vmatprep.subr.mxu0 0.0
    %v5476 = vand.u32 %v1426, 4294901760
    %v5477 = vsub.f32 %v1426, %v5476
    %5478 = vmatpush1.msra.mxu0 %v5477
    %5479 = vmatprep.subr.mxu0 0.0
    %v5480 = vand.u32 %v1429, 4294901760
    %v5481 = vsub.f32 %v1429, %v5480
    %5482 = vmatpush1.msra.mxu0 %v5481
    %5483 = vmatprep.subr.mxu0 0.0
    %v5484 = vand.u32 %v1432, 4294901760
    %v5485 = vsub.f32 %v1432, %v5484
    %5486 = vmatpush1.msra.mxu0 %v5485
    %5487 = vmatprep.subr.mxu0 0.0
    %v5488 = vand.u32 %v1435, 4294901760
    %v5489 = vsub.f32 %v1435, %v5488
    %5490 = vmatpush1.msra.mxu0 %v5489
    %5491 = vmatprep.subr.mxu0 0.0
    %v5492 = vand.u32 %v1438, 4294901760
    %v5493 = vsub.f32 %v1438, %v5492
    %5494 = vmatpush1.msra.mxu0 %v5493
    %5495 = vmatprep.subr.mxu0 0.0
    %v5496 = vand.u32 %v1441, 4294901760
    %v5497 = vsub.f32 %v1441, %v5496
    %5498 = vmatpush1.msra.mxu0 %v5497
    %5499 = vmatprep.subr.mxu0 0.0
    %v5500 = vand.u32 %v1444, 4294901760
    %v5501 = vsub.f32 %v1444, %v5500
    %5502 = vmatpush1.msra.mxu0 %v5501
    %5503 = vmatprep.subr.mxu0 0.0
    %v5504 = vand.u32 %v1447, 4294901760
    %v5505 = vsub.f32 %v1447, %v5504
    %5506 = vmatpush1.msra.mxu0 %v5505
    %5507 = vmatprep.subr.mxu0 0.0
    %v5508 = vand.u32 %v1450, 4294901760
    %v5509 = vsub.f32 %v1450, %v5508
    %5510 = vmatpush1.msra.mxu0 %v5509
    %5511 = vmatprep.subr.mxu0 0.0
    %v5512 = vand.u32 %v1453, 4294901760
    %v5513 = vsub.f32 %v1453, %v5512
    %5514 = vmatpush1.msra.mxu0 %v5513
    %5515 = vmatprep.subr.mxu0 0.0
    %v5516 = vand.u32 %v1456, 4294901760
    %v5517 = vsub.f32 %v1456, %v5516
    %5518 = vmatpush1.msra.mxu0 %v5517
    %5519 = vmatprep.subr.mxu0 0.0
    %v5520 = vand.u32 %v1459, 4294901760
    %v5521 = vsub.f32 %v1459, %v5520
    %5522 = vmatpush1.msra.mxu0 %v5521
    %5523 = vmatprep.subr.mxu0 0.0
    %v5524 = vand.u32 %v1462, 4294901760
    %v5525 = vsub.f32 %v1462, %v5524
    %5526 = vmatpush1.msra.mxu0 %v5525
    %5527 = vmatprep.subr.mxu0 0.0
    %v5528 = vand.u32 %v1465, 4294901760
    %v5529 = vsub.f32 %v1465, %v5528
    %5530 = vmatpush1.msra.mxu0 %v5529
    %v5531 = vand.u32 %v1367, 4294901760
    %v5532 = vsub.f32 %v1367, %v5531
    %5533 = vmatprep.mubr.f32.mxu0 %v5532
    %v5534 = vand.u32 %v1366, 4294901760
    %v5535 = vsub.f32 %v1366, %v5534
    %5536 = vmatmul.mubr.f32.gmra.mrb[0].mxu0 %v5535
    %v5537 = vpop.f32.mrb[0].mxu0
    %v5538 = vadd.f32 %v5400, %v5537
    %v5539 = vpop.f32.mrb[0].mxu0
    %5540 = vdwg.mxu0
    %5541 = vmatprep.subr.mxu0 0.0
    %v5542 = vand.u32 %v1372, 4294901760
    %5543 = vmatpush1.msra.mxu0 %v5542
    %5544 = vmatprep.subr.mxu0 0.0
    %v5545 = vand.u32 %v1375, 4294901760
    %5546 = vmatpush1.msra.mxu0 %v5545
    %5547 = vmatprep.subr.mxu0 0.0
    %v5548 = vand.u32 %v1378, 4294901760
    %5549 = vmatpush1.msra.mxu0 %v5548
    %5550 = vmatprep.subr.mxu0 0.0
    %v5551 = vand.u32 %v1381, 4294901760
    %5552 = vmatpush1.msra.mxu0 %v5551
    %5553 = vmatprep.subr.mxu0 0.0
    %v5554 = vand.u32 %v1384, 4294901760
    %5555 = vmatpush1.msra.mxu0 %v5554
    %5556 = vmatprep.subr.mxu0 0.0
    %v5557 = vand.u32 %v1387, 4294901760
    %5558 = vmatpush1.msra.mxu0 %v5557
    %5559 = vmatprep.subr.mxu0 0.0
    %v5560 = vand.u32 %v1390, 4294901760
    %5561 = vmatpush1.msra.mxu0 %v5560
    %5562 = vmatprep.subr.mxu0 0.0
    %v5563 = vand.u32 %v1393, 4294901760
    %5564 = vmatpush1.msra.mxu0 %v5563
    %5565 = vmatprep.subr.mxu0 0.0
    %v5566 = vand.u32 %v1396, 4294901760
    %5567 = vmatpush1.msra.mxu0 %v5566
    %5568 = vmatprep.subr.mxu0 0.0
    %v5569 = vand.u32 %v1399, 4294901760
    %5570 = vmatpush1.msra.mxu0 %v5569
    %5571 = vmatprep.subr.mxu0 0.0
    %v5572 = vand.u32 %v1402, 4294901760
    %5573 = vmatpush1.msra.mxu0 %v5572
    %5574 = vmatprep.subr.mxu0 0.0
    %v5575 = vand.u32 %v1405, 4294901760
    %5576 = vmatpush1.msra.mxu0 %v5575
    %5577 = vmatprep.subr.mxu0 0.0
    %v5578 = vand.u32 %v1408, 4294901760
    %5579 = vmatpush1.msra.mxu0 %v5578
    %5580 = vmatprep.subr.mxu0 0.0
    %v5581 = vand.u32 %v1411, 4294901760
    %5582 = vmatpush1.msra.mxu0 %v5581
    %5583 = vmatprep.subr.mxu0 0.0
    %v5584 = vand.u32 %v1414, 4294901760
    %5585 = vmatpush1.msra.mxu0 %v5584
    %5586 = vmatprep.subr.mxu0 0.0
    %v5587 = vand.u32 %v1417, 4294901760
    %5588 = vmatpush1.msra.mxu0 %v5587
    %5589 = vmatprep.subr.mxu0 0.0
    %v5590 = vand.u32 %v1420, 4294901760
    %5591 = vmatpush1.msra.mxu0 %v5590
    %5592 = vmatprep.subr.mxu0 0.0
    %v5593 = vand.u32 %v1423, 4294901760
    %5594 = vmatpush1.msra.mxu0 %v5593
    %5595 = vmatprep.subr.mxu0 0.0
    %v5596 = vand.u32 %v1426, 4294901760
    %5597 = vmatpush1.msra.mxu0 %v5596
    %5598 = vmatprep.subr.mxu0 0.0
    %v5599 = vand.u32 %v1429, 4294901760
    %5600 = vmatpush1.msra.mxu0 %v5599
    %5601 = vmatprep.subr.mxu0 0.0
    %v5602 = vand.u32 %v1432, 4294901760
    %5603 = vmatpush1.msra.mxu0 %v5602
    %5604 = vmatprep.subr.mxu0 0.0
    %v5605 = vand.u32 %v1435, 4294901760
    %5606 = vmatpush1.msra.mxu0 %v5605
    %5607 = vmatprep.subr.mxu0 0.0
    %v5608 = vand.u32 %v1438, 4294901760
    %5609 = vmatpush1.msra.mxu0 %v5608
    %5610 = vmatprep.subr.mxu0 0.0
    %v5611 = vand.u32 %v1441, 4294901760
    %5612 = vmatpush1.msra.mxu0 %v5611
    %5613 = vmatprep.subr.mxu0 0.0
    %v5614 = vand.u32 %v1444, 4294901760
    %5615 = vmatpush1.msra.mxu0 %v5614
    %5616 = vmatprep.subr.mxu0 0.0
    %v5617 = vand.u32 %v1447, 4294901760
    %5618 = vmatpush1.msra.mxu0 %v5617
    %5619 = vmatprep.subr.mxu0 0.0
    %v5620 = vand.u32 %v1450, 4294901760
    %5621 = vmatpush1.msra.mxu0 %v5620
    %5622 = vmatprep.subr.mxu0 0.0
    %v5623 = vand.u32 %v1453, 4294901760
    %5624 = vmatpush1.msra.mxu0 %v5623
    %5625 = vmatprep.subr.mxu0 0.0
    %v5626 = vand.u32 %v1456, 4294901760
    %5627 = vmatpush1.msra.mxu0 %v5626
    %5628 = vmatprep.subr.mxu0 0.0
    %v5629 = vand.u32 %v1459, 4294901760
    %5630 = vmatpush1.msra.mxu0 %v5629
    %5631 = vmatprep.subr.mxu0 0.0
    %v5632 = vand.u32 %v1462, 4294901760
    %5633 = vmatpush1.msra.mxu0 %v5632
    %5634 = vmatprep.subr.mxu0 0.0
    %v5635 = vand.u32 %v1465, 4294901760
    %5636 = vmatpush1.msra.mxu0 %v5635
    %v5637 = vand.u32 %v1367, 4294901760
    %v5638 = vsub.f32 %v1367, %v5637
    %v5639 = vand.u32 %v5638, 4294901760
    %5640 = vmatprep.mubr.f32.mxu0 %v5639
    %v5641 = vand.u32 %v1366, 4294901760
    %v5642 = vsub.f32 %v1366, %v5641
    %v5643 = vand.u32 %v5642, 4294901760
    %5644 = vmatmul.mubr.f32.gmra.mrb[0].mxu0 %v5643
    %v5645 = vpop.f32.mrb[0].mxu0
    %v5646 = vadd.f32 %v5538, %v5645
    %v5647 = vpop.f32.mrb[0].mxu0
    %5648 = vdwg.mxu0
    %5649 = vmatprep.subr.mxu0 0.0
    %v5650 = vand.u32 %v1372, 4294901760
    %v5651 = vsub.f32 %v1372, %v5650
    %v5652 = vand.u32 %v5651, 4294901760
    %5653 = vmatpush1.msra.mxu0 %v5652
    %5654 = vmatprep.subr.mxu0 0.0
    %v5655 = vand.u32 %v1375, 4294901760
    %v5656 = vsub.f32 %v1375, %v5655
    %v5657 = vand.u32 %v5656, 4294901760
    %5658 = vmatpush1.msra.mxu0 %v5657
    %5659 = vmatprep.subr.mxu0 0.0
    %v5660 = vand.u32 %v1378, 4294901760
    %v5661 = vsub.f32 %v1378, %v5660
    %v5662 = vand.u32 %v5661, 4294901760
    %5663 = vmatpush1.msra.mxu0 %v5662
    %5664 = vmatprep.subr.mxu0 0.0
    %v5665 = vand.u32 %v1381, 4294901760
    %v5666 = vsub.f32 %v1381, %v5665
    %v5667 = vand.u32 %v5666, 4294901760
    %5668 = vmatpush1.msra.mxu0 %v5667
    %5669 = vmatprep.subr.mxu0 0.0
    %v5670 = vand.u32 %v1384, 4294901760
    %v5671 = vsub.f32 %v1384, %v5670
    %v5672 = vand.u32 %v5671, 4294901760
    %5673 = vmatpush1.msra.mxu0 %v5672
    %5674 = vmatprep.subr.mxu0 0.0
    %v5675 = vand.u32 %v1387, 4294901760
    %v5676 = vsub.f32 %v1387, %v5675
    %v5677 = vand.u32 %v5676, 4294901760
    %5678 = vmatpush1.msra.mxu0 %v5677
    %5679 = vmatprep.subr.mxu0 0.0
    %v5680 = vand.u32 %v1390, 4294901760
    %v5681 = vsub.f32 %v1390, %v5680
    %v5682 = vand.u32 %v5681, 4294901760
    %5683 = vmatpush1.msra.mxu0 %v5682
    %5684 = vmatprep.subr.mxu0 0.0
    %v5685 = vand.u32 %v1393, 4294901760
    %v5686 = vsub.f32 %v1393, %v5685
    %v5687 = vand.u32 %v5686, 4294901760
    %5688 = vmatpush1.msra.mxu0 %v5687
    %5689 = vmatprep.subr.mxu0 0.0
    %v5690 = vand.u32 %v1396, 4294901760
    %v5691 = vsub.f32 %v1396, %v5690
    %v5692 = vand.u32 %v5691, 4294901760
    %5693 = vmatpush1.msra.mxu0 %v5692
    %5694 = vmatprep.subr.mxu0 0.0
    %v5695 = vand.u32 %v1399, 4294901760
    %v5696 = vsub.f32 %v1399, %v5695
    %v5697 = vand.u32 %v5696, 4294901760
    %5698 = vmatpush1.msra.mxu0 %v5697
    %5699 = vmatprep.subr.mxu0 0.0
    %v5700 = vand.u32 %v1402, 4294901760
    %v5701 = vsub.f32 %v1402, %v5700
    %v5702 = vand.u32 %v5701, 4294901760
    %5703 = vmatpush1.msra.mxu0 %v5702
    %5704 = vmatprep.subr.mxu0 0.0
    %v5705 = vand.u32 %v1405, 4294901760
    %v5706 = vsub.f32 %v1405, %v5705
    %v5707 = vand.u32 %v5706, 4294901760
    %5708 = vmatpush1.msra.mxu0 %v5707
    %5709 = vmatprep.subr.mxu0 0.0
    %v5710 = vand.u32 %v1408, 4294901760
    %v5711 = vsub.f32 %v1408, %v5710
    %v5712 = vand.u32 %v5711, 4294901760
    %5713 = vmatpush1.msra.mxu0 %v5712
    %5714 = vmatprep.subr.mxu0 0.0
    %v5715 = vand.u32 %v1411, 4294901760
    %v5716 = vsub.f32 %v1411, %v5715
    %v5717 = vand.u32 %v5716, 4294901760
    %5718 = vmatpush1.msra.mxu0 %v5717
    %5719 = vmatprep.subr.mxu0 0.0
    %v5720 = vand.u32 %v1414, 4294901760
    %v5721 = vsub.f32 %v1414, %v5720
    %v5722 = vand.u32 %v5721, 4294901760
    %5723 = vmatpush1.msra.mxu0 %v5722
    %5724 = vmatprep.subr.mxu0 0.0
    %v5725 = vand.u32 %v1417, 4294901760
    %v5726 = vsub.f32 %v1417, %v5725
    %v5727 = vand.u32 %v5726, 4294901760
    %5728 = vmatpush1.msra.mxu0 %v5727
    %5729 = vmatprep.subr.mxu0 0.0
    %v5730 = vand.u32 %v1420, 4294901760
    %v5731 = vsub.f32 %v1420, %v5730
    %v5732 = vand.u32 %v5731, 4294901760
    %5733 = vmatpush1.msra.mxu0 %v5732
    %5734 = vmatprep.subr.mxu0 0.0
    %v5735 = vand.u32 %v1423, 4294901760
    %v5736 = vsub.f32 %v1423, %v5735
    %v5737 = vand.u32 %v5736, 4294901760
    %5738 = vmatpush1.msra.mxu0 %v5737
    %5739 = vmatprep.subr.mxu0 0.0
    %v5740 = vand.u32 %v1426, 4294901760
    %v5741 = vsub.f32 %v1426, %v5740
    %v5742 = vand.u32 %v5741, 4294901760
    %5743 = vmatpush1.msra.mxu0 %v5742
    %5744 = vmatprep.subr.mxu0 0.0
    %v5745 = vand.u32 %v1429, 4294901760
    %v5746 = vsub.f32 %v1429, %v5745
    %v5747 = vand.u32 %v5746, 4294901760
    %5748 = vmatpush1.msra.mxu0 %v5747
    %5749 = vmatprep.subr.mxu0 0.0
    %v5750 = vand.u32 %v1432, 4294901760
    %v5751 = vsub.f32 %v1432, %v5750
    %v5752 = vand.u32 %v5751, 4294901760
    %5753 = vmatpush1.msra.mxu0 %v5752
    %5754 = vmatprep.subr.mxu0 0.0
    %v5755 = vand.u32 %v1435, 4294901760
    %v5756 = vsub.f32 %v1435, %v5755
    %v5757 = vand.u32 %v5756, 4294901760
    %5758 = vmatpush1.msra.mxu0 %v5757
    %5759 = vmatprep.subr.mxu0 0.0
    %v5760 = vand.u32 %v1438, 4294901760
    %v5761 = vsub.f32 %v1438, %v5760
    %v5762 = vand.u32 %v5761, 4294901760
    %5763 = vmatpush1.msra.mxu0 %v5762
    %5764 = vmatprep.subr.mxu0 0.0
    %v5765 = vand.u32 %v1441, 4294901760
    %v5766 = vsub.f32 %v1441, %v5765
    %v5767 = vand.u32 %v5766, 4294901760
    %5768 = vmatpush1.msra.mxu0 %v5767
    %5769 = vmatprep.subr.mxu0 0.0
    %v5770 = vand.u32 %v1444, 4294901760
    %v5771 = vsub.f32 %v1444, %v5770
    %v5772 = vand.u32 %v5771, 4294901760
    %5773 = vmatpush1.msra.mxu0 %v5772
    %5774 = vmatprep.subr.mxu0 0.0
    %v5775 = vand.u32 %v1447, 4294901760
    %v5776 = vsub.f32 %v1447, %v5775
    %v5777 = vand.u32 %v5776, 4294901760
    %5778 = vmatpush1.msra.mxu0 %v5777
    %5779 = vmatprep.subr.mxu0 0.0
    %v5780 = vand.u32 %v1450, 4294901760
    %v5781 = vsub.f32 %v1450, %v5780
    %v5782 = vand.u32 %v5781, 4294901760
    %5783 = vmatpush1.msra.mxu0 %v5782
    %5784 = vmatprep.subr.mxu0 0.0
    %v5785 = vand.u32 %v1453, 4294901760
    %v5786 = vsub.f32 %v1453, %v5785
    %v5787 = vand.u32 %v5786, 4294901760
    %5788 = vmatpush1.msra.mxu0 %v5787
    %5789 = vmatprep.subr.mxu0 0.0
    %v5790 = vand.u32 %v1456, 4294901760
    %v5791 = vsub.f32 %v1456, %v5790
    %v5792 = vand.u32 %v5791, 4294901760
    %5793 = vmatpush1.msra.mxu0 %v5792
    %5794 = vmatprep.subr.mxu0 0.0
    %v5795 = vand.u32 %v1459, 4294901760
    %v5796 = vsub.f32 %v1459, %v5795
    %v5797 = vand.u32 %v5796, 4294901760
    %5798 = vmatpush1.msra.mxu0 %v5797
    %5799 = vmatprep.subr.mxu0 0.0
    %v5800 = vand.u32 %v1462, 4294901760
    %v5801 = vsub.f32 %v1462, %v5800
    %v5802 = vand.u32 %v5801, 4294901760
    %5803 = vmatpush1.msra.mxu0 %v5802
    %5804 = vmatprep.subr.mxu0 0.0
    %v5805 = vand.u32 %v1465, 4294901760
    %v5806 = vsub.f32 %v1465, %v5805
    %v5807 = vand.u32 %v5806, 4294901760
    %5808 = vmatpush1.msra.mxu0 %v5807
    %v5809 = vand.u32 %v1367, 4294901760
    %5810 = vmatprep.mubr.f32.mxu0 %v5809
    %v5811 = vand.u32 %v1366, 4294901760
    %5812 = vmatmul.mubr.f32.gmra.mrb[0].mxu0 %v5811
    %v5813 = vpop.f32.mrb[0].mxu0
    %v5814 = vadd.f32 %v5646, %v5813
    %v5815 = vpop.f32.mrb[0].mxu0
    %5816 = vdwg.mxu0
    %5817 = vmatprep.subr.mxu0 0.0
    %v5818 = vand.u32 %v1372, 4294901760
    %5819 = vmatpush1.msra.mxu0 %v5818
    %5820 = vmatprep.subr.mxu0 0.0
    %v5821 = vand.u32 %v1375, 4294901760
    %5822 = vmatpush1.msra.mxu0 %v5821
    %5823 = vmatprep.subr.mxu0 0.0
    %v5824 = vand.u32 %v1378, 4294901760
    %5825 = vmatpush1.msra.mxu0 %v5824
    %5826 = vmatprep.subr.mxu0 0.0
    %v5827 = vand.u32 %v1381, 4294901760
    %5828 = vmatpush1.msra.mxu0 %v5827
    %5829 = vmatprep.subr.mxu0 0.0
    %v5830 = vand.u32 %v1384, 4294901760
    %5831 = vmatpush1.msra.mxu0 %v5830
    %5832 = vmatprep.subr.mxu0 0.0
    %v5833 = vand.u32 %v1387, 4294901760
    %5834 = vmatpush1.msra.mxu0 %v5833
    %5835 = vmatprep.subr.mxu0 0.0
    %v5836 = vand.u32 %v1390, 4294901760
    %5837 = vmatpush1.msra.mxu0 %v5836
    %5838 = vmatprep.subr.mxu0 0.0
    %v5839 = vand.u32 %v1393, 4294901760
    %5840 = vmatpush1.msra.mxu0 %v5839
    %5841 = vmatprep.subr.mxu0 0.0
    %v5842 = vand.u32 %v1396, 4294901760
    %5843 = vmatpush1.msra.mxu0 %v5842
    %5844 = vmatprep.subr.mxu0 0.0
    %v5845 = vand.u32 %v1399, 4294901760
    %5846 = vmatpush1.msra.mxu0 %v5845
    %5847 = vmatprep.subr.mxu0 0.0
    %v5848 = vand.u32 %v1402, 4294901760
    %5849 = vmatpush1.msra.mxu0 %v5848
    %5850 = vmatprep.subr.mxu0 0.0
    %v5851 = vand.u32 %v1405, 4294901760
    %5852 = vmatpush1.msra.mxu0 %v5851
    %5853 = vmatprep.subr.mxu0 0.0
    %v5854 = vand.u32 %v1408, 4294901760
    %5855 = vmatpush1.msra.mxu0 %v5854
    %5856 = vmatprep.subr.mxu0 0.0
    %v5857 = vand.u32 %v1411, 4294901760
    %5858 = vmatpush1.msra.mxu0 %v5857
    %5859 = vmatprep.subr.mxu0 0.0
    %v5860 = vand.u32 %v1414, 4294901760
    %5861 = vmatpush1.msra.mxu0 %v5860
    %5862 = vmatprep.subr.mxu0 0.0
    %v5863 = vand.u32 %v1417, 4294901760
    %5864 = vmatpush1.msra.mxu0 %v5863
    %5865 = vmatprep.subr.mxu0 0.0
    %v5866 = vand.u32 %v1420, 4294901760
    %5867 = vmatpush1.msra.mxu0 %v5866
    %5868 = vmatprep.subr.mxu0 0.0
    %v5869 = vand.u32 %v1423, 4294901760
    %5870 = vmatpush1.msra.mxu0 %v5869
    %5871 = vmatprep.subr.mxu0 0.0
    %v5872 = vand.u32 %v1426, 4294901760
    %5873 = vmatpush1.msra.mxu0 %v5872
    %5874 = vmatprep.subr.mxu0 0.0
    %v5875 = vand.u32 %v1429, 4294901760
    %5876 = vmatpush1.msra.mxu0 %v5875
    %5877 = vmatprep.subr.mxu0 0.0
    %v5878 = vand.u32 %v1432, 4294901760
    %5879 = vmatpush1.msra.mxu0 %v5878
    %5880 = vmatprep.subr.mxu0 0.0
    %v5881 = vand.u32 %v1435, 4294901760
    %5882 = vmatpush1.msra.mxu0 %v5881
    %5883 = vmatprep.subr.mxu0 0.0
    %v5884 = vand.u32 %v1438, 4294901760
    %5885 = vmatpush1.msra.mxu0 %v5884
    %5886 = vmatprep.subr.mxu0 0.0
    %v5887 = vand.u32 %v1441, 4294901760
    %5888 = vmatpush1.msra.mxu0 %v5887
    %5889 = vmatprep.subr.mxu0 0.0
    %v5890 = vand.u32 %v1444, 4294901760
    %5891 = vmatpush1.msra.mxu0 %v5890
    %5892 = vmatprep.subr.mxu0 0.0
    %v5893 = vand.u32 %v1447, 4294901760
    %5894 = vmatpush1.msra.mxu0 %v5893
    %5895 = vmatprep.subr.mxu0 0.0
    %v5896 = vand.u32 %v1450, 4294901760
    %5897 = vmatpush1.msra.mxu0 %v5896
    %5898 = vmatprep.subr.mxu0 0.0
    %v5899 = vand.u32 %v1453, 4294901760
    %5900 = vmatpush1.msra.mxu0 %v5899
    %5901 = vmatprep.subr.mxu0 0.0
    %v5902 = vand.u32 %v1456, 4294901760
    %5903 = vmatpush1.msra.mxu0 %v5902
    %5904 = vmatprep.subr.mxu0 0.0
    %v5905 = vand.u32 %v1459, 4294901760
    %5906 = vmatpush1.msra.mxu0 %v5905
    %5907 = vmatprep.subr.mxu0 0.0
    %v5908 = vand.u32 %v1462, 4294901760
    %5909 = vmatpush1.msra.mxu0 %v5908
    %5910 = vmatprep.subr.mxu0 0.0
    %v5911 = vand.u32 %v1465, 4294901760
    %5912 = vmatpush1.msra.mxu0 %v5911
    %v5913 = vand.u32 %v1367, 4294901760
    %5914 = vmatprep.mubr.f32.mxu0 %v5913
    %v5915 = vand.u32 %v1366, 4294901760
    %5916 = vmatmul.mubr.f32.gmra.mrb[0].mxu0 %v5915
    %v5917 = vpop.f32.mrb[0].mxu0
    %v5918 = vadd.f32 %v5814, %v5917
    %v5919 = vpop.f32.mrb[0].mxu0
    %5920 = vdwg.mxu0
    %5921 = vmatprep.subr.mxu0 0.0
    %v5922 = vand.u32 %v1468, 4294901760
    %5923 = vmatpush1.msra.mxu0 %v5922
    %5924 = vmatprep.subr.mxu0 0.0
    %v5925 = vand.u32 %v1471, 4294901760
    %5926 = vmatpush1.msra.mxu0 %v5925
    %5927 = vmatprep.subr.mxu0 0.0
    %v5928 = vand.u32 %v1474, 4294901760
    %5929 = vmatpush1.msra.mxu0 %v5928
    %5930 = vmatprep.subr.mxu0 0.0
    %v5931 = vand.u32 %v1477, 4294901760
    %5932 = vmatpush1.msra.mxu0 %v5931
    %5933 = vmatprep.subr.mxu0 0.0
    %v5934 = vand.u32 %v1480, 4294901760
    %5935 = vmatpush1.msra.mxu0 %v5934
    %5936 = vmatprep.subr.mxu0 0.0
    %v5937 = vand.u32 %v1483, 4294901760
    %5938 = vmatpush1.msra.mxu0 %v5937
    %5939 = vmatprep.subr.mxu0 0.0
    %v5940 = vand.u32 %v1486, 4294901760
    %5941 = vmatpush1.msra.mxu0 %v5940
    %5942 = vmatprep.subr.mxu0 0.0
    %v5943 = vand.u32 %v1489, 4294901760
    %5944 = vmatpush1.msra.mxu0 %v5943
    %5945 = vmatprep.subr.mxu0 0.0
    %v5946 = vand.u32 %v1492, 4294901760
    %5947 = vmatpush1.msra.mxu0 %v5946
    %5948 = vmatprep.subr.mxu0 0.0
    %v5949 = vand.u32 %v1495, 4294901760
    %5950 = vmatpush1.msra.mxu0 %v5949
    %5951 = vmatprep.subr.mxu0 0.0
    %v5952 = vand.u32 %v1498, 4294901760
    %5953 = vmatpush1.msra.mxu0 %v5952
    %5954 = vmatprep.subr.mxu0 0.0
    %v5955 = vand.u32 %v1501, 4294901760
    %5956 = vmatpush1.msra.mxu0 %v5955
    %5957 = vmatprep.subr.mxu0 0.0
    %v5958 = vand.u32 %v1504, 4294901760
    %5959 = vmatpush1.msra.mxu0 %v5958
    %5960 = vmatprep.subr.mxu0 0.0
    %v5961 = vand.u32 %v1507, 4294901760
    %5962 = vmatpush1.msra.mxu0 %v5961
    %5963 = vmatprep.subr.mxu0 0.0
    %v5964 = vand.u32 %v1510, 4294901760
    %5965 = vmatpush1.msra.mxu0 %v5964
    %5966 = vmatprep.subr.mxu0 0.0
    %v5967 = vand.u32 %v1513, 4294901760
    %5968 = vmatpush1.msra.mxu0 %v5967
    %5969 = vmatprep.subr.mxu0 0.0
    %v5970 = vand.u32 %v1516, 4294901760
    %5971 = vmatpush1.msra.mxu0 %v5970
    %5972 = vmatprep.subr.mxu0 0.0
    %v5973 = vand.u32 %v1519, 4294901760
    %5974 = vmatpush1.msra.mxu0 %v5973
    %5975 = vmatprep.subr.mxu0 0.0
    %v5976 = vand.u32 %v1522, 4294901760
    %5977 = vmatpush1.msra.mxu0 %v5976
    %5978 = vmatprep.subr.mxu0 0.0
    %v5979 = vand.u32 %v1525, 4294901760
    %5980 = vmatpush1.msra.mxu0 %v5979
    %5981 = vmatprep.subr.mxu0 0.0
    %v5982 = vand.u32 %v1528, 4294901760
    %5983 = vmatpush1.msra.mxu0 %v5982
    %5984 = vmatprep.subr.mxu0 0.0
    %v5985 = vand.u32 %v1531, 4294901760
    %5986 = vmatpush1.msra.mxu0 %v5985
    %5987 = vmatprep.subr.mxu0 0.0
    %v5988 = vand.u32 %v1534, 4294901760
    %5989 = vmatpush1.msra.mxu0 %v5988
    %5990 = vmatprep.subr.mxu0 0.0
    %v5991 = vand.u32 %v1537, 4294901760
    %5992 = vmatpush1.msra.mxu0 %v5991
    %5993 = vmatprep.subr.mxu0 0.0
    %v5994 = vand.u32 %v1540, 4294901760
    %5995 = vmatpush1.msra.mxu0 %v5994
    %5996 = vmatprep.subr.mxu0 0.0
    %v5997 = vand.u32 %v1543, 4294901760
    %5998 = vmatpush1.msra.mxu0 %v5997
    %5999 = vmatprep.subr.mxu0 0.0
    %v6000 = vand.u32 %v1546, 4294901760
    %6001 = vmatpush1.msra.mxu0 %v6000
    %6002 = vmatprep.subr.mxu0 0.0
    %v6003 = vand.u32 %v1549, 4294901760
    %6004 = vmatpush1.msra.mxu0 %v6003
    %6005 = vmatprep.subr.mxu0 0.0
    %v6006 = vand.u32 %v1552, 4294901760
    %6007 = vmatpush1.msra.mxu0 %v6006
    %6008 = vmatprep.subr.mxu0 0.0
    %v6009 = vand.u32 %v1555, 4294901760
    %6010 = vmatpush1.msra.mxu0 %v6009
    %6011 = vmatprep.subr.mxu0 0.0
    %v6012 = vand.u32 %v1558, 4294901760
    %6013 = vmatpush1.msra.mxu0 %v6012
    %6014 = vmatprep.subr.mxu0 0.0
    %v6015 = vand.u32 %v1561, 4294901760
    %6016 = vmatpush1.msra.mxu0 %v6015
    %v6017 = vand.u32 %v1369, 4294901760
    %v6018 = vsub.f32 %v1369, %v6017
    %v6019 = vand.u32 %v6018, 4294901760
    %v6020 = vsub.f32 %v6018, %v6019
    %v6021 = vand.u32 %v6020, 4294901760
    %6022 = vmatprep.mubr.f32.mxu0 %v6021
    %v6023 = vand.u32 %v1368, 4294901760
    %v6024 = vsub.f32 %v1368, %v6023
    %v6025 = vand.u32 %v6024, 4294901760
    %v6026 = vsub.f32 %v6024, %v6025
    %v6027 = vand.u32 %v6026, 4294901760
    %6028 = vmatmul.mubr.f32.gmra.mrb[0].mxu0 %v6027
    %v6029 = vpop.f32.mrb[0].mxu0
    %v6030 = vadd.f32 %v5918, %v6029
    %v6031 = vpop.f32.mrb[0].mxu0
    %6032 = vdwg.mxu0
    %6033 = vmatprep.subr.mxu0 0.0
    %v6034 = vand.u32 %v1468, 4294901760
    %v6035 = vsub.f32 %v1468, %v6034
    %v6036 = vand.u32 %v6035, 4294901760
    %v6037 = vsub.f32 %v6035, %v6036
    %v6038 = vand.u32 %v6037, 4294901760
    %6039 = vmatpush1.msra.mxu0 %v6038
    %6040 = vmatprep.subr.mxu0 0.0
    %v6041 = vand.u32 %v1471, 4294901760
    %v6042 = vsub.f32 %v1471, %v6041
    %v6043 = vand.u32 %v6042, 4294901760
    %v6044 = vsub.f32 %v6042, %v6043
    %v6045 = vand.u32 %v6044, 4294901760
    %6046 = vmatpush1.msra.mxu0 %v6045
    %6047 = vmatprep.subr.mxu0 0.0
    %v6048 = vand.u32 %v1474, 4294901760
    %v6049 = vsub.f32 %v1474, %v6048
    %v6050 = vand.u32 %v6049, 4294901760
    %v6051 = vsub.f32 %v6049, %v6050
    %v6052 = vand.u32 %v6051, 4294901760
    %6053 = vmatpush1.msra.mxu0 %v6052
    %6054 = vmatprep.subr.mxu0 0.0
    %v6055 = vand.u32 %v1477, 4294901760
    %v6056 = vsub.f32 %v1477, %v6055
    %v6057 = vand.u32 %v6056, 4294901760
    %v6058 = vsub.f32 %v6056, %v6057
    %v6059 = vand.u32 %v6058, 4294901760
    %6060 = vmatpush1.msra.mxu0 %v6059
    %6061 = vmatprep.subr.mxu0 0.0
    %v6062 = vand.u32 %v1480, 4294901760
    %v6063 = vsub.f32 %v1480, %v6062
    %v6064 = vand.u32 %v6063, 4294901760
    %v6065 = vsub.f32 %v6063, %v6064
    %v6066 = vand.u32 %v6065, 4294901760
    %6067 = vmatpush1.msra.mxu0 %v6066
    %6068 = vmatprep.subr.mxu0 0.0
    %v6069 = vand.u32 %v1483, 4294901760
    %v6070 = vsub.f32 %v1483, %v6069
    %v6071 = vand.u32 %v6070, 4294901760
    %v6072 = vsub.f32 %v6070, %v6071
    %v6073 = vand.u32 %v6072, 4294901760
    %6074 = vmatpush1.msra.mxu0 %v6073
    %6075 = vmatprep.subr.mxu0 0.0
    %v6076 = vand.u32 %v1486, 4294901760
    %v6077 = vsub.f32 %v1486, %v6076
    %v6078 = vand.u32 %v6077, 4294901760
    %v6079 = vsub.f32 %v6077, %v6078
    %v6080 = vand.u32 %v6079, 4294901760
    %6081 = vmatpush1.msra.mxu0 %v6080
    %6082 = vmatprep.subr.mxu0 0.0
    %v6083 = vand.u32 %v1489, 4294901760
    %v6084 = vsub.f32 %v1489, %v6083
    %v6085 = vand.u32 %v6084, 4294901760
    %v6086 = vsub.f32 %v6084, %v6085
    %v6087 = vand.u32 %v6086, 4294901760
    %6088 = vmatpush1.msra.mxu0 %v6087
    %6089 = vmatprep.subr.mxu0 0.0
    %v6090 = vand.u32 %v1492, 4294901760
    %v6091 = vsub.f32 %v1492, %v6090
    %v6092 = vand.u32 %v6091, 4294901760
    %v6093 = vsub.f32 %v6091, %v6092
    %v6094 = vand.u32 %v6093, 4294901760
    %6095 = vmatpush1.msra.mxu0 %v6094
    %6096 = vmatprep.subr.mxu0 0.0
    %v6097 = vand.u32 %v1495, 4294901760
    %v6098 = vsub.f32 %v1495, %v6097
    %v6099 = vand.u32 %v6098, 4294901760
    %v6100 = vsub.f32 %v6098, %v6099
    %v6101 = vand.u32 %v6100, 4294901760
    %6102 = vmatpush1.msra.mxu0 %v6101
    %6103 = vmatprep.subr.mxu0 0.0
    %v6104 = vand.u32 %v1498, 4294901760
    %v6105 = vsub.f32 %v1498, %v6104
    %v6106 = vand.u32 %v6105, 4294901760
    %v6107 = vsub.f32 %v6105, %v6106
    %v6108 = vand.u32 %v6107, 4294901760
    %6109 = vmatpush1.msra.mxu0 %v6108
    %6110 = vmatprep.subr.mxu0 0.0
    %v6111 = vand.u32 %v1501, 4294901760
    %v6112 = vsub.f32 %v1501, %v6111
    %v6113 = vand.u32 %v6112, 4294901760
    %v6114 = vsub.f32 %v6112, %v6113
    %v6115 = vand.u32 %v6114, 4294901760
    %6116 = vmatpush1.msra.mxu0 %v6115
    %6117 = vmatprep.subr.mxu0 0.0
    %v6118 = vand.u32 %v1504, 4294901760
    %v6119 = vsub.f32 %v1504, %v6118
    %v6120 = vand.u32 %v6119, 4294901760
    %v6121 = vsub.f32 %v6119, %v6120
    %v6122 = vand.u32 %v6121, 4294901760
    %6123 = vmatpush1.msra.mxu0 %v6122
    %6124 = vmatprep.subr.mxu0 0.0
    %v6125 = vand.u32 %v1507, 4294901760
    %v6126 = vsub.f32 %v1507, %v6125
    %v6127 = vand.u32 %v6126, 4294901760
    %v6128 = vsub.f32 %v6126, %v6127
    %v6129 = vand.u32 %v6128, 4294901760
    %6130 = vmatpush1.msra.mxu0 %v6129
    %6131 = vmatprep.subr.mxu0 0.0
    %v6132 = vand.u32 %v1510, 4294901760
    %v6133 = vsub.f32 %v1510, %v6132
    %v6134 = vand.u32 %v6133, 4294901760
    %v6135 = vsub.f32 %v6133, %v6134
    %v6136 = vand.u32 %v6135, 4294901760
    %6137 = vmatpush1.msra.mxu0 %v6136
    %6138 = vmatprep.subr.mxu0 0.0
    %v6139 = vand.u32 %v1513, 4294901760
    %v6140 = vsub.f32 %v1513, %v6139
    %v6141 = vand.u32 %v6140, 4294901760
    %v6142 = vsub.f32 %v6140, %v6141
    %v6143 = vand.u32 %v6142, 4294901760
    %6144 = vmatpush1.msra.mxu0 %v6143
    %6145 = vmatprep.subr.mxu0 0.0
    %v6146 = vand.u32 %v1516, 4294901760
    %v6147 = vsub.f32 %v1516, %v6146
    %v6148 = vand.u32 %v6147, 4294901760
    %v6149 = vsub.f32 %v6147, %v6148
    %v6150 = vand.u32 %v6149, 4294901760
    %6151 = vmatpush1.msra.mxu0 %v6150
    %6152 = vmatprep.subr.mxu0 0.0
    %v6153 = vand.u32 %v1519, 4294901760
    %v6154 = vsub.f32 %v1519, %v6153
    %v6155 = vand.u32 %v6154, 4294901760
    %v6156 = vsub.f32 %v6154, %v6155
    %v6157 = vand.u32 %v6156, 4294901760
    %6158 = vmatpush1.msra.mxu0 %v6157
    %6159 = vmatprep.subr.mxu0 0.0
    %v6160 = vand.u32 %v1522, 4294901760
    %v6161 = vsub.f32 %v1522, %v6160
    %v6162 = vand.u32 %v6161, 4294901760
    %v6163 = vsub.f32 %v6161, %v6162
    %v6164 = vand.u32 %v6163, 4294901760
    %6165 = vmatpush1.msra.mxu0 %v6164
    %6166 = vmatprep.subr.mxu0 0.0
    %v6167 = vand.u32 %v1525, 4294901760
    %v6168 = vsub.f32 %v1525, %v6167
    %v6169 = vand.u32 %v6168, 4294901760
    %v6170 = vsub.f32 %v6168, %v6169
    %v6171 = vand.u32 %v6170, 4294901760
    %6172 = vmatpush1.msra.mxu0 %v6171
    %6173 = vmatprep.subr.mxu0 0.0
    %v6174 = vand.u32 %v1528, 4294901760
    %v6175 = vsub.f32 %v1528, %v6174
    %v6176 = vand.u32 %v6175, 4294901760
    %v6177 = vsub.f32 %v6175, %v6176
    %v6178 = vand.u32 %v6177, 4294901760
    %6179 = vmatpush1.msra.mxu0 %v6178
    %6180 = vmatprep.subr.mxu0 0.0
    %v6181 = vand.u32 %v1531, 4294901760
    %v6182 = vsub.f32 %v1531, %v6181
    %v6183 = vand.u32 %v6182, 4294901760
    %v6184 = vsub.f32 %v6182, %v6183
    %v6185 = vand.u32 %v6184, 4294901760
    %6186 = vmatpush1.msra.mxu0 %v6185
    %6187 = vmatprep.subr.mxu0 0.0
    %v6188 = vand.u32 %v1534, 4294901760
    %v6189 = vsub.f32 %v1534, %v6188
    %v6190 = vand.u32 %v6189, 4294901760
    %v6191 = vsub.f32 %v6189, %v6190
    %v6192 = vand.u32 %v6191, 4294901760
    %6193 = vmatpush1.msra.mxu0 %v6192
    %6194 = vmatprep.subr.mxu0 0.0
    %v6195 = vand.u32 %v1537, 4294901760
    %v6196 = vsub.f32 %v1537, %v6195
    %v6197 = vand.u32 %v6196, 4294901760
    %v6198 = vsub.f32 %v6196, %v6197
    %v6199 = vand.u32 %v6198, 4294901760
    %6200 = vmatpush1.msra.mxu0 %v6199
    %6201 = vmatprep.subr.mxu0 0.0
    %v6202 = vand.u32 %v1540, 4294901760
    %v6203 = vsub.f32 %v1540, %v6202
    %v6204 = vand.u32 %v6203, 4294901760
    %v6205 = vsub.f32 %v6203, %v6204
    %v6206 = vand.u32 %v6205, 4294901760
    %6207 = vmatpush1.msra.mxu0 %v6206
    %6208 = vmatprep.subr.mxu0 0.0
    %v6209 = vand.u32 %v1543, 4294901760
    %v6210 = vsub.f32 %v1543, %v6209
    %v6211 = vand.u32 %v6210, 4294901760
    %v6212 = vsub.f32 %v6210, %v6211
    %v6213 = vand.u32 %v6212, 4294901760
    %6214 = vmatpush1.msra.mxu0 %v6213
    %6215 = vmatprep.subr.mxu0 0.0
    %v6216 = vand.u32 %v1546, 4294901760
    %v6217 = vsub.f32 %v1546, %v6216
    %v6218 = vand.u32 %v6217, 4294901760
    %v6219 = vsub.f32 %v6217, %v6218
    %v6220 = vand.u32 %v6219, 4294901760
    %6221 = vmatpush1.msra.mxu0 %v6220
    %6222 = vmatprep.subr.mxu0 0.0
    %v6223 = vand.u32 %v1549, 4294901760
    %v6224 = vsub.f32 %v1549, %v6223
    %v6225 = vand.u32 %v6224, 4294901760
    %v6226 = vsub.f32 %v6224, %v6225
    %v6227 = vand.u32 %v6226, 4294901760
    %6228 = vmatpush1.msra.mxu0 %v6227
    %6229 = vmatprep.subr.mxu0 0.0
    %v6230 = vand.u32 %v1552, 4294901760
    %v6231 = vsub.f32 %v1552, %v6230
    %v6232 = vand.u32 %v6231, 4294901760
    %v6233 = vsub.f32 %v6231, %v6232
    %v6234 = vand.u32 %v6233, 4294901760
    %6235 = vmatpush1.msra.mxu0 %v6234
    %6236 = vmatprep.subr.mxu0 0.0
    %v6237 = vand.u32 %v1555, 4294901760
    %v6238 = vsub.f32 %v1555, %v6237
    %v6239 = vand.u32 %v6238, 4294901760
    %v6240 = vsub.f32 %v6238, %v6239
    %v6241 = vand.u32 %v6240, 4294901760
    %6242 = vmatpush1.msra.mxu0 %v6241
    %6243 = vmatprep.subr.mxu0 0.0
    %v6244 = vand.u32 %v1558, 4294901760
    %v6245 = vsub.f32 %v1558, %v6244
    %v6246 = vand.u32 %v6245, 4294901760
    %v6247 = vsub.f32 %v6245, %v6246
    %v6248 = vand.u32 %v6247, 4294901760
    %6249 = vmatpush1.msra.mxu0 %v6248
    %6250 = vmatprep.subr.mxu0 0.0
    %v6251 = vand.u32 %v1561, 4294901760
    %v6252 = vsub.f32 %v1561, %v6251
    %v6253 = vand.u32 %v6252, 4294901760
    %v6254 = vsub.f32 %v6252, %v6253
    %v6255 = vand.u32 %v6254, 4294901760
    %6256 = vmatpush1.msra.mxu0 %v6255
    %v6257 = vand.u32 %v1369, 4294901760
    %6258 = vmatprep.mubr.f32.mxu0 %v6257
    %v6259 = vand.u32 %v1368, 4294901760
    %6260 = vmatmul.mubr.f32.gmra.mrb[0].mxu0 %v6259
    %v6261 = vpop.f32.mrb[0].mxu0
    %v6262 = vadd.f32 %v6030, %v6261
    %v6263 = vpop.f32.mrb[0].mxu0
    %6264 = vdwg.mxu0
    %6265 = vmatprep.subr.mxu0 0.0
    %v6266 = vand.u32 %v1468, 4294901760
    %v6267 = vsub.f32 %v1468, %v6266
    %6268 = vmatpush1.msra.mxu0 %v6267
    %6269 = vmatprep.subr.mxu0 0.0
    %v6270 = vand.u32 %v1471, 4294901760
    %v6271 = vsub.f32 %v1471, %v6270
    %6272 = vmatpush1.msra.mxu0 %v6271
    %6273 = vmatprep.subr.mxu0 0.0
    %v6274 = vand.u32 %v1474, 4294901760
    %v6275 = vsub.f32 %v1474, %v6274
    %6276 = vmatpush1.msra.mxu0 %v6275
    %6277 = vmatprep.subr.mxu0 0.0
    %v6278 = vand.u32 %v1477, 4294901760
    %v6279 = vsub.f32 %v1477, %v6278
    %6280 = vmatpush1.msra.mxu0 %v6279
    %6281 = vmatprep.subr.mxu0 0.0
    %v6282 = vand.u32 %v1480, 4294901760
    %v6283 = vsub.f32 %v1480, %v6282
    %6284 = vmatpush1.msra.mxu0 %v6283
    %6285 = vmatprep.subr.mxu0 0.0
    %v6286 = vand.u32 %v1483, 4294901760
    %v6287 = vsub.f32 %v1483, %v6286
    %6288 = vmatpush1.msra.mxu0 %v6287
    %6289 = vmatprep.subr.mxu0 0.0
    %v6290 = vand.u32 %v1486, 4294901760
    %v6291 = vsub.f32 %v1486, %v6290
    %6292 = vmatpush1.msra.mxu0 %v6291
    %6293 = vmatprep.subr.mxu0 0.0
    %v6294 = vand.u32 %v1489, 4294901760
    %v6295 = vsub.f32 %v1489, %v6294
    %6296 = vmatpush1.msra.mxu0 %v6295
    %6297 = vmatprep.subr.mxu0 0.0
    %v6298 = vand.u32 %v1492, 4294901760
    %v6299 = vsub.f32 %v1492, %v6298
    %6300 = vmatpush1.msra.mxu0 %v6299
    %6301 = vmatprep.subr.mxu0 0.0
    %v6302 = vand.u32 %v1495, 4294901760
    %v6303 = vsub.f32 %v1495, %v6302
    %6304 = vmatpush1.msra.mxu0 %v6303
    %6305 = vmatprep.subr.mxu0 0.0
    %v6306 = vand.u32 %v1498, 4294901760
    %v6307 = vsub.f32 %v1498, %v6306
    %6308 = vmatpush1.msra.mxu0 %v6307
    %6309 = vmatprep.subr.mxu0 0.0
    %v6310 = vand.u32 %v1501, 4294901760
    %v6311 = vsub.f32 %v1501, %v6310
    %6312 = vmatpush1.msra.mxu0 %v6311
    %6313 = vmatprep.subr.mxu0 0.0
    %v6314 = vand.u32 %v1504, 4294901760
    %v6315 = vsub.f32 %v1504, %v6314
    %6316 = vmatpush1.msra.mxu0 %v6315
    %6317 = vmatprep.subr.mxu0 0.0
    %v6318 = vand.u32 %v1507, 4294901760
    %v6319 = vsub.f32 %v1507, %v6318
    %6320 = vmatpush1.msra.mxu0 %v6319
    %6321 = vmatprep.subr.mxu0 0.0
    %v6322 = vand.u32 %v1510, 4294901760
    %v6323 = vsub.f32 %v1510, %v6322
    %6324 = vmatpush1.msra.mxu0 %v6323
    %6325 = vmatprep.subr.mxu0 0.0
    %v6326 = vand.u32 %v1513, 4294901760
    %v6327 = vsub.f32 %v1513, %v6326
    %6328 = vmatpush1.msra.mxu0 %v6327
    %6329 = vmatprep.subr.mxu0 0.0
    %v6330 = vand.u32 %v1516, 4294901760
    %v6331 = vsub.f32 %v1516, %v6330
    %6332 = vmatpush1.msra.mxu0 %v6331
    %6333 = vmatprep.subr.mxu0 0.0
    %v6334 = vand.u32 %v1519, 4294901760
    %v6335 = vsub.f32 %v1519, %v6334
    %6336 = vmatpush1.msra.mxu0 %v6335
    %6337 = vmatprep.subr.mxu0 0.0
    %v6338 = vand.u32 %v1522, 4294901760
    %v6339 = vsub.f32 %v1522, %v6338
    %6340 = vmatpush1.msra.mxu0 %v6339
    %6341 = vmatprep.subr.mxu0 0.0
    %v6342 = vand.u32 %v1525, 4294901760
    %v6343 = vsub.f32 %v1525, %v6342
    %6344 = vmatpush1.msra.mxu0 %v6343
    %6345 = vmatprep.subr.mxu0 0.0
    %v6346 = vand.u32 %v1528, 4294901760
    %v6347 = vsub.f32 %v1528, %v6346
    %6348 = vmatpush1.msra.mxu0 %v6347
    %6349 = vmatprep.subr.mxu0 0.0
    %v6350 = vand.u32 %v1531, 4294901760
    %v6351 = vsub.f32 %v1531, %v6350
    %6352 = vmatpush1.msra.mxu0 %v6351
    %6353 = vmatprep.subr.mxu0 0.0
    %v6354 = vand.u32 %v1534, 4294901760
    %v6355 = vsub.f32 %v1534, %v6354
    %6356 = vmatpush1.msra.mxu0 %v6355
    %6357 = vmatprep.subr.mxu0 0.0
    %v6358 = vand.u32 %v1537, 4294901760
    %v6359 = vsub.f32 %v1537, %v6358
    %6360 = vmatpush1.msra.mxu0 %v6359
    %6361 = vmatprep.subr.mxu0 0.0
    %v6362 = vand.u32 %v1540, 4294901760
    %v6363 = vsub.f32 %v1540, %v6362
    %6364 = vmatpush1.msra.mxu0 %v6363
    %6365 = vmatprep.subr.mxu0 0.0
    %v6366 = vand.u32 %v1543, 4294901760
    %v6367 = vsub.f32 %v1543, %v6366
    %6368 = vmatpush1.msra.mxu0 %v6367
    %6369 = vmatprep.subr.mxu0 0.0
    %v6370 = vand.u32 %v1546, 4294901760
    %v6371 = vsub.f32 %v1546, %v6370
    %6372 = vmatpush1.msra.mxu0 %v6371
    %6373 = vmatprep.subr.mxu0 0.0
    %v6374 = vand.u32 %v1549, 4294901760
    %v6375 = vsub.f32 %v1549, %v6374
    %6376 = vmatpush1.msra.mxu0 %v6375
    %6377 = vmatprep.subr.mxu0 0.0
    %v6378 = vand.u32 %v1552, 4294901760
    %v6379 = vsub.f32 %v1552, %v6378
    %6380 = vmatpush1.msra.mxu0 %v6379
    %6381 = vmatprep.subr.mxu0 0.0
    %v6382 = vand.u32 %v1555, 4294901760
    %v6383 = vsub.f32 %v1555, %v6382
    %6384 = vmatpush1.msra.mxu0 %v6383
    %6385 = vmatprep.subr.mxu0 0.0
    %v6386 = vand.u32 %v1558, 4294901760
    %v6387 = vsub.f32 %v1558, %v6386
    %6388 = vmatpush1.msra.mxu0 %v6387
    %6389 = vmatprep.subr.mxu0 0.0
    %v6390 = vand.u32 %v1561, 4294901760
    %v6391 = vsub.f32 %v1561, %v6390
    %6392 = vmatpush1.msra.mxu0 %v6391
    %v6393 = vand.u32 %v1369, 4294901760
    %v6394 = vsub.f32 %v1369, %v6393
    %6395 = vmatprep.mubr.f32.mxu0 %v6394
    %v6396 = vand.u32 %v1368, 4294901760
    %v6397 = vsub.f32 %v1368, %v6396
    %6398 = vmatmul.mubr.f32.gmra.mrb[0].mxu0 %v6397
    %v6399 = vpop.f32.mrb[0].mxu0
    %v6400 = vadd.f32 %v6262, %v6399
    %v6401 = vpop.f32.mrb[0].mxu0
    %6402 = vdwg.mxu0
    %6403 = vmatprep.subr.mxu0 0.0
    %v6404 = vand.u32 %v1468, 4294901760
    %6405 = vmatpush1.msra.mxu0 %v6404
    %6406 = vmatprep.subr.mxu0 0.0
    %v6407 = vand.u32 %v1471, 4294901760
    %6408 = vmatpush1.msra.mxu0 %v6407
    %6409 = vmatprep.subr.mxu0 0.0
    %v6410 = vand.u32 %v1474, 4294901760
    %6411 = vmatpush1.msra.mxu0 %v6410
    %6412 = vmatprep.subr.mxu0 0.0
    %v6413 = vand.u32 %v1477, 4294901760
    %6414 = vmatpush1.msra.mxu0 %v6413
    %6415 = vmatprep.subr.mxu0 0.0
    %v6416 = vand.u32 %v1480, 4294901760
    %6417 = vmatpush1.msra.mxu0 %v6416
    %6418 = vmatprep.subr.mxu0 0.0
    %v6419 = vand.u32 %v1483, 4294901760
    %6420 = vmatpush1.msra.mxu0 %v6419
    %6421 = vmatprep.subr.mxu0 0.0
    %v6422 = vand.u32 %v1486, 4294901760
    %6423 = vmatpush1.msra.mxu0 %v6422
    %6424 = vmatprep.subr.mxu0 0.0
    %v6425 = vand.u32 %v1489, 4294901760
    %6426 = vmatpush1.msra.mxu0 %v6425
    %6427 = vmatprep.subr.mxu0 0.0
    %v6428 = vand.u32 %v1492, 4294901760
    %6429 = vmatpush1.msra.mxu0 %v6428
    %6430 = vmatprep.subr.mxu0 0.0
    %v6431 = vand.u32 %v1495, 4294901760
    %6432 = vmatpush1.msra.mxu0 %v6431
    %6433 = vmatprep.subr.mxu0 0.0
    %v6434 = vand.u32 %v1498, 4294901760
    %6435 = vmatpush1.msra.mxu0 %v6434
    %6436 = vmatprep.subr.mxu0 0.0
    %v6437 = vand.u32 %v1501, 4294901760
    %6438 = vmatpush1.msra.mxu0 %v6437
    %6439 = vmatprep.subr.mxu0 0.0
    %v6440 = vand.u32 %v1504, 4294901760
    %6441 = vmatpush1.msra.mxu0 %v6440
    %6442 = vmatprep.subr.mxu0 0.0
    %v6443 = vand.u32 %v1507, 4294901760
    %6444 = vmatpush1.msra.mxu0 %v6443
    %6445 = vmatprep.subr.mxu0 0.0
    %v6446 = vand.u32 %v1510, 4294901760
    %6447 = vmatpush1.msra.mxu0 %v6446
    %6448 = vmatprep.subr.mxu0 0.0
    %v6449 = vand.u32 %v1513, 4294901760
    %6450 = vmatpush1.msra.mxu0 %v6449
    %6451 = vmatprep.subr.mxu0 0.0
    %v6452 = vand.u32 %v1516, 4294901760
    %6453 = vmatpush1.msra.mxu0 %v6452
    %6454 = vmatprep.subr.mxu0 0.0
    %v6455 = vand.u32 %v1519, 4294901760
    %6456 = vmatpush1.msra.mxu0 %v6455
    %6457 = vmatprep.subr.mxu0 0.0
    %v6458 = vand.u32 %v1522, 4294901760
    %6459 = vmatpush1.msra.mxu0 %v6458
    %6460 = vmatprep.subr.mxu0 0.0
    %v6461 = vand.u32 %v1525, 4294901760
    %6462 = vmatpush1.msra.mxu0 %v6461
    %6463 = vmatprep.subr.mxu0 0.0
    %v6464 = vand.u32 %v1528, 4294901760
    %6465 = vmatpush1.msra.mxu0 %v6464
    %6466 = vmatprep.subr.mxu0 0.0
    %v6467 = vand.u32 %v1531, 4294901760
    %6468 = vmatpush1.msra.mxu0 %v6467
    %6469 = vmatprep.subr.mxu0 0.0
    %v6470 = vand.u32 %v1534, 4294901760
    %6471 = vmatpush1.msra.mxu0 %v6470
    %6472 = vmatprep.subr.mxu0 0.0
    %v6473 = vand.u32 %v1537, 4294901760
    %6474 = vmatpush1.msra.mxu0 %v6473
    %6475 = vmatprep.subr.mxu0 0.0
    %v6476 = vand.u32 %v1540, 4294901760
    %6477 = vmatpush1.msra.mxu0 %v6476
    %6478 = vmatprep.subr.mxu0 0.0
    %v6479 = vand.u32 %v1543, 4294901760
    %6480 = vmatpush1.msra.mxu0 %v6479
    %6481 = vmatprep.subr.mxu0 0.0
    %v6482 = vand.u32 %v1546, 4294901760
    %6483 = vmatpush1.msra.mxu0 %v6482
    %6484 = vmatprep.subr.mxu0 0.0
    %v6485 = vand.u32 %v1549, 4294901760
    %6486 = vmatpush1.msra.mxu0 %v6485
    %6487 = vmatprep.subr.mxu0 0.0
    %v6488 = vand.u32 %v1552, 4294901760
    %6489 = vmatpush1.msra.mxu0 %v6488
    %6490 = vmatprep.subr.mxu0 0.0
    %v6491 = vand.u32 %v1555, 4294901760
    %6492 = vmatpush1.msra.mxu0 %v6491
    %6493 = vmatprep.subr.mxu0 0.0
    %v6494 = vand.u32 %v1558, 4294901760
    %6495 = vmatpush1.msra.mxu0 %v6494
    %6496 = vmatprep.subr.mxu0 0.0
    %v6497 = vand.u32 %v1561, 4294901760
    %6498 = vmatpush1.msra.mxu0 %v6497
    %v6499 = vand.u32 %v1369, 4294901760
    %v6500 = vsub.f32 %v1369, %v6499
    %v6501 = vand.u32 %v6500, 4294901760
    %6502 = vmatprep.mubr.f32.mxu0 %v6501
    %v6503 = vand.u32 %v1368, 4294901760
    %v6504 = vsub.f32 %v1368, %v6503
    %v6505 = vand.u32 %v6504, 4294901760
    %6506 = vmatmul.mubr.f32.gmra.mrb[0].mxu0 %v6505
    %v6507 = vpop.f32.mrb[0].mxu0
    %v6508 = vadd.f32 %v6400, %v6507
    %v6509 = vpop.f32.mrb[0].mxu0
    %6510 = vdwg.mxu0
    %6511 = vmatprep.subr.mxu0 0.0
    %v6512 = vand.u32 %v1468, 4294901760
    %v6513 = vsub.f32 %v1468, %v6512
    %v6514 = vand.u32 %v6513, 4294901760
    %6515 = vmatpush1.msra.mxu0 %v6514
    %6516 = vmatprep.subr.mxu0 0.0
    %v6517 = vand.u32 %v1471, 4294901760
    %v6518 = vsub.f32 %v1471, %v6517
    %v6519 = vand.u32 %v6518, 4294901760
    %6520 = vmatpush1.msra.mxu0 %v6519
    %6521 = vmatprep.subr.mxu0 0.0
    %v6522 = vand.u32 %v1474, 4294901760
    %v6523 = vsub.f32 %v1474, %v6522
    %v6524 = vand.u32 %v6523, 4294901760
    %6525 = vmatpush1.msra.mxu0 %v6524
    %6526 = vmatprep.subr.mxu0 0.0
    %v6527 = vand.u32 %v1477, 4294901760
    %v6528 = vsub.f32 %v1477, %v6527
    %v6529 = vand.u32 %v6528, 4294901760
    %6530 = vmatpush1.msra.mxu0 %v6529
    %6531 = vmatprep.subr.mxu0 0.0
    %v6532 = vand.u32 %v1480, 4294901760
    %v6533 = vsub.f32 %v1480, %v6532
    %v6534 = vand.u32 %v6533, 4294901760
    %6535 = vmatpush1.msra.mxu0 %v6534
    %6536 = vmatprep.subr.mxu0 0.0
    %v6537 = vand.u32 %v1483, 4294901760
    %v6538 = vsub.f32 %v1483, %v6537
    %v6539 = vand.u32 %v6538, 4294901760
    %6540 = vmatpush1.msra.mxu0 %v6539
    %6541 = vmatprep.subr.mxu0 0.0
    %v6542 = vand.u32 %v1486, 4294901760
    %v6543 = vsub.f32 %v1486, %v6542
    %v6544 = vand.u32 %v6543, 4294901760
    %6545 = vmatpush1.msra.mxu0 %v6544
    %6546 = vmatprep.subr.mxu0 0.0
    %v6547 = vand.u32 %v1489, 4294901760
    %v6548 = vsub.f32 %v1489, %v6547
    %v6549 = vand.u32 %v6548, 4294901760
    %6550 = vmatpush1.msra.mxu0 %v6549
    %6551 = vmatprep.subr.mxu0 0.0
    %v6552 = vand.u32 %v1492, 4294901760
    %v6553 = vsub.f32 %v1492, %v6552
    %v6554 = vand.u32 %v6553, 4294901760
    %6555 = vmatpush1.msra.mxu0 %v6554
    %6556 = vmatprep.subr.mxu0 0.0
    %v6557 = vand.u32 %v1495, 4294901760
    %v6558 = vsub.f32 %v1495, %v6557
    %v6559 = vand.u32 %v6558, 4294901760
    %6560 = vmatpush1.msra.mxu0 %v6559
    %6561 = vmatprep.subr.mxu0 0.0
    %v6562 = vand.u32 %v1498, 4294901760
    %v6563 = vsub.f32 %v1498, %v6562
    %v6564 = vand.u32 %v6563, 4294901760
    %6565 = vmatpush1.msra.mxu0 %v6564
    %6566 = vmatprep.subr.mxu0 0.0
    %v6567 = vand.u32 %v1501, 4294901760
    %v6568 = vsub.f32 %v1501, %v6567
    %v6569 = vand.u32 %v6568, 4294901760
    %6570 = vmatpush1.msra.mxu0 %v6569
    %6571 = vmatprep.subr.mxu0 0.0
    %v6572 = vand.u32 %v1504, 4294901760
    %v6573 = vsub.f32 %v1504, %v6572
    %v6574 = vand.u32 %v6573, 4294901760
    %6575 = vmatpush1.msra.mxu0 %v6574
    %6576 = vmatprep.subr.mxu0 0.0
    %v6577 = vand.u32 %v1507, 4294901760
    %v6578 = vsub.f32 %v1507, %v6577
    %v6579 = vand.u32 %v6578, 4294901760
    %6580 = vmatpush1.msra.mxu0 %v6579
    %6581 = vmatprep.subr.mxu0 0.0
    %v6582 = vand.u32 %v1510, 4294901760
    %v6583 = vsub.f32 %v1510, %v6582
    %v6584 = vand.u32 %v6583, 4294901760
    %6585 = vmatpush1.msra.mxu0 %v6584
    %6586 = vmatprep.subr.mxu0 0.0
    %v6587 = vand.u32 %v1513, 4294901760
    %v6588 = vsub.f32 %v1513, %v6587
    %v6589 = vand.u32 %v6588, 4294901760
    %6590 = vmatpush1.msra.mxu0 %v6589
    %6591 = vmatprep.subr.mxu0 0.0
    %v6592 = vand.u32 %v1516, 4294901760
    %v6593 = vsub.f32 %v1516, %v6592
    %v6594 = vand.u32 %v6593, 4294901760
    %6595 = vmatpush1.msra.mxu0 %v6594
    %6596 = vmatprep.subr.mxu0 0.0
    %v6597 = vand.u32 %v1519, 4294901760
    %v6598 = vsub.f32 %v1519, %v6597
    %v6599 = vand.u32 %v6598, 4294901760
    %6600 = vmatpush1.msra.mxu0 %v6599
    %6601 = vmatprep.subr.mxu0 0.0
    %v6602 = vand.u32 %v1522, 4294901760
    %v6603 = vsub.f32 %v1522, %v6602
    %v6604 = vand.u32 %v6603, 4294901760
    %6605 = vmatpush1.msra.mxu0 %v6604
    %6606 = vmatprep.subr.mxu0 0.0
    %v6607 = vand.u32 %v1525, 4294901760
    %v6608 = vsub.f32 %v1525, %v6607
    %v6609 = vand.u32 %v6608, 4294901760
    %6610 = vmatpush1.msra.mxu0 %v6609
    %6611 = vmatprep.subr.mxu0 0.0
    %v6612 = vand.u32 %v1528, 4294901760
    %v6613 = vsub.f32 %v1528, %v6612
    %v6614 = vand.u32 %v6613, 4294901760
    %6615 = vmatpush1.msra.mxu0 %v6614
    %6616 = vmatprep.subr.mxu0 0.0
    %v6617 = vand.u32 %v1531, 4294901760
    %v6618 = vsub.f32 %v1531, %v6617
    %v6619 = vand.u32 %v6618, 4294901760
    %6620 = vmatpush1.msra.mxu0 %v6619
    %6621 = vmatprep.subr.mxu0 0.0
    %v6622 = vand.u32 %v1534, 4294901760
    %v6623 = vsub.f32 %v1534, %v6622
    %v6624 = vand.u32 %v6623, 4294901760
    %6625 = vmatpush1.msra.mxu0 %v6624
    %6626 = vmatprep.subr.mxu0 0.0
    %v6627 = vand.u32 %v1537, 4294901760
    %v6628 = vsub.f32 %v1537, %v6627
    %v6629 = vand.u32 %v6628, 4294901760
    %6630 = vmatpush1.msra.mxu0 %v6629
    %6631 = vmatprep.subr.mxu0 0.0
    %v6632 = vand.u32 %v1540, 4294901760
    %v6633 = vsub.f32 %v1540, %v6632
    %v6634 = vand.u32 %v6633, 4294901760
    %6635 = vmatpush1.msra.mxu0 %v6634
    %6636 = vmatprep.subr.mxu0 0.0
    %v6637 = vand.u32 %v1543, 4294901760
    %v6638 = vsub.f32 %v1543, %v6637
    %v6639 = vand.u32 %v6638, 4294901760
    %6640 = vmatpush1.msra.mxu0 %v6639
    %6641 = vmatprep.subr.mxu0 0.0
    %v6642 = vand.u32 %v1546, 4294901760
    %v6643 = vsub.f32 %v1546, %v6642
    %v6644 = vand.u32 %v6643, 4294901760
    %6645 = vmatpush1.msra.mxu0 %v6644
    %6646 = vmatprep.subr.mxu0 0.0
    %v6647 = vand.u32 %v1549, 4294901760
    %v6648 = vsub.f32 %v1549, %v6647
    %v6649 = vand.u32 %v6648, 4294901760
    %6650 = vmatpush1.msra.mxu0 %v6649
    %6651 = vmatprep.subr.mxu0 0.0
    %v6652 = vand.u32 %v1552, 4294901760
    %v6653 = vsub.f32 %v1552, %v6652
    %v6654 = vand.u32 %v6653, 4294901760
    %6655 = vmatpush1.msra.mxu0 %v6654
    %6656 = vmatprep.subr.mxu0 0.0
    %v6657 = vand.u32 %v1555, 4294901760
    %v6658 = vsub.f32 %v1555, %v6657
    %v6659 = vand.u32 %v6658, 4294901760
    %6660 = vmatpush1.msra.mxu0 %v6659
    %6661 = vmatprep.subr.mxu0 0.0
    %v6662 = vand.u32 %v1558, 4294901760
    %v6663 = vsub.f32 %v1558, %v6662
    %v6664 = vand.u32 %v6663, 4294901760
    %6665 = vmatpush1.msra.mxu0 %v6664
    %6666 = vmatprep.subr.mxu0 0.0
    %v6667 = vand.u32 %v1561, 4294901760
    %v6668 = vsub.f32 %v1561, %v6667
    %v6669 = vand.u32 %v6668, 4294901760
    %6670 = vmatpush1.msra.mxu0 %v6669
    %v6671 = vand.u32 %v1369, 4294901760
    %6672 = vmatprep.mubr.f32.mxu0 %v6671
    %v6673 = vand.u32 %v1368, 4294901760
    %6674 = vmatmul.mubr.f32.gmra.mrb[0].mxu0 %v6673
    %v6675 = vpop.f32.mrb[0].mxu0
    %v6676 = vadd.f32 %v6508, %v6675
    %v6677 = vpop.f32.mrb[0].mxu0
    %6678 = vdwg.mxu0
    %6679 = vmatprep.subr.mxu0 0.0
    %v6680 = vand.u32 %v1468, 4294901760
    %6681 = vmatpush1.msra.mxu0 %v6680
    %6682 = vmatprep.subr.mxu0 0.0
    %v6683 = vand.u32 %v1471, 4294901760
    %6684 = vmatpush1.msra.mxu0 %v6683
    %6685 = vmatprep.subr.mxu0 0.0
    %v6686 = vand.u32 %v1474, 4294901760
    %6687 = vmatpush1.msra.mxu0 %v6686
    %6688 = vmatprep.subr.mxu0 0.0
    %v6689 = vand.u32 %v1477, 4294901760
    %6690 = vmatpush1.msra.mxu0 %v6689
    %6691 = vmatprep.subr.mxu0 0.0
    %v6692 = vand.u32 %v1480, 4294901760
    %6693 = vmatpush1.msra.mxu0 %v6692
    %6694 = vmatprep.subr.mxu0 0.0
    %v6695 = vand.u32 %v1483, 4294901760
    %6696 = vmatpush1.msra.mxu0 %v6695
    %6697 = vmatprep.subr.mxu0 0.0
    %v6698 = vand.u32 %v1486, 4294901760
    %6699 = vmatpush1.msra.mxu0 %v6698
    %6700 = vmatprep.subr.mxu0 0.0
    %v6701 = vand.u32 %v1489, 4294901760
    %6702 = vmatpush1.msra.mxu0 %v6701
    %6703 = vmatprep.subr.mxu0 0.0
    %v6704 = vand.u32 %v1492, 4294901760
    %6705 = vmatpush1.msra.mxu0 %v6704
    %6706 = vmatprep.subr.mxu0 0.0
    %v6707 = vand.u32 %v1495, 4294901760
    %6708 = vmatpush1.msra.mxu0 %v6707
    %6709 = vmatprep.subr.mxu0 0.0
    %v6710 = vand.u32 %v1498, 4294901760
    %6711 = vmatpush1.msra.mxu0 %v6710
    %6712 = vmatprep.subr.mxu0 0.0
    %v6713 = vand.u32 %v1501, 4294901760
    %6714 = vmatpush1.msra.mxu0 %v6713
    %6715 = vmatprep.subr.mxu0 0.0
    %v6716 = vand.u32 %v1504, 4294901760
    %6717 = vmatpush1.msra.mxu0 %v6716
    %6718 = vmatprep.subr.mxu0 0.0
    %v6719 = vand.u32 %v1507, 4294901760
    %6720 = vmatpush1.msra.mxu0 %v6719
    %6721 = vmatprep.subr.mxu0 0.0
    %v6722 = vand.u32 %v1510, 4294901760
    %6723 = vmatpush1.msra.mxu0 %v6722
    %6724 = vmatprep.subr.mxu0 0.0
    %v6725 = vand.u32 %v1513, 4294901760
    %6726 = vmatpush1.msra.mxu0 %v6725
    %6727 = vmatprep.subr.mxu0 0.0
    %v6728 = vand.u32 %v1516, 4294901760
    %6729 = vmatpush1.msra.mxu0 %v6728
    %6730 = vmatprep.subr.mxu0 0.0
    %v6731 = vand.u32 %v1519, 4294901760
    %6732 = vmatpush1.msra.mxu0 %v6731
    %6733 = vmatprep.subr.mxu0 0.0
    %v6734 = vand.u32 %v1522, 4294901760
    %6735 = vmatpush1.msra.mxu0 %v6734
    %6736 = vmatprep.subr.mxu0 0.0
    %v6737 = vand.u32 %v1525, 4294901760
    %6738 = vmatpush1.msra.mxu0 %v6737
    %6739 = vmatprep.subr.mxu0 0.0
    %v6740 = vand.u32 %v1528, 4294901760
    %6741 = vmatpush1.msra.mxu0 %v6740
    %6742 = vmatprep.subr.mxu0 0.0
    %v6743 = vand.u32 %v1531, 4294901760
    %6744 = vmatpush1.msra.mxu0 %v6743
    %6745 = vmatprep.subr.mxu0 0.0
    %v6746 = vand.u32 %v1534, 4294901760
    %6747 = vmatpush1.msra.mxu0 %v6746
    %6748 = vmatprep.subr.mxu0 0.0
    %v6749 = vand.u32 %v1537, 4294901760
    %6750 = vmatpush1.msra.mxu0 %v6749
    %6751 = vmatprep.subr.mxu0 0.0
    %v6752 = vand.u32 %v1540, 4294901760
    %6753 = vmatpush1.msra.mxu0 %v6752
    %6754 = vmatprep.subr.mxu0 0.0
    %v6755 = vand.u32 %v1543, 4294901760
    %6756 = vmatpush1.msra.mxu0 %v6755
    %6757 = vmatprep.subr.mxu0 0.0
    %v6758 = vand.u32 %v1546, 4294901760
    %6759 = vmatpush1.msra.mxu0 %v6758
    %6760 = vmatprep.subr.mxu0 0.0
    %v6761 = vand.u32 %v1549, 4294901760
    %6762 = vmatpush1.msra.mxu0 %v6761
    %6763 = vmatprep.subr.mxu0 0.0
    %v6764 = vand.u32 %v1552, 4294901760
    %6765 = vmatpush1.msra.mxu0 %v6764
    %6766 = vmatprep.subr.mxu0 0.0
    %v6767 = vand.u32 %v1555, 4294901760
    %6768 = vmatpush1.msra.mxu0 %v6767
    %6769 = vmatprep.subr.mxu0 0.0
    %v6770 = vand.u32 %v1558, 4294901760
    %6771 = vmatpush1.msra.mxu0 %v6770
    %6772 = vmatprep.subr.mxu0 0.0
    %v6773 = vand.u32 %v1561, 4294901760
    %6774 = vmatpush1.msra.mxu0 %v6773
    %v6775 = vand.u32 %v1369, 4294901760
    %6776 = vmatprep.mubr.f32.mxu0 %v6775
    %v6777 = vand.u32 %v1368, 4294901760
    %6778 = vmatmul.mubr.f32.gmra.mrb[0].mxu0 %v6777
    %v6779 = vpop.f32.mrb[0].mxu0
    %v6780 = vadd.f32 %v6676, %v6779
    %v6781 = vpop.f32.mrb[0].mxu0
    %6782 = vdwg.mxu0
    %s6783 = scalar_lea.vmem [#allocation6], 3
    %v6784 = vld [vmem:[%s6783] ss:$8 sm:$0x7]
    %v6786 = vlaneseq
    %v6787 = vshrl.u32 %v6786, 7
    %v6788 = vsub.s32 0, %v6787
    %v6789 = vrot.slane %v6784, %v6788
    %v6790 = vlaneseq
    %v6791 = vshrl.u32 %v6790, 7
    %v6792 = vsub.s32 1, %v6791
    %v6793 = vrot.slane %v6784, %v6792
    %v6794 = vlaneseq
    %v6795 = vshrl.u32 %v6794, 7
    %v6796 = vsub.s32 2, %v6795
    %v6797 = vrot.slane %v6784, %v6796
    %v6801 = vadd.f32 %v5055, %v6789
    %v6802 = vadd.f32 %v5057, %v6793
    %v6803 = vadd.f32 %v6780, %v6797
    %v6804 = vmax.f32 %v6801, 0.0
    %v6805 = vmax.f32 %v6802, 0.0
    %v6806 = vmax.f32 %v6803, 0.0
    %s6807 = scalar_lea.vmem [#allocation6], 4
    %v6808 = vld [vmem:[%s6807] ss:$8 sm:$0x7]
    %v6810 = vlaneseq
    %v6811 = vshrl.u32 %v6810, 7
    %v6812 = vsub.s32 0, %v6811
    %v6813 = vrot.slane %v6808, %v6812
    %v6814 = vlaneseq
    %v6815 = vshrl.u32 %v6814, 7
    %v6816 = vsub.s32 1, %v6815
    %v6817 = vrot.slane %v6808, %v6816
    %v6818 = vlaneseq
    %v6819 = vshrl.u32 %v6818, 7
    %v6820 = vsub.s32 2, %v6819
    %v6821 = vrot.slane %v6808, %v6820
    %v6825 = vmul.f32 %v6804, %v6813
    %v6826 = vmul.f32 %v6805, %v6817
    %v6827 = vmul.f32 %v6806, %v6821
    %v6828 = vadd.f32 %v6825, %v6826
    %v6829 = vadd.f32 %v6828, %v6827
    %6830 = vadd.xlane.f32.xlu0 %v6829
    %v6831 = vpop.xlane.xlu0 %6830
    %v6832 = vld [vmem:[#allocation6 + $0x5] ss:$0 sm:$0xff]
    %v6833 = vadd.f32 %v6831, %v6832
    %vm6834 = vcmask 7168
    %6835 = vst.msk [vmem:[%s5] sm:$0xff] %vm6834, %v6833
    // Predicated region
    $region34: #{tpu_custom_call.1} parent=1 // pred_check
      _
    $region35: #{tpu_custom_call.1} parent=1 // pred_check_branch
      %6837 = sbr.rel (0) target = $region37
    $region36: #{tpu_custom_call.1} parent=1 // pred_region
      _
    $region37: #{tpu_custom_call.1} parent=1 // pred_fallthru
      _
    // Predicated region
    $region38: #{tpu_custom_call.1} parent=1 // pred_check
      _
    $region39: #{tpu_custom_call.1} parent=1 // pred_check_branch
      %6839 = sbr.rel (0) target = $region41
    $region40: #{tpu_custom_call.1} parent=1 // pred_region
      _
    $region41: #{tpu_custom_call.1} parent=1 // pred_fallthru
      _
    %6840 = vsyncpa [#allocation3], 1
    %6841 = vsyncpa [#allocation5], 1

</llo_original>
